<compile_context>
chip_gen: v5e
topology: v5e:2x2
jax: 0.10.0
libtpu: 0.0.40
codegen_flags: <defaults>
</compile_context>

<pallas_src>
import jax
import jax.numpy as jnp
from jax.experimental import pallas as pl
from jax.experimental.pallas import tpu as pltpu


def _cbam_head_kernel(x_ref, w1t_ref, w2t_ref, wct_ref, bc_ref, out_ref, stat_sc):
    """One (batch-tile, channel-chunk) grid step.

    x_ref   : (tb, tc, HW)   native-NCHW feature chunk (HW on the lane axis)
    w1t_ref : (C, HP)        shared_mlp[0].weight.T, hidden zero-padded (bf16)
    w2t_ref : (HP, C)        shared_mlp[2].weight.T                     (bf16)
    wct_ref : (C, NCP)       classifier.weight.T, classes zero-padded   (bf16)
    bc_ref  : (1, NCP)       classifier.bias, zero-padded (f32)
    out_ref : (1, tb, NCP)   lane-padded logits
    stat_sc : (2*tb, C) f32  rows [0:tb] = spatial mean, rows [tb:2tb] = spatial max
    """
    c = pl.program_id(1)
    tb, tc, hw = x_ref.shape

    # Spatial reduction for this channel chunk: lane-axis sum/max with f32
    # accumulation.  HW equals the full (logical) minor extent, so Mosaic's
    # masked lane reduction ignores any lane padding.  Only the (tb, tc)
    # results get relaid out to lanes; the feature map itself is never
    # transposed in HBM or VMEM.
    xf = x_ref[...].astype(jnp.float32)                        # (tb, tc, hw)
    off = pl.multiple_of(c * tc, 128)                          # lane-aligned
    stat_sc[pl.ds(0, tb), pl.ds(off, tc)] = jnp.sum(xf, axis=2) * (1.0 / hw)
    stat_sc[pl.ds(tb, tb), pl.ds(off, tc)] = jnp.max(xf, axis=2)

    # Finalize once every channel chunk of this batch tile has been reduced.
    @pl.when(c == pl.num_programs(1) - 1)
    def _finalize():
        stats = stat_sc[...]                                   # (2tb, C) f32
        stacked = stats.astype(w1t_ref.dtype)                  # bf16 MXU operand

        # One shared-MLP pass over stacked [avg; max] rows (weights stream
        # through the MXU once instead of twice).
        h = jnp.dot(stacked, w1t_ref[...], preferred_element_type=jnp.float32)
        h = jnp.maximum(h, 0.0).astype(w2t_ref.dtype)
        mlp = jnp.dot(h, w2t_ref[...], preferred_element_type=jnp.float32)
        att = jax.nn.sigmoid(mlp[:tb] + mlp[tb:])              # (tb, C) f32

        # mean(x * att, spatial) == att * mean(x, spatial): single pass over x.
        pooled = (stats[:tb] * att).astype(wct_ref.dtype)      # (tb, C)

        # Dropout(0.5): identity in eval mode.
        logits = jnp.dot(pooled, wct_ref[...], preferred_element_type=jnp.float32)
        out_ref[...] = (logits + bc_ref[...])[None].astype(out_ref.dtype)


def prepare_head_params(w1, w2, wc, bc, *, weight_dtype=jnp.bfloat16):
    """Transpose / zero-pad / downcast the PyTorch-layout weights.  Call ONCE,
    outside the per-step hot path.

    w1 : (C//r, C)  CBAM shared_mlp[0].weight  (no bias)
    w2 : (C, C//r)  CBAM shared_mlp[2].weight  (no bias)
    wc : (nc, C)    classifier.weight
    bc : (nc,)      classifier.bias
    """
    hid, C = w1.shape
    nc = wc.shape[0]
    hp = max(128, ((hid + 127) // 128) * 128)        # MLP hidden 224 -> 256
    ncp = max(128, ((nc + 127) // 128) * 128)        # lane-dense logits

    w1t = jnp.zeros((C, hp), weight_dtype).at[:, :hid].set(
        jnp.transpose(w1).astype(weight_dtype))
    w2t = jnp.zeros((hp, C), weight_dtype).at[:hid, :].set(
        jnp.transpose(w2).astype(weight_dtype))
    wct = jnp.zeros((C, ncp), weight_dtype).at[:, :nc].set(
        jnp.transpose(wc).astype(weight_dtype))
    bcp = jnp.zeros((1, ncp), jnp.float32).at[0, :nc].set(
        bc.astype(jnp.float32))
    return w1t, w2t, wct, bcp, nc


def _pick_batch_tile(B):
    # Prefer >= 2 steps on the "parallel" grid axis (dual-TensorCore on v7x).
    for tb in (8, 4, 2, 1):
        if B % tb == 0 and B // tb >= 2:
            return tb
    return B


def _pick_channel_chunk(C):
    # Largest 128-multiple divisor of C that still gives >= 2 chunks:
    # lane-aligned scratch stores, bounded per-step VMEM, pipelined x DMA,
    # while keeping per-step DMA large enough to amortize grid-step overhead.
    # C = 1792 -> 896 (2 chunks per batch tile).
    best = None
    t = 128
    while t <= C // 2:
        if C % t == 0:
            best = t
        t += 128
    return best if best is not None else C


def _vmem_limit_bytes(x_tile_bytes, w_bytes, scratch_bytes, f32_tmp_bytes):
    try:
        cap = int(pltpu.get_tpu_info().vmem_capacity_bytes)
    except Exception:
        cap = 64 << 20                     # conservative default: v7x per-TC VMEM
    need = (2 * x_tile_bytes               # double-buffered x stream
            + 2 * w_bytes                  # resident weights (+ 2nd buffer)
            + scratch_bytes
            + f32_tmp_bytes                # in-kernel f32 upcast temporaries
            + (8 << 20))                   # margin
    # Never request more than ~3/4 of the physical per-core VMEM.
    return int(min(max(need, 16 << 20), cap * 3 // 4))


def efficientnet_cbam_head(x_nchw, params):
    """CBAM -> AdaptiveAvgPool2d(1) -> Dropout(eval) -> Linear on top of the
    (B, C, H, W) feature map produced by base.features.

    x_nchw may be f32 or bf16 (a bf16 backbone output halves the dominant HBM
    stream; the kernel upcasts to f32 internally).  No host-side layout pass:
    the kernel streams the feature map in its native NCHW layout.
    """
    w1t, w2t, wct, bcp, num_classes = params
    B, C, H, W = x_nchw.shape
    hw = H * W
    ncp = wct.shape[1]

    x = x_nchw.reshape(B, C, hw)           # metadata-only collapse, no HBM pass

    tb = _pick_batch_tile(B)
    tc = _pick_channel_chunk(C)

    hw_pad = ((hw + 127) // 128) * 128
    x_tile_bytes = tb * tc * hw_pad * x.dtype.itemsize
    w_bytes = sum(a.size * a.dtype.itemsize for a in (w1t, w2t, wct, bcp))
    scratch_bytes = 2 * tb * C * 4
    vmem_bytes = _vmem_limit_bytes(x_tile_bytes, w_bytes, scratch_bytes,
                                   tb * tc * hw_pad * 4)

    out = pl.pallas_call(
        _cbam_head_kernel,
        out_shape=jax.ShapeDtypeStruct((B // tb, tb, ncp), jnp.float32),
        grid_spec=pltpu.PrefetchScalarGridSpec(
            num_scalar_prefetch=0,
            grid=(B // tb, C // tc),
            in_specs=[
                pl.BlockSpec((tb, tc, hw), lambda b, c: (b, c, 0)),   # streamed
                pl.BlockSpec(w1t.shape, lambda b, c: (0, 0)),         # resident
                pl.BlockSpec(w2t.shape, lambda b, c: (0, 0)),         # resident
                pl.BlockSpec(wct.shape, lambda b, c: (0, 0)),         # resident
                pl.BlockSpec(bcp.shape, lambda b, c: (0, 0)),         # resident
            ],
            out_specs=pl.BlockSpec((1, tb, ncp), lambda b, c: (b, 0, 0)),
            scratch_shapes=[pltpu.VMEM((2 * tb, C), jnp.float32)],
        ),
        compiler_params=pltpu.CompilerParams(
            dimension_semantics=("parallel", "arbitrary"),
            vmem_limit_bytes=vmem_bytes,
        ),
    )(x, w1t, w2t, wct, bcp)

    return out.reshape(B, ncp)[:, :num_classes]


def reference_forward(x_nchw, w1, w2, wc, bc):
    """Pure-JAX reference matching the PyTorch module semantics exactly."""
    avg = jnp.mean(x_nchw, axis=(2, 3))                        # (B, C)
    mx = jnp.max(x_nchw, axis=(2, 3))                          # (B, C)

    def mlp(v):
        return jnp.maximum(v @ w1.T, 0.0) @ w2.T

    att = jax.nn.sigmoid(mlp(avg) + mlp(mx))                   # (B, C)
    pooled = jnp.mean(x_nchw * att[:, :, None, None], axis=(2, 3))
    return pooled @ wc.T + bc


if __name__ == "__main__":
    # Shapes consistent with the module: CBAM/classifier channel = 1792
    # (hard-coded in EfficientNetCBAM), small batch and spatial extent.
    B, C, H, W = 2, 1792, 8, 8
    ratio, num_classes = 8, 2

    key = jax.random.PRNGKey(0)
    kx, k1, k2, k3 = jax.random.split(key, 4)

    x = jax.random.normal(kx, (B, C, H, W), jnp.float32)
    w1 = jax.random.normal(k1, (C // ratio, C), jnp.float32) * 0.02
    w2 = jax.random.normal(k2, (C, C // ratio), jnp.float32) * 0.02
    wc = jax.random.normal(k3, (num_classes, C), jnp.float32) * 0.02
    bc = jnp.zeros((num_classes,), jnp.float32)

    params = prepare_head_params(w1, w2, wc, bc)   # once, outside hot path
    ref = reference_forward(x, w1, w2, wc, bc)

    out = jax.block_until_ready(efficientnet_cbam_head(x, params))
    assert out.shape == (B, num_classes)
    # bf16 MXU operands / weights -> slightly looser than pure-f32 tolerance.
    assert jnp.allclose(out, ref, rtol=2e-2, atol=5e-3), (out, ref)

    # bf16 feature-map stream (halves HBM traffic on the dominant x read).
    out_bf16 = jax.block_until_ready(
        efficientnet_cbam_head(x.astype(jnp.bfloat16), params))
    assert jnp.allclose(out_bf16, ref, rtol=5e-2, atol=2e-2), (out_bf16, ref)

    print("KERNEL_OK")
</pallas_src>

<mosaic_0001>
module attributes {stable_mosaic.version = 11 : i64} {
  func.func @_cbam_head_kernel(%arg0: i32, %arg1: i32, %arg2: memref<1x896x64xf32, #tpu.memory_space<vmem>>, %arg3: memref<1792x256xbf16, #tpu.memory_space<vmem>>, %arg4: memref<256x1792xbf16, #tpu.memory_space<vmem>>, %arg5: memref<1792x128xbf16, #tpu.memory_space<vmem>>, %arg6: memref<1x128xf32, #tpu.memory_space<vmem>>, %arg7: memref<1x1x128xf32, #tpu.memory_space<vmem>>, %arg8: memref<2x1792xf32, #tpu.memory_space<vmem>>) attributes {dimension_semantics = [#tpu.dimension_semantics<parallel>, #tpu.dimension_semantics<arbitrary>], iteration_bounds = array<i64: 2, 2>, scalar_prefetch = 0 : i64, scratch_operands = 1 : i64, tpu.core_type = #tpu.core_type<tc>, window_params = [{transform_indices = @transform_0, window_bounds = array<i64: 1, 896, 64>}, {pipeline_mode = #tpu.pipeline_mode<synchronous>, transform_indices = @transform_1, window_bounds = array<i64: 1792, 256>}, {pipeline_mode = #tpu.pipeline_mode<synchronous>, transform_indices = @transform_2, window_bounds = array<i64: 256, 1792>}, {pipeline_mode = #tpu.pipeline_mode<synchronous>, transform_indices = @transform_3, window_bounds = array<i64: 1792, 128>}, {pipeline_mode = #tpu.pipeline_mode<synchronous>, transform_indices = @transform_4, window_bounds = array<i64: 1, 128>}, {transform_indices = @transform_5, window_bounds = array<i64: 1, 1, 128>}]} {
    %c0 = arith.constant 0 : index
    %c0_0 = arith.constant 0 : index
    %c0_1 = arith.constant 0 : index
    %0 = vector.load %arg2[%c0, %c0_0, %c0_1] : memref<1x896x64xf32, #tpu.memory_space<vmem>>, vector<1x896x64xf32>
    %c896_i32 = arith.constant 896 : i32
    %1 = arith.muli %arg1, %c896_i32 : i32
    %2 = tpu.assume_multiple %1, 128 : i32
    %cst = arith.constant dense<0.000000e+00> : vector<1x896xf32>
    %3 = vector.multi_reduction <add>, %0, %cst [2] : vector<1x896x64xf32> to vector<1x896xf32>
    %cst_2 = arith.constant 1.562500e-02 : f32
    %4 = vector.broadcast %cst_2 : f32 to vector<1x896xf32>
    %5 = arith.mulf %3, %4 : vector<1x896xf32>
    %c0_3 = arith.constant 0 : index
    %6 = arith.index_cast %2 : i32 to index
    %7 = vector.load %arg8[%c0_3, %6] : memref<2x1792xf32, #tpu.memory_space<vmem>>, vector<1x896xf32>
    tpu.vector_store %arg8[%c0_3, %6], %5 {strides = array<i32>} : memref<2x1792xf32, #tpu.memory_space<vmem>>, vector<1x896xf32>,
    %cst_4 = arith.constant dense<0xFF800000> : vector<1x896xf32>
    %8 = vector.multi_reduction <maximumf>, %0, %cst_4 [2] : vector<1x896x64xf32> to vector<1x896xf32>
    %c1 = arith.constant 1 : index
    %9 = arith.index_cast %2 : i32 to index
    %10 = vector.load %arg8[%c1, %9] : memref<2x1792xf32, #tpu.memory_space<vmem>>, vector<1x896xf32>
    tpu.vector_store %arg8[%c1, %9], %8 {strides = array<i32>} : memref<2x1792xf32, #tpu.memory_space<vmem>>, vector<1x896xf32>,
    %c1_i32 = arith.constant 1 : i32
    %11 = arith.cmpi eq, %arg1, %c1_i32 : i32
    %12 = arith.extui %11 : i1 to i32
    %c0_i32 = arith.constant 0 : i32
    %13 = arith.cmpi ne, %12, %c0_i32 : i32
    scf.if %13 {
      %c0_5 = arith.constant 0 : index
      %c0_6 = arith.constant 0 : index
      %14 = vector.load %arg8[%c0_5, %c0_6] : memref<2x1792xf32, #tpu.memory_space<vmem>>, vector<2x1792xf32>
      %15 = arith.truncf %14 : vector<2x1792xf32> to vector<2x1792xbf16>
      %c0_7 = arith.constant 0 : index
      %c0_8 = arith.constant 0 : index
      %16 = vector.load %arg3[%c0_7, %c0_8] : memref<1792x256xbf16, #tpu.memory_space<vmem>>, vector<1792x256xbf16>
      %cst_9 = arith.constant dense<0.000000e+00> : vector<2x256xf32>
      %17 = tpu.matmul %15, %16, %cst_9 {dimension_numbers = #tpu.dot_dimension_numbers<[1], [0], [0], [1], [0, 0, 1, 1], [], []>} : vector<2x1792xbf16>, vector<1792x256xbf16>, vector<2x256xf32> -> vector<2x256xf32>
      %cst_10 = arith.constant 0.000000e+00 : f32
      %18 = vector.broadcast %cst_10 : f32 to vector<2x256xf32>
      %19 = arith.maximumf %17, %18 : vector<2x256xf32>
      %20 = arith.truncf %19 : vector<2x256xf32> to vector<2x256xbf16>
      %c0_11 = arith.constant 0 : index
      %c0_12 = arith.constant 0 : index
      %21 = vector.load %arg4[%c0_11, %c0_12] : memref<256x1792xbf16, #tpu.memory_space<vmem>>, vector<256x1792xbf16>
      %cst_13 = arith.constant dense<0.000000e+00> : vector<2x1792xf32>
      %22 = tpu.matmul %20, %21, %cst_13 {dimension_numbers = #tpu.dot_dimension_numbers<[1], [0], [0], [1], [0, 0, 1, 1], [], []>} : vector<2x256xbf16>, vector<256x1792xbf16>, vector<2x1792xf32> -> vector<2x1792xf32>
      %23 = vector.extract_strided_slice %22 {offsets = [0, 0], sizes = [1, 1792], strides = [1, 1]} : vector<2x1792xf32> to vector<1x1792xf32>
      %24 = vector.extract_strided_slice %22 {offsets = [1, 0], sizes = [1, 1792], strides = [1, 1]} : vector<2x1792xf32> to vector<1x1792xf32>
      %25 = arith.addf %23, %24 : vector<1x1792xf32>
      %26 = arith.negf %25 : vector<1x1792xf32>
      %27 = math.exp %26 : vector<1x1792xf32>
      %cst_14 = arith.constant 1.000000e+00 : f32
      %28 = vector.broadcast %cst_14 : f32 to vector<1x1792xf32>
      %29 = arith.addf %28, %27 : vector<1x1792xf32>
      %30 = arith.divf %28, %29 : vector<1x1792xf32>
      %31 = vector.extract_strided_slice %14 {offsets = [0, 0], sizes = [1, 1792], strides = [1, 1]} : vector<2x1792xf32> to vector<1x1792xf32>
      %32 = arith.mulf %31, %30 : vector<1x1792xf32>
      %33 = arith.truncf %32 : vector<1x1792xf32> to vector<1x1792xbf16>
      %c0_15 = arith.constant 0 : index
      %c0_16 = arith.constant 0 : index
      %34 = vector.load %arg5[%c0_15, %c0_16] : memref<1792x128xbf16, #tpu.memory_space<vmem>>, vector<1792x128xbf16>
      %cst_17 = arith.constant dense<0.000000e+00> : vector<1x128xf32>
      %35 = tpu.matmul %33, %34, %cst_17 {dimension_numbers = #tpu.dot_dimension_numbers<[1], [0], [0], [1], [0, 0, 1, 1], [], []>} : vector<1x1792xbf16>, vector<1792x128xbf16>, vector<1x128xf32> -> vector<1x128xf32>
      %c0_18 = arith.constant 0 : index
      %c0_19 = arith.constant 0 : index
      %36 = vector.load %arg6[%c0_18, %c0_19] : memref<1x128xf32, #tpu.memory_space<vmem>>, vector<1x128xf32>
      %37 = arith.addf %35, %36 : vector<1x128xf32>
      %38 = vector.shape_cast %37 : vector<1x128xf32> to vector<1x1x128xf32>
      %c0_20 = arith.constant 0 : index
      %c0_21 = arith.constant 0 : index
      %c0_22 = arith.constant 0 : index
      %39 = vector.load %arg7[%c0_20, %c0_21, %c0_22] : memref<1x1x128xf32, #tpu.memory_space<vmem>>, vector<1x1x128xf32>
      tpu.vector_store %arg7[%c0_20, %c0_21, %c0_22], %38 {strides = array<i32>} : memref<1x1x128xf32, #tpu.memory_space<vmem>>, vector<1x1x128xf32>,
    } else {
    }
    return
  }
  func.func @transform_0(%arg0: i32, %arg1: i32) -> (i32, i32, i32) {
    %c0_i32 = arith.constant 0 : i32
    %c0_i32_0 = arith.constant 0 : i32
    return %arg0, %arg1, %c0_i32 : i32, i32, i32
  }
  func.func @transform_1(%arg0: i32, %arg1: i32) -> (i32, i32) {
    %c0_i32 = arith.constant 0 : i32
    %c0_i32_0 = arith.constant 0 : i32
    %c0_i32_1 = arith.constant 0 : i32
    return %c0_i32, %c0_i32_0 : i32, i32
  }
  func.func @transform_2(%arg0: i32, %arg1: i32) -> (i32, i32) {
    %c0_i32 = arith.constant 0 : i32
    %c0_i32_0 = arith.constant 0 : i32
    %c0_i32_1 = arith.constant 0 : i32
    return %c0_i32, %c0_i32_0 : i32, i32
  }
  func.func @transform_3(%arg0: i32, %arg1: i32) -> (i32, i32) {
    %c0_i32 = arith.constant 0 : i32
    %c0_i32_0 = arith.constant 0 : i32
    %c0_i32_1 = arith.constant 0 : i32
    return %c0_i32, %c0_i32_0 : i32, i32
  }
  func.func @transform_4(%arg0: i32, %arg1: i32) -> (i32, i32) {
    %c0_i32 = arith.constant 0 : i32
    %c0_i32_0 = arith.constant 0 : i32
    %c0_i32_1 = arith.constant 0 : i32
    return %c0_i32, %c0_i32_0 : i32, i32
  }
  func.func @transform_5(%arg0: i32, %arg1: i32) -> (i32, i32, i32) {
    %c0_i32 = arith.constant 0 : i32
    %c0_i32_0 = arith.constant 0 : i32
    %c0_i32_1 = arith.constant 0 : i32
    return %arg0, %c0_i32, %c0_i32_0 : i32, i32, i32
  }
}

</mosaic_0001>

<llo_original>
// kernel: tpu_custom_call.1
$region0: #{tpu_custom_call.1}
  #allocation0 [shape = 'u32[]', space=smem, size = 0x4, offset = 0x4, fixed_abs, tag = 'smem constant byte address 0x4 - core index']
  #allocation1 [shape = 'u32[72,128]{1,0:T(1,128)}', space=vmem, size = 0x9000, scoped, tag = 'internal scratch']
  #allocation2 [shape = 'f32[2,1792]{1,0:T(2,128)}', space=vmem, size = 0x3800, scoped, tag = 'scratch operand']
  %s0 = inlined_call_operand.vmem [shape: f32[2,1792,64], index: 0, kind: input, shape index: {}]
  %s1 = inlined_call_operand.vmem [shape: bf16[1792,256], index: 1, kind: input, shape index: {}]
  %s2 = inlined_call_operand.vmem [shape: bf16[256,1792], index: 2, kind: input, shape index: {}]
  %s3 = inlined_call_operand.vmem [shape: bf16[1792,128], index: 3, kind: input, shape index: {}]
  %s4 = inlined_call_operand.vmem [shape: f32[1,128], index: 4, kind: input, shape index: {}]
  %s5 = inlined_call_operand.hbm [shape: f32[2,1,128], index: 5, kind: output, shape index: {}]
  %s6 = sld [smem:[#allocation0]]
  $region57: #{tpu_custom_call.1} parent=0
    _
  %s8 = ssub.s32 1, %s6
  %s9 = scalar_select 0, %s8, %s6
  $region1: #{tpu_custom_call.1} parent=0
    #allocation3 [shape = 'u8[1024]{0}', space=vmem, size = 0x400, scoped, tag = 'output window, operand 0']
    #allocation4 [shape = 's32[2]{0}', space=sflag, size = 0x8, scoped, tag = 'scoped memory for tpu_custom_call.1']
    %10 = vsyncpa [#allocation4], 0
    %s11 = scalar_lea.sflag [#allocation4], 1
    %12 = vsyncpa %s11, 0
    loop: start=0, step=1, limit=6
    $region2: #{tpu_custom_call.1} parent=1 // loop_pre_header
      _
    $region3: #{tpu_custom_call.1} parent=1 // loop_header
      %s14 = sphi 0, %s18
      %p15 = scmp.ge.s32.totalorder %s14, 6
      %s21 = sphi 0, %s33
      %s22 = sphi 0, %s29
      %s23 = sphi 0, %s21
      %s24 = sphi 0, %s22
      %s25 = sphi 0, %s23
      %s26 = sphi 0, %s24
      %s38 = sphi 0, %s40
      %s41 = sphi 0, %s38
      %s42 = sphi 0, %s41
      %s58 = sphi 0, %s42
      %s62 = sphi 0, %s62
      %s64 = sphi 0, %s62
      %s65 = sphi 0, %s64
      %s79 = sphi 0, %s65
      %s83 = sphi 0, %s83
      %s85 = sphi 0, %s83
      %s86 = sphi 0, %s85
      %s100 = sphi 0, %s86
      %s104 = sphi 0, %s104
      %s106 = sphi 0, %s104
      %s107 = sphi 0, %s106
      %s121 = sphi 0, %s107
      %s125 = sphi 0, %s125
      %s127 = sphi 0, %s125
      %s128 = sphi 0, %s127
      %s142 = sphi 0, %s128
      %s148 = sphi 0, %s150
      %s151 = sphi 0, %s148
      %s152 = sphi 0, %s151
      %s168 = sphi 0, %s152
    $region4: #{tpu_custom_call.1} parent=1 // loop_header_branch
      %17 = sbr.rel (%p15) target = $region8
    $region5: #{tpu_custom_call.1} parent=1 // loop_body
      %s19 = ssub.s32 %s14, 1
      %s20 = ssub.s32 %s14, 2
      %s27 = sadd.s32 1, %s22
      %p28 = scmp.ge.s32.totalorder %s27, 2
      %s29 = scalar_select %p28, 0, %s27
      %s30 = sadd.s32 1, %s21
      %s31 = scalar_select %p28, %s30, %s21
      %p32 = scmp.ge.s32.totalorder %s31, 2
      %s33 = scalar_select %p32, 0, %s31
      %s34 = ssub.s32 %s21, %s33
      %s35 = ssub.s32 %s22, %s29
      %s36 = sor.u32 %s34, %s35
      %p37 = scmp.eq.s32.totalorder %s36, 0
      %s39 = sadd.s32 %s38, 1
      %s40 = scalar_select %p37, %s38, %s39
      %p43 = pneg %p37
      %p44 = scmp.eq.s32.totalorder %s14, 3
      %p45 = por %p43, %p44
      %p46 = scmp.ne.s32.totalorder %s38, %s41
      %p47 = scmp.eq.s32.totalorder %s14, 0
      %p48 = por %p46, %p47
      %p49 = scmp.ne.s32.totalorder %s38, %s41
      %p50 = scmp.eq.s32.totalorder %s19, 3
      %p51 = por %p49, %p50
      %p52 = scmp.ne.s32.totalorder %s41, %s42
      %p53 = scmp.eq.s32.totalorder %s19, 0
      %p54 = por %p52, %p53
      %p55 = scmp.ne.s32.totalorder %s41, %s42
      %p56 = scmp.eq.s32.totalorder %s20, 3
      %p57 = por %p55, %p56
      %p59 = scmp.ne.s32.totalorder %s42, %s58
      %p60 = scmp.eq.s32.totalorder %s20, 0
      %p61 = por %p59, %p60
      %s63 = sadd.s32 %s62, 1
      %p66 = scmp.eq.s32.totalorder %s14, 3
      %p67 = scmp.ne.s32.totalorder %s62, %s64
      %p68 = scmp.eq.s32.totalorder %s14, 0
      %p69 = por %p67, %p68
      %p70 = scmp.ne.s32.totalorder %s62, %s64
      %p71 = scmp.eq.s32.totalorder %s19, 3
      %p72 = por %p70, %p71
      %p73 = scmp.ne.s32.totalorder %s64, %s65
      %p74 = scmp.eq.s32.totalorder %s19, 0
      %p75 = por %p73, %p74
      %p76 = scmp.ne.s32.totalorder %s64, %s65
      %p77 = scmp.eq.s32.totalorder %s20, 3
      %p78 = por %p76, %p77
      %p80 = scmp.ne.s32.totalorder %s65, %s79
      %p81 = scmp.eq.s32.totalorder %s20, 0
      %p82 = por %p80, %p81
      %s84 = sadd.s32 %s83, 1
      %p87 = scmp.eq.s32.totalorder %s14, 3
      %p88 = scmp.ne.s32.totalorder %s83, %s85
      %p89 = scmp.eq.s32.totalorder %s14, 0
      %p90 = por %p88, %p89
      %p91 = scmp.ne.s32.totalorder %s83, %s85
      %p92 = scmp.eq.s32.totalorder %s19, 3
      %p93 = por %p91, %p92
      %p94 = scmp.ne.s32.totalorder %s85, %s86
      %p95 = scmp.eq.s32.totalorder %s19, 0
      %p96 = por %p94, %p95
      %p97 = scmp.ne.s32.totalorder %s85, %s86
      %p98 = scmp.eq.s32.totalorder %s20, 3
      %p99 = por %p97, %p98
      %p101 = scmp.ne.s32.totalorder %s86, %s100
      %p102 = scmp.eq.s32.totalorder %s20, 0
      %p103 = por %p101, %p102
      %s105 = sadd.s32 %s104, 1
      %p108 = scmp.eq.s32.totalorder %s14, 3
      %p109 = scmp.ne.s32.totalorder %s104, %s106
      %p110 = scmp.eq.s32.totalorder %s14, 0
      %p111 = por %p109, %p110
      %p112 = scmp.ne.s32.totalorder %s104, %s106
      %p113 = scmp.eq.s32.totalorder %s19, 3
      %p114 = por %p112, %p113
      %p115 = scmp.ne.s32.totalorder %s106, %s107
      %p116 = scmp.eq.s32.totalorder %s19, 0
      %p117 = por %p115, %p116
      %p118 = scmp.ne.s32.totalorder %s106, %s107
      %p119 = scmp.eq.s32.totalorder %s20, 3
      %p120 = por %p118, %p119
      %p122 = scmp.ne.s32.totalorder %s107, %s121
      %p123 = scmp.eq.s32.totalorder %s20, 0
      %p124 = por %p122, %p123
      %s126 = sadd.s32 %s125, 1
      %p129 = scmp.eq.s32.totalorder %s14, 3
      %p130 = scmp.ne.s32.totalorder %s125, %s127
      %p131 = scmp.eq.s32.totalorder %s14, 0
      %p132 = por %p130, %p131
      %p133 = scmp.ne.s32.totalorder %s125, %s127
      %p134 = scmp.eq.s32.totalorder %s19, 3
      %p135 = por %p133, %p134
      %p136 = scmp.ne.s32.totalorder %s127, %s128
      %p137 = scmp.eq.s32.totalorder %s19, 0
      %p138 = por %p136, %p137
      %p139 = scmp.ne.s32.totalorder %s127, %s128
      %p140 = scmp.eq.s32.totalorder %s20, 3
      %p141 = por %p139, %p140
      %p143 = scmp.ne.s32.totalorder %s128, %s142
      %p144 = scmp.eq.s32.totalorder %s20, 0
      %p145 = por %p143, %p144
      %s146 = ssub.s32 %s21, %s33
      %p147 = scmp.eq.s32.totalorder %s146, 0
      %s149 = sadd.s32 %s148, 1
      %s150 = scalar_select %p147, %s148, %s149
      %p153 = pneg %p147
      %p154 = scmp.eq.s32.totalorder %s14, 3
      %p155 = por %p153, %p154
      %p156 = scmp.ne.s32.totalorder %s148, %s151
      %p157 = scmp.eq.s32.totalorder %s14, 0
      %p158 = por %p156, %p157
      %p159 = scmp.ne.s32.totalorder %s148, %s151
      %p160 = scmp.eq.s32.totalorder %s19, 3
      %p161 = por %p159, %p160
      %p162 = scmp.ne.s32.totalorder %s151, %s152
      %p163 = scmp.eq.s32.totalorder %s19, 0
      %p164 = por %p162, %p163
      %p165 = scmp.ne.s32.totalorder %s151, %s152
      %p166 = scmp.eq.s32.totalorder %s20, 3
      %p167 = por %p165, %p166
      %p169 = scmp.ne.s32.totalorder %s152, %s168
      %p170 = scmp.eq.s32.totalorder %s20, 0
      %p171 = por %p169, %p170
      %p172 = scmp.le.s32.totalorder 1, %s14
      %p173 = scmp.lt.s32.totalorder %s14, 5
      %p174 = pnand %p172, %p173
      %p175 = pneg %p174
      // Predicated region
      $region9: #{tpu_custom_call.1} parent=5 // pred_check
        _
      $region10: #{tpu_custom_call.1} parent=5 // pred_check_branch
        %177 = sbr.rel (%p174) target = $region12
      $region11: #{tpu_custom_call.1} parent=5 // pred_region
        %s178 = ssub.s32 %s14, 1
        // Predicated region
        $region13: #{tpu_custom_call.1} parent=11 // pred_check
          %p179 = pneg %p75
        $region14: #{tpu_custom_call.1} parent=11 // pred_check_branch
          %181 = sbr.rel (%p179) target = $region16
        $region15: #{tpu_custom_call.1} parent=11 // pred_region
          _
        $region16: #{tpu_custom_call.1} parent=11 // pred_fallthru
          _
        // Predicated region
        $region17: #{tpu_custom_call.1} parent=11 // pred_check
          %p182 = pneg %p96
        $region18: #{tpu_custom_call.1} parent=11 // pred_check_branch
          %184 = sbr.rel (%p182) target = $region20
        $region19: #{tpu_custom_call.1} parent=11 // pred_region
          _
        $region20: #{tpu_custom_call.1} parent=11 // pred_fallthru
          _
        // Predicated region
        $region21: #{tpu_custom_call.1} parent=11 // pred_check
          %p185 = pneg %p117
        $region22: #{tpu_custom_call.1} parent=11 // pred_check_branch
          %187 = sbr.rel (%p185) target = $region24
        $region23: #{tpu_custom_call.1} parent=11 // pred_region
          _
        $region24: #{tpu_custom_call.1} parent=11 // pred_fallthru
          _
        // Predicated region
        $region25: #{tpu_custom_call.1} parent=11 // pred_check
          %p188 = pneg %p138
        $region26: #{tpu_custom_call.1} parent=11 // pred_check_branch
          %190 = sbr.rel (%p188) target = $region28
        $region27: #{tpu_custom_call.1} parent=11 // pred_region
          _
        $region28: #{tpu_custom_call.1} parent=11 // pred_fallthru
          _
      $region12: #{tpu_custom_call.1} parent=5 // pred_fallthru
        _
      %p191 = scmp.lt.s32.totalorder %s14, 4
      // Predicated region
      $region29: #{tpu_custom_call.1} parent=5 // pred_check
        %p192 = pneg %p191
      $region30: #{tpu_custom_call.1} parent=5 // pred_check_branch
        %194 = sbr.rel (%p192) target = $region32
      $region31: #{tpu_custom_call.1} parent=5 // pred_region
        // Predicated region
        $region33: #{tpu_custom_call.1} parent=31 // pred_check
          %p195 = pneg %p48
        $region34: #{tpu_custom_call.1} parent=31 // pred_check_branch
          %197 = sbr.rel (%p195) target = $region36
        $region35: #{tpu_custom_call.1} parent=31 // pred_region
          %s198 = smul.u32 112, %s22
          %p199 = scmp.lt.s32.totalorder %s21, 1
          %s200 = scalar_select %p199, %s21, 1
          %p201 = scmp.lt.s32.totalorder %s198, 223
          %s202 = scalar_select %p201, %s198, 223
          %s203 = smul.addr %s200, 224
          %s204 = sadd.s32 %s202, %s203
          %s205 = smul.addr %s204, 8
          %s206 = scalar_lea.vmem %s0, %s205
          %s207 = smul.u32 112, %s22
        $region36: #{tpu_custom_call.1} parent=31 // pred_fallthru
          _
      $region32: #{tpu_custom_call.1} parent=5 // pred_fallthru
        _
      %p208 = scmp.le.s32.totalorder 1, %s14
      %p209 = scmp.lt.s32.totalorder %s14, 5
      %p210 = pnand %p208, %p209
      %p211 = pneg %p210
      // Predicated region
      $region37: #{tpu_custom_call.1} parent=5 // pred_check
        _
      $region38: #{tpu_custom_call.1} parent=5 // pred_check_branch
        %213 = sbr.rel (%p210) target = $region40
      $region39: #{tpu_custom_call.1} parent=5 // pred_region
        %s214 = ssub.s32 %s14, 1
        %s215 = smul.u32 112, %s24
        %p216 = scmp.lt.s32.totalorder %s23, 1
        %s217 = scalar_select %p216, %s23, 1
        %p218 = scmp.lt.s32.totalorder %s215, 223
        %s219 = scalar_select %p218, %s215, 223
        %s220 = smul.addr %s217, 224
        %s221 = sadd.s32 %s219, %s220
        %s222 = smul.addr %s221, 8
        %s223 = scalar_lea.vmem %s0, %s222
        %p224 = pneg %p54
        %p225 = pneg %p51
        %p226 = pneg %p75
        %p227 = pneg %p72
        %p228 = pneg %p96
        %p229 = pneg %p93
        %p230 = pneg %p117
        %p231 = pneg %p114
        %p232 = pneg %p138
        %p233 = pneg %p135
        %p234 = pneg %p164
        %p235 = pneg %p161
        %s236 = sand.u32 %s151, 1
        %s237 = scalar_lea.sflag [#allocation4], %s236
        %s238 = sand.u32 %s151, 1
        %s239 = scalar_lea.vmem [#allocation3], %s238
        %s240 = smul.u32 112, %s24
        %p241 = scmp.lt.s32.totalorder %s23, 1
        %s242 = scalar_select %p241, %s23, 1
        %p243 = scmp.lt.s32.totalorder %s240, 223
        %s244 = scalar_select %p243, %s240, 223
        %s245 = smul.addr %s242, 224
        %s246 = sadd.s32 %s244, %s245
        %s247 = smul.addr %s246, 8
        %s248 = scalar_lea.vmem %s0, %s247
        %s249 = smul.u32 112, %s24
        %v250 = vld [vmem:[%s248] sm:$0xff]
        %v251 = vld [vmem:[%s248 + $0x8] sm:$0xff]
        %v252 = vld [vmem:[%s248 + $0x10] sm:$0xff]
        %v253 = vld [vmem:[%s248 + $0x18] sm:$0xff]
        %v254 = vld [vmem:[%s248 + $0x20] sm:$0xff]
        %v255 = vld [vmem:[%s248 + $0x28] sm:$0xff]
        %v256 = vld [vmem:[%s248 + $0x30] sm:$0xff]
        %v257 = vld [vmem:[%s248 + $0x38] sm:$0xff]
        %v258 = vld [vmem:[%s248 + $0x40] sm:$0xff]
        %v259 = vld [vmem:[%s248 + $0x48] sm:$0xff]
        %v260 = vld [vmem:[%s248 + $0x50] sm:$0xff]
        %v261 = vld [vmem:[%s248 + $0x58] sm:$0xff]
        %v262 = vld [vmem:[%s248 + $0x60] sm:$0xff]
        %v263 = vld [vmem:[%s248 + $0x68] sm:$0xff]
        %v264 = vld [vmem:[%s248 + $0x70] sm:$0xff]
        %v265 = vld [vmem:[%s248 + $0x78] sm:$0xff]
        %v266 = vld [vmem:[%s248 + $0x80] sm:$0xff]
        %v267 = vld [vmem:[%s248 + $0x88] sm:$0xff]
        %v268 = vld [vmem:[%s248 + $0x90] sm:$0xff]
        %v269 = vld [vmem:[%s248 + $0x98] sm:$0xff]
        %v270 = vld [vmem:[%s248 + $0xa0] sm:$0xff]
        %v271 = vld [vmem:[%s248 + $0xa8] sm:$0xff]
        %v272 = vld [vmem:[%s248 + $0xb0] sm:$0xff]
        %v273 = vld [vmem:[%s248 + $0xb8] sm:$0xff]
        %v274 = vld [vmem:[%s248 + $0xc0] sm:$0xff]
        %v275 = vld [vmem:[%s248 + $0xc8] sm:$0xff]
        %v276 = vld [vmem:[%s248 + $0xd0] sm:$0xff]
        %v277 = vld [vmem:[%s248 + $0xd8] sm:$0xff]
        %v278 = vld [vmem:[%s248 + $0xe0] sm:$0xff]
        %v279 = vld [vmem:[%s248 + $0xe8] sm:$0xff]
        %v280 = vld [vmem:[%s248 + $0xf0] sm:$0xff]
        %v281 = vld [vmem:[%s248 + $0xf8] sm:$0xff]
        %v282 = vld [vmem:[%s248 + $0x100] sm:$0xff]
        %v283 = vld [vmem:[%s248 + $0x108] sm:$0xff]
        %v284 = vld [vmem:[%s248 + $0x110] sm:$0xff]
        %v285 = vld [vmem:[%s248 + $0x118] sm:$0xff]
        %v286 = vld [vmem:[%s248 + $0x120] sm:$0xff]
        %v287 = vld [vmem:[%s248 + $0x128] sm:$0xff]
        %v288 = vld [vmem:[%s248 + $0x130] sm:$0xff]
        %v289 = vld [vmem:[%s248 + $0x138] sm:$0xff]
        %v290 = vld [vmem:[%s248 + $0x140] sm:$0xff]
        %v291 = vld [vmem:[%s248 + $0x148] sm:$0xff]
        %v292 = vld [vmem:[%s248 + $0x150] sm:$0xff]
        %v293 = vld [vmem:[%s248 + $0x158] sm:$0xff]
        %v294 = vld [vmem:[%s248 + $0x160] sm:$0xff]
        %v295 = vld [vmem:[%s248 + $0x168] sm:$0xff]
        %v296 = vld [vmem:[%s248 + $0x170] sm:$0xff]
        %v297 = vld [vmem:[%s248 + $0x178] sm:$0xff]
        %v298 = vld [vmem:[%s248 + $0x180] sm:$0xff]
        %v299 = vld [vmem:[%s248 + $0x188] sm:$0xff]
        %v300 = vld [vmem:[%s248 + $0x190] sm:$0xff]
        %v301 = vld [vmem:[%s248 + $0x198] sm:$0xff]
        %v302 = vld [vmem:[%s248 + $0x1a0] sm:$0xff]
        %v303 = vld [vmem:[%s248 + $0x1a8] sm:$0xff]
        %v304 = vld [vmem:[%s248 + $0x1b0] sm:$0xff]
        %v305 = vld [vmem:[%s248 + $0x1b8] sm:$0xff]
        %v306 = vld [vmem:[%s248 + $0x1c0] sm:$0xff]
        %v307 = vld [vmem:[%s248 + $0x1c8] sm:$0xff]
        %v308 = vld [vmem:[%s248 + $0x1d0] sm:$0xff]
        %v309 = vld [vmem:[%s248 + $0x1d8] sm:$0xff]
        %v310 = vld [vmem:[%s248 + $0x1e0] sm:$0xff]
        %v311 = vld [vmem:[%s248 + $0x1e8] sm:$0xff]
        %v312 = vld [vmem:[%s248 + $0x1f0] sm:$0xff]
        %v313 = vld [vmem:[%s248 + $0x1f8] sm:$0xff]
        %v314 = vld [vmem:[%s248 + $0x200] sm:$0xff]
        %v315 = vld [vmem:[%s248 + $0x208] sm:$0xff]
        %v316 = vld [vmem:[%s248 + $0x210] sm:$0xff]
        %v317 = vld [vmem:[%s248 + $0x218] sm:$0xff]
        %v318 = vld [vmem:[%s248 + $0x220] sm:$0xff]
        %v319 = vld [vmem:[%s248 + $0x228] sm:$0xff]
        %v320 = vld [vmem:[%s248 + $0x230] sm:$0xff]
        %v321 = vld [vmem:[%s248 + $0x238] sm:$0xff]
        %v322 = vld [vmem:[%s248 + $0x240] sm:$0xff]
        %v323 = vld [vmem:[%s248 + $0x248] sm:$0xff]
        %v324 = vld [vmem:[%s248 + $0x250] sm:$0xff]
        %v325 = vld [vmem:[%s248 + $0x258] sm:$0xff]
        %v326 = vld [vmem:[%s248 + $0x260] sm:$0xff]
        %v327 = vld [vmem:[%s248 + $0x268] sm:$0xff]
        %v328 = vld [vmem:[%s248 + $0x270] sm:$0xff]
        %v329 = vld [vmem:[%s248 + $0x278] sm:$0xff]
        %v330 = vld [vmem:[%s248 + $0x280] sm:$0xff]
        %v331 = vld [vmem:[%s248 + $0x288] sm:$0xff]
        %v332 = vld [vmem:[%s248 + $0x290] sm:$0xff]
        %v333 = vld [vmem:[%s248 + $0x298] sm:$0xff]
        %v334 = vld [vmem:[%s248 + $0x2a0] sm:$0xff]
        %v335 = vld [vmem:[%s248 + $0x2a8] sm:$0xff]
        %v336 = vld [vmem:[%s248 + $0x2b0] sm:$0xff]
        %v337 = vld [vmem:[%s248 + $0x2b8] sm:$0xff]
        %v338 = vld [vmem:[%s248 + $0x2c0] sm:$0xff]
        %v339 = vld [vmem:[%s248 + $0x2c8] sm:$0xff]
        %v340 = vld [vmem:[%s248 + $0x2d0] sm:$0xff]
        %v341 = vld [vmem:[%s248 + $0x2d8] sm:$0xff]
        %v342 = vld [vmem:[%s248 + $0x2e0] sm:$0xff]
        %v343 = vld [vmem:[%s248 + $0x2e8] sm:$0xff]
        %v344 = vld [vmem:[%s248 + $0x2f0] sm:$0xff]
        %v345 = vld [vmem:[%s248 + $0x2f8] sm:$0xff]
        %v346 = vld [vmem:[%s248 + $0x300] sm:$0xff]
        %v347 = vld [vmem:[%s248 + $0x308] sm:$0xff]
        %v348 = vld [vmem:[%s248 + $0x310] sm:$0xff]
        %v349 = vld [vmem:[%s248 + $0x318] sm:$0xff]
        %v350 = vld [vmem:[%s248 + $0x320] sm:$0xff]
        %v351 = vld [vmem:[%s248 + $0x328] sm:$0xff]
        %v352 = vld [vmem:[%s248 + $0x330] sm:$0xff]
        %v353 = vld [vmem:[%s248 + $0x338] sm:$0xff]
        %v354 = vld [vmem:[%s248 + $0x340] sm:$0xff]
        %v355 = vld [vmem:[%s248 + $0x348] sm:$0xff]
        %v356 = vld [vmem:[%s248 + $0x350] sm:$0xff]
        %v357 = vld [vmem:[%s248 + $0x358] sm:$0xff]
        %v358 = vld [vmem:[%s248 + $0x360] sm:$0xff]
        %v359 = vld [vmem:[%s248 + $0x368] sm:$0xff]
        %v360 = vld [vmem:[%s248 + $0x370] sm:$0xff]
        %v361 = vld [vmem:[%s248 + $0x378] sm:$0xff]
        %s362 = smul.u32 %s24, 896
        %vm363 = vcmask 523264
        %v364 = vsel %vm363, %v250, 0.0
        %365 = vadd.xlane.f32.xlu0 %v364
        %v366 = vpop.xlane.xlu0 %365
        %v367 = vsel %vm363, %v251, 0.0
        %368 = vadd.xlane.f32.xlu0 %v367
        %v369 = vpop.xlane.xlu0 %368
        %v370 = vsel %vm363, %v252, 0.0
        %371 = vadd.xlane.f32.xlu0 %v370
        %v372 = vpop.xlane.xlu0 %371
        %v373 = vsel %vm363, %v253, 0.0
        %374 = vadd.xlane.f32.xlu0 %v373
        %v375 = vpop.xlane.xlu0 %374
        %v376 = vsel %vm363, %v254, 0.0
        %377 = vadd.xlane.f32.xlu0 %v376
        %v378 = vpop.xlane.xlu0 %377
        %v379 = vsel %vm363, %v255, 0.0
        %380 = vadd.xlane.f32.xlu0 %v379
        %v381 = vpop.xlane.xlu0 %380
        %v382 = vsel %vm363, %v256, 0.0
        %383 = vadd.xlane.f32.xlu0 %v382
        %v384 = vpop.xlane.xlu0 %383
        %v385 = vsel %vm363, %v257, 0.0
        %386 = vadd.xlane.f32.xlu0 %v385
        %v387 = vpop.xlane.xlu0 %386
        %v388 = vsel %vm363, %v258, 0.0
        %389 = vadd.xlane.f32.xlu0 %v388
        %v390 = vpop.xlane.xlu0 %389
        %v391 = vsel %vm363, %v259, 0.0
        %392 = vadd.xlane.f32.xlu0 %v391
        %v393 = vpop.xlane.xlu0 %392
        %v394 = vsel %vm363, %v260, 0.0
        %395 = vadd.xlane.f32.xlu0 %v394
        %v396 = vpop.xlane.xlu0 %395
        %v397 = vsel %vm363, %v261, 0.0
        %398 = vadd.xlane.f32.xlu0 %v397
        %v399 = vpop.xlane.xlu0 %398
        %v400 = vsel %vm363, %v262, 0.0
        %401 = vadd.xlane.f32.xlu0 %v400
        %v402 = vpop.xlane.xlu0 %401
        %v403 = vsel %vm363, %v263, 0.0
        %404 = vadd.xlane.f32.xlu0 %v403
        %v405 = vpop.xlane.xlu0 %404
        %v406 = vsel %vm363, %v264, 0.0
        %407 = vadd.xlane.f32.xlu0 %v406
        %v408 = vpop.xlane.xlu0 %407
        %v409 = vsel %vm363, %v265, 0.0
        %410 = vadd.xlane.f32.xlu0 %v409
        %v411 = vpop.xlane.xlu0 %410
        %v412 = vsel %vm363, %v266, 0.0
        %413 = vadd.xlane.f32.xlu0 %v412
        %v414 = vpop.xlane.xlu0 %413
        %v415 = vsel %vm363, %v267, 0.0
        %416 = vadd.xlane.f32.xlu0 %v415
        %v417 = vpop.xlane.xlu0 %416
        %v418 = vsel %vm363, %v268, 0.0
        %419 = vadd.xlane.f32.xlu0 %v418
        %v420 = vpop.xlane.xlu0 %419
        %v421 = vsel %vm363, %v269, 0.0
        %422 = vadd.xlane.f32.xlu0 %v421
        %v423 = vpop.xlane.xlu0 %422
        %v424 = vsel %vm363, %v270, 0.0
        %425 = vadd.xlane.f32.xlu0 %v424
        %v426 = vpop.xlane.xlu0 %425
        %v427 = vsel %vm363, %v271, 0.0
        %428 = vadd.xlane.f32.xlu0 %v427
        %v429 = vpop.xlane.xlu0 %428
        %v430 = vsel %vm363, %v272, 0.0
        %431 = vadd.xlane.f32.xlu0 %v430
        %v432 = vpop.xlane.xlu0 %431
        %v433 = vsel %vm363, %v273, 0.0
        %434 = vadd.xlane.f32.xlu0 %v433
        %v435 = vpop.xlane.xlu0 %434
        %v436 = vsel %vm363, %v274, 0.0
        %437 = vadd.xlane.f32.xlu0 %v436
        %v438 = vpop.xlane.xlu0 %437
        %v439 = vsel %vm363, %v275, 0.0
        %440 = vadd.xlane.f32.xlu0 %v439
        %v441 = vpop.xlane.xlu0 %440
        %v442 = vsel %vm363, %v276, 0.0
        %443 = vadd.xlane.f32.xlu0 %v442
        %v444 = vpop.xlane.xlu0 %443
        %v445 = vsel %vm363, %v277, 0.0
        %446 = vadd.xlane.f32.xlu0 %v445
        %v447 = vpop.xlane.xlu0 %446
        %v448 = vsel %vm363, %v278, 0.0
        %449 = vadd.xlane.f32.xlu0 %v448
        %v450 = vpop.xlane.xlu0 %449
        %v451 = vsel %vm363, %v279, 0.0
        %452 = vadd.xlane.f32.xlu0 %v451
        %v453 = vpop.xlane.xlu0 %452
        %v454 = vsel %vm363, %v280, 0.0
        %455 = vadd.xlane.f32.xlu0 %v454
        %v456 = vpop.xlane.xlu0 %455
        %v457 = vsel %vm363, %v281, 0.0
        %458 = vadd.xlane.f32.xlu0 %v457
        %v459 = vpop.xlane.xlu0 %458
        %v460 = vsel %vm363, %v282, 0.0
        %461 = vadd.xlane.f32.xlu0 %v460
        %v462 = vpop.xlane.xlu0 %461
        %v463 = vsel %vm363, %v283, 0.0
        %464 = vadd.xlane.f32.xlu0 %v463
        %v465 = vpop.xlane.xlu0 %464
        %v466 = vsel %vm363, %v284, 0.0
        %467 = vadd.xlane.f32.xlu0 %v466
        %v468 = vpop.xlane.xlu0 %467
        %v469 = vsel %vm363, %v285, 0.0
        %470 = vadd.xlane.f32.xlu0 %v469
        %v471 = vpop.xlane.xlu0 %470
        %v472 = vsel %vm363, %v286, 0.0
        %473 = vadd.xlane.f32.xlu0 %v472
        %v474 = vpop.xlane.xlu0 %473
        %v475 = vsel %vm363, %v287, 0.0
        %476 = vadd.xlane.f32.xlu0 %v475
        %v477 = vpop.xlane.xlu0 %476
        %v478 = vsel %vm363, %v288, 0.0
        %479 = vadd.xlane.f32.xlu0 %v478
        %v480 = vpop.xlane.xlu0 %479
        %v481 = vsel %vm363, %v289, 0.0
        %482 = vadd.xlane.f32.xlu0 %v481
        %v483 = vpop.xlane.xlu0 %482
        %v484 = vsel %vm363, %v290, 0.0
        %485 = vadd.xlane.f32.xlu0 %v484
        %v486 = vpop.xlane.xlu0 %485
        %v487 = vsel %vm363, %v291, 0.0
        %488 = vadd.xlane.f32.xlu0 %v487
        %v489 = vpop.xlane.xlu0 %488
        %v490 = vsel %vm363, %v292, 0.0
        %491 = vadd.xlane.f32.xlu0 %v490
        %v492 = vpop.xlane.xlu0 %491
        %v493 = vsel %vm363, %v293, 0.0
        %494 = vadd.xlane.f32.xlu0 %v493
        %v495 = vpop.xlane.xlu0 %494
        %v496 = vsel %vm363, %v294, 0.0
        %497 = vadd.xlane.f32.xlu0 %v496
        %v498 = vpop.xlane.xlu0 %497
        %v499 = vsel %vm363, %v295, 0.0
        %500 = vadd.xlane.f32.xlu0 %v499
        %v501 = vpop.xlane.xlu0 %500
        %v502 = vsel %vm363, %v296, 0.0
        %503 = vadd.xlane.f32.xlu0 %v502
        %v504 = vpop.xlane.xlu0 %503
        %v505 = vsel %vm363, %v297, 0.0
        %506 = vadd.xlane.f32.xlu0 %v505
        %v507 = vpop.xlane.xlu0 %506
        %v508 = vsel %vm363, %v298, 0.0
        %509 = vadd.xlane.f32.xlu0 %v508
        %v510 = vpop.xlane.xlu0 %509
        %v511 = vsel %vm363, %v299, 0.0
        %512 = vadd.xlane.f32.xlu0 %v511
        %v513 = vpop.xlane.xlu0 %512
        %v514 = vsel %vm363, %v300, 0.0
        %515 = vadd.xlane.f32.xlu0 %v514
        %v516 = vpop.xlane.xlu0 %515
        %v517 = vsel %vm363, %v301, 0.0
        %518 = vadd.xlane.f32.xlu0 %v517
        %v519 = vpop.xlane.xlu0 %518
        %v520 = vsel %vm363, %v302, 0.0
        %521 = vadd.xlane.f32.xlu0 %v520
        %v522 = vpop.xlane.xlu0 %521
        %v523 = vsel %vm363, %v303, 0.0
        %524 = vadd.xlane.f32.xlu0 %v523
        %v525 = vpop.xlane.xlu0 %524
        %v526 = vsel %vm363, %v304, 0.0
        %527 = vadd.xlane.f32.xlu0 %v526
        %v528 = vpop.xlane.xlu0 %527
        %v529 = vsel %vm363, %v305, 0.0
        %530 = vadd.xlane.f32.xlu0 %v529
        %v531 = vpop.xlane.xlu0 %530
        %v532 = vsel %vm363, %v306, 0.0
        %533 = vadd.xlane.f32.xlu0 %v532
        %v534 = vpop.xlane.xlu0 %533
        %v535 = vsel %vm363, %v307, 0.0
        %536 = vadd.xlane.f32.xlu0 %v535
        %v537 = vpop.xlane.xlu0 %536
        %v538 = vsel %vm363, %v308, 0.0
        %539 = vadd.xlane.f32.xlu0 %v538
        %v540 = vpop.xlane.xlu0 %539
        %v541 = vsel %vm363, %v309, 0.0
        %542 = vadd.xlane.f32.xlu0 %v541
        %v543 = vpop.xlane.xlu0 %542
        %v544 = vsel %vm363, %v310, 0.0
        %545 = vadd.xlane.f32.xlu0 %v544
        %v546 = vpop.xlane.xlu0 %545
        %v547 = vsel %vm363, %v311, 0.0
        %548 = vadd.xlane.f32.xlu0 %v547
        %v549 = vpop.xlane.xlu0 %548
        %v550 = vsel %vm363, %v312, 0.0
        %551 = vadd.xlane.f32.xlu0 %v550
        %v552 = vpop.xlane.xlu0 %551
        %v553 = vsel %vm363, %v313, 0.0
        %554 = vadd.xlane.f32.xlu0 %v553
        %v555 = vpop.xlane.xlu0 %554
        %v556 = vsel %vm363, %v314, 0.0
        %557 = vadd.xlane.f32.xlu0 %v556
        %v558 = vpop.xlane.xlu0 %557
        %v559 = vsel %vm363, %v315, 0.0
        %560 = vadd.xlane.f32.xlu0 %v559
        %v561 = vpop.xlane.xlu0 %560
        %v562 = vsel %vm363, %v316, 0.0
        %563 = vadd.xlane.f32.xlu0 %v562
        %v564 = vpop.xlane.xlu0 %563
        %v565 = vsel %vm363, %v317, 0.0
        %566 = vadd.xlane.f32.xlu0 %v565
        %v567 = vpop.xlane.xlu0 %566
        %v568 = vsel %vm363, %v318, 0.0
        %569 = vadd.xlane.f32.xlu0 %v568
        %v570 = vpop.xlane.xlu0 %569
        %v571 = vsel %vm363, %v319, 0.0
        %572 = vadd.xlane.f32.xlu0 %v571
        %v573 = vpop.xlane.xlu0 %572
        %v574 = vsel %vm363, %v320, 0.0
        %575 = vadd.xlane.f32.xlu0 %v574
        %v576 = vpop.xlane.xlu0 %575
        %v577 = vsel %vm363, %v321, 0.0
        %578 = vadd.xlane.f32.xlu0 %v577
        %v579 = vpop.xlane.xlu0 %578
        %v580 = vsel %vm363, %v322, 0.0
        %581 = vadd.xlane.f32.xlu0 %v580
        %v582 = vpop.xlane.xlu0 %581
        %v583 = vsel %vm363, %v323, 0.0
        %584 = vadd.xlane.f32.xlu0 %v583
        %v585 = vpop.xlane.xlu0 %584
        %v586 = vsel %vm363, %v324, 0.0
        %587 = vadd.xlane.f32.xlu0 %v586
        %v588 = vpop.xlane.xlu0 %587
        %v589 = vsel %vm363, %v325, 0.0
        %590 = vadd.xlane.f32.xlu0 %v589
        %v591 = vpop.xlane.xlu0 %590
        %v592 = vsel %vm363, %v326, 0.0
        %593 = vadd.xlane.f32.xlu0 %v592
        %v594 = vpop.xlane.xlu0 %593
        %v595 = vsel %vm363, %v327, 0.0
        %596 = vadd.xlane.f32.xlu0 %v595
        %v597 = vpop.xlane.xlu0 %596
        %v598 = vsel %vm363, %v328, 0.0
        %599 = vadd.xlane.f32.xlu0 %v598
        %v600 = vpop.xlane.xlu0 %599
        %v601 = vsel %vm363, %v329, 0.0
        %602 = vadd.xlane.f32.xlu0 %v601
        %v603 = vpop.xlane.xlu0 %602
        %v604 = vsel %vm363, %v330, 0.0
        %605 = vadd.xlane.f32.xlu0 %v604
        %v606 = vpop.xlane.xlu0 %605
        %v607 = vsel %vm363, %v331, 0.0
        %608 = vadd.xlane.f32.xlu0 %v607
        %v609 = vpop.xlane.xlu0 %608
        %v610 = vsel %vm363, %v332, 0.0
        %611 = vadd.xlane.f32.xlu0 %v610
        %v612 = vpop.xlane.xlu0 %611
        %v613 = vsel %vm363, %v333, 0.0
        %614 = vadd.xlane.f32.xlu0 %v613
        %v615 = vpop.xlane.xlu0 %614
        %v616 = vsel %vm363, %v334, 0.0
        %617 = vadd.xlane.f32.xlu0 %v616
        %v618 = vpop.xlane.xlu0 %617
        %v619 = vsel %vm363, %v335, 0.0
        %620 = vadd.xlane.f32.xlu0 %v619
        %v621 = vpop.xlane.xlu0 %620
        %v622 = vsel %vm363, %v336, 0.0
        %623 = vadd.xlane.f32.xlu0 %v622
        %v624 = vpop.xlane.xlu0 %623
        %v625 = vsel %vm363, %v337, 0.0
        %626 = vadd.xlane.f32.xlu0 %v625
        %v627 = vpop.xlane.xlu0 %626
        %v628 = vsel %vm363, %v338, 0.0
        %629 = vadd.xlane.f32.xlu0 %v628
        %v630 = vpop.xlane.xlu0 %629
        %v631 = vsel %vm363, %v339, 0.0
        %632 = vadd.xlane.f32.xlu0 %v631
        %v633 = vpop.xlane.xlu0 %632
        %v634 = vsel %vm363, %v340, 0.0
        %635 = vadd.xlane.f32.xlu0 %v634
        %v636 = vpop.xlane.xlu0 %635
        %v637 = vsel %vm363, %v341, 0.0
        %638 = vadd.xlane.f32.xlu0 %v637
        %v639 = vpop.xlane.xlu0 %638
        %v640 = vsel %vm363, %v342, 0.0
        %641 = vadd.xlane.f32.xlu0 %v640
        %v642 = vpop.xlane.xlu0 %641
        %v643 = vsel %vm363, %v343, 0.0
        %644 = vadd.xlane.f32.xlu0 %v643
        %v645 = vpop.xlane.xlu0 %644
        %v646 = vsel %vm363, %v344, 0.0
        %647 = vadd.xlane.f32.xlu0 %v646
        %v648 = vpop.xlane.xlu0 %647
        %v649 = vsel %vm363, %v345, 0.0
        %650 = vadd.xlane.f32.xlu0 %v649
        %v651 = vpop.xlane.xlu0 %650
        %v652 = vsel %vm363, %v346, 0.0
        %653 = vadd.xlane.f32.xlu0 %v652
        %v654 = vpop.xlane.xlu0 %653
        %v655 = vsel %vm363, %v347, 0.0
        %656 = vadd.xlane.f32.xlu0 %v655
        %v657 = vpop.xlane.xlu0 %656
        %v658 = vsel %vm363, %v348, 0.0
        %659 = vadd.xlane.f32.xlu0 %v658
        %v660 = vpop.xlane.xlu0 %659
        %v661 = vsel %vm363, %v349, 0.0
        %662 = vadd.xlane.f32.xlu0 %v661
        %v663 = vpop.xlane.xlu0 %662
        %v664 = vsel %vm363, %v350, 0.0
        %665 = vadd.xlane.f32.xlu0 %v664
        %v666 = vpop.xlane.xlu0 %665
        %v667 = vsel %vm363, %v351, 0.0
        %668 = vadd.xlane.f32.xlu0 %v667
        %v669 = vpop.xlane.xlu0 %668
        %v670 = vsel %vm363, %v352, 0.0
        %671 = vadd.xlane.f32.xlu0 %v670
        %v672 = vpop.xlane.xlu0 %671
        %v673 = vsel %vm363, %v353, 0.0
        %674 = vadd.xlane.f32.xlu0 %v673
        %v675 = vpop.xlane.xlu0 %674
        %v676 = vsel %vm363, %v354, 0.0
        %677 = vadd.xlane.f32.xlu0 %v676
        %v678 = vpop.xlane.xlu0 %677
        %v679 = vsel %vm363, %v355, 0.0
        %680 = vadd.xlane.f32.xlu0 %v679
        %v681 = vpop.xlane.xlu0 %680
        %v682 = vsel %vm363, %v356, 0.0
        %683 = vadd.xlane.f32.xlu0 %v682
        %v684 = vpop.xlane.xlu0 %683
        %v685 = vsel %vm363, %v357, 0.0
        %686 = vadd.xlane.f32.xlu0 %v685
        %v687 = vpop.xlane.xlu0 %686
        %v688 = vsel %vm363, %v358, 0.0
        %689 = vadd.xlane.f32.xlu0 %v688
        %v690 = vpop.xlane.xlu0 %689
        %v691 = vsel %vm363, %v359, 0.0
        %692 = vadd.xlane.f32.xlu0 %v691
        %v693 = vpop.xlane.xlu0 %692
        %v694 = vsel %vm363, %v360, 0.0
        %695 = vadd.xlane.f32.xlu0 %v694
        %v696 = vpop.xlane.xlu0 %695
        %v697 = vsel %vm363, %v361, 0.0
        %698 = vadd.xlane.f32.xlu0 %v697
        %v699 = vpop.xlane.xlu0 %698
        %v700 = vmul.f32 %v366, 0.015625
        %v701 = vmul.f32 %v369, 0.015625
        %v702 = vmul.f32 %v372, 0.015625
        %v703 = vmul.f32 %v375, 0.015625
        %v704 = vmul.f32 %v378, 0.015625
        %v705 = vmul.f32 %v381, 0.015625
        %v706 = vmul.f32 %v384, 0.015625
        %v707 = vmul.f32 %v387, 0.015625
        %v708 = vmul.f32 %v390, 0.015625
        %v709 = vmul.f32 %v393, 0.015625
        %v710 = vmul.f32 %v396, 0.015625
        %v711 = vmul.f32 %v399, 0.015625
        %v712 = vmul.f32 %v402, 0.015625
        %v713 = vmul.f32 %v405, 0.015625
        %v714 = vmul.f32 %v408, 0.015625
        %v715 = vmul.f32 %v411, 0.015625
        %v716 = vmul.f32 %v414, 0.015625
        %v717 = vmul.f32 %v417, 0.015625
        %v718 = vmul.f32 %v420, 0.015625
        %v719 = vmul.f32 %v423, 0.015625
        %v720 = vmul.f32 %v426, 0.015625
        %v721 = vmul.f32 %v429, 0.015625
        %v722 = vmul.f32 %v432, 0.015625
        %v723 = vmul.f32 %v435, 0.015625
        %v724 = vmul.f32 %v438, 0.015625
        %v725 = vmul.f32 %v441, 0.015625
        %v726 = vmul.f32 %v444, 0.015625
        %v727 = vmul.f32 %v447, 0.015625
        %v728 = vmul.f32 %v450, 0.015625
        %v729 = vmul.f32 %v453, 0.015625
        %v730 = vmul.f32 %v456, 0.015625
        %v731 = vmul.f32 %v459, 0.015625
        %v732 = vmul.f32 %v462, 0.015625
        %v733 = vmul.f32 %v465, 0.015625
        %v734 = vmul.f32 %v468, 0.015625
        %v735 = vmul.f32 %v471, 0.015625
        %v736 = vmul.f32 %v474, 0.015625
        %v737 = vmul.f32 %v477, 0.015625
        %v738 = vmul.f32 %v480, 0.015625
        %v739 = vmul.f32 %v483, 0.015625
        %v740 = vmul.f32 %v486, 0.015625
        %v741 = vmul.f32 %v489, 0.015625
        %v742 = vmul.f32 %v492, 0.015625
        %v743 = vmul.f32 %v495, 0.015625
        %v744 = vmul.f32 %v498, 0.015625
        %v745 = vmul.f32 %v501, 0.015625
        %v746 = vmul.f32 %v504, 0.015625
        %v747 = vmul.f32 %v507, 0.015625
        %v748 = vmul.f32 %v510, 0.015625
        %v749 = vmul.f32 %v513, 0.015625
        %v750 = vmul.f32 %v516, 0.015625
        %v751 = vmul.f32 %v519, 0.015625
        %v752 = vmul.f32 %v522, 0.015625
        %v753 = vmul.f32 %v525, 0.015625
        %v754 = vmul.f32 %v528, 0.015625
        %v755 = vmul.f32 %v531, 0.015625
        %v756 = vmul.f32 %v534, 0.015625
        %v757 = vmul.f32 %v537, 0.015625
        %v758 = vmul.f32 %v540, 0.015625
        %v759 = vmul.f32 %v543, 0.015625
        %v760 = vmul.f32 %v546, 0.015625
        %v761 = vmul.f32 %v549, 0.015625
        %v762 = vmul.f32 %v552, 0.015625
        %v763 = vmul.f32 %v555, 0.015625
        %v764 = vmul.f32 %v558, 0.015625
        %v765 = vmul.f32 %v561, 0.015625
        %v766 = vmul.f32 %v564, 0.015625
        %v767 = vmul.f32 %v567, 0.015625
        %v768 = vmul.f32 %v570, 0.015625
        %v769 = vmul.f32 %v573, 0.015625
        %v770 = vmul.f32 %v576, 0.015625
        %v771 = vmul.f32 %v579, 0.015625
        %v772 = vmul.f32 %v582, 0.015625
        %v773 = vmul.f32 %v585, 0.015625
        %v774 = vmul.f32 %v588, 0.015625
        %v775 = vmul.f32 %v591, 0.015625
        %v776 = vmul.f32 %v594, 0.015625
        %v777 = vmul.f32 %v597, 0.015625
        %v778 = vmul.f32 %v600, 0.015625
        %v779 = vmul.f32 %v603, 0.015625
        %v780 = vmul.f32 %v606, 0.015625
        %v781 = vmul.f32 %v609, 0.015625
        %v782 = vmul.f32 %v612, 0.015625
        %v783 = vmul.f32 %v615, 0.015625
        %v784 = vmul.f32 %v618, 0.015625
        %v785 = vmul.f32 %v621, 0.015625
        %v786 = vmul.f32 %v624, 0.015625
        %v787 = vmul.f32 %v627, 0.015625
        %v788 = vmul.f32 %v630, 0.015625
        %v789 = vmul.f32 %v633, 0.015625
        %v790 = vmul.f32 %v636, 0.015625
        %v791 = vmul.f32 %v639, 0.015625
        %v792 = vmul.f32 %v642, 0.015625
        %v793 = vmul.f32 %v645, 0.015625
        %v794 = vmul.f32 %v648, 0.015625
        %v795 = vmul.f32 %v651, 0.015625
        %v796 = vmul.f32 %v654, 0.015625
        %v797 = vmul.f32 %v657, 0.015625
        %v798 = vmul.f32 %v660, 0.015625
        %v799 = vmul.f32 %v663, 0.015625
        %v800 = vmul.f32 %v666, 0.015625
        %v801 = vmul.f32 %v669, 0.015625
        %v802 = vmul.f32 %v672, 0.015625
        %v803 = vmul.f32 %v675, 0.015625
        %v804 = vmul.f32 %v678, 0.015625
        %v805 = vmul.f32 %v681, 0.015625
        %v806 = vmul.f32 %v684, 0.015625
        %v807 = vmul.f32 %v687, 0.015625
        %v808 = vmul.f32 %v690, 0.015625
        %v809 = vmul.f32 %v693, 0.015625
        %v810 = vmul.f32 %v696, 0.015625
        %v811 = vmul.f32 %v699, 0.015625
        %v924 = vperm.slane %v700, 0
        %v925 = vperm.slane %v700, 1
        %v926 = vperm.slane %v700, 2
        %v927 = vperm.slane %v700, 3
        %v928 = vperm.slane %v700, 4
        %v929 = vperm.slane %v700, 5
        %v930 = vperm.slane %v700, 6
        %v931 = vperm.slane %v700, 7
        %v932 = vperm.slane %v701, 0
        %v933 = vperm.slane %v701, 1
        %v934 = vperm.slane %v701, 2
        %v935 = vperm.slane %v701, 3
        %v936 = vperm.slane %v701, 4
        %v937 = vperm.slane %v701, 5
        %v938 = vperm.slane %v701, 6
        %v939 = vperm.slane %v701, 7
        %v940 = vperm.slane %v702, 0
        %v941 = vperm.slane %v702, 1
        %v942 = vperm.slane %v702, 2
        %v943 = vperm.slane %v702, 3
        %v944 = vperm.slane %v702, 4
        %v945 = vperm.slane %v702, 5
        %v946 = vperm.slane %v702, 6
        %v947 = vperm.slane %v702, 7
        %v948 = vperm.slane %v703, 0
        %v949 = vperm.slane %v703, 1
        %v950 = vperm.slane %v703, 2
        %v951 = vperm.slane %v703, 3
        %v952 = vperm.slane %v703, 4
        %v953 = vperm.slane %v703, 5
        %v954 = vperm.slane %v703, 6
        %v955 = vperm.slane %v703, 7
        %v956 = vperm.slane %v704, 0
        %v957 = vperm.slane %v704, 1
        %v958 = vperm.slane %v704, 2
        %v959 = vperm.slane %v704, 3
        %v960 = vperm.slane %v704, 4
        %v961 = vperm.slane %v704, 5
        %v962 = vperm.slane %v704, 6
        %v963 = vperm.slane %v704, 7
        %v964 = vperm.slane %v705, 0
        %v965 = vperm.slane %v705, 1
        %v966 = vperm.slane %v705, 2
        %v967 = vperm.slane %v705, 3
        %v968 = vperm.slane %v705, 4
        %v969 = vperm.slane %v705, 5
        %v970 = vperm.slane %v705, 6
        %v971 = vperm.slane %v705, 7
        %v972 = vperm.slane %v706, 0
        %v973 = vperm.slane %v706, 1
        %v974 = vperm.slane %v706, 2
        %v975 = vperm.slane %v706, 3
        %v976 = vperm.slane %v706, 4
        %v977 = vperm.slane %v706, 5
        %v978 = vperm.slane %v706, 6
        %v979 = vperm.slane %v706, 7
        %v980 = vperm.slane %v707, 0
        %v981 = vperm.slane %v707, 1
        %v982 = vperm.slane %v707, 2
        %v983 = vperm.slane %v707, 3
        %v984 = vperm.slane %v707, 4
        %v985 = vperm.slane %v707, 5
        %v986 = vperm.slane %v707, 6
        %v987 = vperm.slane %v707, 7
        %v988 = vperm.slane %v708, 0
        %v989 = vperm.slane %v708, 1
        %v990 = vperm.slane %v708, 2
        %v991 = vperm.slane %v708, 3
        %v992 = vperm.slane %v708, 4
        %v993 = vperm.slane %v708, 5
        %v994 = vperm.slane %v708, 6
        %v995 = vperm.slane %v708, 7
        %v996 = vperm.slane %v709, 0
        %v997 = vperm.slane %v709, 1
        %v998 = vperm.slane %v709, 2
        %v999 = vperm.slane %v709, 3
        %v1000 = vperm.slane %v709, 4
        %v1001 = vperm.slane %v709, 5
        %v1002 = vperm.slane %v709, 6
        %v1003 = vperm.slane %v709, 7
        %v1004 = vperm.slane %v710, 0
        %v1005 = vperm.slane %v710, 1
        %v1006 = vperm.slane %v710, 2
        %v1007 = vperm.slane %v710, 3
        %v1008 = vperm.slane %v710, 4
        %v1009 = vperm.slane %v710, 5
        %v1010 = vperm.slane %v710, 6
        %v1011 = vperm.slane %v710, 7
        %v1012 = vperm.slane %v711, 0
        %v1013 = vperm.slane %v711, 1
        %v1014 = vperm.slane %v711, 2
        %v1015 = vperm.slane %v711, 3
        %v1016 = vperm.slane %v711, 4
        %v1017 = vperm.slane %v711, 5
        %v1018 = vperm.slane %v711, 6
        %v1019 = vperm.slane %v711, 7
        %v1020 = vperm.slane %v712, 0
        %v1021 = vperm.slane %v712, 1
        %v1022 = vperm.slane %v712, 2
        %v1023 = vperm.slane %v712, 3
        %v1024 = vperm.slane %v712, 4
        %v1025 = vperm.slane %v712, 5
        %v1026 = vperm.slane %v712, 6
        %v1027 = vperm.slane %v712, 7
        %v1028 = vperm.slane %v713, 0
        %v1029 = vperm.slane %v713, 1
        %v1030 = vperm.slane %v713, 2
        %v1031 = vperm.slane %v713, 3
        %v1032 = vperm.slane %v713, 4
        %v1033 = vperm.slane %v713, 5
        %v1034 = vperm.slane %v713, 6
        %v1035 = vperm.slane %v713, 7
        %v1036 = vperm.slane %v714, 0
        %v1037 = vperm.slane %v714, 1
        %v1038 = vperm.slane %v714, 2
        %v1039 = vperm.slane %v714, 3
        %v1040 = vperm.slane %v714, 4
        %v1041 = vperm.slane %v714, 5
        %v1042 = vperm.slane %v714, 6
        %v1043 = vperm.slane %v714, 7
        %v1044 = vperm.slane %v715, 0
        %v1045 = vperm.slane %v715, 1
        %v1046 = vperm.slane %v715, 2
        %v1047 = vperm.slane %v715, 3
        %v1048 = vperm.slane %v715, 4
        %v1049 = vperm.slane %v715, 5
        %v1050 = vperm.slane %v715, 6
        %v1051 = vperm.slane %v715, 7
        %v1052 = vperm.slane %v716, 0
        %v1053 = vperm.slane %v716, 1
        %v1054 = vperm.slane %v716, 2
        %v1055 = vperm.slane %v716, 3
        %v1056 = vperm.slane %v716, 4
        %v1057 = vperm.slane %v716, 5
        %v1058 = vperm.slane %v716, 6
        %v1059 = vperm.slane %v716, 7
        %v1060 = vperm.slane %v717, 0
        %v1061 = vperm.slane %v717, 1
        %v1062 = vperm.slane %v717, 2
        %v1063 = vperm.slane %v717, 3
        %v1064 = vperm.slane %v717, 4
        %v1065 = vperm.slane %v717, 5
        %v1066 = vperm.slane %v717, 6
        %v1067 = vperm.slane %v717, 7
        %v1068 = vperm.slane %v718, 0
        %v1069 = vperm.slane %v718, 1
        %v1070 = vperm.slane %v718, 2
        %v1071 = vperm.slane %v718, 3
        %v1072 = vperm.slane %v718, 4
        %v1073 = vperm.slane %v718, 5
        %v1074 = vperm.slane %v718, 6
        %v1075 = vperm.slane %v718, 7
        %v1076 = vperm.slane %v719, 0
        %v1077 = vperm.slane %v719, 1
        %v1078 = vperm.slane %v719, 2
        %v1079 = vperm.slane %v719, 3
        %v1080 = vperm.slane %v719, 4
        %v1081 = vperm.slane %v719, 5
        %v1082 = vperm.slane %v719, 6
        %v1083 = vperm.slane %v719, 7
        %v1084 = vperm.slane %v720, 0
        %v1085 = vperm.slane %v720, 1
        %v1086 = vperm.slane %v720, 2
        %v1087 = vperm.slane %v720, 3
        %v1088 = vperm.slane %v720, 4
        %v1089 = vperm.slane %v720, 5
        %v1090 = vperm.slane %v720, 6
        %v1091 = vperm.slane %v720, 7
        %v1092 = vperm.slane %v721, 0
        %v1093 = vperm.slane %v721, 1
        %v1094 = vperm.slane %v721, 2
        %v1095 = vperm.slane %v721, 3
        %v1096 = vperm.slane %v721, 4
        %v1097 = vperm.slane %v721, 5
        %v1098 = vperm.slane %v721, 6
        %v1099 = vperm.slane %v721, 7
        %v1100 = vperm.slane %v722, 0
        %v1101 = vperm.slane %v722, 1
        %v1102 = vperm.slane %v722, 2
        %v1103 = vperm.slane %v722, 3
        %v1104 = vperm.slane %v722, 4
        %v1105 = vperm.slane %v722, 5
        %v1106 = vperm.slane %v722, 6
        %v1107 = vperm.slane %v722, 7
        %v1108 = vperm.slane %v723, 0
        %v1109 = vperm.slane %v723, 1
        %v1110 = vperm.slane %v723, 2
        %v1111 = vperm.slane %v723, 3
        %v1112 = vperm.slane %v723, 4
        %v1113 = vperm.slane %v723, 5
        %v1114 = vperm.slane %v723, 6
        %v1115 = vperm.slane %v723, 7
        %v1116 = vperm.slane %v724, 0
        %v1117 = vperm.slane %v724, 1
        %v1118 = vperm.slane %v724, 2
        %v1119 = vperm.slane %v724, 3
        %v1120 = vperm.slane %v724, 4
        %v1121 = vperm.slane %v724, 5
        %v1122 = vperm.slane %v724, 6
        %v1123 = vperm.slane %v724, 7
        %v1124 = vperm.slane %v725, 0
        %v1125 = vperm.slane %v725, 1
        %v1126 = vperm.slane %v725, 2
        %v1127 = vperm.slane %v725, 3
        %v1128 = vperm.slane %v725, 4
        %v1129 = vperm.slane %v725, 5
        %v1130 = vperm.slane %v725, 6
        %v1131 = vperm.slane %v725, 7
        %v1132 = vperm.slane %v726, 0
        %v1133 = vperm.slane %v726, 1
        %v1134 = vperm.slane %v726, 2
        %v1135 = vperm.slane %v726, 3
        %v1136 = vperm.slane %v726, 4
        %v1137 = vperm.slane %v726, 5
        %v1138 = vperm.slane %v726, 6
        %v1139 = vperm.slane %v726, 7
        %v1140 = vperm.slane %v727, 0
        %v1141 = vperm.slane %v727, 1
        %v1142 = vperm.slane %v727, 2
        %v1143 = vperm.slane %v727, 3
        %v1144 = vperm.slane %v727, 4
        %v1145 = vperm.slane %v727, 5
        %v1146 = vperm.slane %v727, 6
        %v1147 = vperm.slane %v727, 7
        %v1148 = vperm.slane %v728, 0
        %v1149 = vperm.slane %v728, 1
        %v1150 = vperm.slane %v728, 2
        %v1151 = vperm.slane %v728, 3
        %v1152 = vperm.slane %v728, 4
        %v1153 = vperm.slane %v728, 5
        %v1154 = vperm.slane %v728, 6
        %v1155 = vperm.slane %v728, 7
        %v1156 = vperm.slane %v729, 0
        %v1157 = vperm.slane %v729, 1
        %v1158 = vperm.slane %v729, 2
        %v1159 = vperm.slane %v729, 3
        %v1160 = vperm.slane %v729, 4
        %v1161 = vperm.slane %v729, 5
        %v1162 = vperm.slane %v729, 6
        %v1163 = vperm.slane %v729, 7
        %v1164 = vperm.slane %v730, 0
        %v1165 = vperm.slane %v730, 1
        %v1166 = vperm.slane %v730, 2
        %v1167 = vperm.slane %v730, 3
        %v1168 = vperm.slane %v730, 4
        %v1169 = vperm.slane %v730, 5
        %v1170 = vperm.slane %v730, 6
        %v1171 = vperm.slane %v730, 7
        %v1172 = vperm.slane %v731, 0
        %v1173 = vperm.slane %v731, 1
        %v1174 = vperm.slane %v731, 2
        %v1175 = vperm.slane %v731, 3
        %v1176 = vperm.slane %v731, 4
        %v1177 = vperm.slane %v731, 5
        %v1178 = vperm.slane %v731, 6
        %v1179 = vperm.slane %v731, 7
        %v1180 = vperm.slane %v732, 0
        %v1181 = vperm.slane %v732, 1
        %v1182 = vperm.slane %v732, 2
        %v1183 = vperm.slane %v732, 3
        %v1184 = vperm.slane %v732, 4
        %v1185 = vperm.slane %v732, 5
        %v1186 = vperm.slane %v732, 6
        %v1187 = vperm.slane %v732, 7
        %v1188 = vperm.slane %v733, 0
        %v1189 = vperm.slane %v733, 1
        %v1190 = vperm.slane %v733, 2
        %v1191 = vperm.slane %v733, 3
        %v1192 = vperm.slane %v733, 4
        %v1193 = vperm.slane %v733, 5
        %v1194 = vperm.slane %v733, 6
        %v1195 = vperm.slane %v733, 7
        %v1196 = vperm.slane %v734, 0
        %v1197 = vperm.slane %v734, 1
        %v1198 = vperm.slane %v734, 2
        %v1199 = vperm.slane %v734, 3
        %v1200 = vperm.slane %v734, 4
        %v1201 = vperm.slane %v734, 5
        %v1202 = vperm.slane %v734, 6
        %v1203 = vperm.slane %v734, 7
        %v1204 = vperm.slane %v735, 0
        %v1205 = vperm.slane %v735, 1
        %v1206 = vperm.slane %v735, 2
        %v1207 = vperm.slane %v735, 3
        %v1208 = vperm.slane %v735, 4
        %v1209 = vperm.slane %v735, 5
        %v1210 = vperm.slane %v735, 6
        %v1211 = vperm.slane %v735, 7
        %v1212 = vperm.slane %v736, 0
        %v1213 = vperm.slane %v736, 1
        %v1214 = vperm.slane %v736, 2
        %v1215 = vperm.slane %v736, 3
        %v1216 = vperm.slane %v736, 4
        %v1217 = vperm.slane %v736, 5
        %v1218 = vperm.slane %v736, 6
        %v1219 = vperm.slane %v736, 7
        %v1220 = vperm.slane %v737, 0
        %v1221 = vperm.slane %v737, 1
        %v1222 = vperm.slane %v737, 2
        %v1223 = vperm.slane %v737, 3
        %v1224 = vperm.slane %v737, 4
        %v1225 = vperm.slane %v737, 5
        %v1226 = vperm.slane %v737, 6
        %v1227 = vperm.slane %v737, 7
        %v1228 = vperm.slane %v738, 0
        %v1229 = vperm.slane %v738, 1
        %v1230 = vperm.slane %v738, 2
        %v1231 = vperm.slane %v738, 3
        %v1232 = vperm.slane %v738, 4
        %v1233 = vperm.slane %v738, 5
        %v1234 = vperm.slane %v738, 6
        %v1235 = vperm.slane %v738, 7
        %v1236 = vperm.slane %v739, 0
        %v1237 = vperm.slane %v739, 1
        %v1238 = vperm.slane %v739, 2
        %v1239 = vperm.slane %v739, 3
        %v1240 = vperm.slane %v739, 4
        %v1241 = vperm.slane %v739, 5
        %v1242 = vperm.slane %v739, 6
        %v1243 = vperm.slane %v739, 7
        %v1244 = vperm.slane %v740, 0
        %v1245 = vperm.slane %v740, 1
        %v1246 = vperm.slane %v740, 2
        %v1247 = vperm.slane %v740, 3
        %v1248 = vperm.slane %v740, 4
        %v1249 = vperm.slane %v740, 5
        %v1250 = vperm.slane %v740, 6
        %v1251 = vperm.slane %v740, 7
        %v1252 = vperm.slane %v741, 0
        %v1253 = vperm.slane %v741, 1
        %v1254 = vperm.slane %v741, 2
        %v1255 = vperm.slane %v741, 3
        %v1256 = vperm.slane %v741, 4
        %v1257 = vperm.slane %v741, 5
        %v1258 = vperm.slane %v741, 6
        %v1259 = vperm.slane %v741, 7
        %v1260 = vperm.slane %v742, 0
        %v1261 = vperm.slane %v742, 1
        %v1262 = vperm.slane %v742, 2
        %v1263 = vperm.slane %v742, 3
        %v1264 = vperm.slane %v742, 4
        %v1265 = vperm.slane %v742, 5
        %v1266 = vperm.slane %v742, 6
        %v1267 = vperm.slane %v742, 7
        %v1268 = vperm.slane %v743, 0
        %v1269 = vperm.slane %v743, 1
        %v1270 = vperm.slane %v743, 2
        %v1271 = vperm.slane %v743, 3
        %v1272 = vperm.slane %v743, 4
        %v1273 = vperm.slane %v743, 5
        %v1274 = vperm.slane %v743, 6
        %v1275 = vperm.slane %v743, 7
        %v1276 = vperm.slane %v744, 0
        %v1277 = vperm.slane %v744, 1
        %v1278 = vperm.slane %v744, 2
        %v1279 = vperm.slane %v744, 3
        %v1280 = vperm.slane %v744, 4
        %v1281 = vperm.slane %v744, 5
        %v1282 = vperm.slane %v744, 6
        %v1283 = vperm.slane %v744, 7
        %v1284 = vperm.slane %v745, 0
        %v1285 = vperm.slane %v745, 1
        %v1286 = vperm.slane %v745, 2
        %v1287 = vperm.slane %v745, 3
        %v1288 = vperm.slane %v745, 4
        %v1289 = vperm.slane %v745, 5
        %v1290 = vperm.slane %v745, 6
        %v1291 = vperm.slane %v745, 7
        %v1292 = vperm.slane %v746, 0
        %v1293 = vperm.slane %v746, 1
        %v1294 = vperm.slane %v746, 2
        %v1295 = vperm.slane %v746, 3
        %v1296 = vperm.slane %v746, 4
        %v1297 = vperm.slane %v746, 5
        %v1298 = vperm.slane %v746, 6
        %v1299 = vperm.slane %v746, 7
        %v1300 = vperm.slane %v747, 0
        %v1301 = vperm.slane %v747, 1
        %v1302 = vperm.slane %v747, 2
        %v1303 = vperm.slane %v747, 3
        %v1304 = vperm.slane %v747, 4
        %v1305 = vperm.slane %v747, 5
        %v1306 = vperm.slane %v747, 6
        %v1307 = vperm.slane %v747, 7
        %v1308 = vperm.slane %v748, 0
        %v1309 = vperm.slane %v748, 1
        %v1310 = vperm.slane %v748, 2
        %v1311 = vperm.slane %v748, 3
        %v1312 = vperm.slane %v748, 4
        %v1313 = vperm.slane %v748, 5
        %v1314 = vperm.slane %v748, 6
        %v1315 = vperm.slane %v748, 7
        %v1316 = vperm.slane %v749, 0
        %v1317 = vperm.slane %v749, 1
        %v1318 = vperm.slane %v749, 2
        %v1319 = vperm.slane %v749, 3
        %v1320 = vperm.slane %v749, 4
        %v1321 = vperm.slane %v749, 5
        %v1322 = vperm.slane %v749, 6
        %v1323 = vperm.slane %v749, 7
        %v1324 = vperm.slane %v750, 0
        %v1325 = vperm.slane %v750, 1
        %v1326 = vperm.slane %v750, 2
        %v1327 = vperm.slane %v750, 3
        %v1328 = vperm.slane %v750, 4
        %v1329 = vperm.slane %v750, 5
        %v1330 = vperm.slane %v750, 6
        %v1331 = vperm.slane %v750, 7
        %v1332 = vperm.slane %v751, 0
        %v1333 = vperm.slane %v751, 1
        %v1334 = vperm.slane %v751, 2
        %v1335 = vperm.slane %v751, 3
        %v1336 = vperm.slane %v751, 4
        %v1337 = vperm.slane %v751, 5
        %v1338 = vperm.slane %v751, 6
        %v1339 = vperm.slane %v751, 7
        %v1340 = vperm.slane %v752, 0
        %v1341 = vperm.slane %v752, 1
        %v1342 = vperm.slane %v752, 2
        %v1343 = vperm.slane %v752, 3
        %v1344 = vperm.slane %v752, 4
        %v1345 = vperm.slane %v752, 5
        %v1346 = vperm.slane %v752, 6
        %v1347 = vperm.slane %v752, 7
        %v1348 = vperm.slane %v753, 0
        %v1349 = vperm.slane %v753, 1
        %v1350 = vperm.slane %v753, 2
        %v1351 = vperm.slane %v753, 3
        %v1352 = vperm.slane %v753, 4
        %v1353 = vperm.slane %v753, 5
        %v1354 = vperm.slane %v753, 6
        %v1355 = vperm.slane %v753, 7
        %v1356 = vperm.slane %v754, 0
        %v1357 = vperm.slane %v754, 1
        %v1358 = vperm.slane %v754, 2
        %v1359 = vperm.slane %v754, 3
        %v1360 = vperm.slane %v754, 4
        %v1361 = vperm.slane %v754, 5
        %v1362 = vperm.slane %v754, 6
        %v1363 = vperm.slane %v754, 7
        %v1364 = vperm.slane %v755, 0
        %v1365 = vperm.slane %v755, 1
        %v1366 = vperm.slane %v755, 2
        %v1367 = vperm.slane %v755, 3
        %v1368 = vperm.slane %v755, 4
        %v1369 = vperm.slane %v755, 5
        %v1370 = vperm.slane %v755, 6
        %v1371 = vperm.slane %v755, 7
        %v1372 = vperm.slane %v756, 0
        %v1373 = vperm.slane %v756, 1
        %v1374 = vperm.slane %v756, 2
        %v1375 = vperm.slane %v756, 3
        %v1376 = vperm.slane %v756, 4
        %v1377 = vperm.slane %v756, 5
        %v1378 = vperm.slane %v756, 6
        %v1379 = vperm.slane %v756, 7
        %v1380 = vperm.slane %v757, 0
        %v1381 = vperm.slane %v757, 1
        %v1382 = vperm.slane %v757, 2
        %v1383 = vperm.slane %v757, 3
        %v1384 = vperm.slane %v757, 4
        %v1385 = vperm.slane %v757, 5
        %v1386 = vperm.slane %v757, 6
        %v1387 = vperm.slane %v757, 7
        %v1388 = vperm.slane %v758, 0
        %v1389 = vperm.slane %v758, 1
        %v1390 = vperm.slane %v758, 2
        %v1391 = vperm.slane %v758, 3
        %v1392 = vperm.slane %v758, 4
        %v1393 = vperm.slane %v758, 5
        %v1394 = vperm.slane %v758, 6
        %v1395 = vperm.slane %v758, 7
        %v1396 = vperm.slane %v759, 0
        %v1397 = vperm.slane %v759, 1
        %v1398 = vperm.slane %v759, 2
        %v1399 = vperm.slane %v759, 3
        %v1400 = vperm.slane %v759, 4
        %v1401 = vperm.slane %v759, 5
        %v1402 = vperm.slane %v759, 6
        %v1403 = vperm.slane %v759, 7
        %v1404 = vperm.slane %v760, 0
        %v1405 = vperm.slane %v760, 1
        %v1406 = vperm.slane %v760, 2
        %v1407 = vperm.slane %v760, 3
        %v1408 = vperm.slane %v760, 4
        %v1409 = vperm.slane %v760, 5
        %v1410 = vperm.slane %v760, 6
        %v1411 = vperm.slane %v760, 7
        %v1412 = vperm.slane %v761, 0
        %v1413 = vperm.slane %v761, 1
        %v1414 = vperm.slane %v761, 2
        %v1415 = vperm.slane %v761, 3
        %v1416 = vperm.slane %v761, 4
        %v1417 = vperm.slane %v761, 5
        %v1418 = vperm.slane %v761, 6
        %v1419 = vperm.slane %v761, 7
        %v1420 = vperm.slane %v762, 0
        %v1421 = vperm.slane %v762, 1
        %v1422 = vperm.slane %v762, 2
        %v1423 = vperm.slane %v762, 3
        %v1424 = vperm.slane %v762, 4
        %v1425 = vperm.slane %v762, 5
        %v1426 = vperm.slane %v762, 6
        %v1427 = vperm.slane %v762, 7
        %v1428 = vperm.slane %v763, 0
        %v1429 = vperm.slane %v763, 1
        %v1430 = vperm.slane %v763, 2
        %v1431 = vperm.slane %v763, 3
        %v1432 = vperm.slane %v763, 4
        %v1433 = vperm.slane %v763, 5
        %v1434 = vperm.slane %v763, 6
        %v1435 = vperm.slane %v763, 7
        %v1436 = vperm.slane %v764, 0
        %v1437 = vperm.slane %v764, 1
        %v1438 = vperm.slane %v764, 2
        %v1439 = vperm.slane %v764, 3
        %v1440 = vperm.slane %v764, 4
        %v1441 = vperm.slane %v764, 5
        %v1442 = vperm.slane %v764, 6
        %v1443 = vperm.slane %v764, 7
        %v1444 = vperm.slane %v765, 0
        %v1445 = vperm.slane %v765, 1
        %v1446 = vperm.slane %v765, 2
        %v1447 = vperm.slane %v765, 3
        %v1448 = vperm.slane %v765, 4
        %v1449 = vperm.slane %v765, 5
        %v1450 = vperm.slane %v765, 6
        %v1451 = vperm.slane %v765, 7
        %v1452 = vperm.slane %v766, 0
        %v1453 = vperm.slane %v766, 1
        %v1454 = vperm.slane %v766, 2
        %v1455 = vperm.slane %v766, 3
        %v1456 = vperm.slane %v766, 4
        %v1457 = vperm.slane %v766, 5
        %v1458 = vperm.slane %v766, 6
        %v1459 = vperm.slane %v766, 7
        %v1460 = vperm.slane %v767, 0
        %v1461 = vperm.slane %v767, 1
        %v1462 = vperm.slane %v767, 2
        %v1463 = vperm.slane %v767, 3
        %v1464 = vperm.slane %v767, 4
        %v1465 = vperm.slane %v767, 5
        %v1466 = vperm.slane %v767, 6
        %v1467 = vperm.slane %v767, 7
        %v1468 = vperm.slane %v768, 0
        %v1469 = vperm.slane %v768, 1
        %v1470 = vperm.slane %v768, 2
        %v1471 = vperm.slane %v768, 3
        %v1472 = vperm.slane %v768, 4
        %v1473 = vperm.slane %v768, 5
        %v1474 = vperm.slane %v768, 6
        %v1475 = vperm.slane %v768, 7
        %v1476 = vperm.slane %v769, 0
        %v1477 = vperm.slane %v769, 1
        %v1478 = vperm.slane %v769, 2
        %v1479 = vperm.slane %v769, 3
        %v1480 = vperm.slane %v769, 4
        %v1481 = vperm.slane %v769, 5
        %v1482 = vperm.slane %v769, 6
        %v1483 = vperm.slane %v769, 7
        %v1484 = vperm.slane %v770, 0
        %v1485 = vperm.slane %v770, 1
        %v1486 = vperm.slane %v770, 2
        %v1487 = vperm.slane %v770, 3
        %v1488 = vperm.slane %v770, 4
        %v1489 = vperm.slane %v770, 5
        %v1490 = vperm.slane %v770, 6
        %v1491 = vperm.slane %v770, 7
        %v1492 = vperm.slane %v771, 0
        %v1493 = vperm.slane %v771, 1
        %v1494 = vperm.slane %v771, 2
        %v1495 = vperm.slane %v771, 3
        %v1496 = vperm.slane %v771, 4
        %v1497 = vperm.slane %v771, 5
        %v1498 = vperm.slane %v771, 6
        %v1499 = vperm.slane %v771, 7
        %v1500 = vperm.slane %v772, 0
        %v1501 = vperm.slane %v772, 1
        %v1502 = vperm.slane %v772, 2
        %v1503 = vperm.slane %v772, 3
        %v1504 = vperm.slane %v772, 4
        %v1505 = vperm.slane %v772, 5
        %v1506 = vperm.slane %v772, 6
        %v1507 = vperm.slane %v772, 7
        %v1508 = vperm.slane %v773, 0
        %v1509 = vperm.slane %v773, 1
        %v1510 = vperm.slane %v773, 2
        %v1511 = vperm.slane %v773, 3
        %v1512 = vperm.slane %v773, 4
        %v1513 = vperm.slane %v773, 5
        %v1514 = vperm.slane %v773, 6
        %v1515 = vperm.slane %v773, 7
        %v1516 = vperm.slane %v774, 0
        %v1517 = vperm.slane %v774, 1
        %v1518 = vperm.slane %v774, 2
        %v1519 = vperm.slane %v774, 3
        %v1520 = vperm.slane %v774, 4
        %v1521 = vperm.slane %v774, 5
        %v1522 = vperm.slane %v774, 6
        %v1523 = vperm.slane %v774, 7
        %v1524 = vperm.slane %v775, 0
        %v1525 = vperm.slane %v775, 1
        %v1526 = vperm.slane %v775, 2
        %v1527 = vperm.slane %v775, 3
        %v1528 = vperm.slane %v775, 4
        %v1529 = vperm.slane %v775, 5
        %v1530 = vperm.slane %v775, 6
        %v1531 = vperm.slane %v775, 7
        %v1532 = vperm.slane %v776, 0
        %v1533 = vperm.slane %v776, 1
        %v1534 = vperm.slane %v776, 2
        %v1535 = vperm.slane %v776, 3
        %v1536 = vperm.slane %v776, 4
        %v1537 = vperm.slane %v776, 5
        %v1538 = vperm.slane %v776, 6
        %v1539 = vperm.slane %v776, 7
        %v1540 = vperm.slane %v777, 0
        %v1541 = vperm.slane %v777, 1
        %v1542 = vperm.slane %v777, 2
        %v1543 = vperm.slane %v777, 3
        %v1544 = vperm.slane %v777, 4
        %v1545 = vperm.slane %v777, 5
        %v1546 = vperm.slane %v777, 6
        %v1547 = vperm.slane %v777, 7
        %v1548 = vperm.slane %v778, 0
        %v1549 = vperm.slane %v778, 1
        %v1550 = vperm.slane %v778, 2
        %v1551 = vperm.slane %v778, 3
        %v1552 = vperm.slane %v778, 4
        %v1553 = vperm.slane %v778, 5
        %v1554 = vperm.slane %v778, 6
        %v1555 = vperm.slane %v778, 7
        %v1556 = vperm.slane %v779, 0
        %v1557 = vperm.slane %v779, 1
        %v1558 = vperm.slane %v779, 2
        %v1559 = vperm.slane %v779, 3
        %v1560 = vperm.slane %v779, 4
        %v1561 = vperm.slane %v779, 5
        %v1562 = vperm.slane %v779, 6
        %v1563 = vperm.slane %v779, 7
        %v1564 = vperm.slane %v780, 0
        %v1565 = vperm.slane %v780, 1
        %v1566 = vperm.slane %v780, 2
        %v1567 = vperm.slane %v780, 3
        %v1568 = vperm.slane %v780, 4
        %v1569 = vperm.slane %v780, 5
        %v1570 = vperm.slane %v780, 6
        %v1571 = vperm.slane %v780, 7
        %v1572 = vperm.slane %v781, 0
        %v1573 = vperm.slane %v781, 1
        %v1574 = vperm.slane %v781, 2
        %v1575 = vperm.slane %v781, 3
        %v1576 = vperm.slane %v781, 4
        %v1577 = vperm.slane %v781, 5
        %v1578 = vperm.slane %v781, 6
        %v1579 = vperm.slane %v781, 7
        %v1580 = vperm.slane %v782, 0
        %v1581 = vperm.slane %v782, 1
        %v1582 = vperm.slane %v782, 2
        %v1583 = vperm.slane %v782, 3
        %v1584 = vperm.slane %v782, 4
        %v1585 = vperm.slane %v782, 5
        %v1586 = vperm.slane %v782, 6
        %v1587 = vperm.slane %v782, 7
        %v1588 = vperm.slane %v783, 0
        %v1589 = vperm.slane %v783, 1
        %v1590 = vperm.slane %v783, 2
        %v1591 = vperm.slane %v783, 3
        %v1592 = vperm.slane %v783, 4
        %v1593 = vperm.slane %v783, 5
        %v1594 = vperm.slane %v783, 6
        %v1595 = vperm.slane %v783, 7
        %v1596 = vperm.slane %v784, 0
        %v1597 = vperm.slane %v784, 1
        %v1598 = vperm.slane %v784, 2
        %v1599 = vperm.slane %v784, 3
        %v1600 = vperm.slane %v784, 4
        %v1601 = vperm.slane %v784, 5
        %v1602 = vperm.slane %v784, 6
        %v1603 = vperm.slane %v784, 7
        %v1604 = vperm.slane %v785, 0
        %v1605 = vperm.slane %v785, 1
        %v1606 = vperm.slane %v785, 2
        %v1607 = vperm.slane %v785, 3
        %v1608 = vperm.slane %v785, 4
        %v1609 = vperm.slane %v785, 5
        %v1610 = vperm.slane %v785, 6
        %v1611 = vperm.slane %v785, 7
        %v1612 = vperm.slane %v786, 0
        %v1613 = vperm.slane %v786, 1
        %v1614 = vperm.slane %v786, 2
        %v1615 = vperm.slane %v786, 3
        %v1616 = vperm.slane %v786, 4
        %v1617 = vperm.slane %v786, 5
        %v1618 = vperm.slane %v786, 6
        %v1619 = vperm.slane %v786, 7
        %v1620 = vperm.slane %v787, 0
        %v1621 = vperm.slane %v787, 1
        %v1622 = vperm.slane %v787, 2
        %v1623 = vperm.slane %v787, 3
        %v1624 = vperm.slane %v787, 4
        %v1625 = vperm.slane %v787, 5
        %v1626 = vperm.slane %v787, 6
        %v1627 = vperm.slane %v787, 7
        %v1628 = vperm.slane %v788, 0
        %v1629 = vperm.slane %v788, 1
        %v1630 = vperm.slane %v788, 2
        %v1631 = vperm.slane %v788, 3
        %v1632 = vperm.slane %v788, 4
        %v1633 = vperm.slane %v788, 5
        %v1634 = vperm.slane %v788, 6
        %v1635 = vperm.slane %v788, 7
        %v1636 = vperm.slane %v789, 0
        %v1637 = vperm.slane %v789, 1
        %v1638 = vperm.slane %v789, 2
        %v1639 = vperm.slane %v789, 3
        %v1640 = vperm.slane %v789, 4
        %v1641 = vperm.slane %v789, 5
        %v1642 = vperm.slane %v789, 6
        %v1643 = vperm.slane %v789, 7
        %v1644 = vperm.slane %v790, 0
        %v1645 = vperm.slane %v790, 1
        %v1646 = vperm.slane %v790, 2
        %v1647 = vperm.slane %v790, 3
        %v1648 = vperm.slane %v790, 4
        %v1649 = vperm.slane %v790, 5
        %v1650 = vperm.slane %v790, 6
        %v1651 = vperm.slane %v790, 7
        %v1652 = vperm.slane %v791, 0
        %v1653 = vperm.slane %v791, 1
        %v1654 = vperm.slane %v791, 2
        %v1655 = vperm.slane %v791, 3
        %v1656 = vperm.slane %v791, 4
        %v1657 = vperm.slane %v791, 5
        %v1658 = vperm.slane %v791, 6
        %v1659 = vperm.slane %v791, 7
        %v1660 = vperm.slane %v792, 0
        %v1661 = vperm.slane %v792, 1
        %v1662 = vperm.slane %v792, 2
        %v1663 = vperm.slane %v792, 3
        %v1664 = vperm.slane %v792, 4
        %v1665 = vperm.slane %v792, 5
        %v1666 = vperm.slane %v792, 6
        %v1667 = vperm.slane %v792, 7
        %v1668 = vperm.slane %v793, 0
        %v1669 = vperm.slane %v793, 1
        %v1670 = vperm.slane %v793, 2
        %v1671 = vperm.slane %v793, 3
        %v1672 = vperm.slane %v793, 4
        %v1673 = vperm.slane %v793, 5
        %v1674 = vperm.slane %v793, 6
        %v1675 = vperm.slane %v793, 7
        %v1676 = vperm.slane %v794, 0
        %v1677 = vperm.slane %v794, 1
        %v1678 = vperm.slane %v794, 2
        %v1679 = vperm.slane %v794, 3
        %v1680 = vperm.slane %v794, 4
        %v1681 = vperm.slane %v794, 5
        %v1682 = vperm.slane %v794, 6
        %v1683 = vperm.slane %v794, 7
        %v1684 = vperm.slane %v795, 0
        %v1685 = vperm.slane %v795, 1
        %v1686 = vperm.slane %v795, 2
        %v1687 = vperm.slane %v795, 3
        %v1688 = vperm.slane %v795, 4
        %v1689 = vperm.slane %v795, 5
        %v1690 = vperm.slane %v795, 6
        %v1691 = vperm.slane %v795, 7
        %v1692 = vperm.slane %v796, 0
        %v1693 = vperm.slane %v796, 1
        %v1694 = vperm.slane %v796, 2
        %v1695 = vperm.slane %v796, 3
        %v1696 = vperm.slane %v796, 4
        %v1697 = vperm.slane %v796, 5
        %v1698 = vperm.slane %v796, 6
        %v1699 = vperm.slane %v796, 7
        %v1700 = vperm.slane %v797, 0
        %v1701 = vperm.slane %v797, 1
        %v1702 = vperm.slane %v797, 2
        %v1703 = vperm.slane %v797, 3
        %v1704 = vperm.slane %v797, 4
        %v1705 = vperm.slane %v797, 5
        %v1706 = vperm.slane %v797, 6
        %v1707 = vperm.slane %v797, 7
        %v1708 = vperm.slane %v798, 0
        %v1709 = vperm.slane %v798, 1
        %v1710 = vperm.slane %v798, 2
        %v1711 = vperm.slane %v798, 3
        %v1712 = vperm.slane %v798, 4
        %v1713 = vperm.slane %v798, 5
        %v1714 = vperm.slane %v798, 6
        %v1715 = vperm.slane %v798, 7
        %v1716 = vperm.slane %v799, 0
        %v1717 = vperm.slane %v799, 1
        %v1718 = vperm.slane %v799, 2
        %v1719 = vperm.slane %v799, 3
        %v1720 = vperm.slane %v799, 4
        %v1721 = vperm.slane %v799, 5
        %v1722 = vperm.slane %v799, 6
        %v1723 = vperm.slane %v799, 7
        %v1724 = vperm.slane %v800, 0
        %v1725 = vperm.slane %v800, 1
        %v1726 = vperm.slane %v800, 2
        %v1727 = vperm.slane %v800, 3
        %v1728 = vperm.slane %v800, 4
        %v1729 = vperm.slane %v800, 5
        %v1730 = vperm.slane %v800, 6
        %v1731 = vperm.slane %v800, 7
        %v1732 = vperm.slane %v801, 0
        %v1733 = vperm.slane %v801, 1
        %v1734 = vperm.slane %v801, 2
        %v1735 = vperm.slane %v801, 3
        %v1736 = vperm.slane %v801, 4
        %v1737 = vperm.slane %v801, 5
        %v1738 = vperm.slane %v801, 6
        %v1739 = vperm.slane %v801, 7
        %v1740 = vperm.slane %v802, 0
        %v1741 = vperm.slane %v802, 1
        %v1742 = vperm.slane %v802, 2
        %v1743 = vperm.slane %v802, 3
        %v1744 = vperm.slane %v802, 4
        %v1745 = vperm.slane %v802, 5
        %v1746 = vperm.slane %v802, 6
        %v1747 = vperm.slane %v802, 7
        %v1748 = vperm.slane %v803, 0
        %v1749 = vperm.slane %v803, 1
        %v1750 = vperm.slane %v803, 2
        %v1751 = vperm.slane %v803, 3
        %v1752 = vperm.slane %v803, 4
        %v1753 = vperm.slane %v803, 5
        %v1754 = vperm.slane %v803, 6
        %v1755 = vperm.slane %v803, 7
        %v1756 = vperm.slane %v804, 0
        %v1757 = vperm.slane %v804, 1
        %v1758 = vperm.slane %v804, 2
        %v1759 = vperm.slane %v804, 3
        %v1760 = vperm.slane %v804, 4
        %v1761 = vperm.slane %v804, 5
        %v1762 = vperm.slane %v804, 6
        %v1763 = vperm.slane %v804, 7
        %v1764 = vperm.slane %v805, 0
        %v1765 = vperm.slane %v805, 1
        %v1766 = vperm.slane %v805, 2
        %v1767 = vperm.slane %v805, 3
        %v1768 = vperm.slane %v805, 4
        %v1769 = vperm.slane %v805, 5
        %v1770 = vperm.slane %v805, 6
        %v1771 = vperm.slane %v805, 7
        %v1772 = vperm.slane %v806, 0
        %v1773 = vperm.slane %v806, 1
        %v1774 = vperm.slane %v806, 2
        %v1775 = vperm.slane %v806, 3
        %v1776 = vperm.slane %v806, 4
        %v1777 = vperm.slane %v806, 5
        %v1778 = vperm.slane %v806, 6
        %v1779 = vperm.slane %v806, 7
        %v1780 = vperm.slane %v807, 0
        %v1781 = vperm.slane %v807, 1
        %v1782 = vperm.slane %v807, 2
        %v1783 = vperm.slane %v807, 3
        %v1784 = vperm.slane %v807, 4
        %v1785 = vperm.slane %v807, 5
        %v1786 = vperm.slane %v807, 6
        %v1787 = vperm.slane %v807, 7
        %v1788 = vperm.slane %v808, 0
        %v1789 = vperm.slane %v808, 1
        %v1790 = vperm.slane %v808, 2
        %v1791 = vperm.slane %v808, 3
        %v1792 = vperm.slane %v808, 4
        %v1793 = vperm.slane %v808, 5
        %v1794 = vperm.slane %v808, 6
        %v1795 = vperm.slane %v808, 7
        %v1796 = vperm.slane %v809, 0
        %v1797 = vperm.slane %v809, 1
        %v1798 = vperm.slane %v809, 2
        %v1799 = vperm.slane %v809, 3
        %v1800 = vperm.slane %v809, 4
        %v1801 = vperm.slane %v809, 5
        %v1802 = vperm.slane %v809, 6
        %v1803 = vperm.slane %v809, 7
        %v1804 = vperm.slane %v810, 0
        %v1805 = vperm.slane %v810, 1
        %v1806 = vperm.slane %v810, 2
        %v1807 = vperm.slane %v810, 3
        %v1808 = vperm.slane %v810, 4
        %v1809 = vperm.slane %v810, 5
        %v1810 = vperm.slane %v810, 6
        %v1811 = vperm.slane %v810, 7
        %v1812 = vperm.slane %v811, 0
        %v1813 = vperm.slane %v811, 1
        %v1814 = vperm.slane %v811, 2
        %v1815 = vperm.slane %v811, 3
        %v1816 = vperm.slane %v811, 4
        %v1817 = vperm.slane %v811, 5
        %v1818 = vperm.slane %v811, 6
        %v1819 = vperm.slane %v811, 7
        %1820 = vst [vmem:[#allocation1] ss:$9 sm:$0xff] %v924
        %s1821 = scalar_lea.vmem [#allocation1], 1
        %1822 = vst [vmem:[%s1821] ss:$9 sm:$0xff] %v925
        %s1823 = scalar_lea.vmem [#allocation1], 2
        %1824 = vst [vmem:[%s1823] ss:$9 sm:$0xff] %v926
        %s1825 = scalar_lea.vmem [#allocation1], 3
        %1826 = vst [vmem:[%s1825] ss:$9 sm:$0xff] %v927
        %s1827 = scalar_lea.vmem [#allocation1], 4
        %1828 = vst [vmem:[%s1827] ss:$9 sm:$0xff] %v928
        %s1829 = scalar_lea.vmem [#allocation1], 5
        %1830 = vst [vmem:[%s1829] ss:$9 sm:$0xff] %v929
        %s1831 = scalar_lea.vmem [#allocation1], 6
        %1832 = vst [vmem:[%s1831] ss:$9 sm:$0xff] %v930
        %s1833 = scalar_lea.vmem [#allocation1], 7
        %1834 = vst [vmem:[%s1833] ss:$9 sm:$0xff] %v931
        %v1835 = vld [vmem:[#allocation1] sm:$0xff]
        %1836 = vst [vmem:[#allocation1] ss:$9 sm:$0xff] %v932
        %1837 = vst [vmem:[%s1821] ss:$9 sm:$0xff] %v933
        %1838 = vst [vmem:[%s1823] ss:$9 sm:$0xff] %v934
        %1839 = vst [vmem:[%s1825] ss:$9 sm:$0xff] %v935
        %1840 = vst [vmem:[%s1827] ss:$9 sm:$0xff] %v936
        %1841 = vst [vmem:[%s1829] ss:$9 sm:$0xff] %v937
        %1842 = vst [vmem:[%s1831] ss:$9 sm:$0xff] %v938
        %1843 = vst [vmem:[%s1833] ss:$9 sm:$0xff] %v939
        %v1844 = vld [vmem:[#allocation1] sm:$0xff]
        %1845 = vst [vmem:[#allocation1] ss:$9 sm:$0xff] %v940
        %1846 = vst [vmem:[%s1821] ss:$9 sm:$0xff] %v941
        %1847 = vst [vmem:[%s1823] ss:$9 sm:$0xff] %v942
        %1848 = vst [vmem:[%s1825] ss:$9 sm:$0xff] %v943
        %1849 = vst [vmem:[%s1827] ss:$9 sm:$0xff] %v944
        %1850 = vst [vmem:[%s1829] ss:$9 sm:$0xff] %v945
        %1851 = vst [vmem:[%s1831] ss:$9 sm:$0xff] %v946
        %1852 = vst [vmem:[%s1833] ss:$9 sm:$0xff] %v947
        %v1853 = vld [vmem:[#allocation1] sm:$0xff]
        %1854 = vst [vmem:[#allocation1] ss:$9 sm:$0xff] %v948
        %1855 = vst [vmem:[%s1821] ss:$9 sm:$0xff] %v949
        %1856 = vst [vmem:[%s1823] ss:$9 sm:$0xff] %v950
        %1857 = vst [vmem:[%s1825] ss:$9 sm:$0xff] %v951
        %1858 = vst [vmem:[%s1827] ss:$9 sm:$0xff] %v952
        %1859 = vst [vmem:[%s1829] ss:$9 sm:$0xff] %v953
        %1860 = vst [vmem:[%s1831] ss:$9 sm:$0xff] %v954
        %1861 = vst [vmem:[%s1833] ss:$9 sm:$0xff] %v955
        %v1862 = vld [vmem:[#allocation1] sm:$0xff]
        %1863 = vst [vmem:[#allocation1] ss:$9 sm:$0xff] %v956
        %1864 = vst [vmem:[%s1821] ss:$9 sm:$0xff] %v957
        %1865 = vst [vmem:[%s1823] ss:$9 sm:$0xff] %v958
        %1866 = vst [vmem:[%s1825] ss:$9 sm:$0xff] %v959
        %1867 = vst [vmem:[%s1827] ss:$9 sm:$0xff] %v960
        %1868 = vst [vmem:[%s1829] ss:$9 sm:$0xff] %v961
        %1869 = vst [vmem:[%s1831] ss:$9 sm:$0xff] %v962
        %1870 = vst [vmem:[%s1833] ss:$9 sm:$0xff] %v963
        %v1871 = vld [vmem:[#allocation1] sm:$0xff]
        %1872 = vst [vmem:[#allocation1] ss:$9 sm:$0xff] %v964
        %1873 = vst [vmem:[%s1821] ss:$9 sm:$0xff] %v965
        %1874 = vst [vmem:[%s1823] ss:$9 sm:$0xff] %v966
        %1875 = vst [vmem:[%s1825] ss:$9 sm:$0xff] %v967
        %1876 = vst [vmem:[%s1827] ss:$9 sm:$0xff] %v968
        %1877 = vst [vmem:[%s1829] ss:$9 sm:$0xff] %v969
        %1878 = vst [vmem:[%s1831] ss:$9 sm:$0xff] %v970
        %1879 = vst [vmem:[%s1833] ss:$9 sm:$0xff] %v971
        %v1880 = vld [vmem:[#allocation1] sm:$0xff]
        %1881 = vst [vmem:[#allocation1] ss:$9 sm:$0xff] %v972
        %1882 = vst [vmem:[%s1821] ss:$9 sm:$0xff] %v973
        %1883 = vst [vmem:[%s1823] ss:$9 sm:$0xff] %v974
        %1884 = vst [vmem:[%s1825] ss:$9 sm:$0xff] %v975
        %1885 = vst [vmem:[%s1827] ss:$9 sm:$0xff] %v976
        %1886 = vst [vmem:[%s1829] ss:$9 sm:$0xff] %v977
        %1887 = vst [vmem:[%s1831] ss:$9 sm:$0xff] %v978
        %1888 = vst [vmem:[%s1833] ss:$9 sm:$0xff] %v979
        %v1889 = vld [vmem:[#allocation1] sm:$0xff]
        %1890 = vst [vmem:[#allocation1] ss:$9 sm:$0xff] %v980
        %1891 = vst [vmem:[%s1821] ss:$9 sm:$0xff] %v981
        %1892 = vst [vmem:[%s1823] ss:$9 sm:$0xff] %v982
        %1893 = vst [vmem:[%s1825] ss:$9 sm:$0xff] %v983
        %1894 = vst [vmem:[%s1827] ss:$9 sm:$0xff] %v984
        %1895 = vst [vmem:[%s1829] ss:$9 sm:$0xff] %v985
        %1896 = vst [vmem:[%s1831] ss:$9 sm:$0xff] %v986
        %1897 = vst [vmem:[%s1833] ss:$9 sm:$0xff] %v987
        %v1898 = vld [vmem:[#allocation1] sm:$0xff]
        %1899 = vst [vmem:[#allocation1] ss:$9 sm:$0xff] %v988
        %1900 = vst [vmem:[%s1821] ss:$9 sm:$0xff] %v989
        %1901 = vst [vmem:[%s1823] ss:$9 sm:$0xff] %v990
        %1902 = vst [vmem:[%s1825] ss:$9 sm:$0xff] %v991
        %1903 = vst [vmem:[%s1827] ss:$9 sm:$0xff] %v992
        %1904 = vst [vmem:[%s1829] ss:$9 sm:$0xff] %v993
        %1905 = vst [vmem:[%s1831] ss:$9 sm:$0xff] %v994
        %1906 = vst [vmem:[%s1833] ss:$9 sm:$0xff] %v995
        %v1907 = vld [vmem:[#allocation1] sm:$0xff]
        %1908 = vst [vmem:[#allocation1] ss:$9 sm:$0xff] %v996
        %1909 = vst [vmem:[%s1821] ss:$9 sm:$0xff] %v997
        %1910 = vst [vmem:[%s1823] ss:$9 sm:$0xff] %v998
        %1911 = vst [vmem:[%s1825] ss:$9 sm:$0xff] %v999
        %1912 = vst [vmem:[%s1827] ss:$9 sm:$0xff] %v1000
        %1913 = vst [vmem:[%s1829] ss:$9 sm:$0xff] %v1001
        %1914 = vst [vmem:[%s1831] ss:$9 sm:$0xff] %v1002
        %1915 = vst [vmem:[%s1833] ss:$9 sm:$0xff] %v1003
        %v1916 = vld [vmem:[#allocation1] sm:$0xff]
        %1917 = vst [vmem:[#allocation1] ss:$9 sm:$0xff] %v1004
        %1918 = vst [vmem:[%s1821] ss:$9 sm:$0xff] %v1005
        %1919 = vst [vmem:[%s1823] ss:$9 sm:$0xff] %v1006
        %1920 = vst [vmem:[%s1825] ss:$9 sm:$0xff] %v1007
        %1921 = vst [vmem:[%s1827] ss:$9 sm:$0xff] %v1008
        %1922 = vst [vmem:[%s1829] ss:$9 sm:$0xff] %v1009
        %1923 = vst [vmem:[%s1831] ss:$9 sm:$0xff] %v1010
        %1924 = vst [vmem:[%s1833] ss:$9 sm:$0xff] %v1011
        %v1925 = vld [vmem:[#allocation1] sm:$0xff]
        %1926 = vst [vmem:[#allocation1] ss:$9 sm:$0xff] %v1012
        %1927 = vst [vmem:[%s1821] ss:$9 sm:$0xff] %v1013
        %1928 = vst [vmem:[%s1823] ss:$9 sm:$0xff] %v1014
        %1929 = vst [vmem:[%s1825] ss:$9 sm:$0xff] %v1015
        %1930 = vst [vmem:[%s1827] ss:$9 sm:$0xff] %v1016
        %1931 = vst [vmem:[%s1829] ss:$9 sm:$0xff] %v1017
        %1932 = vst [vmem:[%s1831] ss:$9 sm:$0xff] %v1018
        %1933 = vst [vmem:[%s1833] ss:$9 sm:$0xff] %v1019
        %v1934 = vld [vmem:[#allocation1] sm:$0xff]
        %1935 = vst [vmem:[#allocation1] ss:$9 sm:$0xff] %v1020
        %1936 = vst [vmem:[%s1821] ss:$9 sm:$0xff] %v1021
        %1937 = vst [vmem:[%s1823] ss:$9 sm:$0xff] %v1022
        %1938 = vst [vmem:[%s1825] ss:$9 sm:$0xff] %v1023
        %1939 = vst [vmem:[%s1827] ss:$9 sm:$0xff] %v1024
        %1940 = vst [vmem:[%s1829] ss:$9 sm:$0xff] %v1025
        %1941 = vst [vmem:[%s1831] ss:$9 sm:$0xff] %v1026
        %1942 = vst [vmem:[%s1833] ss:$9 sm:$0xff] %v1027
        %v1943 = vld [vmem:[#allocation1] sm:$0xff]
        %1944 = vst [vmem:[#allocation1] ss:$9 sm:$0xff] %v1028
        %1945 = vst [vmem:[%s1821] ss:$9 sm:$0xff] %v1029
        %1946 = vst [vmem:[%s1823] ss:$9 sm:$0xff] %v1030
        %1947 = vst [vmem:[%s1825] ss:$9 sm:$0xff] %v1031
        %1948 = vst [vmem:[%s1827] ss:$9 sm:$0xff] %v1032
        %1949 = vst [vmem:[%s1829] ss:$9 sm:$0xff] %v1033
        %1950 = vst [vmem:[%s1831] ss:$9 sm:$0xff] %v1034
        %1951 = vst [vmem:[%s1833] ss:$9 sm:$0xff] %v1035
        %v1952 = vld [vmem:[#allocation1] sm:$0xff]
        %1953 = vst [vmem:[#allocation1] ss:$9 sm:$0xff] %v1036
        %1954 = vst [vmem:[%s1821] ss:$9 sm:$0xff] %v1037
        %1955 = vst [vmem:[%s1823] ss:$9 sm:$0xff] %v1038
        %1956 = vst [vmem:[%s1825] ss:$9 sm:$0xff] %v1039
        %1957 = vst [vmem:[%s1827] ss:$9 sm:$0xff] %v1040
        %1958 = vst [vmem:[%s1829] ss:$9 sm:$0xff] %v1041
        %1959 = vst [vmem:[%s1831] ss:$9 sm:$0xff] %v1042
        %1960 = vst [vmem:[%s1833] ss:$9 sm:$0xff] %v1043
        %v1961 = vld [vmem:[#allocation1] sm:$0xff]
        %1962 = vst [vmem:[#allocation1] ss:$9 sm:$0xff] %v1044
        %1963 = vst [vmem:[%s1821] ss:$9 sm:$0xff] %v1045
        %1964 = vst [vmem:[%s1823] ss:$9 sm:$0xff] %v1046
        %1965 = vst [vmem:[%s1825] ss:$9 sm:$0xff] %v1047
        %1966 = vst [vmem:[%s1827] ss:$9 sm:$0xff] %v1048
        %1967 = vst [vmem:[%s1829] ss:$9 sm:$0xff] %v1049
        %1968 = vst [vmem:[%s1831] ss:$9 sm:$0xff] %v1050
        %1969 = vst [vmem:[%s1833] ss:$9 sm:$0xff] %v1051
        %v1970 = vld [vmem:[#allocation1] sm:$0xff]
        %1971 = vst [vmem:[#allocation1] ss:$9 sm:$0xff] %v1052
        %1972 = vst [vmem:[%s1821] ss:$9 sm:$0xff] %v1053
        %1973 = vst [vmem:[%s1823] ss:$9 sm:$0xff] %v1054
        %1974 = vst [vmem:[%s1825] ss:$9 sm:$0xff] %v1055
        %1975 = vst [vmem:[%s1827] ss:$9 sm:$0xff] %v1056
        %1976 = vst [vmem:[%s1829] ss:$9 sm:$0xff] %v1057
        %1977 = vst [vmem:[%s1831] ss:$9 sm:$0xff] %v1058
        %1978 = vst [vmem:[%s1833] ss:$9 sm:$0xff] %v1059
        %v1979 = vld [vmem:[#allocation1] sm:$0xff]
        %1980 = vst [vmem:[#allocation1] ss:$9 sm:$0xff] %v1060
        %1981 = vst [vmem:[%s1821] ss:$9 sm:$0xff] %v1061
        %1982 = vst [vmem:[%s1823] ss:$9 sm:$0xff] %v1062
        %1983 = vst [vmem:[%s1825] ss:$9 sm:$0xff] %v1063
        %1984 = vst [vmem:[%s1827] ss:$9 sm:$0xff] %v1064
        %1985 = vst [vmem:[%s1829] ss:$9 sm:$0xff] %v1065
        %1986 = vst [vmem:[%s1831] ss:$9 sm:$0xff] %v1066
        %1987 = vst [vmem:[%s1833] ss:$9 sm:$0xff] %v1067
        %v1988 = vld [vmem:[#allocation1] sm:$0xff]
        %1989 = vst [vmem:[#allocation1] ss:$9 sm:$0xff] %v1068
        %1990 = vst [vmem:[%s1821] ss:$9 sm:$0xff] %v1069
        %1991 = vst [vmem:[%s1823] ss:$9 sm:$0xff] %v1070
        %1992 = vst [vmem:[%s1825] ss:$9 sm:$0xff] %v1071
        %1993 = vst [vmem:[%s1827] ss:$9 sm:$0xff] %v1072
        %1994 = vst [vmem:[%s1829] ss:$9 sm:$0xff] %v1073
        %1995 = vst [vmem:[%s1831] ss:$9 sm:$0xff] %v1074
        %1996 = vst [vmem:[%s1833] ss:$9 sm:$0xff] %v1075
        %v1997 = vld [vmem:[#allocation1] sm:$0xff]
        %1998 = vst [vmem:[#allocation1] ss:$9 sm:$0xff] %v1076
        %1999 = vst [vmem:[%s1821] ss:$9 sm:$0xff] %v1077
        %2000 = vst [vmem:[%s1823] ss:$9 sm:$0xff] %v1078
        %2001 = vst [vmem:[%s1825] ss:$9 sm:$0xff] %v1079
        %2002 = vst [vmem:[%s1827] ss:$9 sm:$0xff] %v1080
        %2003 = vst [vmem:[%s1829] ss:$9 sm:$0xff] %v1081
        %2004 = vst [vmem:[%s1831] ss:$9 sm:$0xff] %v1082
        %2005 = vst [vmem:[%s1833] ss:$9 sm:$0xff] %v1083
        %v2006 = vld [vmem:[#allocation1] sm:$0xff]
        %2007 = vst [vmem:[#allocation1] ss:$9 sm:$0xff] %v1084
        %2008 = vst [vmem:[%s1821] ss:$9 sm:$0xff] %v1085
        %2009 = vst [vmem:[%s1823] ss:$9 sm:$0xff] %v1086
        %2010 = vst [vmem:[%s1825] ss:$9 sm:$0xff] %v1087
        %2011 = vst [vmem:[%s1827] ss:$9 sm:$0xff] %v1088
        %2012 = vst [vmem:[%s1829] ss:$9 sm:$0xff] %v1089
        %2013 = vst [vmem:[%s1831] ss:$9 sm:$0xff] %v1090
        %2014 = vst [vmem:[%s1833] ss:$9 sm:$0xff] %v1091
        %v2015 = vld [vmem:[#allocation1] sm:$0xff]
        %2016 = vst [vmem:[#allocation1] ss:$9 sm:$0xff] %v1092
        %2017 = vst [vmem:[%s1821] ss:$9 sm:$0xff] %v1093
        %2018 = vst [vmem:[%s1823] ss:$9 sm:$0xff] %v1094
        %2019 = vst [vmem:[%s1825] ss:$9 sm:$0xff] %v1095
        %2020 = vst [vmem:[%s1827] ss:$9 sm:$0xff] %v1096
        %2021 = vst [vmem:[%s1829] ss:$9 sm:$0xff] %v1097
        %2022 = vst [vmem:[%s1831] ss:$9 sm:$0xff] %v1098
        %2023 = vst [vmem:[%s1833] ss:$9 sm:$0xff] %v1099
        %v2024 = vld [vmem:[#allocation1] sm:$0xff]
        %2025 = vst [vmem:[#allocation1] ss:$9 sm:$0xff] %v1100
        %2026 = vst [vmem:[%s1821] ss:$9 sm:$0xff] %v1101
        %2027 = vst [vmem:[%s1823] ss:$9 sm:$0xff] %v1102
        %2028 = vst [vmem:[%s1825] ss:$9 sm:$0xff] %v1103
        %2029 = vst [vmem:[%s1827] ss:$9 sm:$0xff] %v1104
        %2030 = vst [vmem:[%s1829] ss:$9 sm:$0xff] %v1105
        %2031 = vst [vmem:[%s1831] ss:$9 sm:$0xff] %v1106
        %2032 = vst [vmem:[%s1833] ss:$9 sm:$0xff] %v1107
        %v2033 = vld [vmem:[#allocation1] sm:$0xff]
        %2034 = vst [vmem:[#allocation1] ss:$9 sm:$0xff] %v1108
        %2035 = vst [vmem:[%s1821] ss:$9 sm:$0xff] %v1109
        %2036 = vst [vmem:[%s1823] ss:$9 sm:$0xff] %v1110
        %2037 = vst [vmem:[%s1825] ss:$9 sm:$0xff] %v1111
        %2038 = vst [vmem:[%s1827] ss:$9 sm:$0xff] %v1112
        %2039 = vst [vmem:[%s1829] ss:$9 sm:$0xff] %v1113
        %2040 = vst [vmem:[%s1831] ss:$9 sm:$0xff] %v1114
        %2041 = vst [vmem:[%s1833] ss:$9 sm:$0xff] %v1115
        %v2042 = vld [vmem:[#allocation1] sm:$0xff]
        %2043 = vst [vmem:[#allocation1] ss:$9 sm:$0xff] %v1116
        %2044 = vst [vmem:[%s1821] ss:$9 sm:$0xff] %v1117
        %2045 = vst [vmem:[%s1823] ss:$9 sm:$0xff] %v1118
        %2046 = vst [vmem:[%s1825] ss:$9 sm:$0xff] %v1119
        %2047 = vst [vmem:[%s1827] ss:$9 sm:$0xff] %v1120
        %2048 = vst [vmem:[%s1829] ss:$9 sm:$0xff] %v1121
        %2049 = vst [vmem:[%s1831] ss:$9 sm:$0xff] %v1122
        %2050 = vst [vmem:[%s1833] ss:$9 sm:$0xff] %v1123
        %v2051 = vld [vmem:[#allocation1] sm:$0xff]
        %2052 = vst [vmem:[#allocation1] ss:$9 sm:$0xff] %v1124
        %2053 = vst [vmem:[%s1821] ss:$9 sm:$0xff] %v1125
        %2054 = vst [vmem:[%s1823] ss:$9 sm:$0xff] %v1126
        %2055 = vst [vmem:[%s1825] ss:$9 sm:$0xff] %v1127
        %2056 = vst [vmem:[%s1827] ss:$9 sm:$0xff] %v1128
        %2057 = vst [vmem:[%s1829] ss:$9 sm:$0xff] %v1129
        %2058 = vst [vmem:[%s1831] ss:$9 sm:$0xff] %v1130
        %2059 = vst [vmem:[%s1833] ss:$9 sm:$0xff] %v1131
        %v2060 = vld [vmem:[#allocation1] sm:$0xff]
        %2061 = vst [vmem:[#allocation1] ss:$9 sm:$0xff] %v1132
        %2062 = vst [vmem:[%s1821] ss:$9 sm:$0xff] %v1133
        %2063 = vst [vmem:[%s1823] ss:$9 sm:$0xff] %v1134
        %2064 = vst [vmem:[%s1825] ss:$9 sm:$0xff] %v1135
        %2065 = vst [vmem:[%s1827] ss:$9 sm:$0xff] %v1136
        %2066 = vst [vmem:[%s1829] ss:$9 sm:$0xff] %v1137
        %2067 = vst [vmem:[%s1831] ss:$9 sm:$0xff] %v1138
        %2068 = vst [vmem:[%s1833] ss:$9 sm:$0xff] %v1139
        %v2069 = vld [vmem:[#allocation1] sm:$0xff]
        %2070 = vst [vmem:[#allocation1] ss:$9 sm:$0xff] %v1140
        %2071 = vst [vmem:[%s1821] ss:$9 sm:$0xff] %v1141
        %2072 = vst [vmem:[%s1823] ss:$9 sm:$0xff] %v1142
        %2073 = vst [vmem:[%s1825] ss:$9 sm:$0xff] %v1143
        %2074 = vst [vmem:[%s1827] ss:$9 sm:$0xff] %v1144
        %2075 = vst [vmem:[%s1829] ss:$9 sm:$0xff] %v1145
        %2076 = vst [vmem:[%s1831] ss:$9 sm:$0xff] %v1146
        %2077 = vst [vmem:[%s1833] ss:$9 sm:$0xff] %v1147
        %v2078 = vld [vmem:[#allocation1] sm:$0xff]
        %2079 = vst [vmem:[#allocation1] ss:$9 sm:$0xff] %v1148
        %2080 = vst [vmem:[%s1821] ss:$9 sm:$0xff] %v1149
        %2081 = vst [vmem:[%s1823] ss:$9 sm:$0xff] %v1150
        %2082 = vst [vmem:[%s1825] ss:$9 sm:$0xff] %v1151
        %2083 = vst [vmem:[%s1827] ss:$9 sm:$0xff] %v1152
        %2084 = vst [vmem:[%s1829] ss:$9 sm:$0xff] %v1153
        %2085 = vst [vmem:[%s1831] ss:$9 sm:$0xff] %v1154
        %2086 = vst [vmem:[%s1833] ss:$9 sm:$0xff] %v1155
        %v2087 = vld [vmem:[#allocation1] sm:$0xff]
        %2088 = vst [vmem:[#allocation1] ss:$9 sm:$0xff] %v1156
        %2089 = vst [vmem:[%s1821] ss:$9 sm:$0xff] %v1157
        %2090 = vst [vmem:[%s1823] ss:$9 sm:$0xff] %v1158
        %2091 = vst [vmem:[%s1825] ss:$9 sm:$0xff] %v1159
        %2092 = vst [vmem:[%s1827] ss:$9 sm:$0xff] %v1160
        %2093 = vst [vmem:[%s1829] ss:$9 sm:$0xff] %v1161
        %2094 = vst [vmem:[%s1831] ss:$9 sm:$0xff] %v1162
        %2095 = vst [vmem:[%s1833] ss:$9 sm:$0xff] %v1163
        %v2096 = vld [vmem:[#allocation1] sm:$0xff]
        %2097 = vst [vmem:[#allocation1] ss:$9 sm:$0xff] %v1164
        %2098 = vst [vmem:[%s1821] ss:$9 sm:$0xff] %v1165
        %2099 = vst [vmem:[%s1823] ss:$9 sm:$0xff] %v1166
        %2100 = vst [vmem:[%s1825] ss:$9 sm:$0xff] %v1167
        %2101 = vst [vmem:[%s1827] ss:$9 sm:$0xff] %v1168
        %2102 = vst [vmem:[%s1829] ss:$9 sm:$0xff] %v1169
        %2103 = vst [vmem:[%s1831] ss:$9 sm:$0xff] %v1170
        %2104 = vst [vmem:[%s1833] ss:$9 sm:$0xff] %v1171
        %v2105 = vld [vmem:[#allocation1] sm:$0xff]
        %2106 = vst [vmem:[#allocation1] ss:$9 sm:$0xff] %v1172
        %2107 = vst [vmem:[%s1821] ss:$9 sm:$0xff] %v1173
        %2108 = vst [vmem:[%s1823] ss:$9 sm:$0xff] %v1174
        %2109 = vst [vmem:[%s1825] ss:$9 sm:$0xff] %v1175
        %2110 = vst [vmem:[%s1827] ss:$9 sm:$0xff] %v1176
        %2111 = vst [vmem:[%s1829] ss:$9 sm:$0xff] %v1177
        %2112 = vst [vmem:[%s1831] ss:$9 sm:$0xff] %v1178
        %2113 = vst [vmem:[%s1833] ss:$9 sm:$0xff] %v1179
        %v2114 = vld [vmem:[#allocation1] sm:$0xff]
        %2115 = vst [vmem:[#allocation1] ss:$9 sm:$0xff] %v1180
        %2116 = vst [vmem:[%s1821] ss:$9 sm:$0xff] %v1181
        %2117 = vst [vmem:[%s1823] ss:$9 sm:$0xff] %v1182
        %2118 = vst [vmem:[%s1825] ss:$9 sm:$0xff] %v1183
        %2119 = vst [vmem:[%s1827] ss:$9 sm:$0xff] %v1184
        %2120 = vst [vmem:[%s1829] ss:$9 sm:$0xff] %v1185
        %2121 = vst [vmem:[%s1831] ss:$9 sm:$0xff] %v1186
        %2122 = vst [vmem:[%s1833] ss:$9 sm:$0xff] %v1187
        %v2123 = vld [vmem:[#allocation1] sm:$0xff]
        %2124 = vst [vmem:[#allocation1] ss:$9 sm:$0xff] %v1188
        %2125 = vst [vmem:[%s1821] ss:$9 sm:$0xff] %v1189
        %2126 = vst [vmem:[%s1823] ss:$9 sm:$0xff] %v1190
        %2127 = vst [vmem:[%s1825] ss:$9 sm:$0xff] %v1191
        %2128 = vst [vmem:[%s1827] ss:$9 sm:$0xff] %v1192
        %2129 = vst [vmem:[%s1829] ss:$9 sm:$0xff] %v1193
        %2130 = vst [vmem:[%s1831] ss:$9 sm:$0xff] %v1194
        %2131 = vst [vmem:[%s1833] ss:$9 sm:$0xff] %v1195
        %v2132 = vld [vmem:[#allocation1] sm:$0xff]
        %2133 = vst [vmem:[#allocation1] ss:$9 sm:$0xff] %v1196
        %2134 = vst [vmem:[%s1821] ss:$9 sm:$0xff] %v1197
        %2135 = vst [vmem:[%s1823] ss:$9 sm:$0xff] %v1198
        %2136 = vst [vmem:[%s1825] ss:$9 sm:$0xff] %v1199
        %2137 = vst [vmem:[%s1827] ss:$9 sm:$0xff] %v1200
        %2138 = vst [vmem:[%s1829] ss:$9 sm:$0xff] %v1201
        %2139 = vst [vmem:[%s1831] ss:$9 sm:$0xff] %v1202
        %2140 = vst [vmem:[%s1833] ss:$9 sm:$0xff] %v1203
        %v2141 = vld [vmem:[#allocation1] sm:$0xff]
        %2142 = vst [vmem:[#allocation1] ss:$9 sm:$0xff] %v1204
        %2143 = vst [vmem:[%s1821] ss:$9 sm:$0xff] %v1205
        %2144 = vst [vmem:[%s1823] ss:$9 sm:$0xff] %v1206
        %2145 = vst [vmem:[%s1825] ss:$9 sm:$0xff] %v1207
        %2146 = vst [vmem:[%s1827] ss:$9 sm:$0xff] %v1208
        %2147 = vst [vmem:[%s1829] ss:$9 sm:$0xff] %v1209
        %2148 = vst [vmem:[%s1831] ss:$9 sm:$0xff] %v1210
        %2149 = vst [vmem:[%s1833] ss:$9 sm:$0xff] %v1211
        %v2150 = vld [vmem:[#allocation1] sm:$0xff]
        %2151 = vst [vmem:[#allocation1] ss:$9 sm:$0xff] %v1212
        %2152 = vst [vmem:[%s1821] ss:$9 sm:$0xff] %v1213
        %2153 = vst [vmem:[%s1823] ss:$9 sm:$0xff] %v1214
        %2154 = vst [vmem:[%s1825] ss:$9 sm:$0xff] %v1215
        %2155 = vst [vmem:[%s1827] ss:$9 sm:$0xff] %v1216
        %2156 = vst [vmem:[%s1829] ss:$9 sm:$0xff] %v1217
        %2157 = vst [vmem:[%s1831] ss:$9 sm:$0xff] %v1218
        %2158 = vst [vmem:[%s1833] ss:$9 sm:$0xff] %v1219
        %v2159 = vld [vmem:[#allocation1] sm:$0xff]
        %2160 = vst [vmem:[#allocation1] ss:$9 sm:$0xff] %v1220
        %2161 = vst [vmem:[%s1821] ss:$9 sm:$0xff] %v1221
        %2162 = vst [vmem:[%s1823] ss:$9 sm:$0xff] %v1222
        %2163 = vst [vmem:[%s1825] ss:$9 sm:$0xff] %v1223
        %2164 = vst [vmem:[%s1827] ss:$9 sm:$0xff] %v1224
        %2165 = vst [vmem:[%s1829] ss:$9 sm:$0xff] %v1225
        %2166 = vst [vmem:[%s1831] ss:$9 sm:$0xff] %v1226
        %2167 = vst [vmem:[%s1833] ss:$9 sm:$0xff] %v1227
        %v2168 = vld [vmem:[#allocation1] sm:$0xff]
        %2169 = vst [vmem:[#allocation1] ss:$9 sm:$0xff] %v1228
        %2170 = vst [vmem:[%s1821] ss:$9 sm:$0xff] %v1229
        %2171 = vst [vmem:[%s1823] ss:$9 sm:$0xff] %v1230
        %2172 = vst [vmem:[%s1825] ss:$9 sm:$0xff] %v1231
        %2173 = vst [vmem:[%s1827] ss:$9 sm:$0xff] %v1232
        %2174 = vst [vmem:[%s1829] ss:$9 sm:$0xff] %v1233
        %2175 = vst [vmem:[%s1831] ss:$9 sm:$0xff] %v1234
        %2176 = vst [vmem:[%s1833] ss:$9 sm:$0xff] %v1235
        %v2177 = vld [vmem:[#allocation1] sm:$0xff]
        %2178 = vst [vmem:[#allocation1] ss:$9 sm:$0xff] %v1236
        %2179 = vst [vmem:[%s1821] ss:$9 sm:$0xff] %v1237
        %2180 = vst [vmem:[%s1823] ss:$9 sm:$0xff] %v1238
        %2181 = vst [vmem:[%s1825] ss:$9 sm:$0xff] %v1239
        %2182 = vst [vmem:[%s1827] ss:$9 sm:$0xff] %v1240
        %2183 = vst [vmem:[%s1829] ss:$9 sm:$0xff] %v1241
        %2184 = vst [vmem:[%s1831] ss:$9 sm:$0xff] %v1242
        %2185 = vst [vmem:[%s1833] ss:$9 sm:$0xff] %v1243
        %v2186 = vld [vmem:[#allocation1] sm:$0xff]
        %2187 = vst [vmem:[#allocation1] ss:$9 sm:$0xff] %v1244
        %2188 = vst [vmem:[%s1821] ss:$9 sm:$0xff] %v1245
        %2189 = vst [vmem:[%s1823] ss:$9 sm:$0xff] %v1246
        %2190 = vst [vmem:[%s1825] ss:$9 sm:$0xff] %v1247
        %2191 = vst [vmem:[%s1827] ss:$9 sm:$0xff] %v1248
        %2192 = vst [vmem:[%s1829] ss:$9 sm:$0xff] %v1249
        %2193 = vst [vmem:[%s1831] ss:$9 sm:$0xff] %v1250
        %2194 = vst [vmem:[%s1833] ss:$9 sm:$0xff] %v1251
        %v2195 = vld [vmem:[#allocation1] sm:$0xff]
        %2196 = vst [vmem:[#allocation1] ss:$9 sm:$0xff] %v1252
        %2197 = vst [vmem:[%s1821] ss:$9 sm:$0xff] %v1253
        %2198 = vst [vmem:[%s1823] ss:$9 sm:$0xff] %v1254
        %2199 = vst [vmem:[%s1825] ss:$9 sm:$0xff] %v1255
        %2200 = vst [vmem:[%s1827] ss:$9 sm:$0xff] %v1256
        %2201 = vst [vmem:[%s1829] ss:$9 sm:$0xff] %v1257
        %2202 = vst [vmem:[%s1831] ss:$9 sm:$0xff] %v1258
        %2203 = vst [vmem:[%s1833] ss:$9 sm:$0xff] %v1259
        %v2204 = vld [vmem:[#allocation1] sm:$0xff]
        %2205 = vst [vmem:[#allocation1] ss:$9 sm:$0xff] %v1260
        %2206 = vst [vmem:[%s1821] ss:$9 sm:$0xff] %v1261
        %2207 = vst [vmem:[%s1823] ss:$9 sm:$0xff] %v1262
        %2208 = vst [vmem:[%s1825] ss:$9 sm:$0xff] %v1263
        %2209 = vst [vmem:[%s1827] ss:$9 sm:$0xff] %v1264
        %2210 = vst [vmem:[%s1829] ss:$9 sm:$0xff] %v1265
        %2211 = vst [vmem:[%s1831] ss:$9 sm:$0xff] %v1266
        %2212 = vst [vmem:[%s1833] ss:$9 sm:$0xff] %v1267
        %v2213 = vld [vmem:[#allocation1] sm:$0xff]
        %2214 = vst [vmem:[#allocation1] ss:$9 sm:$0xff] %v1268
        %2215 = vst [vmem:[%s1821] ss:$9 sm:$0xff] %v1269
        %2216 = vst [vmem:[%s1823] ss:$9 sm:$0xff] %v1270
        %2217 = vst [vmem:[%s1825] ss:$9 sm:$0xff] %v1271
        %2218 = vst [vmem:[%s1827] ss:$9 sm:$0xff] %v1272
        %2219 = vst [vmem:[%s1829] ss:$9 sm:$0xff] %v1273
        %2220 = vst [vmem:[%s1831] ss:$9 sm:$0xff] %v1274
        %2221 = vst [vmem:[%s1833] ss:$9 sm:$0xff] %v1275
        %v2222 = vld [vmem:[#allocation1] sm:$0xff]
        %2223 = vst [vmem:[#allocation1] ss:$9 sm:$0xff] %v1276
        %2224 = vst [vmem:[%s1821] ss:$9 sm:$0xff] %v1277
        %2225 = vst [vmem:[%s1823] ss:$9 sm:$0xff] %v1278
        %2226 = vst [vmem:[%s1825] ss:$9 sm:$0xff] %v1279
        %2227 = vst [vmem:[%s1827] ss:$9 sm:$0xff] %v1280
        %2228 = vst [vmem:[%s1829] ss:$9 sm:$0xff] %v1281
        %2229 = vst [vmem:[%s1831] ss:$9 sm:$0xff] %v1282
        %2230 = vst [vmem:[%s1833] ss:$9 sm:$0xff] %v1283
        %v2231 = vld [vmem:[#allocation1] sm:$0xff]
        %2232 = vst [vmem:[#allocation1] ss:$9 sm:$0xff] %v1284
        %2233 = vst [vmem:[%s1821] ss:$9 sm:$0xff] %v1285
        %2234 = vst [vmem:[%s1823] ss:$9 sm:$0xff] %v1286
        %2235 = vst [vmem:[%s1825] ss:$9 sm:$0xff] %v1287
        %2236 = vst [vmem:[%s1827] ss:$9 sm:$0xff] %v1288
        %2237 = vst [vmem:[%s1829] ss:$9 sm:$0xff] %v1289
        %2238 = vst [vmem:[%s1831] ss:$9 sm:$0xff] %v1290
        %2239 = vst [vmem:[%s1833] ss:$9 sm:$0xff] %v1291
        %v2240 = vld [vmem:[#allocation1] sm:$0xff]
        %2241 = vst [vmem:[#allocation1] ss:$9 sm:$0xff] %v1292
        %2242 = vst [vmem:[%s1821] ss:$9 sm:$0xff] %v1293
        %2243 = vst [vmem:[%s1823] ss:$9 sm:$0xff] %v1294
        %2244 = vst [vmem:[%s1825] ss:$9 sm:$0xff] %v1295
        %2245 = vst [vmem:[%s1827] ss:$9 sm:$0xff] %v1296
        %2246 = vst [vmem:[%s1829] ss:$9 sm:$0xff] %v1297
        %2247 = vst [vmem:[%s1831] ss:$9 sm:$0xff] %v1298
        %2248 = vst [vmem:[%s1833] ss:$9 sm:$0xff] %v1299
        %v2249 = vld [vmem:[#allocation1] sm:$0xff]
        %2250 = vst [vmem:[#allocation1] ss:$9 sm:$0xff] %v1300
        %2251 = vst [vmem:[%s1821] ss:$9 sm:$0xff] %v1301
        %2252 = vst [vmem:[%s1823] ss:$9 sm:$0xff] %v1302
        %2253 = vst [vmem:[%s1825] ss:$9 sm:$0xff] %v1303
        %2254 = vst [vmem:[%s1827] ss:$9 sm:$0xff] %v1304
        %2255 = vst [vmem:[%s1829] ss:$9 sm:$0xff] %v1305
        %2256 = vst [vmem:[%s1831] ss:$9 sm:$0xff] %v1306
        %2257 = vst [vmem:[%s1833] ss:$9 sm:$0xff] %v1307
        %v2258 = vld [vmem:[#allocation1] sm:$0xff]
        %2259 = vst [vmem:[#allocation1] ss:$9 sm:$0xff] %v1308
        %2260 = vst [vmem:[%s1821] ss:$9 sm:$0xff] %v1309
        %2261 = vst [vmem:[%s1823] ss:$9 sm:$0xff] %v1310
        %2262 = vst [vmem:[%s1825] ss:$9 sm:$0xff] %v1311
        %2263 = vst [vmem:[%s1827] ss:$9 sm:$0xff] %v1312
        %2264 = vst [vmem:[%s1829] ss:$9 sm:$0xff] %v1313
        %2265 = vst [vmem:[%s1831] ss:$9 sm:$0xff] %v1314
        %2266 = vst [vmem:[%s1833] ss:$9 sm:$0xff] %v1315
        %v2267 = vld [vmem:[#allocation1] sm:$0xff]
        %2268 = vst [vmem:[#allocation1] ss:$9 sm:$0xff] %v1316
        %2269 = vst [vmem:[%s1821] ss:$9 sm:$0xff] %v1317
        %2270 = vst [vmem:[%s1823] ss:$9 sm:$0xff] %v1318
        %2271 = vst [vmem:[%s1825] ss:$9 sm:$0xff] %v1319
        %2272 = vst [vmem:[%s1827] ss:$9 sm:$0xff] %v1320
        %2273 = vst [vmem:[%s1829] ss:$9 sm:$0xff] %v1321
        %2274 = vst [vmem:[%s1831] ss:$9 sm:$0xff] %v1322
        %2275 = vst [vmem:[%s1833] ss:$9 sm:$0xff] %v1323
        %v2276 = vld [vmem:[#allocation1] sm:$0xff]
        %2277 = vst [vmem:[#allocation1] ss:$9 sm:$0xff] %v1324
        %2278 = vst [vmem:[%s1821] ss:$9 sm:$0xff] %v1325
        %2279 = vst [vmem:[%s1823] ss:$9 sm:$0xff] %v1326
        %2280 = vst [vmem:[%s1825] ss:$9 sm:$0xff] %v1327
        %2281 = vst [vmem:[%s1827] ss:$9 sm:$0xff] %v1328
        %2282 = vst [vmem:[%s1829] ss:$9 sm:$0xff] %v1329
        %2283 = vst [vmem:[%s1831] ss:$9 sm:$0xff] %v1330
        %2284 = vst [vmem:[%s1833] ss:$9 sm:$0xff] %v1331
        %v2285 = vld [vmem:[#allocation1] sm:$0xff]
        %2286 = vst [vmem:[#allocation1] ss:$9 sm:$0xff] %v1332
        %2287 = vst [vmem:[%s1821] ss:$9 sm:$0xff] %v1333
        %2288 = vst [vmem:[%s1823] ss:$9 sm:$0xff] %v1334
        %2289 = vst [vmem:[%s1825] ss:$9 sm:$0xff] %v1335
        %2290 = vst [vmem:[%s1827] ss:$9 sm:$0xff] %v1336
        %2291 = vst [vmem:[%s1829] ss:$9 sm:$0xff] %v1337
        %2292 = vst [vmem:[%s1831] ss:$9 sm:$0xff] %v1338
        %2293 = vst [vmem:[%s1833] ss:$9 sm:$0xff] %v1339
        %v2294 = vld [vmem:[#allocation1] sm:$0xff]
        %2295 = vst [vmem:[#allocation1] ss:$9 sm:$0xff] %v1340
        %2296 = vst [vmem:[%s1821] ss:$9 sm:$0xff] %v1341
        %2297 = vst [vmem:[%s1823] ss:$9 sm:$0xff] %v1342
        %2298 = vst [vmem:[%s1825] ss:$9 sm:$0xff] %v1343
        %2299 = vst [vmem:[%s1827] ss:$9 sm:$0xff] %v1344
        %2300 = vst [vmem:[%s1829] ss:$9 sm:$0xff] %v1345
        %2301 = vst [vmem:[%s1831] ss:$9 sm:$0xff] %v1346
        %2302 = vst [vmem:[%s1833] ss:$9 sm:$0xff] %v1347
        %v2303 = vld [vmem:[#allocation1] sm:$0xff]
        %2304 = vst [vmem:[#allocation1] ss:$9 sm:$0xff] %v1348
        %2305 = vst [vmem:[%s1821] ss:$9 sm:$0xff] %v1349
        %2306 = vst [vmem:[%s1823] ss:$9 sm:$0xff] %v1350
        %2307 = vst [vmem:[%s1825] ss:$9 sm:$0xff] %v1351
        %2308 = vst [vmem:[%s1827] ss:$9 sm:$0xff] %v1352
        %2309 = vst [vmem:[%s1829] ss:$9 sm:$0xff] %v1353
        %2310 = vst [vmem:[%s1831] ss:$9 sm:$0xff] %v1354
        %2311 = vst [vmem:[%s1833] ss:$9 sm:$0xff] %v1355
        %v2312 = vld [vmem:[#allocation1] sm:$0xff]
        %2313 = vst [vmem:[#allocation1] ss:$9 sm:$0xff] %v1356
        %2314 = vst [vmem:[%s1821] ss:$9 sm:$0xff] %v1357
        %2315 = vst [vmem:[%s1823] ss:$9 sm:$0xff] %v1358
        %2316 = vst [vmem:[%s1825] ss:$9 sm:$0xff] %v1359
        %2317 = vst [vmem:[%s1827] ss:$9 sm:$0xff] %v1360
        %2318 = vst [vmem:[%s1829] ss:$9 sm:$0xff] %v1361
        %2319 = vst [vmem:[%s1831] ss:$9 sm:$0xff] %v1362
        %2320 = vst [vmem:[%s1833] ss:$9 sm:$0xff] %v1363
        %v2321 = vld [vmem:[#allocation1] sm:$0xff]
        %2322 = vst [vmem:[#allocation1] ss:$9 sm:$0xff] %v1364
        %2323 = vst [vmem:[%s1821] ss:$9 sm:$0xff] %v1365
        %2324 = vst [vmem:[%s1823] ss:$9 sm:$0xff] %v1366
        %2325 = vst [vmem:[%s1825] ss:$9 sm:$0xff] %v1367
        %2326 = vst [vmem:[%s1827] ss:$9 sm:$0xff] %v1368
        %2327 = vst [vmem:[%s1829] ss:$9 sm:$0xff] %v1369
        %2328 = vst [vmem:[%s1831] ss:$9 sm:$0xff] %v1370
        %2329 = vst [vmem:[%s1833] ss:$9 sm:$0xff] %v1371
        %v2330 = vld [vmem:[#allocation1] sm:$0xff]
        %2331 = vst [vmem:[#allocation1] ss:$9 sm:$0xff] %v1372
        %2332 = vst [vmem:[%s1821] ss:$9 sm:$0xff] %v1373
        %2333 = vst [vmem:[%s1823] ss:$9 sm:$0xff] %v1374
        %2334 = vst [vmem:[%s1825] ss:$9 sm:$0xff] %v1375
        %2335 = vst [vmem:[%s1827] ss:$9 sm:$0xff] %v1376
        %2336 = vst [vmem:[%s1829] ss:$9 sm:$0xff] %v1377
        %2337 = vst [vmem:[%s1831] ss:$9 sm:$0xff] %v1378
        %2338 = vst [vmem:[%s1833] ss:$9 sm:$0xff] %v1379
        %v2339 = vld [vmem:[#allocation1] sm:$0xff]
        %2340 = vst [vmem:[#allocation1] ss:$9 sm:$0xff] %v1380
        %2341 = vst [vmem:[%s1821] ss:$9 sm:$0xff] %v1381
        %2342 = vst [vmem:[%s1823] ss:$9 sm:$0xff] %v1382
        %2343 = vst [vmem:[%s1825] ss:$9 sm:$0xff] %v1383
        %2344 = vst [vmem:[%s1827] ss:$9 sm:$0xff] %v1384
        %2345 = vst [vmem:[%s1829] ss:$9 sm:$0xff] %v1385
        %2346 = vst [vmem:[%s1831] ss:$9 sm:$0xff] %v1386
        %2347 = vst [vmem:[%s1833] ss:$9 sm:$0xff] %v1387
        %v2348 = vld [vmem:[#allocation1] sm:$0xff]
        %2349 = vst [vmem:[#allocation1] ss:$9 sm:$0xff] %v1388
        %2350 = vst [vmem:[%s1821] ss:$9 sm:$0xff] %v1389
        %2351 = vst [vmem:[%s1823] ss:$9 sm:$0xff] %v1390
        %2352 = vst [vmem:[%s1825] ss:$9 sm:$0xff] %v1391
        %2353 = vst [vmem:[%s1827] ss:$9 sm:$0xff] %v1392
        %2354 = vst [vmem:[%s1829] ss:$9 sm:$0xff] %v1393
        %2355 = vst [vmem:[%s1831] ss:$9 sm:$0xff] %v1394
        %2356 = vst [vmem:[%s1833] ss:$9 sm:$0xff] %v1395
        %v2357 = vld [vmem:[#allocation1] sm:$0xff]
        %2358 = vst [vmem:[#allocation1] ss:$9 sm:$0xff] %v1396
        %2359 = vst [vmem:[%s1821] ss:$9 sm:$0xff] %v1397
        %2360 = vst [vmem:[%s1823] ss:$9 sm:$0xff] %v1398
        %2361 = vst [vmem:[%s1825] ss:$9 sm:$0xff] %v1399
        %2362 = vst [vmem:[%s1827] ss:$9 sm:$0xff] %v1400
        %2363 = vst [vmem:[%s1829] ss:$9 sm:$0xff] %v1401
        %2364 = vst [vmem:[%s1831] ss:$9 sm:$0xff] %v1402
        %2365 = vst [vmem:[%s1833] ss:$9 sm:$0xff] %v1403
        %v2366 = vld [vmem:[#allocation1] sm:$0xff]
        %2367 = vst [vmem:[#allocation1] ss:$9 sm:$0xff] %v1404
        %2368 = vst [vmem:[%s1821] ss:$9 sm:$0xff] %v1405
        %2369 = vst [vmem:[%s1823] ss:$9 sm:$0xff] %v1406
        %2370 = vst [vmem:[%s1825] ss:$9 sm:$0xff] %v1407
        %2371 = vst [vmem:[%s1827] ss:$9 sm:$0xff] %v1408
        %2372 = vst [vmem:[%s1829] ss:$9 sm:$0xff] %v1409
        %2373 = vst [vmem:[%s1831] ss:$9 sm:$0xff] %v1410
        %2374 = vst [vmem:[%s1833] ss:$9 sm:$0xff] %v1411
        %v2375 = vld [vmem:[#allocation1] sm:$0xff]
        %2376 = vst [vmem:[#allocation1] ss:$9 sm:$0xff] %v1412
        %2377 = vst [vmem:[%s1821] ss:$9 sm:$0xff] %v1413
        %2378 = vst [vmem:[%s1823] ss:$9 sm:$0xff] %v1414
        %2379 = vst [vmem:[%s1825] ss:$9 sm:$0xff] %v1415
        %2380 = vst [vmem:[%s1827] ss:$9 sm:$0xff] %v1416
        %2381 = vst [vmem:[%s1829] ss:$9 sm:$0xff] %v1417
        %2382 = vst [vmem:[%s1831] ss:$9 sm:$0xff] %v1418
        %2383 = vst [vmem:[%s1833] ss:$9 sm:$0xff] %v1419
        %v2384 = vld [vmem:[#allocation1] sm:$0xff]
        %2385 = vst [vmem:[#allocation1] ss:$9 sm:$0xff] %v1420
        %2386 = vst [vmem:[%s1821] ss:$9 sm:$0xff] %v1421
        %2387 = vst [vmem:[%s1823] ss:$9 sm:$0xff] %v1422
        %2388 = vst [vmem:[%s1825] ss:$9 sm:$0xff] %v1423
        %2389 = vst [vmem:[%s1827] ss:$9 sm:$0xff] %v1424
        %2390 = vst [vmem:[%s1829] ss:$9 sm:$0xff] %v1425
        %2391 = vst [vmem:[%s1831] ss:$9 sm:$0xff] %v1426
        %2392 = vst [vmem:[%s1833] ss:$9 sm:$0xff] %v1427
        %v2393 = vld [vmem:[#allocation1] sm:$0xff]
        %2394 = vst [vmem:[#allocation1] ss:$9 sm:$0xff] %v1428
        %2395 = vst [vmem:[%s1821] ss:$9 sm:$0xff] %v1429
        %2396 = vst [vmem:[%s1823] ss:$9 sm:$0xff] %v1430
        %2397 = vst [vmem:[%s1825] ss:$9 sm:$0xff] %v1431
        %2398 = vst [vmem:[%s1827] ss:$9 sm:$0xff] %v1432
        %2399 = vst [vmem:[%s1829] ss:$9 sm:$0xff] %v1433
        %2400 = vst [vmem:[%s1831] ss:$9 sm:$0xff] %v1434
        %2401 = vst [vmem:[%s1833] ss:$9 sm:$0xff] %v1435
        %v2402 = vld [vmem:[#allocation1] sm:$0xff]
        %2403 = vst [vmem:[#allocation1] ss:$9 sm:$0xff] %v1436
        %2404 = vst [vmem:[%s1821] ss:$9 sm:$0xff] %v1437
        %2405 = vst [vmem:[%s1823] ss:$9 sm:$0xff] %v1438
        %2406 = vst [vmem:[%s1825] ss:$9 sm:$0xff] %v1439
        %2407 = vst [vmem:[%s1827] ss:$9 sm:$0xff] %v1440
        %2408 = vst [vmem:[%s1829] ss:$9 sm:$0xff] %v1441
        %2409 = vst [vmem:[%s1831] ss:$9 sm:$0xff] %v1442
        %2410 = vst [vmem:[%s1833] ss:$9 sm:$0xff] %v1443
        %v2411 = vld [vmem:[#allocation1] sm:$0xff]
        %2412 = vst [vmem:[#allocation1] ss:$9 sm:$0xff] %v1444
        %2413 = vst [vmem:[%s1821] ss:$9 sm:$0xff] %v1445
        %2414 = vst [vmem:[%s1823] ss:$9 sm:$0xff] %v1446
        %2415 = vst [vmem:[%s1825] ss:$9 sm:$0xff] %v1447
        %2416 = vst [vmem:[%s1827] ss:$9 sm:$0xff] %v1448
        %2417 = vst [vmem:[%s1829] ss:$9 sm:$0xff] %v1449
        %2418 = vst [vmem:[%s1831] ss:$9 sm:$0xff] %v1450
        %2419 = vst [vmem:[%s1833] ss:$9 sm:$0xff] %v1451
        %v2420 = vld [vmem:[#allocation1] sm:$0xff]
        %2421 = vst [vmem:[#allocation1] ss:$9 sm:$0xff] %v1452
        %2422 = vst [vmem:[%s1821] ss:$9 sm:$0xff] %v1453
        %2423 = vst [vmem:[%s1823] ss:$9 sm:$0xff] %v1454
        %2424 = vst [vmem:[%s1825] ss:$9 sm:$0xff] %v1455
        %2425 = vst [vmem:[%s1827] ss:$9 sm:$0xff] %v1456
        %2426 = vst [vmem:[%s1829] ss:$9 sm:$0xff] %v1457
        %2427 = vst [vmem:[%s1831] ss:$9 sm:$0xff] %v1458
        %2428 = vst [vmem:[%s1833] ss:$9 sm:$0xff] %v1459
        %v2429 = vld [vmem:[#allocation1] sm:$0xff]
        %2430 = vst [vmem:[#allocation1] ss:$9 sm:$0xff] %v1460
        %2431 = vst [vmem:[%s1821] ss:$9 sm:$0xff] %v1461
        %2432 = vst [vmem:[%s1823] ss:$9 sm:$0xff] %v1462
        %2433 = vst [vmem:[%s1825] ss:$9 sm:$0xff] %v1463
        %2434 = vst [vmem:[%s1827] ss:$9 sm:$0xff] %v1464
        %2435 = vst [vmem:[%s1829] ss:$9 sm:$0xff] %v1465
        %2436 = vst [vmem:[%s1831] ss:$9 sm:$0xff] %v1466
        %2437 = vst [vmem:[%s1833] ss:$9 sm:$0xff] %v1467
        %v2438 = vld [vmem:[#allocation1] sm:$0xff]
        %2439 = vst [vmem:[#allocation1] ss:$9 sm:$0xff] %v1468
        %2440 = vst [vmem:[%s1821] ss:$9 sm:$0xff] %v1469
        %2441 = vst [vmem:[%s1823] ss:$9 sm:$0xff] %v1470
        %2442 = vst [vmem:[%s1825] ss:$9 sm:$0xff] %v1471
        %2443 = vst [vmem:[%s1827] ss:$9 sm:$0xff] %v1472
        %2444 = vst [vmem:[%s1829] ss:$9 sm:$0xff] %v1473
        %2445 = vst [vmem:[%s1831] ss:$9 sm:$0xff] %v1474
        %2446 = vst [vmem:[%s1833] ss:$9 sm:$0xff] %v1475
        %v2447 = vld [vmem:[#allocation1] sm:$0xff]
        %2448 = vst [vmem:[#allocation1] ss:$9 sm:$0xff] %v1476
        %2449 = vst [vmem:[%s1821] ss:$9 sm:$0xff] %v1477
        %2450 = vst [vmem:[%s1823] ss:$9 sm:$0xff] %v1478
        %2451 = vst [vmem:[%s1825] ss:$9 sm:$0xff] %v1479
        %2452 = vst [vmem:[%s1827] ss:$9 sm:$0xff] %v1480
        %2453 = vst [vmem:[%s1829] ss:$9 sm:$0xff] %v1481
        %2454 = vst [vmem:[%s1831] ss:$9 sm:$0xff] %v1482
        %2455 = vst [vmem:[%s1833] ss:$9 sm:$0xff] %v1483
        %v2456 = vld [vmem:[#allocation1] sm:$0xff]
        %2457 = vst [vmem:[#allocation1] ss:$9 sm:$0xff] %v1484
        %2458 = vst [vmem:[%s1821] ss:$9 sm:$0xff] %v1485
        %2459 = vst [vmem:[%s1823] ss:$9 sm:$0xff] %v1486
        %2460 = vst [vmem:[%s1825] ss:$9 sm:$0xff] %v1487
        %2461 = vst [vmem:[%s1827] ss:$9 sm:$0xff] %v1488
        %2462 = vst [vmem:[%s1829] ss:$9 sm:$0xff] %v1489
        %2463 = vst [vmem:[%s1831] ss:$9 sm:$0xff] %v1490
        %2464 = vst [vmem:[%s1833] ss:$9 sm:$0xff] %v1491
        %v2465 = vld [vmem:[#allocation1] sm:$0xff]
        %2466 = vst [vmem:[#allocation1] ss:$9 sm:$0xff] %v1492
        %2467 = vst [vmem:[%s1821] ss:$9 sm:$0xff] %v1493
        %2468 = vst [vmem:[%s1823] ss:$9 sm:$0xff] %v1494
        %2469 = vst [vmem:[%s1825] ss:$9 sm:$0xff] %v1495
        %2470 = vst [vmem:[%s1827] ss:$9 sm:$0xff] %v1496
        %2471 = vst [vmem:[%s1829] ss:$9 sm:$0xff] %v1497
        %2472 = vst [vmem:[%s1831] ss:$9 sm:$0xff] %v1498
        %2473 = vst [vmem:[%s1833] ss:$9 sm:$0xff] %v1499
        %v2474 = vld [vmem:[#allocation1] sm:$0xff]
        %2475 = vst [vmem:[#allocation1] ss:$9 sm:$0xff] %v1500
        %2476 = vst [vmem:[%s1821] ss:$9 sm:$0xff] %v1501
        %2477 = vst [vmem:[%s1823] ss:$9 sm:$0xff] %v1502
        %2478 = vst [vmem:[%s1825] ss:$9 sm:$0xff] %v1503
        %2479 = vst [vmem:[%s1827] ss:$9 sm:$0xff] %v1504
        %2480 = vst [vmem:[%s1829] ss:$9 sm:$0xff] %v1505
        %2481 = vst [vmem:[%s1831] ss:$9 sm:$0xff] %v1506
        %2482 = vst [vmem:[%s1833] ss:$9 sm:$0xff] %v1507
        %v2483 = vld [vmem:[#allocation1] sm:$0xff]
        %2484 = vst [vmem:[#allocation1] ss:$9 sm:$0xff] %v1508
        %2485 = vst [vmem:[%s1821] ss:$9 sm:$0xff] %v1509
        %2486 = vst [vmem:[%s1823] ss:$9 sm:$0xff] %v1510
        %2487 = vst [vmem:[%s1825] ss:$9 sm:$0xff] %v1511
        %2488 = vst [vmem:[%s1827] ss:$9 sm:$0xff] %v1512
        %2489 = vst [vmem:[%s1829] ss:$9 sm:$0xff] %v1513
        %2490 = vst [vmem:[%s1831] ss:$9 sm:$0xff] %v1514
        %2491 = vst [vmem:[%s1833] ss:$9 sm:$0xff] %v1515
        %v2492 = vld [vmem:[#allocation1] sm:$0xff]
        %2493 = vst [vmem:[#allocation1] ss:$9 sm:$0xff] %v1516
        %2494 = vst [vmem:[%s1821] ss:$9 sm:$0xff] %v1517
        %2495 = vst [vmem:[%s1823] ss:$9 sm:$0xff] %v1518
        %2496 = vst [vmem:[%s1825] ss:$9 sm:$0xff] %v1519
        %2497 = vst [vmem:[%s1827] ss:$9 sm:$0xff] %v1520
        %2498 = vst [vmem:[%s1829] ss:$9 sm:$0xff] %v1521
        %2499 = vst [vmem:[%s1831] ss:$9 sm:$0xff] %v1522
        %2500 = vst [vmem:[%s1833] ss:$9 sm:$0xff] %v1523
        %v2501 = vld [vmem:[#allocation1] sm:$0xff]
        %2502 = vst [vmem:[#allocation1] ss:$9 sm:$0xff] %v1524
        %2503 = vst [vmem:[%s1821] ss:$9 sm:$0xff] %v1525
        %2504 = vst [vmem:[%s1823] ss:$9 sm:$0xff] %v1526
        %2505 = vst [vmem:[%s1825] ss:$9 sm:$0xff] %v1527
        %2506 = vst [vmem:[%s1827] ss:$9 sm:$0xff] %v1528
        %2507 = vst [vmem:[%s1829] ss:$9 sm:$0xff] %v1529
        %2508 = vst [vmem:[%s1831] ss:$9 sm:$0xff] %v1530
        %2509 = vst [vmem:[%s1833] ss:$9 sm:$0xff] %v1531
        %v2510 = vld [vmem:[#allocation1] sm:$0xff]
        %2511 = vst [vmem:[#allocation1] ss:$9 sm:$0xff] %v1532
        %2512 = vst [vmem:[%s1821] ss:$9 sm:$0xff] %v1533
        %2513 = vst [vmem:[%s1823] ss:$9 sm:$0xff] %v1534
        %2514 = vst [vmem:[%s1825] ss:$9 sm:$0xff] %v1535
        %2515 = vst [vmem:[%s1827] ss:$9 sm:$0xff] %v1536
        %2516 = vst [vmem:[%s1829] ss:$9 sm:$0xff] %v1537
        %2517 = vst [vmem:[%s1831] ss:$9 sm:$0xff] %v1538
        %2518 = vst [vmem:[%s1833] ss:$9 sm:$0xff] %v1539
        %v2519 = vld [vmem:[#allocation1] sm:$0xff]
        %2520 = vst [vmem:[#allocation1] ss:$9 sm:$0xff] %v1540
        %2521 = vst [vmem:[%s1821] ss:$9 sm:$0xff] %v1541
        %2522 = vst [vmem:[%s1823] ss:$9 sm:$0xff] %v1542
        %2523 = vst [vmem:[%s1825] ss:$9 sm:$0xff] %v1543
        %2524 = vst [vmem:[%s1827] ss:$9 sm:$0xff] %v1544
        %2525 = vst [vmem:[%s1829] ss:$9 sm:$0xff] %v1545
        %2526 = vst [vmem:[%s1831] ss:$9 sm:$0xff] %v1546
        %2527 = vst [vmem:[%s1833] ss:$9 sm:$0xff] %v1547
        %v2528 = vld [vmem:[#allocation1] sm:$0xff]
        %2529 = vst [vmem:[#allocation1] ss:$9 sm:$0xff] %v1548
        %2530 = vst [vmem:[%s1821] ss:$9 sm:$0xff] %v1549
        %2531 = vst [vmem:[%s1823] ss:$9 sm:$0xff] %v1550
        %2532 = vst [vmem:[%s1825] ss:$9 sm:$0xff] %v1551
        %2533 = vst [vmem:[%s1827] ss:$9 sm:$0xff] %v1552
        %2534 = vst [vmem:[%s1829] ss:$9 sm:$0xff] %v1553
        %2535 = vst [vmem:[%s1831] ss:$9 sm:$0xff] %v1554
        %2536 = vst [vmem:[%s1833] ss:$9 sm:$0xff] %v1555
        %v2537 = vld [vmem:[#allocation1] sm:$0xff]
        %2538 = vst [vmem:[#allocation1] ss:$9 sm:$0xff] %v1556
        %2539 = vst [vmem:[%s1821] ss:$9 sm:$0xff] %v1557
        %2540 = vst [vmem:[%s1823] ss:$9 sm:$0xff] %v1558
        %2541 = vst [vmem:[%s1825] ss:$9 sm:$0xff] %v1559
        %2542 = vst [vmem:[%s1827] ss:$9 sm:$0xff] %v1560
        %2543 = vst [vmem:[%s1829] ss:$9 sm:$0xff] %v1561
        %2544 = vst [vmem:[%s1831] ss:$9 sm:$0xff] %v1562
        %2545 = vst [vmem:[%s1833] ss:$9 sm:$0xff] %v1563
        %v2546 = vld [vmem:[#allocation1] sm:$0xff]
        %2547 = vst [vmem:[#allocation1] ss:$9 sm:$0xff] %v1564
        %2548 = vst [vmem:[%s1821] ss:$9 sm:$0xff] %v1565
        %2549 = vst [vmem:[%s1823] ss:$9 sm:$0xff] %v1566
        %2550 = vst [vmem:[%s1825] ss:$9 sm:$0xff] %v1567
        %2551 = vst [vmem:[%s1827] ss:$9 sm:$0xff] %v1568
        %2552 = vst [vmem:[%s1829] ss:$9 sm:$0xff] %v1569
        %2553 = vst [vmem:[%s1831] ss:$9 sm:$0xff] %v1570
        %2554 = vst [vmem:[%s1833] ss:$9 sm:$0xff] %v1571
        %v2555 = vld [vmem:[#allocation1] sm:$0xff]
        %2556 = vst [vmem:[#allocation1] ss:$9 sm:$0xff] %v1572
        %2557 = vst [vmem:[%s1821] ss:$9 sm:$0xff] %v1573
        %2558 = vst [vmem:[%s1823] ss:$9 sm:$0xff] %v1574
        %2559 = vst [vmem:[%s1825] ss:$9 sm:$0xff] %v1575
        %2560 = vst [vmem:[%s1827] ss:$9 sm:$0xff] %v1576
        %2561 = vst [vmem:[%s1829] ss:$9 sm:$0xff] %v1577
        %2562 = vst [vmem:[%s1831] ss:$9 sm:$0xff] %v1578
        %2563 = vst [vmem:[%s1833] ss:$9 sm:$0xff] %v1579
        %v2564 = vld [vmem:[#allocation1] sm:$0xff]
        %2565 = vst [vmem:[#allocation1] ss:$9 sm:$0xff] %v1580
        %2566 = vst [vmem:[%s1821] ss:$9 sm:$0xff] %v1581
        %2567 = vst [vmem:[%s1823] ss:$9 sm:$0xff] %v1582
        %2568 = vst [vmem:[%s1825] ss:$9 sm:$0xff] %v1583
        %2569 = vst [vmem:[%s1827] ss:$9 sm:$0xff] %v1584
        %2570 = vst [vmem:[%s1829] ss:$9 sm:$0xff] %v1585
        %2571 = vst [vmem:[%s1831] ss:$9 sm:$0xff] %v1586
        %2572 = vst [vmem:[%s1833] ss:$9 sm:$0xff] %v1587
        %v2573 = vld [vmem:[#allocation1] sm:$0xff]
        %2574 = vst [vmem:[#allocation1] ss:$9 sm:$0xff] %v1588
        %2575 = vst [vmem:[%s1821] ss:$9 sm:$0xff] %v1589
        %2576 = vst [vmem:[%s1823] ss:$9 sm:$0xff] %v1590
        %2577 = vst [vmem:[%s1825] ss:$9 sm:$0xff] %v1591
        %2578 = vst [vmem:[%s1827] ss:$9 sm:$0xff] %v1592
        %2579 = vst [vmem:[%s1829] ss:$9 sm:$0xff] %v1593
        %2580 = vst [vmem:[%s1831] ss:$9 sm:$0xff] %v1594
        %2581 = vst [vmem:[%s1833] ss:$9 sm:$0xff] %v1595
        %v2582 = vld [vmem:[#allocation1] sm:$0xff]
        %2583 = vst [vmem:[#allocation1] ss:$9 sm:$0xff] %v1596
        %2584 = vst [vmem:[%s1821] ss:$9 sm:$0xff] %v1597
        %2585 = vst [vmem:[%s1823] ss:$9 sm:$0xff] %v1598
        %2586 = vst [vmem:[%s1825] ss:$9 sm:$0xff] %v1599
        %2587 = vst [vmem:[%s1827] ss:$9 sm:$0xff] %v1600
        %2588 = vst [vmem:[%s1829] ss:$9 sm:$0xff] %v1601
        %2589 = vst [vmem:[%s1831] ss:$9 sm:$0xff] %v1602
        %2590 = vst [vmem:[%s1833] ss:$9 sm:$0xff] %v1603
        %v2591 = vld [vmem:[#allocation1] sm:$0xff]
        %2592 = vst [vmem:[#allocation1] ss:$9 sm:$0xff] %v1604
        %2593 = vst [vmem:[%s1821] ss:$9 sm:$0xff] %v1605
        %2594 = vst [vmem:[%s1823] ss:$9 sm:$0xff] %v1606
        %2595 = vst [vmem:[%s1825] ss:$9 sm:$0xff] %v1607
        %2596 = vst [vmem:[%s1827] ss:$9 sm:$0xff] %v1608
        %2597 = vst [vmem:[%s1829] ss:$9 sm:$0xff] %v1609
        %2598 = vst [vmem:[%s1831] ss:$9 sm:$0xff] %v1610
        %2599 = vst [vmem:[%s1833] ss:$9 sm:$0xff] %v1611
        %v2600 = vld [vmem:[#allocation1] sm:$0xff]
        %2601 = vst [vmem:[#allocation1] ss:$9 sm:$0xff] %v1612
        %2602 = vst [vmem:[%s1821] ss:$9 sm:$0xff] %v1613
        %2603 = vst [vmem:[%s1823] ss:$9 sm:$0xff] %v1614
        %2604 = vst [vmem:[%s1825] ss:$9 sm:$0xff] %v1615
        %2605 = vst [vmem:[%s1827] ss:$9 sm:$0xff] %v1616
        %2606 = vst [vmem:[%s1829] ss:$9 sm:$0xff] %v1617
        %2607 = vst [vmem:[%s1831] ss:$9 sm:$0xff] %v1618
        %2608 = vst [vmem:[%s1833] ss:$9 sm:$0xff] %v1619
        %v2609 = vld [vmem:[#allocation1] sm:$0xff]
        %2610 = vst [vmem:[#allocation1] ss:$9 sm:$0xff] %v1620
        %2611 = vst [vmem:[%s1821] ss:$9 sm:$0xff] %v1621
        %2612 = vst [vmem:[%s1823] ss:$9 sm:$0xff] %v1622
        %2613 = vst [vmem:[%s1825] ss:$9 sm:$0xff] %v1623
        %2614 = vst [vmem:[%s1827] ss:$9 sm:$0xff] %v1624
        %2615 = vst [vmem:[%s1829] ss:$9 sm:$0xff] %v1625
        %2616 = vst [vmem:[%s1831] ss:$9 sm:$0xff] %v1626
        %2617 = vst [vmem:[%s1833] ss:$9 sm:$0xff] %v1627
        %v2618 = vld [vmem:[#allocation1] sm:$0xff]
        %2619 = vst [vmem:[#allocation1] ss:$9 sm:$0xff] %v1628
        %2620 = vst [vmem:[%s1821] ss:$9 sm:$0xff] %v1629
        %2621 = vst [vmem:[%s1823] ss:$9 sm:$0xff] %v1630
        %2622 = vst [vmem:[%s1825] ss:$9 sm:$0xff] %v1631
        %2623 = vst [vmem:[%s1827] ss:$9 sm:$0xff] %v1632
        %2624 = vst [vmem:[%s1829] ss:$9 sm:$0xff] %v1633
        %2625 = vst [vmem:[%s1831] ss:$9 sm:$0xff] %v1634
        %2626 = vst [vmem:[%s1833] ss:$9 sm:$0xff] %v1635
        %v2627 = vld [vmem:[#allocation1] sm:$0xff]
        %2628 = vst [vmem:[#allocation1] ss:$9 sm:$0xff] %v1636
        %2629 = vst [vmem:[%s1821] ss:$9 sm:$0xff] %v1637
        %2630 = vst [vmem:[%s1823] ss:$9 sm:$0xff] %v1638
        %2631 = vst [vmem:[%s1825] ss:$9 sm:$0xff] %v1639
        %2632 = vst [vmem:[%s1827] ss:$9 sm:$0xff] %v1640
        %2633 = vst [vmem:[%s1829] ss:$9 sm:$0xff] %v1641
        %2634 = vst [vmem:[%s1831] ss:$9 sm:$0xff] %v1642
        %2635 = vst [vmem:[%s1833] ss:$9 sm:$0xff] %v1643
        %v2636 = vld [vmem:[#allocation1] sm:$0xff]
        %2637 = vst [vmem:[#allocation1] ss:$9 sm:$0xff] %v1644
        %2638 = vst [vmem:[%s1821] ss:$9 sm:$0xff] %v1645
        %2639 = vst [vmem:[%s1823] ss:$9 sm:$0xff] %v1646
        %2640 = vst [vmem:[%s1825] ss:$9 sm:$0xff] %v1647
        %2641 = vst [vmem:[%s1827] ss:$9 sm:$0xff] %v1648
        %2642 = vst [vmem:[%s1829] ss:$9 sm:$0xff] %v1649
        %2643 = vst [vmem:[%s1831] ss:$9 sm:$0xff] %v1650
        %2644 = vst [vmem:[%s1833] ss:$9 sm:$0xff] %v1651
        %v2645 = vld [vmem:[#allocation1] sm:$0xff]
        %2646 = vst [vmem:[#allocation1] ss:$9 sm:$0xff] %v1652
        %2647 = vst [vmem:[%s1821] ss:$9 sm:$0xff] %v1653
        %2648 = vst [vmem:[%s1823] ss:$9 sm:$0xff] %v1654
        %2649 = vst [vmem:[%s1825] ss:$9 sm:$0xff] %v1655
        %2650 = vst [vmem:[%s1827] ss:$9 sm:$0xff] %v1656
        %2651 = vst [vmem:[%s1829] ss:$9 sm:$0xff] %v1657
        %2652 = vst [vmem:[%s1831] ss:$9 sm:$0xff] %v1658
        %2653 = vst [vmem:[%s1833] ss:$9 sm:$0xff] %v1659
        %v2654 = vld [vmem:[#allocation1] sm:$0xff]
        %2655 = vst [vmem:[#allocation1] ss:$9 sm:$0xff] %v1660
        %2656 = vst [vmem:[%s1821] ss:$9 sm:$0xff] %v1661
        %2657 = vst [vmem:[%s1823] ss:$9 sm:$0xff] %v1662
        %2658 = vst [vmem:[%s1825] ss:$9 sm:$0xff] %v1663
        %2659 = vst [vmem:[%s1827] ss:$9 sm:$0xff] %v1664
        %2660 = vst [vmem:[%s1829] ss:$9 sm:$0xff] %v1665
        %2661 = vst [vmem:[%s1831] ss:$9 sm:$0xff] %v1666
        %2662 = vst [vmem:[%s1833] ss:$9 sm:$0xff] %v1667
        %v2663 = vld [vmem:[#allocation1] sm:$0xff]
        %2664 = vst [vmem:[#allocation1] ss:$9 sm:$0xff] %v1668
        %2665 = vst [vmem:[%s1821] ss:$9 sm:$0xff] %v1669
        %2666 = vst [vmem:[%s1823] ss:$9 sm:$0xff] %v1670
        %2667 = vst [vmem:[%s1825] ss:$9 sm:$0xff] %v1671
        %2668 = vst [vmem:[%s1827] ss:$9 sm:$0xff] %v1672
        %2669 = vst [vmem:[%s1829] ss:$9 sm:$0xff] %v1673
        %2670 = vst [vmem:[%s1831] ss:$9 sm:$0xff] %v1674
        %2671 = vst [vmem:[%s1833] ss:$9 sm:$0xff] %v1675
        %v2672 = vld [vmem:[#allocation1] sm:$0xff]
        %2673 = vst [vmem:[#allocation1] ss:$9 sm:$0xff] %v1676
        %2674 = vst [vmem:[%s1821] ss:$9 sm:$0xff] %v1677
        %2675 = vst [vmem:[%s1823] ss:$9 sm:$0xff] %v1678
        %2676 = vst [vmem:[%s1825] ss:$9 sm:$0xff] %v1679
        %2677 = vst [vmem:[%s1827] ss:$9 sm:$0xff] %v1680
        %2678 = vst [vmem:[%s1829] ss:$9 sm:$0xff] %v1681
        %2679 = vst [vmem:[%s1831] ss:$9 sm:$0xff] %v1682
        %2680 = vst [vmem:[%s1833] ss:$9 sm:$0xff] %v1683
        %v2681 = vld [vmem:[#allocation1] sm:$0xff]
        %2682 = vst [vmem:[#allocation1] ss:$9 sm:$0xff] %v1684
        %2683 = vst [vmem:[%s1821] ss:$9 sm:$0xff] %v1685
        %2684 = vst [vmem:[%s1823] ss:$9 sm:$0xff] %v1686
        %2685 = vst [vmem:[%s1825] ss:$9 sm:$0xff] %v1687
        %2686 = vst [vmem:[%s1827] ss:$9 sm:$0xff] %v1688
        %2687 = vst [vmem:[%s1829] ss:$9 sm:$0xff] %v1689
        %2688 = vst [vmem:[%s1831] ss:$9 sm:$0xff] %v1690
        %2689 = vst [vmem:[%s1833] ss:$9 sm:$0xff] %v1691
        %v2690 = vld [vmem:[#allocation1] sm:$0xff]
        %2691 = vst [vmem:[#allocation1] ss:$9 sm:$0xff] %v1692
        %2692 = vst [vmem:[%s1821] ss:$9 sm:$0xff] %v1693
        %2693 = vst [vmem:[%s1823] ss:$9 sm:$0xff] %v1694
        %2694 = vst [vmem:[%s1825] ss:$9 sm:$0xff] %v1695
        %2695 = vst [vmem:[%s1827] ss:$9 sm:$0xff] %v1696
        %2696 = vst [vmem:[%s1829] ss:$9 sm:$0xff] %v1697
        %2697 = vst [vmem:[%s1831] ss:$9 sm:$0xff] %v1698
        %2698 = vst [vmem:[%s1833] ss:$9 sm:$0xff] %v1699
        %v2699 = vld [vmem:[#allocation1] sm:$0xff]
        %2700 = vst [vmem:[#allocation1] ss:$9 sm:$0xff] %v1700
        %2701 = vst [vmem:[%s1821] ss:$9 sm:$0xff] %v1701
        %2702 = vst [vmem:[%s1823] ss:$9 sm:$0xff] %v1702
        %2703 = vst [vmem:[%s1825] ss:$9 sm:$0xff] %v1703
        %2704 = vst [vmem:[%s1827] ss:$9 sm:$0xff] %v1704
        %2705 = vst [vmem:[%s1829] ss:$9 sm:$0xff] %v1705
        %2706 = vst [vmem:[%s1831] ss:$9 sm:$0xff] %v1706
        %2707 = vst [vmem:[%s1833] ss:$9 sm:$0xff] %v1707
        %v2708 = vld [vmem:[#allocation1] sm:$0xff]
        %2709 = vst [vmem:[#allocation1] ss:$9 sm:$0xff] %v1708
        %2710 = vst [vmem:[%s1821] ss:$9 sm:$0xff] %v1709
        %2711 = vst [vmem:[%s1823] ss:$9 sm:$0xff] %v1710
        %2712 = vst [vmem:[%s1825] ss:$9 sm:$0xff] %v1711
        %2713 = vst [vmem:[%s1827] ss:$9 sm:$0xff] %v1712
        %2714 = vst [vmem:[%s1829] ss:$9 sm:$0xff] %v1713
        %2715 = vst [vmem:[%s1831] ss:$9 sm:$0xff] %v1714
        %2716 = vst [vmem:[%s1833] ss:$9 sm:$0xff] %v1715
        %v2717 = vld [vmem:[#allocation1] sm:$0xff]
        %2718 = vst [vmem:[#allocation1] ss:$9 sm:$0xff] %v1716
        %2719 = vst [vmem:[%s1821] ss:$9 sm:$0xff] %v1717
        %2720 = vst [vmem:[%s1823] ss:$9 sm:$0xff] %v1718
        %2721 = vst [vmem:[%s1825] ss:$9 sm:$0xff] %v1719
        %2722 = vst [vmem:[%s1827] ss:$9 sm:$0xff] %v1720
        %2723 = vst [vmem:[%s1829] ss:$9 sm:$0xff] %v1721
        %2724 = vst [vmem:[%s1831] ss:$9 sm:$0xff] %v1722
        %2725 = vst [vmem:[%s1833] ss:$9 sm:$0xff] %v1723
        %v2726 = vld [vmem:[#allocation1] sm:$0xff]
        %2727 = vst [vmem:[#allocation1] ss:$9 sm:$0xff] %v1724
        %2728 = vst [vmem:[%s1821] ss:$9 sm:$0xff] %v1725
        %2729 = vst [vmem:[%s1823] ss:$9 sm:$0xff] %v1726
        %2730 = vst [vmem:[%s1825] ss:$9 sm:$0xff] %v1727
        %2731 = vst [vmem:[%s1827] ss:$9 sm:$0xff] %v1728
        %2732 = vst [vmem:[%s1829] ss:$9 sm:$0xff] %v1729
        %2733 = vst [vmem:[%s1831] ss:$9 sm:$0xff] %v1730
        %2734 = vst [vmem:[%s1833] ss:$9 sm:$0xff] %v1731
        %v2735 = vld [vmem:[#allocation1] sm:$0xff]
        %2736 = vst [vmem:[#allocation1] ss:$9 sm:$0xff] %v1732
        %2737 = vst [vmem:[%s1821] ss:$9 sm:$0xff] %v1733
        %2738 = vst [vmem:[%s1823] ss:$9 sm:$0xff] %v1734
        %2739 = vst [vmem:[%s1825] ss:$9 sm:$0xff] %v1735
        %2740 = vst [vmem:[%s1827] ss:$9 sm:$0xff] %v1736
        %2741 = vst [vmem:[%s1829] ss:$9 sm:$0xff] %v1737
        %2742 = vst [vmem:[%s1831] ss:$9 sm:$0xff] %v1738
        %2743 = vst [vmem:[%s1833] ss:$9 sm:$0xff] %v1739
        %v2744 = vld [vmem:[#allocation1] sm:$0xff]
        %2745 = vst [vmem:[#allocation1] ss:$9 sm:$0xff] %v1740
        %2746 = vst [vmem:[%s1821] ss:$9 sm:$0xff] %v1741
        %2747 = vst [vmem:[%s1823] ss:$9 sm:$0xff] %v1742
        %2748 = vst [vmem:[%s1825] ss:$9 sm:$0xff] %v1743
        %2749 = vst [vmem:[%s1827] ss:$9 sm:$0xff] %v1744
        %2750 = vst [vmem:[%s1829] ss:$9 sm:$0xff] %v1745
        %2751 = vst [vmem:[%s1831] ss:$9 sm:$0xff] %v1746
        %2752 = vst [vmem:[%s1833] ss:$9 sm:$0xff] %v1747
        %v2753 = vld [vmem:[#allocation1] sm:$0xff]
        %2754 = vst [vmem:[#allocation1] ss:$9 sm:$0xff] %v1748
        %2755 = vst [vmem:[%s1821] ss:$9 sm:$0xff] %v1749
        %2756 = vst [vmem:[%s1823] ss:$9 sm:$0xff] %v1750
        %2757 = vst [vmem:[%s1825] ss:$9 sm:$0xff] %v1751
        %2758 = vst [vmem:[%s1827] ss:$9 sm:$0xff] %v1752
        %2759 = vst [vmem:[%s1829] ss:$9 sm:$0xff] %v1753
        %2760 = vst [vmem:[%s1831] ss:$9 sm:$0xff] %v1754
        %2761 = vst [vmem:[%s1833] ss:$9 sm:$0xff] %v1755
        %v2762 = vld [vmem:[#allocation1] sm:$0xff]
        %2763 = vst [vmem:[#allocation1] ss:$9 sm:$0xff] %v1756
        %2764 = vst [vmem:[%s1821] ss:$9 sm:$0xff] %v1757
        %2765 = vst [vmem:[%s1823] ss:$9 sm:$0xff] %v1758
        %2766 = vst [vmem:[%s1825] ss:$9 sm:$0xff] %v1759
        %2767 = vst [vmem:[%s1827] ss:$9 sm:$0xff] %v1760
        %2768 = vst [vmem:[%s1829] ss:$9 sm:$0xff] %v1761
        %2769 = vst [vmem:[%s1831] ss:$9 sm:$0xff] %v1762
        %2770 = vst [vmem:[%s1833] ss:$9 sm:$0xff] %v1763
        %v2771 = vld [vmem:[#allocation1] sm:$0xff]
        %2772 = vst [vmem:[#allocation1] ss:$9 sm:$0xff] %v1764
        %2773 = vst [vmem:[%s1821] ss:$9 sm:$0xff] %v1765
        %2774 = vst [vmem:[%s1823] ss:$9 sm:$0xff] %v1766
        %2775 = vst [vmem:[%s1825] ss:$9 sm:$0xff] %v1767
        %2776 = vst [vmem:[%s1827] ss:$9 sm:$0xff] %v1768
        %2777 = vst [vmem:[%s1829] ss:$9 sm:$0xff] %v1769
        %2778 = vst [vmem:[%s1831] ss:$9 sm:$0xff] %v1770
        %2779 = vst [vmem:[%s1833] ss:$9 sm:$0xff] %v1771
        %v2780 = vld [vmem:[#allocation1] sm:$0xff]
        %2781 = vst [vmem:[#allocation1] ss:$9 sm:$0xff] %v1772
        %2782 = vst [vmem:[%s1821] ss:$9 sm:$0xff] %v1773
        %2783 = vst [vmem:[%s1823] ss:$9 sm:$0xff] %v1774
        %2784 = vst [vmem:[%s1825] ss:$9 sm:$0xff] %v1775
        %2785 = vst [vmem:[%s1827] ss:$9 sm:$0xff] %v1776
        %2786 = vst [vmem:[%s1829] ss:$9 sm:$0xff] %v1777
        %2787 = vst [vmem:[%s1831] ss:$9 sm:$0xff] %v1778
        %2788 = vst [vmem:[%s1833] ss:$9 sm:$0xff] %v1779
        %v2789 = vld [vmem:[#allocation1] sm:$0xff]
        %2790 = vst [vmem:[#allocation1] ss:$9 sm:$0xff] %v1780
        %2791 = vst [vmem:[%s1821] ss:$9 sm:$0xff] %v1781
        %2792 = vst [vmem:[%s1823] ss:$9 sm:$0xff] %v1782
        %2793 = vst [vmem:[%s1825] ss:$9 sm:$0xff] %v1783
        %2794 = vst [vmem:[%s1827] ss:$9 sm:$0xff] %v1784
        %2795 = vst [vmem:[%s1829] ss:$9 sm:$0xff] %v1785
        %2796 = vst [vmem:[%s1831] ss:$9 sm:$0xff] %v1786
        %2797 = vst [vmem:[%s1833] ss:$9 sm:$0xff] %v1787
        %v2798 = vld [vmem:[#allocation1] sm:$0xff]
        %2799 = vst [vmem:[#allocation1] ss:$9 sm:$0xff] %v1788
        %2800 = vst [vmem:[%s1821] ss:$9 sm:$0xff] %v1789
        %2801 = vst [vmem:[%s1823] ss:$9 sm:$0xff] %v1790
        %2802 = vst [vmem:[%s1825] ss:$9 sm:$0xff] %v1791
        %2803 = vst [vmem:[%s1827] ss:$9 sm:$0xff] %v1792
        %2804 = vst [vmem:[%s1829] ss:$9 sm:$0xff] %v1793
        %2805 = vst [vmem:[%s1831] ss:$9 sm:$0xff] %v1794
        %2806 = vst [vmem:[%s1833] ss:$9 sm:$0xff] %v1795
        %v2807 = vld [vmem:[#allocation1] sm:$0xff]
        %2808 = vst [vmem:[#allocation1] ss:$9 sm:$0xff] %v1796
        %2809 = vst [vmem:[%s1821] ss:$9 sm:$0xff] %v1797
        %2810 = vst [vmem:[%s1823] ss:$9 sm:$0xff] %v1798
        %2811 = vst [vmem:[%s1825] ss:$9 sm:$0xff] %v1799
        %2812 = vst [vmem:[%s1827] ss:$9 sm:$0xff] %v1800
        %2813 = vst [vmem:[%s1829] ss:$9 sm:$0xff] %v1801
        %2814 = vst [vmem:[%s1831] ss:$9 sm:$0xff] %v1802
        %2815 = vst [vmem:[%s1833] ss:$9 sm:$0xff] %v1803
        %v2816 = vld [vmem:[#allocation1] sm:$0xff]
        %2817 = vst [vmem:[#allocation1] ss:$9 sm:$0xff] %v1804
        %2818 = vst [vmem:[%s1821] ss:$9 sm:$0xff] %v1805
        %2819 = vst [vmem:[%s1823] ss:$9 sm:$0xff] %v1806
        %2820 = vst [vmem:[%s1825] ss:$9 sm:$0xff] %v1807
        %2821 = vst [vmem:[%s1827] ss:$9 sm:$0xff] %v1808
        %2822 = vst [vmem:[%s1829] ss:$9 sm:$0xff] %v1809
        %2823 = vst [vmem:[%s1831] ss:$9 sm:$0xff] %v1810
        %2824 = vst [vmem:[%s1833] ss:$9 sm:$0xff] %v1811
        %v2825 = vld [vmem:[#allocation1] sm:$0xff]
        %2826 = vst [vmem:[#allocation1] ss:$9 sm:$0xff] %v1812
        %2827 = vst [vmem:[%s1821] ss:$9 sm:$0xff] %v1813
        %2828 = vst [vmem:[%s1823] ss:$9 sm:$0xff] %v1814
        %2829 = vst [vmem:[%s1825] ss:$9 sm:$0xff] %v1815
        %2830 = vst [vmem:[%s1827] ss:$9 sm:$0xff] %v1816
        %2831 = vst [vmem:[%s1829] ss:$9 sm:$0xff] %v1817
        %2832 = vst [vmem:[%s1831] ss:$9 sm:$0xff] %v1818
        %2833 = vst [vmem:[%s1833] ss:$9 sm:$0xff] %v1819
        %v2834 = vld [vmem:[#allocation1] sm:$0xff]
        %2835 = vset.pattern.permute.xlu0 0
        %2836 = vperm.xlu0 %2835, %v1835
        %v2837 = vpop.permute.xlu0 %2836
        %2838 = vset.pattern.permute.xlu0 0
        %2839 = vperm.xlu0 %2838, %v1844
        %v2840 = vpop.permute.xlu0 %2839
        %2841 = vset.pattern.permute.xlu0 0
        %2842 = vperm.xlu0 %2841, %v1853
        %v2843 = vpop.permute.xlu0 %2842
        %2844 = vset.pattern.permute.xlu0 0
        %2845 = vperm.xlu0 %2844, %v1862
        %v2846 = vpop.permute.xlu0 %2845
        %2847 = vset.pattern.permute.xlu0 0
        %2848 = vperm.xlu0 %2847, %v1871
        %v2849 = vpop.permute.xlu0 %2848
        %2850 = vset.pattern.permute.xlu0 0
        %2851 = vperm.xlu0 %2850, %v1880
        %v2852 = vpop.permute.xlu0 %2851
        %2853 = vset.pattern.permute.xlu0 0
        %2854 = vperm.xlu0 %2853, %v1889
        %v2855 = vpop.permute.xlu0 %2854
        %2856 = vset.pattern.permute.xlu0 0
        %2857 = vperm.xlu0 %2856, %v1898
        %v2858 = vpop.permute.xlu0 %2857
        %2859 = vset.pattern.permute.xlu0 0
        %2860 = vperm.xlu0 %2859, %v1907
        %v2861 = vpop.permute.xlu0 %2860
        %2862 = vset.pattern.permute.xlu0 0
        %2863 = vperm.xlu0 %2862, %v1916
        %v2864 = vpop.permute.xlu0 %2863
        %2865 = vset.pattern.permute.xlu0 0
        %2866 = vperm.xlu0 %2865, %v1925
        %v2867 = vpop.permute.xlu0 %2866
        %2868 = vset.pattern.permute.xlu0 0
        %2869 = vperm.xlu0 %2868, %v1934
        %v2870 = vpop.permute.xlu0 %2869
        %2871 = vset.pattern.permute.xlu0 0
        %2872 = vperm.xlu0 %2871, %v1943
        %v2873 = vpop.permute.xlu0 %2872
        %2874 = vset.pattern.permute.xlu0 0
        %2875 = vperm.xlu0 %2874, %v1952
        %v2876 = vpop.permute.xlu0 %2875
        %2877 = vset.pattern.permute.xlu0 0
        %2878 = vperm.xlu0 %2877, %v1961
        %v2879 = vpop.permute.xlu0 %2878
        %2880 = vset.pattern.permute.xlu0 0
        %2881 = vperm.xlu0 %2880, %v1970
        %v2882 = vpop.permute.xlu0 %2881
        %2883 = vset.pattern.permute.xlu0 0
        %2884 = vperm.xlu0 %2883, %v1979
        %v2885 = vpop.permute.xlu0 %2884
        %2886 = vset.pattern.permute.xlu0 0
        %2887 = vperm.xlu0 %2886, %v1988
        %v2888 = vpop.permute.xlu0 %2887
        %2889 = vset.pattern.permute.xlu0 0
        %2890 = vperm.xlu0 %2889, %v1997
        %v2891 = vpop.permute.xlu0 %2890
        %2892 = vset.pattern.permute.xlu0 0
        %2893 = vperm.xlu0 %2892, %v2006
        %v2894 = vpop.permute.xlu0 %2893
        %2895 = vset.pattern.permute.xlu0 0
        %2896 = vperm.xlu0 %2895, %v2015
        %v2897 = vpop.permute.xlu0 %2896
        %2898 = vset.pattern.permute.xlu0 0
        %2899 = vperm.xlu0 %2898, %v2024
        %v2900 = vpop.permute.xlu0 %2899
        %2901 = vset.pattern.permute.xlu0 0
        %2902 = vperm.xlu0 %2901, %v2033
        %v2903 = vpop.permute.xlu0 %2902
        %2904 = vset.pattern.permute.xlu0 0
        %2905 = vperm.xlu0 %2904, %v2042
        %v2906 = vpop.permute.xlu0 %2905
        %2907 = vset.pattern.permute.xlu0 0
        %2908 = vperm.xlu0 %2907, %v2051
        %v2909 = vpop.permute.xlu0 %2908
        %2910 = vset.pattern.permute.xlu0 0
        %2911 = vperm.xlu0 %2910, %v2060
        %v2912 = vpop.permute.xlu0 %2911
        %2913 = vset.pattern.permute.xlu0 0
        %2914 = vperm.xlu0 %2913, %v2069
        %v2915 = vpop.permute.xlu0 %2914
        %2916 = vset.pattern.permute.xlu0 0
        %2917 = vperm.xlu0 %2916, %v2078
        %v2918 = vpop.permute.xlu0 %2917
        %2919 = vset.pattern.permute.xlu0 0
        %2920 = vperm.xlu0 %2919, %v2087
        %v2921 = vpop.permute.xlu0 %2920
        %2922 = vset.pattern.permute.xlu0 0
        %2923 = vperm.xlu0 %2922, %v2096
        %v2924 = vpop.permute.xlu0 %2923
        %2925 = vset.pattern.permute.xlu0 0
        %2926 = vperm.xlu0 %2925, %v2105
        %v2927 = vpop.permute.xlu0 %2926
        %2928 = vset.pattern.permute.xlu0 0
        %2929 = vperm.xlu0 %2928, %v2114
        %v2930 = vpop.permute.xlu0 %2929
        %2931 = vset.pattern.permute.xlu0 0
        %2932 = vperm.xlu0 %2931, %v2123
        %v2933 = vpop.permute.xlu0 %2932
        %2934 = vset.pattern.permute.xlu0 0
        %2935 = vperm.xlu0 %2934, %v2132
        %v2936 = vpop.permute.xlu0 %2935
        %2937 = vset.pattern.permute.xlu0 0
        %2938 = vperm.xlu0 %2937, %v2141
        %v2939 = vpop.permute.xlu0 %2938
        %2940 = vset.pattern.permute.xlu0 0
        %2941 = vperm.xlu0 %2940, %v2150
        %v2942 = vpop.permute.xlu0 %2941
        %2943 = vset.pattern.permute.xlu0 0
        %2944 = vperm.xlu0 %2943, %v2159
        %v2945 = vpop.permute.xlu0 %2944
        %2946 = vset.pattern.permute.xlu0 0
        %2947 = vperm.xlu0 %2946, %v2168
        %v2948 = vpop.permute.xlu0 %2947
        %2949 = vset.pattern.permute.xlu0 0
        %2950 = vperm.xlu0 %2949, %v2177
        %v2951 = vpop.permute.xlu0 %2950
        %2952 = vset.pattern.permute.xlu0 0
        %2953 = vperm.xlu0 %2952, %v2186
        %v2954 = vpop.permute.xlu0 %2953
        %2955 = vset.pattern.permute.xlu0 0
        %2956 = vperm.xlu0 %2955, %v2195
        %v2957 = vpop.permute.xlu0 %2956
        %2958 = vset.pattern.permute.xlu0 0
        %2959 = vperm.xlu0 %2958, %v2204
        %v2960 = vpop.permute.xlu0 %2959
        %2961 = vset.pattern.permute.xlu0 0
        %2962 = vperm.xlu0 %2961, %v2213
        %v2963 = vpop.permute.xlu0 %2962
        %2964 = vset.pattern.permute.xlu0 0
        %2965 = vperm.xlu0 %2964, %v2222
        %v2966 = vpop.permute.xlu0 %2965
        %2967 = vset.pattern.permute.xlu0 0
        %2968 = vperm.xlu0 %2967, %v2231
        %v2969 = vpop.permute.xlu0 %2968
        %2970 = vset.pattern.permute.xlu0 0
        %2971 = vperm.xlu0 %2970, %v2240
        %v2972 = vpop.permute.xlu0 %2971
        %2973 = vset.pattern.permute.xlu0 0
        %2974 = vperm.xlu0 %2973, %v2249
        %v2975 = vpop.permute.xlu0 %2974
        %2976 = vset.pattern.permute.xlu0 0
        %2977 = vperm.xlu0 %2976, %v2258
        %v2978 = vpop.permute.xlu0 %2977
        %2979 = vset.pattern.permute.xlu0 0
        %2980 = vperm.xlu0 %2979, %v2267
        %v2981 = vpop.permute.xlu0 %2980
        %2982 = vset.pattern.permute.xlu0 0
        %2983 = vperm.xlu0 %2982, %v2276
        %v2984 = vpop.permute.xlu0 %2983
        %2985 = vset.pattern.permute.xlu0 0
        %2986 = vperm.xlu0 %2985, %v2285
        %v2987 = vpop.permute.xlu0 %2986
        %2988 = vset.pattern.permute.xlu0 0
        %2989 = vperm.xlu0 %2988, %v2294
        %v2990 = vpop.permute.xlu0 %2989
        %2991 = vset.pattern.permute.xlu0 0
        %2992 = vperm.xlu0 %2991, %v2303
        %v2993 = vpop.permute.xlu0 %2992
        %2994 = vset.pattern.permute.xlu0 0
        %2995 = vperm.xlu0 %2994, %v2312
        %v2996 = vpop.permute.xlu0 %2995
        %2997 = vset.pattern.permute.xlu0 0
        %2998 = vperm.xlu0 %2997, %v2321
        %v2999 = vpop.permute.xlu0 %2998
        %3000 = vset.pattern.permute.xlu0 0
        %3001 = vperm.xlu0 %3000, %v2330
        %v3002 = vpop.permute.xlu0 %3001
        %3003 = vset.pattern.permute.xlu0 0
        %3004 = vperm.xlu0 %3003, %v2339
        %v3005 = vpop.permute.xlu0 %3004
        %3006 = vset.pattern.permute.xlu0 0
        %3007 = vperm.xlu0 %3006, %v2348
        %v3008 = vpop.permute.xlu0 %3007
        %3009 = vset.pattern.permute.xlu0 0
        %3010 = vperm.xlu0 %3009, %v2357
        %v3011 = vpop.permute.xlu0 %3010
        %3012 = vset.pattern.permute.xlu0 0
        %3013 = vperm.xlu0 %3012, %v2366
        %v3014 = vpop.permute.xlu0 %3013
        %3015 = vset.pattern.permute.xlu0 0
        %3016 = vperm.xlu0 %3015, %v2375
        %v3017 = vpop.permute.xlu0 %3016
        %3018 = vset.pattern.permute.xlu0 0
        %3019 = vperm.xlu0 %3018, %v2384
        %v3020 = vpop.permute.xlu0 %3019
        %3021 = vset.pattern.permute.xlu0 0
        %3022 = vperm.xlu0 %3021, %v2393
        %v3023 = vpop.permute.xlu0 %3022
        %3024 = vset.pattern.permute.xlu0 0
        %3025 = vperm.xlu0 %3024, %v2402
        %v3026 = vpop.permute.xlu0 %3025
        %3027 = vset.pattern.permute.xlu0 0
        %3028 = vperm.xlu0 %3027, %v2411
        %v3029 = vpop.permute.xlu0 %3028
        %3030 = vset.pattern.permute.xlu0 0
        %3031 = vperm.xlu0 %3030, %v2420
        %v3032 = vpop.permute.xlu0 %3031
        %3033 = vset.pattern.permute.xlu0 0
        %3034 = vperm.xlu0 %3033, %v2429
        %v3035 = vpop.permute.xlu0 %3034
        %3036 = vset.pattern.permute.xlu0 0
        %3037 = vperm.xlu0 %3036, %v2438
        %v3038 = vpop.permute.xlu0 %3037
        %3039 = vset.pattern.permute.xlu0 0
        %3040 = vperm.xlu0 %3039, %v2447
        %v3041 = vpop.permute.xlu0 %3040
        %3042 = vset.pattern.permute.xlu0 0
        %3043 = vperm.xlu0 %3042, %v2456
        %v3044 = vpop.permute.xlu0 %3043
        %3045 = vset.pattern.permute.xlu0 0
        %3046 = vperm.xlu0 %3045, %v2465
        %v3047 = vpop.permute.xlu0 %3046
        %3048 = vset.pattern.permute.xlu0 0
        %3049 = vperm.xlu0 %3048, %v2474
        %v3050 = vpop.permute.xlu0 %3049
        %3051 = vset.pattern.permute.xlu0 0
        %3052 = vperm.xlu0 %3051, %v2483
        %v3053 = vpop.permute.xlu0 %3052
        %3054 = vset.pattern.permute.xlu0 0
        %3055 = vperm.xlu0 %3054, %v2492
        %v3056 = vpop.permute.xlu0 %3055
        %3057 = vset.pattern.permute.xlu0 0
        %3058 = vperm.xlu0 %3057, %v2501
        %v3059 = vpop.permute.xlu0 %3058
        %3060 = vset.pattern.permute.xlu0 0
        %3061 = vperm.xlu0 %3060, %v2510
        %v3062 = vpop.permute.xlu0 %3061
        %3063 = vset.pattern.permute.xlu0 0
        %3064 = vperm.xlu0 %3063, %v2519
        %v3065 = vpop.permute.xlu0 %3064
        %3066 = vset.pattern.permute.xlu0 0
        %3067 = vperm.xlu0 %3066, %v2528
        %v3068 = vpop.permute.xlu0 %3067
        %3069 = vset.pattern.permute.xlu0 0
        %3070 = vperm.xlu0 %3069, %v2537
        %v3071 = vpop.permute.xlu0 %3070
        %3072 = vset.pattern.permute.xlu0 0
        %3073 = vperm.xlu0 %3072, %v2546
        %v3074 = vpop.permute.xlu0 %3073
        %3075 = vset.pattern.permute.xlu0 0
        %3076 = vperm.xlu0 %3075, %v2555
        %v3077 = vpop.permute.xlu0 %3076
        %3078 = vset.pattern.permute.xlu0 0
        %3079 = vperm.xlu0 %3078, %v2564
        %v3080 = vpop.permute.xlu0 %3079
        %3081 = vset.pattern.permute.xlu0 0
        %3082 = vperm.xlu0 %3081, %v2573
        %v3083 = vpop.permute.xlu0 %3082
        %3084 = vset.pattern.permute.xlu0 0
        %3085 = vperm.xlu0 %3084, %v2582
        %v3086 = vpop.permute.xlu0 %3085
        %3087 = vset.pattern.permute.xlu0 0
        %3088 = vperm.xlu0 %3087, %v2591
        %v3089 = vpop.permute.xlu0 %3088
        %3090 = vset.pattern.permute.xlu0 0
        %3091 = vperm.xlu0 %3090, %v2600
        %v3092 = vpop.permute.xlu0 %3091
        %3093 = vset.pattern.permute.xlu0 0
        %3094 = vperm.xlu0 %3093, %v2609
        %v3095 = vpop.permute.xlu0 %3094
        %3096 = vset.pattern.permute.xlu0 0
        %3097 = vperm.xlu0 %3096, %v2618
        %v3098 = vpop.permute.xlu0 %3097
        %3099 = vset.pattern.permute.xlu0 0
        %3100 = vperm.xlu0 %3099, %v2627
        %v3101 = vpop.permute.xlu0 %3100
        %3102 = vset.pattern.permute.xlu0 0
        %3103 = vperm.xlu0 %3102, %v2636
        %v3104 = vpop.permute.xlu0 %3103
        %3105 = vset.pattern.permute.xlu0 0
        %3106 = vperm.xlu0 %3105, %v2645
        %v3107 = vpop.permute.xlu0 %3106
        %3108 = vset.pattern.permute.xlu0 0
        %3109 = vperm.xlu0 %3108, %v2654
        %v3110 = vpop.permute.xlu0 %3109
        %3111 = vset.pattern.permute.xlu0 0
        %3112 = vperm.xlu0 %3111, %v2663
        %v3113 = vpop.permute.xlu0 %3112
        %3114 = vset.pattern.permute.xlu0 0
        %3115 = vperm.xlu0 %3114, %v2672
        %v3116 = vpop.permute.xlu0 %3115
        %3117 = vset.pattern.permute.xlu0 0
        %3118 = vperm.xlu0 %3117, %v2681
        %v3119 = vpop.permute.xlu0 %3118
        %3120 = vset.pattern.permute.xlu0 0
        %3121 = vperm.xlu0 %3120, %v2690
        %v3122 = vpop.permute.xlu0 %3121
        %3123 = vset.pattern.permute.xlu0 0
        %3124 = vperm.xlu0 %3123, %v2699
        %v3125 = vpop.permute.xlu0 %3124
        %3126 = vset.pattern.permute.xlu0 0
        %3127 = vperm.xlu0 %3126, %v2708
        %v3128 = vpop.permute.xlu0 %3127
        %3129 = vset.pattern.permute.xlu0 0
        %3130 = vperm.xlu0 %3129, %v2717
        %v3131 = vpop.permute.xlu0 %3130
        %3132 = vset.pattern.permute.xlu0 0
        %3133 = vperm.xlu0 %3132, %v2726
        %v3134 = vpop.permute.xlu0 %3133
        %3135 = vset.pattern.permute.xlu0 0
        %3136 = vperm.xlu0 %3135, %v2735
        %v3137 = vpop.permute.xlu0 %3136
        %3138 = vset.pattern.permute.xlu0 0
        %3139 = vperm.xlu0 %3138, %v2744
        %v3140 = vpop.permute.xlu0 %3139
        %3141 = vset.pattern.permute.xlu0 0
        %3142 = vperm.xlu0 %3141, %v2753
        %v3143 = vpop.permute.xlu0 %3142
        %3144 = vset.pattern.permute.xlu0 0
        %3145 = vperm.xlu0 %3144, %v2762
        %v3146 = vpop.permute.xlu0 %3145
        %3147 = vset.pattern.permute.xlu0 0
        %3148 = vperm.xlu0 %3147, %v2771
        %v3149 = vpop.permute.xlu0 %3148
        %3150 = vset.pattern.permute.xlu0 0
        %3151 = vperm.xlu0 %3150, %v2780
        %v3152 = vpop.permute.xlu0 %3151
        %3153 = vset.pattern.permute.xlu0 0
        %3154 = vperm.xlu0 %3153, %v2789
        %v3155 = vpop.permute.xlu0 %3154
        %3156 = vset.pattern.permute.xlu0 0
        %3157 = vperm.xlu0 %3156, %v2798
        %v3158 = vpop.permute.xlu0 %3157
        %3159 = vset.pattern.permute.xlu0 0
        %3160 = vperm.xlu0 %3159, %v2807
        %v3161 = vpop.permute.xlu0 %3160
        %3162 = vset.pattern.permute.xlu0 0
        %3163 = vperm.xlu0 %3162, %v2816
        %v3164 = vpop.permute.xlu0 %3163
        %3165 = vset.pattern.permute.xlu0 0
        %3166 = vperm.xlu0 %3165, %v2825
        %v3167 = vpop.permute.xlu0 %3166
        %3168 = vset.pattern.permute.xlu0 0
        %3169 = vperm.xlu0 %3168, %v2834
        %v3170 = vpop.permute.xlu0 %3169
        %v3171 = vlaneseq
        %v3172 = vand.u32 %v3171, 127
        %v3173 = vperm.slane %v2837, %v3172
        %v3174 = vadd.s32 %v3172, 4294967288
        %v3175 = vperm.slane %v2840, %v3174
        %vm3176 = vcmask 130112
        %v3177 = vsel %vm3176, %v3175, %v3173
        %v3178 = vadd.s32 %v3172, 4294967280
        %v3179 = vperm.slane %v2843, %v3178
        %vm3180 = vcmask 195712
        %v3181 = vsel %vm3180, %v3179, %v3177
        %v3182 = vadd.s32 %v3172, 4294967272
        %v3183 = vperm.slane %v2846, %v3182
        %vm3184 = vcmask 261312
        %v3185 = vsel %vm3184, %v3183, %v3181
        %v3186 = vadd.s32 %v3172, 4294967264
        %v3187 = vperm.slane %v2849, %v3186
        %vm3188 = vcmask 326912
        %v3189 = vsel %vm3188, %v3187, %v3185
        %v3190 = vadd.s32 %v3172, 4294967256
        %v3191 = vperm.slane %v2852, %v3190
        %vm3192 = vcmask 392512
        %v3193 = vsel %vm3192, %v3191, %v3189
        %v3194 = vadd.s32 %v3172, 4294967248
        %v3195 = vperm.slane %v2855, %v3194
        %vm3196 = vcmask 458112
        %v3197 = vsel %vm3196, %v3195, %v3193
        %v3198 = vadd.s32 %v3172, 4294967240
        %v3199 = vperm.slane %v2858, %v3198
        %vm3200 = vcmask 523712
        %v3201 = vsel %vm3200, %v3199, %v3197
        %v3202 = vadd.s32 %v3172, 4294967232
        %v3203 = vperm.slane %v2861, %v3202
        %vm3204 = vcmask 589312
        %v3205 = vsel %vm3204, %v3203, %v3201
        %v3206 = vadd.s32 %v3172, 4294967224
        %v3207 = vperm.slane %v2864, %v3206
        %vm3208 = vcmask 654912
        %v3209 = vsel %vm3208, %v3207, %v3205
        %v3210 = vadd.s32 %v3172, 4294967216
        %v3211 = vperm.slane %v2867, %v3210
        %vm3212 = vcmask 720512
        %v3213 = vsel %vm3212, %v3211, %v3209
        %v3214 = vadd.s32 %v3172, 4294967208
        %v3215 = vperm.slane %v2870, %v3214
        %vm3216 = vcmask 786112
        %v3217 = vsel %vm3216, %v3215, %v3213
        %v3218 = vadd.s32 %v3172, 4294967200
        %v3219 = vperm.slane %v2873, %v3218
        %vm3220 = vcmask 851712
        %v3221 = vsel %vm3220, %v3219, %v3217
        %v3222 = vadd.s32 %v3172, 4294967192
        %v3223 = vperm.slane %v2876, %v3222
        %vm3224 = vcmask 917312
        %v3225 = vsel %vm3224, %v3223, %v3221
        %v3226 = vadd.s32 %v3172, 4294967184
        %v3227 = vperm.slane %v2879, %v3226
        %vm3228 = vcmask 982912
        %v3229 = vsel %vm3228, %v3227, %v3225
        %v3230 = vadd.s32 %v3172, 4294967176
        %v3231 = vperm.slane %v2882, %v3230
        %vm3232 = vcmask 1048512
        %v3233 = vsel %vm3232, %v3231, %v3229
        %v3234 = vperm.slane %v2885, %v3172
        %v3235 = vperm.slane %v2888, %v3174
        %v3236 = vsel %vm3176, %v3235, %v3234
        %v3237 = vperm.slane %v2891, %v3178
        %v3238 = vsel %vm3180, %v3237, %v3236
        %v3239 = vperm.slane %v2894, %v3182
        %v3240 = vsel %vm3184, %v3239, %v3238
        %v3241 = vperm.slane %v2897, %v3186
        %v3242 = vsel %vm3188, %v3241, %v3240
        %v3243 = vperm.slane %v2900, %v3190
        %v3244 = vsel %vm3192, %v3243, %v3242
        %v3245 = vperm.slane %v2903, %v3194
        %v3246 = vsel %vm3196, %v3245, %v3244
        %v3247 = vperm.slane %v2906, %v3198
        %v3248 = vsel %vm3200, %v3247, %v3246
        %v3249 = vperm.slane %v2909, %v3202
        %v3250 = vsel %vm3204, %v3249, %v3248
        %v3251 = vperm.slane %v2912, %v3206
        %v3252 = vsel %vm3208, %v3251, %v3250
        %v3253 = vperm.slane %v2915, %v3210
        %v3254 = vsel %vm3212, %v3253, %v3252
        %v3255 = vperm.slane %v2918, %v3214
        %v3256 = vsel %vm3216, %v3255, %v3254
        %v3257 = vperm.slane %v2921, %v3218
        %v3258 = vsel %vm3220, %v3257, %v3256
        %v3259 = vperm.slane %v2924, %v3222
        %v3260 = vsel %vm3224, %v3259, %v3258
        %v3261 = vperm.slane %v2927, %v3226
        %v3262 = vsel %vm3228, %v3261, %v3260
        %v3263 = vperm.slane %v2930, %v3230
        %v3264 = vsel %vm3232, %v3263, %v3262
        %v3265 = vperm.slane %v2933, %v3172
        %v3266 = vperm.slane %v2936, %v3174
        %v3267 = vsel %vm3176, %v3266, %v3265
        %v3268 = vperm.slane %v2939, %v3178
        %v3269 = vsel %vm3180, %v3268, %v3267
        %v3270 = vperm.slane %v2942, %v3182
        %v3271 = vsel %vm3184, %v3270, %v3269
        %v3272 = vperm.slane %v2945, %v3186
        %v3273 = vsel %vm3188, %v3272, %v3271
        %v3274 = vperm.slane %v2948, %v3190
        %v3275 = vsel %vm3192, %v3274, %v3273
        %v3276 = vperm.slane %v2951, %v3194
        %v3277 = vsel %vm3196, %v3276, %v3275
        %v3278 = vperm.slane %v2954, %v3198
        %v3279 = vsel %vm3200, %v3278, %v3277
        %v3280 = vperm.slane %v2957, %v3202
        %v3281 = vsel %vm3204, %v3280, %v3279
        %v3282 = vperm.slane %v2960, %v3206
        %v3283 = vsel %vm3208, %v3282, %v3281
        %v3284 = vperm.slane %v2963, %v3210
        %v3285 = vsel %vm3212, %v3284, %v3283
        %v3286 = vperm.slane %v2966, %v3214
        %v3287 = vsel %vm3216, %v3286, %v3285
        %v3288 = vperm.slane %v2969, %v3218
        %v3289 = vsel %vm3220, %v3288, %v3287
        %v3290 = vperm.slane %v2972, %v3222
        %v3291 = vsel %vm3224, %v3290, %v3289
        %v3292 = vperm.slane %v2975, %v3226
        %v3293 = vsel %vm3228, %v3292, %v3291
        %v3294 = vperm.slane %v2978, %v3230
        %v3295 = vsel %vm3232, %v3294, %v3293
        %v3296 = vperm.slane %v2981, %v3172
        %v3297 = vperm.slane %v2984, %v3174
        %v3298 = vsel %vm3176, %v3297, %v3296
        %v3299 = vperm.slane %v2987, %v3178
        %v3300 = vsel %vm3180, %v3299, %v3298
        %v3301 = vperm.slane %v2990, %v3182
        %v3302 = vsel %vm3184, %v3301, %v3300
        %v3303 = vperm.slane %v2993, %v3186
        %v3304 = vsel %vm3188, %v3303, %v3302
        %v3305 = vperm.slane %v2996, %v3190
        %v3306 = vsel %vm3192, %v3305, %v3304
        %v3307 = vperm.slane %v2999, %v3194
        %v3308 = vsel %vm3196, %v3307, %v3306
        %v3309 = vperm.slane %v3002, %v3198
        %v3310 = vsel %vm3200, %v3309, %v3308
        %v3311 = vperm.slane %v3005, %v3202
        %v3312 = vsel %vm3204, %v3311, %v3310
        %v3313 = vperm.slane %v3008, %v3206
        %v3314 = vsel %vm3208, %v3313, %v3312
        %v3315 = vperm.slane %v3011, %v3210
        %v3316 = vsel %vm3212, %v3315, %v3314
        %v3317 = vperm.slane %v3014, %v3214
        %v3318 = vsel %vm3216, %v3317, %v3316
        %v3319 = vperm.slane %v3017, %v3218
        %v3320 = vsel %vm3220, %v3319, %v3318
        %v3321 = vperm.slane %v3020, %v3222
        %v3322 = vsel %vm3224, %v3321, %v3320
        %v3323 = vperm.slane %v3023, %v3226
        %v3324 = vsel %vm3228, %v3323, %v3322
        %v3325 = vperm.slane %v3026, %v3230
        %v3326 = vsel %vm3232, %v3325, %v3324
        %v3327 = vperm.slane %v3029, %v3172
        %v3328 = vperm.slane %v3032, %v3174
        %v3329 = vsel %vm3176, %v3328, %v3327
        %v3330 = vperm.slane %v3035, %v3178
        %v3331 = vsel %vm3180, %v3330, %v3329
        %v3332 = vperm.slane %v3038, %v3182
        %v3333 = vsel %vm3184, %v3332, %v3331
        %v3334 = vperm.slane %v3041, %v3186
        %v3335 = vsel %vm3188, %v3334, %v3333
        %v3336 = vperm.slane %v3044, %v3190
        %v3337 = vsel %vm3192, %v3336, %v3335
        %v3338 = vperm.slane %v3047, %v3194
        %v3339 = vsel %vm3196, %v3338, %v3337
        %v3340 = vperm.slane %v3050, %v3198
        %v3341 = vsel %vm3200, %v3340, %v3339
        %v3342 = vperm.slane %v3053, %v3202
        %v3343 = vsel %vm3204, %v3342, %v3341
        %v3344 = vperm.slane %v3056, %v3206
        %v3345 = vsel %vm3208, %v3344, %v3343
        %v3346 = vperm.slane %v3059, %v3210
        %v3347 = vsel %vm3212, %v3346, %v3345
        %v3348 = vperm.slane %v3062, %v3214
        %v3349 = vsel %vm3216, %v3348, %v3347
        %v3350 = vperm.slane %v3065, %v3218
        %v3351 = vsel %vm3220, %v3350, %v3349
        %v3352 = vperm.slane %v3068, %v3222
        %v3353 = vsel %vm3224, %v3352, %v3351
        %v3354 = vperm.slane %v3071, %v3226
        %v3355 = vsel %vm3228, %v3354, %v3353
        %v3356 = vperm.slane %v3074, %v3230
        %v3357 = vsel %vm3232, %v3356, %v3355
        %v3358 = vperm.slane %v3077, %v3172
        %v3359 = vperm.slane %v3080, %v3174
        %v3360 = vsel %vm3176, %v3359, %v3358
        %v3361 = vperm.slane %v3083, %v3178
        %v3362 = vsel %vm3180, %v3361, %v3360
        %v3363 = vperm.slane %v3086, %v3182
        %v3364 = vsel %vm3184, %v3363, %v3362
        %v3365 = vperm.slane %v3089, %v3186
        %v3366 = vsel %vm3188, %v3365, %v3364
        %v3367 = vperm.slane %v3092, %v3190
        %v3368 = vsel %vm3192, %v3367, %v3366
        %v3369 = vperm.slane %v3095, %v3194
        %v3370 = vsel %vm3196, %v3369, %v3368
        %v3371 = vperm.slane %v3098, %v3198
        %v3372 = vsel %vm3200, %v3371, %v3370
        %v3373 = vperm.slane %v3101, %v3202
        %v3374 = vsel %vm3204, %v3373, %v3372
        %v3375 = vperm.slane %v3104, %v3206
        %v3376 = vsel %vm3208, %v3375, %v3374
        %v3377 = vperm.slane %v3107, %v3210
        %v3378 = vsel %vm3212, %v3377, %v3376
        %v3379 = vperm.slane %v3110, %v3214
        %v3380 = vsel %vm3216, %v3379, %v3378
        %v3381 = vperm.slane %v3113, %v3218
        %v3382 = vsel %vm3220, %v3381, %v3380
        %v3383 = vperm.slane %v3116, %v3222
        %v3384 = vsel %vm3224, %v3383, %v3382
        %v3385 = vperm.slane %v3119, %v3226
        %v3386 = vsel %vm3228, %v3385, %v3384
        %v3387 = vperm.slane %v3122, %v3230
        %v3388 = vsel %vm3232, %v3387, %v3386
        %v3389 = vperm.slane %v3125, %v3172
        %v3390 = vperm.slane %v3128, %v3174
        %v3391 = vsel %vm3176, %v3390, %v3389
        %v3392 = vperm.slane %v3131, %v3178
        %v3393 = vsel %vm3180, %v3392, %v3391
        %v3394 = vperm.slane %v3134, %v3182
        %v3395 = vsel %vm3184, %v3394, %v3393
        %v3396 = vperm.slane %v3137, %v3186
        %v3397 = vsel %vm3188, %v3396, %v3395
        %v3398 = vperm.slane %v3140, %v3190
        %v3399 = vsel %vm3192, %v3398, %v3397
        %v3400 = vperm.slane %v3143, %v3194
        %v3401 = vsel %vm3196, %v3400, %v3399
        %v3402 = vperm.slane %v3146, %v3198
        %v3403 = vsel %vm3200, %v3402, %v3401
        %v3404 = vperm.slane %v3149, %v3202
        %v3405 = vsel %vm3204, %v3404, %v3403
        %v3406 = vperm.slane %v3152, %v3206
        %v3407 = vsel %vm3208, %v3406, %v3405
        %v3408 = vperm.slane %v3155, %v3210
        %v3409 = vsel %vm3212, %v3408, %v3407
        %v3410 = vperm.slane %v3158, %v3214
        %v3411 = vsel %vm3216, %v3410, %v3409
        %v3412 = vperm.slane %v3161, %v3218
        %v3413 = vsel %vm3220, %v3412, %v3411
        %v3414 = vperm.slane %v3164, %v3222
        %v3415 = vsel %vm3224, %v3414, %v3413
        %v3416 = vperm.slane %v3167, %v3226
        %v3417 = vsel %vm3228, %v3416, %v3415
        %v3418 = vperm.slane %v3170, %v3230
        %v3419 = vsel %vm3232, %v3418, %v3417
        %v3420 = vrot.slane %v3264, 7
        %v3421 = vrot.slane %v3295, 6
        %v3422 = vrot.slane %v3326, 5
        %v3423 = vrot.slane %v3357, 4
        %v3424 = vrot.slane %v3388, 3
        %v3425 = vrot.slane %v3419, 2
        %vm3426 = vcmask 1040384
        %v3427 = vsel %vm3426, %v3233, %v3420
        %vm3428 = vcmask 1042434
        %v3429 = vsel %vm3428, %v3421, %v3422
        %vm3430 = vcmask 1041408
        %v3431 = vsel %vm3430, %v3427, %v3429
        %vm3432 = vcmask 1044484
        %v3433 = vsel %vm3432, %v3423, %v3424
        %vm3434 = vcmask 1045508
        %v3435 = vsel %vm3434, %v3433, %v3425
        %vm3436 = vcmask 1043456
        %v3437 = vsel %vm3436, %v3431, %v3435
        %s3439 = sshra.s32 %s362, 7
        %s3440 = sand.u32 %s362, 127
        %s3441 = smul.addr %s3439, 2
        %s3442 = scalar_lea.vmem [#allocation2], %s3441
        %v3443 = vlaneseq
        %vm3444 = vcmp.ge.s32.totalorder %v3443, 0
        %vm3445 = vcmp.lt.s32.totalorder %v3443, 896
        %vm3446 = vmand %vm3444, %vm3445
        %3447 = vst.msk [vmem:[%s3442] ss:$2 sm:$0x7f] %vm3446, %v3437
        %v3448 = vsel %vm363, %v250, -inf
        %3449 = vmax.xlane.f32.xlu0 %v3448
        %v3450 = vpop.xlane.xlu0 %3449
        %v3451 = vsel %vm363, %v251, -inf
        %3452 = vmax.xlane.f32.xlu0 %v3451
        %v3453 = vpop.xlane.xlu0 %3452
        %v3454 = vsel %vm363, %v252, -inf
        %3455 = vmax.xlane.f32.xlu0 %v3454
        %v3456 = vpop.xlane.xlu0 %3455
        %v3457 = vsel %vm363, %v253, -inf
        %3458 = vmax.xlane.f32.xlu0 %v3457
        %v3459 = vpop.xlane.xlu0 %3458
        %v3460 = vsel %vm363, %v254, -inf
        %3461 = vmax.xlane.f32.xlu0 %v3460
        %v3462 = vpop.xlane.xlu0 %3461
        %v3463 = vsel %vm363, %v255, -inf
        %3464 = vmax.xlane.f32.xlu0 %v3463
        %v3465 = vpop.xlane.xlu0 %3464
        %v3466 = vsel %vm363, %v256, -inf
        %3467 = vmax.xlane.f32.xlu0 %v3466
        %v3468 = vpop.xlane.xlu0 %3467
        %v3469 = vsel %vm363, %v257, -inf
        %3470 = vmax.xlane.f32.xlu0 %v3469
        %v3471 = vpop.xlane.xlu0 %3470
        %v3472 = vsel %vm363, %v258, -inf
        %3473 = vmax.xlane.f32.xlu0 %v3472
        %v3474 = vpop.xlane.xlu0 %3473
        %v3475 = vsel %vm363, %v259, -inf
        %3476 = vmax.xlane.f32.xlu0 %v3475
        %v3477 = vpop.xlane.xlu0 %3476
        %v3478 = vsel %vm363, %v260, -inf
        %3479 = vmax.xlane.f32.xlu0 %v3478
        %v3480 = vpop.xlane.xlu0 %3479
        %v3481 = vsel %vm363, %v261, -inf
        %3482 = vmax.xlane.f32.xlu0 %v3481
        %v3483 = vpop.xlane.xlu0 %3482
        %v3484 = vsel %vm363, %v262, -inf
        %3485 = vmax.xlane.f32.xlu0 %v3484
        %v3486 = vpop.xlane.xlu0 %3485
        %v3487 = vsel %vm363, %v263, -inf
        %3488 = vmax.xlane.f32.xlu0 %v3487
        %v3489 = vpop.xlane.xlu0 %3488
        %v3490 = vsel %vm363, %v264, -inf
        %3491 = vmax.xlane.f32.xlu0 %v3490
        %v3492 = vpop.xlane.xlu0 %3491
        %v3493 = vsel %vm363, %v265, -inf
        %3494 = vmax.xlane.f32.xlu0 %v3493
        %v3495 = vpop.xlane.xlu0 %3494
        %v3496 = vsel %vm363, %v266, -inf
        %3497 = vmax.xlane.f32.xlu0 %v3496
        %v3498 = vpop.xlane.xlu0 %3497
        %v3499 = vsel %vm363, %v267, -inf
        %3500 = vmax.xlane.f32.xlu0 %v3499
        %v3501 = vpop.xlane.xlu0 %3500
        %v3502 = vsel %vm363, %v268, -inf
        %3503 = vmax.xlane.f32.xlu0 %v3502
        %v3504 = vpop.xlane.xlu0 %3503
        %v3505 = vsel %vm363, %v269, -inf
        %3506 = vmax.xlane.f32.xlu0 %v3505
        %v3507 = vpop.xlane.xlu0 %3506
        %v3508 = vsel %vm363, %v270, -inf
        %3509 = vmax.xlane.f32.xlu0 %v3508
        %v3510 = vpop.xlane.xlu0 %3509
        %v3511 = vsel %vm363, %v271, -inf
        %3512 = vmax.xlane.f32.xlu0 %v3511
        %v3513 = vpop.xlane.xlu0 %3512
        %v3514 = vsel %vm363, %v272, -inf
        %3515 = vmax.xlane.f32.xlu0 %v3514
        %v3516 = vpop.xlane.xlu0 %3515
        %v3517 = vsel %vm363, %v273, -inf
        %3518 = vmax.xlane.f32.xlu0 %v3517
        %v3519 = vpop.xlane.xlu0 %3518
        %v3520 = vsel %vm363, %v274, -inf
        %3521 = vmax.xlane.f32.xlu0 %v3520
        %v3522 = vpop.xlane.xlu0 %3521
        %v3523 = vsel %vm363, %v275, -inf
        %3524 = vmax.xlane.f32.xlu0 %v3523
        %v3525 = vpop.xlane.xlu0 %3524
        %v3526 = vsel %vm363, %v276, -inf
        %3527 = vmax.xlane.f32.xlu0 %v3526
        %v3528 = vpop.xlane.xlu0 %3527
        %v3529 = vsel %vm363, %v277, -inf
        %3530 = vmax.xlane.f32.xlu0 %v3529
        %v3531 = vpop.xlane.xlu0 %3530
        %v3532 = vsel %vm363, %v278, -inf
        %3533 = vmax.xlane.f32.xlu0 %v3532
        %v3534 = vpop.xlane.xlu0 %3533
        %v3535 = vsel %vm363, %v279, -inf
        %3536 = vmax.xlane.f32.xlu0 %v3535
        %v3537 = vpop.xlane.xlu0 %3536
        %v3538 = vsel %vm363, %v280, -inf
        %3539 = vmax.xlane.f32.xlu0 %v3538
        %v3540 = vpop.xlane.xlu0 %3539
        %v3541 = vsel %vm363, %v281, -inf
        %3542 = vmax.xlane.f32.xlu0 %v3541
        %v3543 = vpop.xlane.xlu0 %3542
        %v3544 = vsel %vm363, %v282, -inf
        %3545 = vmax.xlane.f32.xlu0 %v3544
        %v3546 = vpop.xlane.xlu0 %3545
        %v3547 = vsel %vm363, %v283, -inf
        %3548 = vmax.xlane.f32.xlu0 %v3547
        %v3549 = vpop.xlane.xlu0 %3548
        %v3550 = vsel %vm363, %v284, -inf
        %3551 = vmax.xlane.f32.xlu0 %v3550
        %v3552 = vpop.xlane.xlu0 %3551
        %v3553 = vsel %vm363, %v285, -inf
        %3554 = vmax.xlane.f32.xlu0 %v3553
        %v3555 = vpop.xlane.xlu0 %3554
        %v3556 = vsel %vm363, %v286, -inf
        %3557 = vmax.xlane.f32.xlu0 %v3556
        %v3558 = vpop.xlane.xlu0 %3557
        %v3559 = vsel %vm363, %v287, -inf
        %3560 = vmax.xlane.f32.xlu0 %v3559
        %v3561 = vpop.xlane.xlu0 %3560
        %v3562 = vsel %vm363, %v288, -inf
        %3563 = vmax.xlane.f32.xlu0 %v3562
        %v3564 = vpop.xlane.xlu0 %3563
        %v3565 = vsel %vm363, %v289, -inf
        %3566 = vmax.xlane.f32.xlu0 %v3565
        %v3567 = vpop.xlane.xlu0 %3566
        %v3568 = vsel %vm363, %v290, -inf
        %3569 = vmax.xlane.f32.xlu0 %v3568
        %v3570 = vpop.xlane.xlu0 %3569
        %v3571 = vsel %vm363, %v291, -inf
        %3572 = vmax.xlane.f32.xlu0 %v3571
        %v3573 = vpop.xlane.xlu0 %3572
        %v3574 = vsel %vm363, %v292, -inf
        %3575 = vmax.xlane.f32.xlu0 %v3574
        %v3576 = vpop.xlane.xlu0 %3575
        %v3577 = vsel %vm363, %v293, -inf
        %3578 = vmax.xlane.f32.xlu0 %v3577
        %v3579 = vpop.xlane.xlu0 %3578
        %v3580 = vsel %vm363, %v294, -inf
        %3581 = vmax.xlane.f32.xlu0 %v3580
        %v3582 = vpop.xlane.xlu0 %3581
        %v3583 = vsel %vm363, %v295, -inf
        %3584 = vmax.xlane.f32.xlu0 %v3583
        %v3585 = vpop.xlane.xlu0 %3584
        %v3586 = vsel %vm363, %v296, -inf
        %3587 = vmax.xlane.f32.xlu0 %v3586
        %v3588 = vpop.xlane.xlu0 %3587
        %v3589 = vsel %vm363, %v297, -inf
        %3590 = vmax.xlane.f32.xlu0 %v3589
        %v3591 = vpop.xlane.xlu0 %3590
        %v3592 = vsel %vm363, %v298, -inf
        %3593 = vmax.xlane.f32.xlu0 %v3592
        %v3594 = vpop.xlane.xlu0 %3593
        %v3595 = vsel %vm363, %v299, -inf
        %3596 = vmax.xlane.f32.xlu0 %v3595
        %v3597 = vpop.xlane.xlu0 %3596
        %v3598 = vsel %vm363, %v300, -inf
        %3599 = vmax.xlane.f32.xlu0 %v3598
        %v3600 = vpop.xlane.xlu0 %3599
        %v3601 = vsel %vm363, %v301, -inf
        %3602 = vmax.xlane.f32.xlu0 %v3601
        %v3603 = vpop.xlane.xlu0 %3602
        %v3604 = vsel %vm363, %v302, -inf
        %3605 = vmax.xlane.f32.xlu0 %v3604
        %v3606 = vpop.xlane.xlu0 %3605
        %v3607 = vsel %vm363, %v303, -inf
        %3608 = vmax.xlane.f32.xlu0 %v3607
        %v3609 = vpop.xlane.xlu0 %3608
        %v3610 = vsel %vm363, %v304, -inf
        %3611 = vmax.xlane.f32.xlu0 %v3610
        %v3612 = vpop.xlane.xlu0 %3611
        %v3613 = vsel %vm363, %v305, -inf
        %3614 = vmax.xlane.f32.xlu0 %v3613
        %v3615 = vpop.xlane.xlu0 %3614
        %v3616 = vsel %vm363, %v306, -inf
        %3617 = vmax.xlane.f32.xlu0 %v3616
        %v3618 = vpop.xlane.xlu0 %3617
        %v3619 = vsel %vm363, %v307, -inf
        %3620 = vmax.xlane.f32.xlu0 %v3619
        %v3621 = vpop.xlane.xlu0 %3620
        %v3622 = vsel %vm363, %v308, -inf
        %3623 = vmax.xlane.f32.xlu0 %v3622
        %v3624 = vpop.xlane.xlu0 %3623
        %v3625 = vsel %vm363, %v309, -inf
        %3626 = vmax.xlane.f32.xlu0 %v3625
        %v3627 = vpop.xlane.xlu0 %3626
        %v3628 = vsel %vm363, %v310, -inf
        %3629 = vmax.xlane.f32.xlu0 %v3628
        %v3630 = vpop.xlane.xlu0 %3629
        %v3631 = vsel %vm363, %v311, -inf
        %3632 = vmax.xlane.f32.xlu0 %v3631
        %v3633 = vpop.xlane.xlu0 %3632
        %v3634 = vsel %vm363, %v312, -inf
        %3635 = vmax.xlane.f32.xlu0 %v3634
        %v3636 = vpop.xlane.xlu0 %3635
        %v3637 = vsel %vm363, %v313, -inf
        %3638 = vmax.xlane.f32.xlu0 %v3637
        %v3639 = vpop.xlane.xlu0 %3638
        %v3640 = vsel %vm363, %v314, -inf
        %3641 = vmax.xlane.f32.xlu0 %v3640
        %v3642 = vpop.xlane.xlu0 %3641
        %v3643 = vsel %vm363, %v315, -inf
        %3644 = vmax.xlane.f32.xlu0 %v3643
        %v3645 = vpop.xlane.xlu0 %3644
        %v3646 = vsel %vm363, %v316, -inf
        %3647 = vmax.xlane.f32.xlu0 %v3646
        %v3648 = vpop.xlane.xlu0 %3647
        %v3649 = vsel %vm363, %v317, -inf
        %3650 = vmax.xlane.f32.xlu0 %v3649
        %v3651 = vpop.xlane.xlu0 %3650
        %v3652 = vsel %vm363, %v318, -inf
        %3653 = vmax.xlane.f32.xlu0 %v3652
        %v3654 = vpop.xlane.xlu0 %3653
        %v3655 = vsel %vm363, %v319, -inf
        %3656 = vmax.xlane.f32.xlu0 %v3655
        %v3657 = vpop.xlane.xlu0 %3656
        %v3658 = vsel %vm363, %v320, -inf
        %3659 = vmax.xlane.f32.xlu0 %v3658
        %v3660 = vpop.xlane.xlu0 %3659
        %v3661 = vsel %vm363, %v321, -inf
        %3662 = vmax.xlane.f32.xlu0 %v3661
        %v3663 = vpop.xlane.xlu0 %3662
        %v3664 = vsel %vm363, %v322, -inf
        %3665 = vmax.xlane.f32.xlu0 %v3664
        %v3666 = vpop.xlane.xlu0 %3665
        %v3667 = vsel %vm363, %v323, -inf
        %3668 = vmax.xlane.f32.xlu0 %v3667
        %v3669 = vpop.xlane.xlu0 %3668
        %v3670 = vsel %vm363, %v324, -inf
        %3671 = vmax.xlane.f32.xlu0 %v3670
        %v3672 = vpop.xlane.xlu0 %3671
        %v3673 = vsel %vm363, %v325, -inf
        %3674 = vmax.xlane.f32.xlu0 %v3673
        %v3675 = vpop.xlane.xlu0 %3674
        %v3676 = vsel %vm363, %v326, -inf
        %3677 = vmax.xlane.f32.xlu0 %v3676
        %v3678 = vpop.xlane.xlu0 %3677
        %v3679 = vsel %vm363, %v327, -inf
        %3680 = vmax.xlane.f32.xlu0 %v3679
        %v3681 = vpop.xlane.xlu0 %3680
        %v3682 = vsel %vm363, %v328, -inf
        %3683 = vmax.xlane.f32.xlu0 %v3682
        %v3684 = vpop.xlane.xlu0 %3683
        %v3685 = vsel %vm363, %v329, -inf
        %3686 = vmax.xlane.f32.xlu0 %v3685
        %v3687 = vpop.xlane.xlu0 %3686
        %v3688 = vsel %vm363, %v330, -inf
        %3689 = vmax.xlane.f32.xlu0 %v3688
        %v3690 = vpop.xlane.xlu0 %3689
        %v3691 = vsel %vm363, %v331, -inf
        %3692 = vmax.xlane.f32.xlu0 %v3691
        %v3693 = vpop.xlane.xlu0 %3692
        %v3694 = vsel %vm363, %v332, -inf
        %3695 = vmax.xlane.f32.xlu0 %v3694
        %v3696 = vpop.xlane.xlu0 %3695
        %v3697 = vsel %vm363, %v333, -inf
        %3698 = vmax.xlane.f32.xlu0 %v3697
        %v3699 = vpop.xlane.xlu0 %3698
        %v3700 = vsel %vm363, %v334, -inf
        %3701 = vmax.xlane.f32.xlu0 %v3700
        %v3702 = vpop.xlane.xlu0 %3701
        %v3703 = vsel %vm363, %v335, -inf
        %3704 = vmax.xlane.f32.xlu0 %v3703
        %v3705 = vpop.xlane.xlu0 %3704
        %v3706 = vsel %vm363, %v336, -inf
        %3707 = vmax.xlane.f32.xlu0 %v3706
        %v3708 = vpop.xlane.xlu0 %3707
        %v3709 = vsel %vm363, %v337, -inf
        %3710 = vmax.xlane.f32.xlu0 %v3709
        %v3711 = vpop.xlane.xlu0 %3710
        %v3712 = vsel %vm363, %v338, -inf
        %3713 = vmax.xlane.f32.xlu0 %v3712
        %v3714 = vpop.xlane.xlu0 %3713
        %v3715 = vsel %vm363, %v339, -inf
        %3716 = vmax.xlane.f32.xlu0 %v3715
        %v3717 = vpop.xlane.xlu0 %3716
        %v3718 = vsel %vm363, %v340, -inf
        %3719 = vmax.xlane.f32.xlu0 %v3718
        %v3720 = vpop.xlane.xlu0 %3719
        %v3721 = vsel %vm363, %v341, -inf
        %3722 = vmax.xlane.f32.xlu0 %v3721
        %v3723 = vpop.xlane.xlu0 %3722
        %v3724 = vsel %vm363, %v342, -inf
        %3725 = vmax.xlane.f32.xlu0 %v3724
        %v3726 = vpop.xlane.xlu0 %3725
        %v3727 = vsel %vm363, %v343, -inf
        %3728 = vmax.xlane.f32.xlu0 %v3727
        %v3729 = vpop.xlane.xlu0 %3728
        %v3730 = vsel %vm363, %v344, -inf
        %3731 = vmax.xlane.f32.xlu0 %v3730
        %v3732 = vpop.xlane.xlu0 %3731
        %v3733 = vsel %vm363, %v345, -inf
        %3734 = vmax.xlane.f32.xlu0 %v3733
        %v3735 = vpop.xlane.xlu0 %3734
        %v3736 = vsel %vm363, %v346, -inf
        %3737 = vmax.xlane.f32.xlu0 %v3736
        %v3738 = vpop.xlane.xlu0 %3737
        %v3739 = vsel %vm363, %v347, -inf
        %3740 = vmax.xlane.f32.xlu0 %v3739
        %v3741 = vpop.xlane.xlu0 %3740
        %v3742 = vsel %vm363, %v348, -inf
        %3743 = vmax.xlane.f32.xlu0 %v3742
        %v3744 = vpop.xlane.xlu0 %3743
        %v3745 = vsel %vm363, %v349, -inf
        %3746 = vmax.xlane.f32.xlu0 %v3745
        %v3747 = vpop.xlane.xlu0 %3746
        %v3748 = vsel %vm363, %v350, -inf
        %3749 = vmax.xlane.f32.xlu0 %v3748
        %v3750 = vpop.xlane.xlu0 %3749
        %v3751 = vsel %vm363, %v351, -inf
        %3752 = vmax.xlane.f32.xlu0 %v3751
        %v3753 = vpop.xlane.xlu0 %3752
        %v3754 = vsel %vm363, %v352, -inf
        %3755 = vmax.xlane.f32.xlu0 %v3754
        %v3756 = vpop.xlane.xlu0 %3755
        %v3757 = vsel %vm363, %v353, -inf
        %3758 = vmax.xlane.f32.xlu0 %v3757
        %v3759 = vpop.xlane.xlu0 %3758
        %v3760 = vsel %vm363, %v354, -inf
        %3761 = vmax.xlane.f32.xlu0 %v3760
        %v3762 = vpop.xlane.xlu0 %3761
        %v3763 = vsel %vm363, %v355, -inf
        %3764 = vmax.xlane.f32.xlu0 %v3763
        %v3765 = vpop.xlane.xlu0 %3764
        %v3766 = vsel %vm363, %v356, -inf
        %3767 = vmax.xlane.f32.xlu0 %v3766
        %v3768 = vpop.xlane.xlu0 %3767
        %v3769 = vsel %vm363, %v357, -inf
        %3770 = vmax.xlane.f32.xlu0 %v3769
        %v3771 = vpop.xlane.xlu0 %3770
        %v3772 = vsel %vm363, %v358, -inf
        %3773 = vmax.xlane.f32.xlu0 %v3772
        %v3774 = vpop.xlane.xlu0 %3773
        %v3775 = vsel %vm363, %v359, -inf
        %3776 = vmax.xlane.f32.xlu0 %v3775
        %v3777 = vpop.xlane.xlu0 %3776
        %v3778 = vsel %vm363, %v360, -inf
        %3779 = vmax.xlane.f32.xlu0 %v3778
        %v3780 = vpop.xlane.xlu0 %3779
        %v3781 = vsel %vm363, %v361, -inf
        %3782 = vmax.xlane.f32.xlu0 %v3781
        %v3783 = vpop.xlane.xlu0 %3782
        %v3896 = vperm.slane %v3450, 0
        %v3897 = vperm.slane %v3450, 1
        %v3898 = vperm.slane %v3450, 2
        %v3899 = vperm.slane %v3450, 3
        %v3900 = vperm.slane %v3450, 4
        %v3901 = vperm.slane %v3450, 5
        %v3902 = vperm.slane %v3450, 6
        %v3903 = vperm.slane %v3450, 7
        %v3904 = vperm.slane %v3453, 0
        %v3905 = vperm.slane %v3453, 1
        %v3906 = vperm.slane %v3453, 2
        %v3907 = vperm.slane %v3453, 3
        %v3908 = vperm.slane %v3453, 4
        %v3909 = vperm.slane %v3453, 5
        %v3910 = vperm.slane %v3453, 6
        %v3911 = vperm.slane %v3453, 7
        %v3912 = vperm.slane %v3456, 0
        %v3913 = vperm.slane %v3456, 1
        %v3914 = vperm.slane %v3456, 2
        %v3915 = vperm.slane %v3456, 3
        %v3916 = vperm.slane %v3456, 4
        %v3917 = vperm.slane %v3456, 5
        %v3918 = vperm.slane %v3456, 6
        %v3919 = vperm.slane %v3456, 7
        %v3920 = vperm.slane %v3459, 0
        %v3921 = vperm.slane %v3459, 1
        %v3922 = vperm.slane %v3459, 2
        %v3923 = vperm.slane %v3459, 3
        %v3924 = vperm.slane %v3459, 4
        %v3925 = vperm.slane %v3459, 5
        %v3926 = vperm.slane %v3459, 6
        %v3927 = vperm.slane %v3459, 7
        %v3928 = vperm.slane %v3462, 0
        %v3929 = vperm.slane %v3462, 1
        %v3930 = vperm.slane %v3462, 2
        %v3931 = vperm.slane %v3462, 3
        %v3932 = vperm.slane %v3462, 4
        %v3933 = vperm.slane %v3462, 5
        %v3934 = vperm.slane %v3462, 6
        %v3935 = vperm.slane %v3462, 7
        %v3936 = vperm.slane %v3465, 0
        %v3937 = vperm.slane %v3465, 1
        %v3938 = vperm.slane %v3465, 2
        %v3939 = vperm.slane %v3465, 3
        %v3940 = vperm.slane %v3465, 4
        %v3941 = vperm.slane %v3465, 5
        %v3942 = vperm.slane %v3465, 6
        %v3943 = vperm.slane %v3465, 7
        %v3944 = vperm.slane %v3468, 0
        %v3945 = vperm.slane %v3468, 1
        %v3946 = vperm.slane %v3468, 2
        %v3947 = vperm.slane %v3468, 3
        %v3948 = vperm.slane %v3468, 4
        %v3949 = vperm.slane %v3468, 5
        %v3950 = vperm.slane %v3468, 6
        %v3951 = vperm.slane %v3468, 7
        %v3952 = vperm.slane %v3471, 0
        %v3953 = vperm.slane %v3471, 1
        %v3954 = vperm.slane %v3471, 2
        %v3955 = vperm.slane %v3471, 3
        %v3956 = vperm.slane %v3471, 4
        %v3957 = vperm.slane %v3471, 5
        %v3958 = vperm.slane %v3471, 6
        %v3959 = vperm.slane %v3471, 7
        %v3960 = vperm.slane %v3474, 0
        %v3961 = vperm.slane %v3474, 1
        %v3962 = vperm.slane %v3474, 2
        %v3963 = vperm.slane %v3474, 3
        %v3964 = vperm.slane %v3474, 4
        %v3965 = vperm.slane %v3474, 5
        %v3966 = vperm.slane %v3474, 6
        %v3967 = vperm.slane %v3474, 7
        %v3968 = vperm.slane %v3477, 0
        %v3969 = vperm.slane %v3477, 1
        %v3970 = vperm.slane %v3477, 2
        %v3971 = vperm.slane %v3477, 3
        %v3972 = vperm.slane %v3477, 4
        %v3973 = vperm.slane %v3477, 5
        %v3974 = vperm.slane %v3477, 6
        %v3975 = vperm.slane %v3477, 7
        %v3976 = vperm.slane %v3480, 0
        %v3977 = vperm.slane %v3480, 1
        %v3978 = vperm.slane %v3480, 2
        %v3979 = vperm.slane %v3480, 3
        %v3980 = vperm.slane %v3480, 4
        %v3981 = vperm.slane %v3480, 5
        %v3982 = vperm.slane %v3480, 6
        %v3983 = vperm.slane %v3480, 7
        %v3984 = vperm.slane %v3483, 0
        %v3985 = vperm.slane %v3483, 1
        %v3986 = vperm.slane %v3483, 2
        %v3987 = vperm.slane %v3483, 3
        %v3988 = vperm.slane %v3483, 4
        %v3989 = vperm.slane %v3483, 5
        %v3990 = vperm.slane %v3483, 6
        %v3991 = vperm.slane %v3483, 7
        %v3992 = vperm.slane %v3486, 0
        %v3993 = vperm.slane %v3486, 1
        %v3994 = vperm.slane %v3486, 2
        %v3995 = vperm.slane %v3486, 3
        %v3996 = vperm.slane %v3486, 4
        %v3997 = vperm.slane %v3486, 5
        %v3998 = vperm.slane %v3486, 6
        %v3999 = vperm.slane %v3486, 7
        %v4000 = vperm.slane %v3489, 0
        %v4001 = vperm.slane %v3489, 1
        %v4002 = vperm.slane %v3489, 2
        %v4003 = vperm.slane %v3489, 3
        %v4004 = vperm.slane %v3489, 4
        %v4005 = vperm.slane %v3489, 5
        %v4006 = vperm.slane %v3489, 6
        %v4007 = vperm.slane %v3489, 7
        %v4008 = vperm.slane %v3492, 0
        %v4009 = vperm.slane %v3492, 1
        %v4010 = vperm.slane %v3492, 2
        %v4011 = vperm.slane %v3492, 3
        %v4012 = vperm.slane %v3492, 4
        %v4013 = vperm.slane %v3492, 5
        %v4014 = vperm.slane %v3492, 6
        %v4015 = vperm.slane %v3492, 7
        %v4016 = vperm.slane %v3495, 0
        %v4017 = vperm.slane %v3495, 1
        %v4018 = vperm.slane %v3495, 2
        %v4019 = vperm.slane %v3495, 3
        %v4020 = vperm.slane %v3495, 4
        %v4021 = vperm.slane %v3495, 5
        %v4022 = vperm.slane %v3495, 6
        %v4023 = vperm.slane %v3495, 7
        %v4024 = vperm.slane %v3498, 0
        %v4025 = vperm.slane %v3498, 1
        %v4026 = vperm.slane %v3498, 2
        %v4027 = vperm.slane %v3498, 3
        %v4028 = vperm.slane %v3498, 4
        %v4029 = vperm.slane %v3498, 5
        %v4030 = vperm.slane %v3498, 6
        %v4031 = vperm.slane %v3498, 7
        %v4032 = vperm.slane %v3501, 0
        %v4033 = vperm.slane %v3501, 1
        %v4034 = vperm.slane %v3501, 2
        %v4035 = vperm.slane %v3501, 3
        %v4036 = vperm.slane %v3501, 4
        %v4037 = vperm.slane %v3501, 5
        %v4038 = vperm.slane %v3501, 6
        %v4039 = vperm.slane %v3501, 7
        %v4040 = vperm.slane %v3504, 0
        %v4041 = vperm.slane %v3504, 1
        %v4042 = vperm.slane %v3504, 2
        %v4043 = vperm.slane %v3504, 3
        %v4044 = vperm.slane %v3504, 4
        %v4045 = vperm.slane %v3504, 5
        %v4046 = vperm.slane %v3504, 6
        %v4047 = vperm.slane %v3504, 7
        %v4048 = vperm.slane %v3507, 0
        %v4049 = vperm.slane %v3507, 1
        %v4050 = vperm.slane %v3507, 2
        %v4051 = vperm.slane %v3507, 3
        %v4052 = vperm.slane %v3507, 4
        %v4053 = vperm.slane %v3507, 5
        %v4054 = vperm.slane %v3507, 6
        %v4055 = vperm.slane %v3507, 7
        %v4056 = vperm.slane %v3510, 0
        %v4057 = vperm.slane %v3510, 1
        %v4058 = vperm.slane %v3510, 2
        %v4059 = vperm.slane %v3510, 3
        %v4060 = vperm.slane %v3510, 4
        %v4061 = vperm.slane %v3510, 5
        %v4062 = vperm.slane %v3510, 6
        %v4063 = vperm.slane %v3510, 7
        %v4064 = vperm.slane %v3513, 0
        %v4065 = vperm.slane %v3513, 1
        %v4066 = vperm.slane %v3513, 2
        %v4067 = vperm.slane %v3513, 3
        %v4068 = vperm.slane %v3513, 4
        %v4069 = vperm.slane %v3513, 5
        %v4070 = vperm.slane %v3513, 6
        %v4071 = vperm.slane %v3513, 7
        %v4072 = vperm.slane %v3516, 0
        %v4073 = vperm.slane %v3516, 1
        %v4074 = vperm.slane %v3516, 2
        %v4075 = vperm.slane %v3516, 3
        %v4076 = vperm.slane %v3516, 4
        %v4077 = vperm.slane %v3516, 5
        %v4078 = vperm.slane %v3516, 6
        %v4079 = vperm.slane %v3516, 7
        %v4080 = vperm.slane %v3519, 0
        %v4081 = vperm.slane %v3519, 1
        %v4082 = vperm.slane %v3519, 2
        %v4083 = vperm.slane %v3519, 3
        %v4084 = vperm.slane %v3519, 4
        %v4085 = vperm.slane %v3519, 5
        %v4086 = vperm.slane %v3519, 6
        %v4087 = vperm.slane %v3519, 7
        %v4088 = vperm.slane %v3522, 0
        %v4089 = vperm.slane %v3522, 1
        %v4090 = vperm.slane %v3522, 2
        %v4091 = vperm.slane %v3522, 3
        %v4092 = vperm.slane %v3522, 4
        %v4093 = vperm.slane %v3522, 5
        %v4094 = vperm.slane %v3522, 6
        %v4095 = vperm.slane %v3522, 7
        %v4096 = vperm.slane %v3525, 0
        %v4097 = vperm.slane %v3525, 1
        %v4098 = vperm.slane %v3525, 2
        %v4099 = vperm.slane %v3525, 3
        %v4100 = vperm.slane %v3525, 4
        %v4101 = vperm.slane %v3525, 5
        %v4102 = vperm.slane %v3525, 6
        %v4103 = vperm.slane %v3525, 7
        %v4104 = vperm.slane %v3528, 0
        %v4105 = vperm.slane %v3528, 1
        %v4106 = vperm.slane %v3528, 2
        %v4107 = vperm.slane %v3528, 3
        %v4108 = vperm.slane %v3528, 4
        %v4109 = vperm.slane %v3528, 5
        %v4110 = vperm.slane %v3528, 6
        %v4111 = vperm.slane %v3528, 7
        %v4112 = vperm.slane %v3531, 0
        %v4113 = vperm.slane %v3531, 1
        %v4114 = vperm.slane %v3531, 2
        %v4115 = vperm.slane %v3531, 3
        %v4116 = vperm.slane %v3531, 4
        %v4117 = vperm.slane %v3531, 5
        %v4118 = vperm.slane %v3531, 6
        %v4119 = vperm.slane %v3531, 7
        %v4120 = vperm.slane %v3534, 0
        %v4121 = vperm.slane %v3534, 1
        %v4122 = vperm.slane %v3534, 2
        %v4123 = vperm.slane %v3534, 3
        %v4124 = vperm.slane %v3534, 4
        %v4125 = vperm.slane %v3534, 5
        %v4126 = vperm.slane %v3534, 6
        %v4127 = vperm.slane %v3534, 7
        %v4128 = vperm.slane %v3537, 0
        %v4129 = vperm.slane %v3537, 1
        %v4130 = vperm.slane %v3537, 2
        %v4131 = vperm.slane %v3537, 3
        %v4132 = vperm.slane %v3537, 4
        %v4133 = vperm.slane %v3537, 5
        %v4134 = vperm.slane %v3537, 6
        %v4135 = vperm.slane %v3537, 7
        %v4136 = vperm.slane %v3540, 0
        %v4137 = vperm.slane %v3540, 1
        %v4138 = vperm.slane %v3540, 2
        %v4139 = vperm.slane %v3540, 3
        %v4140 = vperm.slane %v3540, 4
        %v4141 = vperm.slane %v3540, 5
        %v4142 = vperm.slane %v3540, 6
        %v4143 = vperm.slane %v3540, 7
        %v4144 = vperm.slane %v3543, 0
        %v4145 = vperm.slane %v3543, 1
        %v4146 = vperm.slane %v3543, 2
        %v4147 = vperm.slane %v3543, 3
        %v4148 = vperm.slane %v3543, 4
        %v4149 = vperm.slane %v3543, 5
        %v4150 = vperm.slane %v3543, 6
        %v4151 = vperm.slane %v3543, 7
        %v4152 = vperm.slane %v3546, 0
        %v4153 = vperm.slane %v3546, 1
        %v4154 = vperm.slane %v3546, 2
        %v4155 = vperm.slane %v3546, 3
        %v4156 = vperm.slane %v3546, 4
        %v4157 = vperm.slane %v3546, 5
        %v4158 = vperm.slane %v3546, 6
        %v4159 = vperm.slane %v3546, 7
        %v4160 = vperm.slane %v3549, 0
        %v4161 = vperm.slane %v3549, 1
        %v4162 = vperm.slane %v3549, 2
        %v4163 = vperm.slane %v3549, 3
        %v4164 = vperm.slane %v3549, 4
        %v4165 = vperm.slane %v3549, 5
        %v4166 = vperm.slane %v3549, 6
        %v4167 = vperm.slane %v3549, 7
        %v4168 = vperm.slane %v3552, 0
        %v4169 = vperm.slane %v3552, 1
        %v4170 = vperm.slane %v3552, 2
        %v4171 = vperm.slane %v3552, 3
        %v4172 = vperm.slane %v3552, 4
        %v4173 = vperm.slane %v3552, 5
        %v4174 = vperm.slane %v3552, 6
        %v4175 = vperm.slane %v3552, 7
        %v4176 = vperm.slane %v3555, 0
        %v4177 = vperm.slane %v3555, 1
        %v4178 = vperm.slane %v3555, 2
        %v4179 = vperm.slane %v3555, 3
        %v4180 = vperm.slane %v3555, 4
        %v4181 = vperm.slane %v3555, 5
        %v4182 = vperm.slane %v3555, 6
        %v4183 = vperm.slane %v3555, 7
        %v4184 = vperm.slane %v3558, 0
        %v4185 = vperm.slane %v3558, 1
        %v4186 = vperm.slane %v3558, 2
        %v4187 = vperm.slane %v3558, 3
        %v4188 = vperm.slane %v3558, 4
        %v4189 = vperm.slane %v3558, 5
        %v4190 = vperm.slane %v3558, 6
        %v4191 = vperm.slane %v3558, 7
        %v4192 = vperm.slane %v3561, 0
        %v4193 = vperm.slane %v3561, 1
        %v4194 = vperm.slane %v3561, 2
        %v4195 = vperm.slane %v3561, 3
        %v4196 = vperm.slane %v3561, 4
        %v4197 = vperm.slane %v3561, 5
        %v4198 = vperm.slane %v3561, 6
        %v4199 = vperm.slane %v3561, 7
        %v4200 = vperm.slane %v3564, 0
        %v4201 = vperm.slane %v3564, 1
        %v4202 = vperm.slane %v3564, 2
        %v4203 = vperm.slane %v3564, 3
        %v4204 = vperm.slane %v3564, 4
        %v4205 = vperm.slane %v3564, 5
        %v4206 = vperm.slane %v3564, 6
        %v4207 = vperm.slane %v3564, 7
        %v4208 = vperm.slane %v3567, 0
        %v4209 = vperm.slane %v3567, 1
        %v4210 = vperm.slane %v3567, 2
        %v4211 = vperm.slane %v3567, 3
        %v4212 = vperm.slane %v3567, 4
        %v4213 = vperm.slane %v3567, 5
        %v4214 = vperm.slane %v3567, 6
        %v4215 = vperm.slane %v3567, 7
        %v4216 = vperm.slane %v3570, 0
        %v4217 = vperm.slane %v3570, 1
        %v4218 = vperm.slane %v3570, 2
        %v4219 = vperm.slane %v3570, 3
        %v4220 = vperm.slane %v3570, 4
        %v4221 = vperm.slane %v3570, 5
        %v4222 = vperm.slane %v3570, 6
        %v4223 = vperm.slane %v3570, 7
        %v4224 = vperm.slane %v3573, 0
        %v4225 = vperm.slane %v3573, 1
        %v4226 = vperm.slane %v3573, 2
        %v4227 = vperm.slane %v3573, 3
        %v4228 = vperm.slane %v3573, 4
        %v4229 = vperm.slane %v3573, 5
        %v4230 = vperm.slane %v3573, 6
        %v4231 = vperm.slane %v3573, 7
        %v4232 = vperm.slane %v3576, 0
        %v4233 = vperm.slane %v3576, 1
        %v4234 = vperm.slane %v3576, 2
        %v4235 = vperm.slane %v3576, 3
        %v4236 = vperm.slane %v3576, 4
        %v4237 = vperm.slane %v3576, 5
        %v4238 = vperm.slane %v3576, 6
        %v4239 = vperm.slane %v3576, 7
        %v4240 = vperm.slane %v3579, 0
        %v4241 = vperm.slane %v3579, 1
        %v4242 = vperm.slane %v3579, 2
        %v4243 = vperm.slane %v3579, 3
        %v4244 = vperm.slane %v3579, 4
        %v4245 = vperm.slane %v3579, 5
        %v4246 = vperm.slane %v3579, 6
        %v4247 = vperm.slane %v3579, 7
        %v4248 = vperm.slane %v3582, 0
        %v4249 = vperm.slane %v3582, 1
        %v4250 = vperm.slane %v3582, 2
        %v4251 = vperm.slane %v3582, 3
        %v4252 = vperm.slane %v3582, 4
        %v4253 = vperm.slane %v3582, 5
        %v4254 = vperm.slane %v3582, 6
        %v4255 = vperm.slane %v3582, 7
        %v4256 = vperm.slane %v3585, 0
        %v4257 = vperm.slane %v3585, 1
        %v4258 = vperm.slane %v3585, 2
        %v4259 = vperm.slane %v3585, 3
        %v4260 = vperm.slane %v3585, 4
        %v4261 = vperm.slane %v3585, 5
        %v4262 = vperm.slane %v3585, 6
        %v4263 = vperm.slane %v3585, 7
        %v4264 = vperm.slane %v3588, 0
        %v4265 = vperm.slane %v3588, 1
        %v4266 = vperm.slane %v3588, 2
        %v4267 = vperm.slane %v3588, 3
        %v4268 = vperm.slane %v3588, 4
        %v4269 = vperm.slane %v3588, 5
        %v4270 = vperm.slane %v3588, 6
        %v4271 = vperm.slane %v3588, 7
        %v4272 = vperm.slane %v3591, 0
        %v4273 = vperm.slane %v3591, 1
        %v4274 = vperm.slane %v3591, 2
        %v4275 = vperm.slane %v3591, 3
        %v4276 = vperm.slane %v3591, 4
        %v4277 = vperm.slane %v3591, 5
        %v4278 = vperm.slane %v3591, 6
        %v4279 = vperm.slane %v3591, 7
        %v4280 = vperm.slane %v3594, 0
        %v4281 = vperm.slane %v3594, 1
        %v4282 = vperm.slane %v3594, 2
        %v4283 = vperm.slane %v3594, 3
        %v4284 = vperm.slane %v3594, 4
        %v4285 = vperm.slane %v3594, 5
        %v4286 = vperm.slane %v3594, 6
        %v4287 = vperm.slane %v3594, 7
        %v4288 = vperm.slane %v3597, 0
        %v4289 = vperm.slane %v3597, 1
        %v4290 = vperm.slane %v3597, 2
        %v4291 = vperm.slane %v3597, 3
        %v4292 = vperm.slane %v3597, 4
        %v4293 = vperm.slane %v3597, 5
        %v4294 = vperm.slane %v3597, 6
        %v4295 = vperm.slane %v3597, 7
        %v4296 = vperm.slane %v3600, 0
        %v4297 = vperm.slane %v3600, 1
        %v4298 = vperm.slane %v3600, 2
        %v4299 = vperm.slane %v3600, 3
        %v4300 = vperm.slane %v3600, 4
        %v4301 = vperm.slane %v3600, 5
        %v4302 = vperm.slane %v3600, 6
        %v4303 = vperm.slane %v3600, 7
        %v4304 = vperm.slane %v3603, 0
        %v4305 = vperm.slane %v3603, 1
        %v4306 = vperm.slane %v3603, 2
        %v4307 = vperm.slane %v3603, 3
        %v4308 = vperm.slane %v3603, 4
        %v4309 = vperm.slane %v3603, 5
        %v4310 = vperm.slane %v3603, 6
        %v4311 = vperm.slane %v3603, 7
        %v4312 = vperm.slane %v3606, 0
        %v4313 = vperm.slane %v3606, 1
        %v4314 = vperm.slane %v3606, 2
        %v4315 = vperm.slane %v3606, 3
        %v4316 = vperm.slane %v3606, 4
        %v4317 = vperm.slane %v3606, 5
        %v4318 = vperm.slane %v3606, 6
        %v4319 = vperm.slane %v3606, 7
        %v4320 = vperm.slane %v3609, 0
        %v4321 = vperm.slane %v3609, 1
        %v4322 = vperm.slane %v3609, 2
        %v4323 = vperm.slane %v3609, 3
        %v4324 = vperm.slane %v3609, 4
        %v4325 = vperm.slane %v3609, 5
        %v4326 = vperm.slane %v3609, 6
        %v4327 = vperm.slane %v3609, 7
        %v4328 = vperm.slane %v3612, 0
        %v4329 = vperm.slane %v3612, 1
        %v4330 = vperm.slane %v3612, 2
        %v4331 = vperm.slane %v3612, 3
        %v4332 = vperm.slane %v3612, 4
        %v4333 = vperm.slane %v3612, 5
        %v4334 = vperm.slane %v3612, 6
        %v4335 = vperm.slane %v3612, 7
        %v4336 = vperm.slane %v3615, 0
        %v4337 = vperm.slane %v3615, 1
        %v4338 = vperm.slane %v3615, 2
        %v4339 = vperm.slane %v3615, 3
        %v4340 = vperm.slane %v3615, 4
        %v4341 = vperm.slane %v3615, 5
        %v4342 = vperm.slane %v3615, 6
        %v4343 = vperm.slane %v3615, 7
        %v4344 = vperm.slane %v3618, 0
        %v4345 = vperm.slane %v3618, 1
        %v4346 = vperm.slane %v3618, 2
        %v4347 = vperm.slane %v3618, 3
        %v4348 = vperm.slane %v3618, 4
        %v4349 = vperm.slane %v3618, 5
        %v4350 = vperm.slane %v3618, 6
        %v4351 = vperm.slane %v3618, 7
        %v4352 = vperm.slane %v3621, 0
        %v4353 = vperm.slane %v3621, 1
        %v4354 = vperm.slane %v3621, 2
        %v4355 = vperm.slane %v3621, 3
        %v4356 = vperm.slane %v3621, 4
        %v4357 = vperm.slane %v3621, 5
        %v4358 = vperm.slane %v3621, 6
        %v4359 = vperm.slane %v3621, 7
        %v4360 = vperm.slane %v3624, 0
        %v4361 = vperm.slane %v3624, 1
        %v4362 = vperm.slane %v3624, 2
        %v4363 = vperm.slane %v3624, 3
        %v4364 = vperm.slane %v3624, 4
        %v4365 = vperm.slane %v3624, 5
        %v4366 = vperm.slane %v3624, 6
        %v4367 = vperm.slane %v3624, 7
        %v4368 = vperm.slane %v3627, 0
        %v4369 = vperm.slane %v3627, 1
        %v4370 = vperm.slane %v3627, 2
        %v4371 = vperm.slane %v3627, 3
        %v4372 = vperm.slane %v3627, 4
        %v4373 = vperm.slane %v3627, 5
        %v4374 = vperm.slane %v3627, 6
        %v4375 = vperm.slane %v3627, 7
        %v4376 = vperm.slane %v3630, 0
        %v4377 = vperm.slane %v3630, 1
        %v4378 = vperm.slane %v3630, 2
        %v4379 = vperm.slane %v3630, 3
        %v4380 = vperm.slane %v3630, 4
        %v4381 = vperm.slane %v3630, 5
        %v4382 = vperm.slane %v3630, 6
        %v4383 = vperm.slane %v3630, 7
        %v4384 = vperm.slane %v3633, 0
        %v4385 = vperm.slane %v3633, 1
        %v4386 = vperm.slane %v3633, 2
        %v4387 = vperm.slane %v3633, 3
        %v4388 = vperm.slane %v3633, 4
        %v4389 = vperm.slane %v3633, 5
        %v4390 = vperm.slane %v3633, 6
        %v4391 = vperm.slane %v3633, 7
        %v4392 = vperm.slane %v3636, 0
        %v4393 = vperm.slane %v3636, 1
        %v4394 = vperm.slane %v3636, 2
        %v4395 = vperm.slane %v3636, 3
        %v4396 = vperm.slane %v3636, 4
        %v4397 = vperm.slane %v3636, 5
        %v4398 = vperm.slane %v3636, 6
        %v4399 = vperm.slane %v3636, 7
        %v4400 = vperm.slane %v3639, 0
        %v4401 = vperm.slane %v3639, 1
        %v4402 = vperm.slane %v3639, 2
        %v4403 = vperm.slane %v3639, 3
        %v4404 = vperm.slane %v3639, 4
        %v4405 = vperm.slane %v3639, 5
        %v4406 = vperm.slane %v3639, 6
        %v4407 = vperm.slane %v3639, 7
        %v4408 = vperm.slane %v3642, 0
        %v4409 = vperm.slane %v3642, 1
        %v4410 = vperm.slane %v3642, 2
        %v4411 = vperm.slane %v3642, 3
        %v4412 = vperm.slane %v3642, 4
        %v4413 = vperm.slane %v3642, 5
        %v4414 = vperm.slane %v3642, 6
        %v4415 = vperm.slane %v3642, 7
        %v4416 = vperm.slane %v3645, 0
        %v4417 = vperm.slane %v3645, 1
        %v4418 = vperm.slane %v3645, 2
        %v4419 = vperm.slane %v3645, 3
        %v4420 = vperm.slane %v3645, 4
        %v4421 = vperm.slane %v3645, 5
        %v4422 = vperm.slane %v3645, 6
        %v4423 = vperm.slane %v3645, 7
        %v4424 = vperm.slane %v3648, 0
        %v4425 = vperm.slane %v3648, 1
        %v4426 = vperm.slane %v3648, 2
        %v4427 = vperm.slane %v3648, 3
        %v4428 = vperm.slane %v3648, 4
        %v4429 = vperm.slane %v3648, 5
        %v4430 = vperm.slane %v3648, 6
        %v4431 = vperm.slane %v3648, 7
        %v4432 = vperm.slane %v3651, 0
        %v4433 = vperm.slane %v3651, 1
        %v4434 = vperm.slane %v3651, 2
        %v4435 = vperm.slane %v3651, 3
        %v4436 = vperm.slane %v3651, 4
        %v4437 = vperm.slane %v3651, 5
        %v4438 = vperm.slane %v3651, 6
        %v4439 = vperm.slane %v3651, 7
        %v4440 = vperm.slane %v3654, 0
        %v4441 = vperm.slane %v3654, 1
        %v4442 = vperm.slane %v3654, 2
        %v4443 = vperm.slane %v3654, 3
        %v4444 = vperm.slane %v3654, 4
        %v4445 = vperm.slane %v3654, 5
        %v4446 = vperm.slane %v3654, 6
        %v4447 = vperm.slane %v3654, 7
        %v4448 = vperm.slane %v3657, 0
        %v4449 = vperm.slane %v3657, 1
        %v4450 = vperm.slane %v3657, 2
        %v4451 = vperm.slane %v3657, 3
        %v4452 = vperm.slane %v3657, 4
        %v4453 = vperm.slane %v3657, 5
        %v4454 = vperm.slane %v3657, 6
        %v4455 = vperm.slane %v3657, 7
        %v4456 = vperm.slane %v3660, 0
        %v4457 = vperm.slane %v3660, 1
        %v4458 = vperm.slane %v3660, 2
        %v4459 = vperm.slane %v3660, 3
        %v4460 = vperm.slane %v3660, 4
        %v4461 = vperm.slane %v3660, 5
        %v4462 = vperm.slane %v3660, 6
        %v4463 = vperm.slane %v3660, 7
        %v4464 = vperm.slane %v3663, 0
        %v4465 = vperm.slane %v3663, 1
        %v4466 = vperm.slane %v3663, 2
        %v4467 = vperm.slane %v3663, 3
        %v4468 = vperm.slane %v3663, 4
        %v4469 = vperm.slane %v3663, 5
        %v4470 = vperm.slane %v3663, 6
        %v4471 = vperm.slane %v3663, 7
        %v4472 = vperm.slane %v3666, 0
        %v4473 = vperm.slane %v3666, 1
        %v4474 = vperm.slane %v3666, 2
        %v4475 = vperm.slane %v3666, 3
        %v4476 = vperm.slane %v3666, 4
        %v4477 = vperm.slane %v3666, 5
        %v4478 = vperm.slane %v3666, 6
        %v4479 = vperm.slane %v3666, 7
        %v4480 = vperm.slane %v3669, 0
        %v4481 = vperm.slane %v3669, 1
        %v4482 = vperm.slane %v3669, 2
        %v4483 = vperm.slane %v3669, 3
        %v4484 = vperm.slane %v3669, 4
        %v4485 = vperm.slane %v3669, 5
        %v4486 = vperm.slane %v3669, 6
        %v4487 = vperm.slane %v3669, 7
        %v4488 = vperm.slane %v3672, 0
        %v4489 = vperm.slane %v3672, 1
        %v4490 = vperm.slane %v3672, 2
        %v4491 = vperm.slane %v3672, 3
        %v4492 = vperm.slane %v3672, 4
        %v4493 = vperm.slane %v3672, 5
        %v4494 = vperm.slane %v3672, 6
        %v4495 = vperm.slane %v3672, 7
        %v4496 = vperm.slane %v3675, 0
        %v4497 = vperm.slane %v3675, 1
        %v4498 = vperm.slane %v3675, 2
        %v4499 = vperm.slane %v3675, 3
        %v4500 = vperm.slane %v3675, 4
        %v4501 = vperm.slane %v3675, 5
        %v4502 = vperm.slane %v3675, 6
        %v4503 = vperm.slane %v3675, 7
        %v4504 = vperm.slane %v3678, 0
        %v4505 = vperm.slane %v3678, 1
        %v4506 = vperm.slane %v3678, 2
        %v4507 = vperm.slane %v3678, 3
        %v4508 = vperm.slane %v3678, 4
        %v4509 = vperm.slane %v3678, 5
        %v4510 = vperm.slane %v3678, 6
        %v4511 = vperm.slane %v3678, 7
        %v4512 = vperm.slane %v3681, 0
        %v4513 = vperm.slane %v3681, 1
        %v4514 = vperm.slane %v3681, 2
        %v4515 = vperm.slane %v3681, 3
        %v4516 = vperm.slane %v3681, 4
        %v4517 = vperm.slane %v3681, 5
        %v4518 = vperm.slane %v3681, 6
        %v4519 = vperm.slane %v3681, 7
        %v4520 = vperm.slane %v3684, 0
        %v4521 = vperm.slane %v3684, 1
        %v4522 = vperm.slane %v3684, 2
        %v4523 = vperm.slane %v3684, 3
        %v4524 = vperm.slane %v3684, 4
        %v4525 = vperm.slane %v3684, 5
        %v4526 = vperm.slane %v3684, 6
        %v4527 = vperm.slane %v3684, 7
        %v4528 = vperm.slane %v3687, 0
        %v4529 = vperm.slane %v3687, 1
        %v4530 = vperm.slane %v3687, 2
        %v4531 = vperm.slane %v3687, 3
        %v4532 = vperm.slane %v3687, 4
        %v4533 = vperm.slane %v3687, 5
        %v4534 = vperm.slane %v3687, 6
        %v4535 = vperm.slane %v3687, 7
        %v4536 = vperm.slane %v3690, 0
        %v4537 = vperm.slane %v3690, 1
        %v4538 = vperm.slane %v3690, 2
        %v4539 = vperm.slane %v3690, 3
        %v4540 = vperm.slane %v3690, 4
        %v4541 = vperm.slane %v3690, 5
        %v4542 = vperm.slane %v3690, 6
        %v4543 = vperm.slane %v3690, 7
        %v4544 = vperm.slane %v3693, 0
        %v4545 = vperm.slane %v3693, 1
        %v4546 = vperm.slane %v3693, 2
        %v4547 = vperm.slane %v3693, 3
        %v4548 = vperm.slane %v3693, 4
        %v4549 = vperm.slane %v3693, 5
        %v4550 = vperm.slane %v3693, 6
        %v4551 = vperm.slane %v3693, 7
        %v4552 = vperm.slane %v3696, 0
        %v4553 = vperm.slane %v3696, 1
        %v4554 = vperm.slane %v3696, 2
        %v4555 = vperm.slane %v3696, 3
        %v4556 = vperm.slane %v3696, 4
        %v4557 = vperm.slane %v3696, 5
        %v4558 = vperm.slane %v3696, 6
        %v4559 = vperm.slane %v3696, 7
        %v4560 = vperm.slane %v3699, 0
        %v4561 = vperm.slane %v3699, 1
        %v4562 = vperm.slane %v3699, 2
        %v4563 = vperm.slane %v3699, 3
        %v4564 = vperm.slane %v3699, 4
        %v4565 = vperm.slane %v3699, 5
        %v4566 = vperm.slane %v3699, 6
        %v4567 = vperm.slane %v3699, 7
        %v4568 = vperm.slane %v3702, 0
        %v4569 = vperm.slane %v3702, 1
        %v4570 = vperm.slane %v3702, 2
        %v4571 = vperm.slane %v3702, 3
        %v4572 = vperm.slane %v3702, 4
        %v4573 = vperm.slane %v3702, 5
        %v4574 = vperm.slane %v3702, 6
        %v4575 = vperm.slane %v3702, 7
        %v4576 = vperm.slane %v3705, 0
        %v4577 = vperm.slane %v3705, 1
        %v4578 = vperm.slane %v3705, 2
        %v4579 = vperm.slane %v3705, 3
        %v4580 = vperm.slane %v3705, 4
        %v4581 = vperm.slane %v3705, 5
        %v4582 = vperm.slane %v3705, 6
        %v4583 = vperm.slane %v3705, 7
        %v4584 = vperm.slane %v3708, 0
        %v4585 = vperm.slane %v3708, 1
        %v4586 = vperm.slane %v3708, 2
        %v4587 = vperm.slane %v3708, 3
        %v4588 = vperm.slane %v3708, 4
        %v4589 = vperm.slane %v3708, 5
        %v4590 = vperm.slane %v3708, 6
        %v4591 = vperm.slane %v3708, 7
        %v4592 = vperm.slane %v3711, 0
        %v4593 = vperm.slane %v3711, 1
        %v4594 = vperm.slane %v3711, 2
        %v4595 = vperm.slane %v3711, 3
        %v4596 = vperm.slane %v3711, 4
        %v4597 = vperm.slane %v3711, 5
        %v4598 = vperm.slane %v3711, 6
        %v4599 = vperm.slane %v3711, 7
        %v4600 = vperm.slane %v3714, 0
        %v4601 = vperm.slane %v3714, 1
        %v4602 = vperm.slane %v3714, 2
        %v4603 = vperm.slane %v3714, 3
        %v4604 = vperm.slane %v3714, 4
        %v4605 = vperm.slane %v3714, 5
        %v4606 = vperm.slane %v3714, 6
        %v4607 = vperm.slane %v3714, 7
        %v4608 = vperm.slane %v3717, 0
        %v4609 = vperm.slane %v3717, 1
        %v4610 = vperm.slane %v3717, 2
        %v4611 = vperm.slane %v3717, 3
        %v4612 = vperm.slane %v3717, 4
        %v4613 = vperm.slane %v3717, 5
        %v4614 = vperm.slane %v3717, 6
        %v4615 = vperm.slane %v3717, 7
        %v4616 = vperm.slane %v3720, 0
        %v4617 = vperm.slane %v3720, 1
        %v4618 = vperm.slane %v3720, 2
        %v4619 = vperm.slane %v3720, 3
        %v4620 = vperm.slane %v3720, 4
        %v4621 = vperm.slane %v3720, 5
        %v4622 = vperm.slane %v3720, 6
        %v4623 = vperm.slane %v3720, 7
        %v4624 = vperm.slane %v3723, 0
        %v4625 = vperm.slane %v3723, 1
        %v4626 = vperm.slane %v3723, 2
        %v4627 = vperm.slane %v3723, 3
        %v4628 = vperm.slane %v3723, 4
        %v4629 = vperm.slane %v3723, 5
        %v4630 = vperm.slane %v3723, 6
        %v4631 = vperm.slane %v3723, 7
        %v4632 = vperm.slane %v3726, 0
        %v4633 = vperm.slane %v3726, 1
        %v4634 = vperm.slane %v3726, 2
        %v4635 = vperm.slane %v3726, 3
        %v4636 = vperm.slane %v3726, 4
        %v4637 = vperm.slane %v3726, 5
        %v4638 = vperm.slane %v3726, 6
        %v4639 = vperm.slane %v3726, 7
        %v4640 = vperm.slane %v3729, 0
        %v4641 = vperm.slane %v3729, 1
        %v4642 = vperm.slane %v3729, 2
        %v4643 = vperm.slane %v3729, 3
        %v4644 = vperm.slane %v3729, 4
        %v4645 = vperm.slane %v3729, 5
        %v4646 = vperm.slane %v3729, 6
        %v4647 = vperm.slane %v3729, 7
        %v4648 = vperm.slane %v3732, 0
        %v4649 = vperm.slane %v3732, 1
        %v4650 = vperm.slane %v3732, 2
        %v4651 = vperm.slane %v3732, 3
        %v4652 = vperm.slane %v3732, 4
        %v4653 = vperm.slane %v3732, 5
        %v4654 = vperm.slane %v3732, 6
        %v4655 = vperm.slane %v3732, 7
        %v4656 = vperm.slane %v3735, 0
        %v4657 = vperm.slane %v3735, 1
        %v4658 = vperm.slane %v3735, 2
        %v4659 = vperm.slane %v3735, 3
        %v4660 = vperm.slane %v3735, 4
        %v4661 = vperm.slane %v3735, 5
        %v4662 = vperm.slane %v3735, 6
        %v4663 = vperm.slane %v3735, 7
        %v4664 = vperm.slane %v3738, 0
        %v4665 = vperm.slane %v3738, 1
        %v4666 = vperm.slane %v3738, 2
        %v4667 = vperm.slane %v3738, 3
        %v4668 = vperm.slane %v3738, 4
        %v4669 = vperm.slane %v3738, 5
        %v4670 = vperm.slane %v3738, 6
        %v4671 = vperm.slane %v3738, 7
        %v4672 = vperm.slane %v3741, 0
        %v4673 = vperm.slane %v3741, 1
        %v4674 = vperm.slane %v3741, 2
        %v4675 = vperm.slane %v3741, 3
        %v4676 = vperm.slane %v3741, 4
        %v4677 = vperm.slane %v3741, 5
        %v4678 = vperm.slane %v3741, 6
        %v4679 = vperm.slane %v3741, 7
        %v4680 = vperm.slane %v3744, 0
        %v4681 = vperm.slane %v3744, 1
        %v4682 = vperm.slane %v3744, 2
        %v4683 = vperm.slane %v3744, 3
        %v4684 = vperm.slane %v3744, 4
        %v4685 = vperm.slane %v3744, 5
        %v4686 = vperm.slane %v3744, 6
        %v4687 = vperm.slane %v3744, 7
        %v4688 = vperm.slane %v3747, 0
        %v4689 = vperm.slane %v3747, 1
        %v4690 = vperm.slane %v3747, 2
        %v4691 = vperm.slane %v3747, 3
        %v4692 = vperm.slane %v3747, 4
        %v4693 = vperm.slane %v3747, 5
        %v4694 = vperm.slane %v3747, 6
        %v4695 = vperm.slane %v3747, 7
        %v4696 = vperm.slane %v3750, 0
        %v4697 = vperm.slane %v3750, 1
        %v4698 = vperm.slane %v3750, 2
        %v4699 = vperm.slane %v3750, 3
        %v4700 = vperm.slane %v3750, 4
        %v4701 = vperm.slane %v3750, 5
        %v4702 = vperm.slane %v3750, 6
        %v4703 = vperm.slane %v3750, 7
        %v4704 = vperm.slane %v3753, 0
        %v4705 = vperm.slane %v3753, 1
        %v4706 = vperm.slane %v3753, 2
        %v4707 = vperm.slane %v3753, 3
        %v4708 = vperm.slane %v3753, 4
        %v4709 = vperm.slane %v3753, 5
        %v4710 = vperm.slane %v3753, 6
        %v4711 = vperm.slane %v3753, 7
        %v4712 = vperm.slane %v3756, 0
        %v4713 = vperm.slane %v3756, 1
        %v4714 = vperm.slane %v3756, 2
        %v4715 = vperm.slane %v3756, 3
        %v4716 = vperm.slane %v3756, 4
        %v4717 = vperm.slane %v3756, 5
        %v4718 = vperm.slane %v3756, 6
        %v4719 = vperm.slane %v3756, 7
        %v4720 = vperm.slane %v3759, 0
        %v4721 = vperm.slane %v3759, 1
        %v4722 = vperm.slane %v3759, 2
        %v4723 = vperm.slane %v3759, 3
        %v4724 = vperm.slane %v3759, 4
        %v4725 = vperm.slane %v3759, 5
        %v4726 = vperm.slane %v3759, 6
        %v4727 = vperm.slane %v3759, 7
        %v4728 = vperm.slane %v3762, 0
        %v4729 = vperm.slane %v3762, 1
        %v4730 = vperm.slane %v3762, 2
        %v4731 = vperm.slane %v3762, 3
        %v4732 = vperm.slane %v3762, 4
        %v4733 = vperm.slane %v3762, 5
        %v4734 = vperm.slane %v3762, 6
        %v4735 = vperm.slane %v3762, 7
        %v4736 = vperm.slane %v3765, 0
        %v4737 = vperm.slane %v3765, 1
        %v4738 = vperm.slane %v3765, 2
        %v4739 = vperm.slane %v3765, 3
        %v4740 = vperm.slane %v3765, 4
        %v4741 = vperm.slane %v3765, 5
        %v4742 = vperm.slane %v3765, 6
        %v4743 = vperm.slane %v3765, 7
        %v4744 = vperm.slane %v3768, 0
        %v4745 = vperm.slane %v3768, 1
        %v4746 = vperm.slane %v3768, 2
        %v4747 = vperm.slane %v3768, 3
        %v4748 = vperm.slane %v3768, 4
        %v4749 = vperm.slane %v3768, 5
        %v4750 = vperm.slane %v3768, 6
        %v4751 = vperm.slane %v3768, 7
        %v4752 = vperm.slane %v3771, 0
        %v4753 = vperm.slane %v3771, 1
        %v4754 = vperm.slane %v3771, 2
        %v4755 = vperm.slane %v3771, 3
        %v4756 = vperm.slane %v3771, 4
        %v4757 = vperm.slane %v3771, 5
        %v4758 = vperm.slane %v3771, 6
        %v4759 = vperm.slane %v3771, 7
        %v4760 = vperm.slane %v3774, 0
        %v4761 = vperm.slane %v3774, 1
        %v4762 = vperm.slane %v3774, 2
        %v4763 = vperm.slane %v3774, 3
        %v4764 = vperm.slane %v3774, 4
        %v4765 = vperm.slane %v3774, 5
        %v4766 = vperm.slane %v3774, 6
        %v4767 = vperm.slane %v3774, 7
        %v4768 = vperm.slane %v3777, 0
        %v4769 = vperm.slane %v3777, 1
        %v4770 = vperm.slane %v3777, 2
        %v4771 = vperm.slane %v3777, 3
        %v4772 = vperm.slane %v3777, 4
        %v4773 = vperm.slane %v3777, 5
        %v4774 = vperm.slane %v3777, 6
        %v4775 = vperm.slane %v3777, 7
        %v4776 = vperm.slane %v3780, 0
        %v4777 = vperm.slane %v3780, 1
        %v4778 = vperm.slane %v3780, 2
        %v4779 = vperm.slane %v3780, 3
        %v4780 = vperm.slane %v3780, 4
        %v4781 = vperm.slane %v3780, 5
        %v4782 = vperm.slane %v3780, 6
        %v4783 = vperm.slane %v3780, 7
        %v4784 = vperm.slane %v3783, 0
        %v4785 = vperm.slane %v3783, 1
        %v4786 = vperm.slane %v3783, 2
        %v4787 = vperm.slane %v3783, 3
        %v4788 = vperm.slane %v3783, 4
        %v4789 = vperm.slane %v3783, 5
        %v4790 = vperm.slane %v3783, 6
        %v4791 = vperm.slane %v3783, 7
        %4792 = vst [vmem:[#allocation1] ss:$9 sm:$0xff] %v3896
        %s4793 = scalar_lea.vmem [#allocation1], 1
        %4794 = vst [vmem:[%s4793] ss:$9 sm:$0xff] %v3897
        %s4795 = scalar_lea.vmem [#allocation1], 2
        %4796 = vst [vmem:[%s4795] ss:$9 sm:$0xff] %v3898
        %s4797 = scalar_lea.vmem [#allocation1], 3
        %4798 = vst [vmem:[%s4797] ss:$9 sm:$0xff] %v3899
        %s4799 = scalar_lea.vmem [#allocation1], 4
        %4800 = vst [vmem:[%s4799] ss:$9 sm:$0xff] %v3900
        %s4801 = scalar_lea.vmem [#allocation1], 5
        %4802 = vst [vmem:[%s4801] ss:$9 sm:$0xff] %v3901
        %s4803 = scalar_lea.vmem [#allocation1], 6
        %4804 = vst [vmem:[%s4803] ss:$9 sm:$0xff] %v3902
        %s4805 = scalar_lea.vmem [#allocation1], 7
        %4806 = vst [vmem:[%s4805] ss:$9 sm:$0xff] %v3903
        %v4807 = vld [vmem:[#allocation1] sm:$0xff]
        %4808 = vst [vmem:[#allocation1] ss:$9 sm:$0xff] %v3904
        %4809 = vst [vmem:[%s4793] ss:$9 sm:$0xff] %v3905
        %4810 = vst [vmem:[%s4795] ss:$9 sm:$0xff] %v3906
        %4811 = vst [vmem:[%s4797] ss:$9 sm:$0xff] %v3907
        %4812 = vst [vmem:[%s4799] ss:$9 sm:$0xff] %v3908
        %4813 = vst [vmem:[%s4801] ss:$9 sm:$0xff] %v3909
        %4814 = vst [vmem:[%s4803] ss:$9 sm:$0xff] %v3910
        %4815 = vst [vmem:[%s4805] ss:$9 sm:$0xff] %v3911
        %v4816 = vld [vmem:[#allocation1] sm:$0xff]
        %4817 = vst [vmem:[#allocation1] ss:$9 sm:$0xff] %v3912
        %4818 = vst [vmem:[%s4793] ss:$9 sm:$0xff] %v3913
        %4819 = vst [vmem:[%s4795] ss:$9 sm:$0xff] %v3914
        %4820 = vst [vmem:[%s4797] ss:$9 sm:$0xff] %v3915
        %4821 = vst [vmem:[%s4799] ss:$9 sm:$0xff] %v3916
        %4822 = vst [vmem:[%s4801] ss:$9 sm:$0xff] %v3917
        %4823 = vst [vmem:[%s4803] ss:$9 sm:$0xff] %v3918
        %4824 = vst [vmem:[%s4805] ss:$9 sm:$0xff] %v3919
        %v4825 = vld [vmem:[#allocation1] sm:$0xff]
        %4826 = vst [vmem:[#allocation1] ss:$9 sm:$0xff] %v3920
        %4827 = vst [vmem:[%s4793] ss:$9 sm:$0xff] %v3921
        %4828 = vst [vmem:[%s4795] ss:$9 sm:$0xff] %v3922
        %4829 = vst [vmem:[%s4797] ss:$9 sm:$0xff] %v3923
        %4830 = vst [vmem:[%s4799] ss:$9 sm:$0xff] %v3924
        %4831 = vst [vmem:[%s4801] ss:$9 sm:$0xff] %v3925
        %4832 = vst [vmem:[%s4803] ss:$9 sm:$0xff] %v3926
        %4833 = vst [vmem:[%s4805] ss:$9 sm:$0xff] %v3927
        %v4834 = vld [vmem:[#allocation1] sm:$0xff]
        %4835 = vst [vmem:[#allocation1] ss:$9 sm:$0xff] %v3928
        %4836 = vst [vmem:[%s4793] ss:$9 sm:$0xff] %v3929
        %4837 = vst [vmem:[%s4795] ss:$9 sm:$0xff] %v3930
        %4838 = vst [vmem:[%s4797] ss:$9 sm:$0xff] %v3931
        %4839 = vst [vmem:[%s4799] ss:$9 sm:$0xff] %v3932
        %4840 = vst [vmem:[%s4801] ss:$9 sm:$0xff] %v3933
        %4841 = vst [vmem:[%s4803] ss:$9 sm:$0xff] %v3934
        %4842 = vst [vmem:[%s4805] ss:$9 sm:$0xff] %v3935
        %v4843 = vld [vmem:[#allocation1] sm:$0xff]
        %4844 = vst [vmem:[#allocation1] ss:$9 sm:$0xff] %v3936
        %4845 = vst [vmem:[%s4793] ss:$9 sm:$0xff] %v3937
        %4846 = vst [vmem:[%s4795] ss:$9 sm:$0xff] %v3938
        %4847 = vst [vmem:[%s4797] ss:$9 sm:$0xff] %v3939
        %4848 = vst [vmem:[%s4799] ss:$9 sm:$0xff] %v3940
        %4849 = vst [vmem:[%s4801] ss:$9 sm:$0xff] %v3941
        %4850 = vst [vmem:[%s4803] ss:$9 sm:$0xff] %v3942
        %4851 = vst [vmem:[%s4805] ss:$9 sm:$0xff] %v3943
        %v4852 = vld [vmem:[#allocation1] sm:$0xff]
        %4853 = vst [vmem:[#allocation1] ss:$9 sm:$0xff] %v3944
        %4854 = vst [vmem:[%s4793] ss:$9 sm:$0xff] %v3945
        %4855 = vst [vmem:[%s4795] ss:$9 sm:$0xff] %v3946
        %4856 = vst [vmem:[%s4797] ss:$9 sm:$0xff] %v3947
        %4857 = vst [vmem:[%s4799] ss:$9 sm:$0xff] %v3948
        %4858 = vst [vmem:[%s4801] ss:$9 sm:$0xff] %v3949
        %4859 = vst [vmem:[%s4803] ss:$9 sm:$0xff] %v3950
        %4860 = vst [vmem:[%s4805] ss:$9 sm:$0xff] %v3951
        %v4861 = vld [vmem:[#allocation1] sm:$0xff]
        %4862 = vst [vmem:[#allocation1] ss:$9 sm:$0xff] %v3952
        %4863 = vst [vmem:[%s4793] ss:$9 sm:$0xff] %v3953
        %4864 = vst [vmem:[%s4795] ss:$9 sm:$0xff] %v3954
        %4865 = vst [vmem:[%s4797] ss:$9 sm:$0xff] %v3955
        %4866 = vst [vmem:[%s4799] ss:$9 sm:$0xff] %v3956
        %4867 = vst [vmem:[%s4801] ss:$9 sm:$0xff] %v3957
        %4868 = vst [vmem:[%s4803] ss:$9 sm:$0xff] %v3958
        %4869 = vst [vmem:[%s4805] ss:$9 sm:$0xff] %v3959
        %v4870 = vld [vmem:[#allocation1] sm:$0xff]
        %4871 = vst [vmem:[#allocation1] ss:$9 sm:$0xff] %v3960
        %4872 = vst [vmem:[%s4793] ss:$9 sm:$0xff] %v3961
        %4873 = vst [vmem:[%s4795] ss:$9 sm:$0xff] %v3962
        %4874 = vst [vmem:[%s4797] ss:$9 sm:$0xff] %v3963
        %4875 = vst [vmem:[%s4799] ss:$9 sm:$0xff] %v3964
        %4876 = vst [vmem:[%s4801] ss:$9 sm:$0xff] %v3965
        %4877 = vst [vmem:[%s4803] ss:$9 sm:$0xff] %v3966
        %4878 = vst [vmem:[%s4805] ss:$9 sm:$0xff] %v3967
        %v4879 = vld [vmem:[#allocation1] sm:$0xff]
        %4880 = vst [vmem:[#allocation1] ss:$9 sm:$0xff] %v3968
        %4881 = vst [vmem:[%s4793] ss:$9 sm:$0xff] %v3969
        %4882 = vst [vmem:[%s4795] ss:$9 sm:$0xff] %v3970
        %4883 = vst [vmem:[%s4797] ss:$9 sm:$0xff] %v3971
        %4884 = vst [vmem:[%s4799] ss:$9 sm:$0xff] %v3972
        %4885 = vst [vmem:[%s4801] ss:$9 sm:$0xff] %v3973
        %4886 = vst [vmem:[%s4803] ss:$9 sm:$0xff] %v3974
        %4887 = vst [vmem:[%s4805] ss:$9 sm:$0xff] %v3975
        %v4888 = vld [vmem:[#allocation1] sm:$0xff]
        %4889 = vst [vmem:[#allocation1] ss:$9 sm:$0xff] %v3976
        %4890 = vst [vmem:[%s4793] ss:$9 sm:$0xff] %v3977
        %4891 = vst [vmem:[%s4795] ss:$9 sm:$0xff] %v3978
        %4892 = vst [vmem:[%s4797] ss:$9 sm:$0xff] %v3979
        %4893 = vst [vmem:[%s4799] ss:$9 sm:$0xff] %v3980
        %4894 = vst [vmem:[%s4801] ss:$9 sm:$0xff] %v3981
        %4895 = vst [vmem:[%s4803] ss:$9 sm:$0xff] %v3982
        %4896 = vst [vmem:[%s4805] ss:$9 sm:$0xff] %v3983
        %v4897 = vld [vmem:[#allocation1] sm:$0xff]
        %4898 = vst [vmem:[#allocation1] ss:$9 sm:$0xff] %v3984
        %4899 = vst [vmem:[%s4793] ss:$9 sm:$0xff] %v3985
        %4900 = vst [vmem:[%s4795] ss:$9 sm:$0xff] %v3986
        %4901 = vst [vmem:[%s4797] ss:$9 sm:$0xff] %v3987
        %4902 = vst [vmem:[%s4799] ss:$9 sm:$0xff] %v3988
        %4903 = vst [vmem:[%s4801] ss:$9 sm:$0xff] %v3989
        %4904 = vst [vmem:[%s4803] ss:$9 sm:$0xff] %v3990
        %4905 = vst [vmem:[%s4805] ss:$9 sm:$0xff] %v3991
        %v4906 = vld [vmem:[#allocation1] sm:$0xff]
        %4907 = vst [vmem:[#allocation1] ss:$9 sm:$0xff] %v3992
        %4908 = vst [vmem:[%s4793] ss:$9 sm:$0xff] %v3993
        %4909 = vst [vmem:[%s4795] ss:$9 sm:$0xff] %v3994
        %4910 = vst [vmem:[%s4797] ss:$9 sm:$0xff] %v3995
        %4911 = vst [vmem:[%s4799] ss:$9 sm:$0xff] %v3996
        %4912 = vst [vmem:[%s4801] ss:$9 sm:$0xff] %v3997
        %4913 = vst [vmem:[%s4803] ss:$9 sm:$0xff] %v3998
        %4914 = vst [vmem:[%s4805] ss:$9 sm:$0xff] %v3999
        %v4915 = vld [vmem:[#allocation1] sm:$0xff]
        %4916 = vst [vmem:[#allocation1] ss:$9 sm:$0xff] %v4000
        %4917 = vst [vmem:[%s4793] ss:$9 sm:$0xff] %v4001
        %4918 = vst [vmem:[%s4795] ss:$9 sm:$0xff] %v4002
        %4919 = vst [vmem:[%s4797] ss:$9 sm:$0xff] %v4003
        %4920 = vst [vmem:[%s4799] ss:$9 sm:$0xff] %v4004
        %4921 = vst [vmem:[%s4801] ss:$9 sm:$0xff] %v4005
        %4922 = vst [vmem:[%s4803] ss:$9 sm:$0xff] %v4006
        %4923 = vst [vmem:[%s4805] ss:$9 sm:$0xff] %v4007
        %v4924 = vld [vmem:[#allocation1] sm:$0xff]
        %4925 = vst [vmem:[#allocation1] ss:$9 sm:$0xff] %v4008
        %4926 = vst [vmem:[%s4793] ss:$9 sm:$0xff] %v4009
        %4927 = vst [vmem:[%s4795] ss:$9 sm:$0xff] %v4010
        %4928 = vst [vmem:[%s4797] ss:$9 sm:$0xff] %v4011
        %4929 = vst [vmem:[%s4799] ss:$9 sm:$0xff] %v4012
        %4930 = vst [vmem:[%s4801] ss:$9 sm:$0xff] %v4013
        %4931 = vst [vmem:[%s4803] ss:$9 sm:$0xff] %v4014
        %4932 = vst [vmem:[%s4805] ss:$9 sm:$0xff] %v4015
        %v4933 = vld [vmem:[#allocation1] sm:$0xff]
        %4934 = vst [vmem:[#allocation1] ss:$9 sm:$0xff] %v4016
        %4935 = vst [vmem:[%s4793] ss:$9 sm:$0xff] %v4017
        %4936 = vst [vmem:[%s4795] ss:$9 sm:$0xff] %v4018
        %4937 = vst [vmem:[%s4797] ss:$9 sm:$0xff] %v4019
        %4938 = vst [vmem:[%s4799] ss:$9 sm:$0xff] %v4020
        %4939 = vst [vmem:[%s4801] ss:$9 sm:$0xff] %v4021
        %4940 = vst [vmem:[%s4803] ss:$9 sm:$0xff] %v4022
        %4941 = vst [vmem:[%s4805] ss:$9 sm:$0xff] %v4023
        %v4942 = vld [vmem:[#allocation1] sm:$0xff]
        %4943 = vst [vmem:[#allocation1] ss:$9 sm:$0xff] %v4024
        %4944 = vst [vmem:[%s4793] ss:$9 sm:$0xff] %v4025
        %4945 = vst [vmem:[%s4795] ss:$9 sm:$0xff] %v4026
        %4946 = vst [vmem:[%s4797] ss:$9 sm:$0xff] %v4027
        %4947 = vst [vmem:[%s4799] ss:$9 sm:$0xff] %v4028
        %4948 = vst [vmem:[%s4801] ss:$9 sm:$0xff] %v4029
        %4949 = vst [vmem:[%s4803] ss:$9 sm:$0xff] %v4030
        %4950 = vst [vmem:[%s4805] ss:$9 sm:$0xff] %v4031
        %v4951 = vld [vmem:[#allocation1] sm:$0xff]
        %4952 = vst [vmem:[#allocation1] ss:$9 sm:$0xff] %v4032
        %4953 = vst [vmem:[%s4793] ss:$9 sm:$0xff] %v4033
        %4954 = vst [vmem:[%s4795] ss:$9 sm:$0xff] %v4034
        %4955 = vst [vmem:[%s4797] ss:$9 sm:$0xff] %v4035
        %4956 = vst [vmem:[%s4799] ss:$9 sm:$0xff] %v4036
        %4957 = vst [vmem:[%s4801] ss:$9 sm:$0xff] %v4037
        %4958 = vst [vmem:[%s4803] ss:$9 sm:$0xff] %v4038
        %4959 = vst [vmem:[%s4805] ss:$9 sm:$0xff] %v4039
        %v4960 = vld [vmem:[#allocation1] sm:$0xff]
        %4961 = vst [vmem:[#allocation1] ss:$9 sm:$0xff] %v4040
        %4962 = vst [vmem:[%s4793] ss:$9 sm:$0xff] %v4041
        %4963 = vst [vmem:[%s4795] ss:$9 sm:$0xff] %v4042
        %4964 = vst [vmem:[%s4797] ss:$9 sm:$0xff] %v4043
        %4965 = vst [vmem:[%s4799] ss:$9 sm:$0xff] %v4044
        %4966 = vst [vmem:[%s4801] ss:$9 sm:$0xff] %v4045
        %4967 = vst [vmem:[%s4803] ss:$9 sm:$0xff] %v4046
        %4968 = vst [vmem:[%s4805] ss:$9 sm:$0xff] %v4047
        %v4969 = vld [vmem:[#allocation1] sm:$0xff]
        %4970 = vst [vmem:[#allocation1] ss:$9 sm:$0xff] %v4048
        %4971 = vst [vmem:[%s4793] ss:$9 sm:$0xff] %v4049
        %4972 = vst [vmem:[%s4795] ss:$9 sm:$0xff] %v4050
        %4973 = vst [vmem:[%s4797] ss:$9 sm:$0xff] %v4051
        %4974 = vst [vmem:[%s4799] ss:$9 sm:$0xff] %v4052
        %4975 = vst [vmem:[%s4801] ss:$9 sm:$0xff] %v4053
        %4976 = vst [vmem:[%s4803] ss:$9 sm:$0xff] %v4054
        %4977 = vst [vmem:[%s4805] ss:$9 sm:$0xff] %v4055
        %v4978 = vld [vmem:[#allocation1] sm:$0xff]
        %4979 = vst [vmem:[#allocation1] ss:$9 sm:$0xff] %v4056
        %4980 = vst [vmem:[%s4793] ss:$9 sm:$0xff] %v4057
        %4981 = vst [vmem:[%s4795] ss:$9 sm:$0xff] %v4058
        %4982 = vst [vmem:[%s4797] ss:$9 sm:$0xff] %v4059
        %4983 = vst [vmem:[%s4799] ss:$9 sm:$0xff] %v4060
        %4984 = vst [vmem:[%s4801] ss:$9 sm:$0xff] %v4061
        %4985 = vst [vmem:[%s4803] ss:$9 sm:$0xff] %v4062
        %4986 = vst [vmem:[%s4805] ss:$9 sm:$0xff] %v4063
        %v4987 = vld [vmem:[#allocation1] sm:$0xff]
        %4988 = vst [vmem:[#allocation1] ss:$9 sm:$0xff] %v4064
        %4989 = vst [vmem:[%s4793] ss:$9 sm:$0xff] %v4065
        %4990 = vst [vmem:[%s4795] ss:$9 sm:$0xff] %v4066
        %4991 = vst [vmem:[%s4797] ss:$9 sm:$0xff] %v4067
        %4992 = vst [vmem:[%s4799] ss:$9 sm:$0xff] %v4068
        %4993 = vst [vmem:[%s4801] ss:$9 sm:$0xff] %v4069
        %4994 = vst [vmem:[%s4803] ss:$9 sm:$0xff] %v4070
        %4995 = vst [vmem:[%s4805] ss:$9 sm:$0xff] %v4071
        %v4996 = vld [vmem:[#allocation1] sm:$0xff]
        %4997 = vst [vmem:[#allocation1] ss:$9 sm:$0xff] %v4072
        %4998 = vst [vmem:[%s4793] ss:$9 sm:$0xff] %v4073
        %4999 = vst [vmem:[%s4795] ss:$9 sm:$0xff] %v4074
        %5000 = vst [vmem:[%s4797] ss:$9 sm:$0xff] %v4075
        %5001 = vst [vmem:[%s4799] ss:$9 sm:$0xff] %v4076
        %5002 = vst [vmem:[%s4801] ss:$9 sm:$0xff] %v4077
        %5003 = vst [vmem:[%s4803] ss:$9 sm:$0xff] %v4078
        %5004 = vst [vmem:[%s4805] ss:$9 sm:$0xff] %v4079
        %v5005 = vld [vmem:[#allocation1] sm:$0xff]
        %5006 = vst [vmem:[#allocation1] ss:$9 sm:$0xff] %v4080
        %5007 = vst [vmem:[%s4793] ss:$9 sm:$0xff] %v4081
        %5008 = vst [vmem:[%s4795] ss:$9 sm:$0xff] %v4082
        %5009 = vst [vmem:[%s4797] ss:$9 sm:$0xff] %v4083
        %5010 = vst [vmem:[%s4799] ss:$9 sm:$0xff] %v4084
        %5011 = vst [vmem:[%s4801] ss:$9 sm:$0xff] %v4085
        %5012 = vst [vmem:[%s4803] ss:$9 sm:$0xff] %v4086
        %5013 = vst [vmem:[%s4805] ss:$9 sm:$0xff] %v4087
        %v5014 = vld [vmem:[#allocation1] sm:$0xff]
        %5015 = vst [vmem:[#allocation1] ss:$9 sm:$0xff] %v4088
        %5016 = vst [vmem:[%s4793] ss:$9 sm:$0xff] %v4089
        %5017 = vst [vmem:[%s4795] ss:$9 sm:$0xff] %v4090
        %5018 = vst [vmem:[%s4797] ss:$9 sm:$0xff] %v4091
        %5019 = vst [vmem:[%s4799] ss:$9 sm:$0xff] %v4092
        %5020 = vst [vmem:[%s4801] ss:$9 sm:$0xff] %v4093
        %5021 = vst [vmem:[%s4803] ss:$9 sm:$0xff] %v4094
        %5022 = vst [vmem:[%s4805] ss:$9 sm:$0xff] %v4095
        %v5023 = vld [vmem:[#allocation1] sm:$0xff]
        %5024 = vst [vmem:[#allocation1] ss:$9 sm:$0xff] %v4096
        %5025 = vst [vmem:[%s4793] ss:$9 sm:$0xff] %v4097
        %5026 = vst [vmem:[%s4795] ss:$9 sm:$0xff] %v4098
        %5027 = vst [vmem:[%s4797] ss:$9 sm:$0xff] %v4099
        %5028 = vst [vmem:[%s4799] ss:$9 sm:$0xff] %v4100
        %5029 = vst [vmem:[%s4801] ss:$9 sm:$0xff] %v4101
        %5030 = vst [vmem:[%s4803] ss:$9 sm:$0xff] %v4102
        %5031 = vst [vmem:[%s4805] ss:$9 sm:$0xff] %v4103
        %v5032 = vld [vmem:[#allocation1] sm:$0xff]
        %5033 = vst [vmem:[#allocation1] ss:$9 sm:$0xff] %v4104
        %5034 = vst [vmem:[%s4793] ss:$9 sm:$0xff] %v4105
        %5035 = vst [vmem:[%s4795] ss:$9 sm:$0xff] %v4106
        %5036 = vst [vmem:[%s4797] ss:$9 sm:$0xff] %v4107
        %5037 = vst [vmem:[%s4799] ss:$9 sm:$0xff] %v4108
        %5038 = vst [vmem:[%s4801] ss:$9 sm:$0xff] %v4109
        %5039 = vst [vmem:[%s4803] ss:$9 sm:$0xff] %v4110
        %5040 = vst [vmem:[%s4805] ss:$9 sm:$0xff] %v4111
        %v5041 = vld [vmem:[#allocation1] sm:$0xff]
        %5042 = vst [vmem:[#allocation1] ss:$9 sm:$0xff] %v4112
        %5043 = vst [vmem:[%s4793] ss:$9 sm:$0xff] %v4113
        %5044 = vst [vmem:[%s4795] ss:$9 sm:$0xff] %v4114
        %5045 = vst [vmem:[%s4797] ss:$9 sm:$0xff] %v4115
        %5046 = vst [vmem:[%s4799] ss:$9 sm:$0xff] %v4116
        %5047 = vst [vmem:[%s4801] ss:$9 sm:$0xff] %v4117
        %5048 = vst [vmem:[%s4803] ss:$9 sm:$0xff] %v4118
        %5049 = vst [vmem:[%s4805] ss:$9 sm:$0xff] %v4119
        %v5050 = vld [vmem:[#allocation1] sm:$0xff]
        %5051 = vst [vmem:[#allocation1] ss:$9 sm:$0xff] %v4120
        %5052 = vst [vmem:[%s4793] ss:$9 sm:$0xff] %v4121
        %5053 = vst [vmem:[%s4795] ss:$9 sm:$0xff] %v4122
        %5054 = vst [vmem:[%s4797] ss:$9 sm:$0xff] %v4123
        %5055 = vst [vmem:[%s4799] ss:$9 sm:$0xff] %v4124
        %5056 = vst [vmem:[%s4801] ss:$9 sm:$0xff] %v4125
        %5057 = vst [vmem:[%s4803] ss:$9 sm:$0xff] %v4126
        %5058 = vst [vmem:[%s4805] ss:$9 sm:$0xff] %v4127
        %v5059 = vld [vmem:[#allocation1] sm:$0xff]
        %5060 = vst [vmem:[#allocation1] ss:$9 sm:$0xff] %v4128
        %5061 = vst [vmem:[%s4793] ss:$9 sm:$0xff] %v4129
        %5062 = vst [vmem:[%s4795] ss:$9 sm:$0xff] %v4130
        %5063 = vst [vmem:[%s4797] ss:$9 sm:$0xff] %v4131
        %5064 = vst [vmem:[%s4799] ss:$9 sm:$0xff] %v4132
        %5065 = vst [vmem:[%s4801] ss:$9 sm:$0xff] %v4133
        %5066 = vst [vmem:[%s4803] ss:$9 sm:$0xff] %v4134
        %5067 = vst [vmem:[%s4805] ss:$9 sm:$0xff] %v4135
        %v5068 = vld [vmem:[#allocation1] sm:$0xff]
        %5069 = vst [vmem:[#allocation1] ss:$9 sm:$0xff] %v4136
        %5070 = vst [vmem:[%s4793] ss:$9 sm:$0xff] %v4137
        %5071 = vst [vmem:[%s4795] ss:$9 sm:$0xff] %v4138
        %5072 = vst [vmem:[%s4797] ss:$9 sm:$0xff] %v4139
        %5073 = vst [vmem:[%s4799] ss:$9 sm:$0xff] %v4140
        %5074 = vst [vmem:[%s4801] ss:$9 sm:$0xff] %v4141
        %5075 = vst [vmem:[%s4803] ss:$9 sm:$0xff] %v4142
        %5076 = vst [vmem:[%s4805] ss:$9 sm:$0xff] %v4143
        %v5077 = vld [vmem:[#allocation1] sm:$0xff]
        %5078 = vst [vmem:[#allocation1] ss:$9 sm:$0xff] %v4144
        %5079 = vst [vmem:[%s4793] ss:$9 sm:$0xff] %v4145
        %5080 = vst [vmem:[%s4795] ss:$9 sm:$0xff] %v4146
        %5081 = vst [vmem:[%s4797] ss:$9 sm:$0xff] %v4147
        %5082 = vst [vmem:[%s4799] ss:$9 sm:$0xff] %v4148
        %5083 = vst [vmem:[%s4801] ss:$9 sm:$0xff] %v4149
        %5084 = vst [vmem:[%s4803] ss:$9 sm:$0xff] %v4150
        %5085 = vst [vmem:[%s4805] ss:$9 sm:$0xff] %v4151
        %v5086 = vld [vmem:[#allocation1] sm:$0xff]
        %5087 = vst [vmem:[#allocation1] ss:$9 sm:$0xff] %v4152
        %5088 = vst [vmem:[%s4793] ss:$9 sm:$0xff] %v4153
        %5089 = vst [vmem:[%s4795] ss:$9 sm:$0xff] %v4154
        %5090 = vst [vmem:[%s4797] ss:$9 sm:$0xff] %v4155
        %5091 = vst [vmem:[%s4799] ss:$9 sm:$0xff] %v4156
        %5092 = vst [vmem:[%s4801] ss:$9 sm:$0xff] %v4157
        %5093 = vst [vmem:[%s4803] ss:$9 sm:$0xff] %v4158
        %5094 = vst [vmem:[%s4805] ss:$9 sm:$0xff] %v4159
        %v5095 = vld [vmem:[#allocation1] sm:$0xff]
        %5096 = vst [vmem:[#allocation1] ss:$9 sm:$0xff] %v4160
        %5097 = vst [vmem:[%s4793] ss:$9 sm:$0xff] %v4161
        %5098 = vst [vmem:[%s4795] ss:$9 sm:$0xff] %v4162
        %5099 = vst [vmem:[%s4797] ss:$9 sm:$0xff] %v4163
        %5100 = vst [vmem:[%s4799] ss:$9 sm:$0xff] %v4164
        %5101 = vst [vmem:[%s4801] ss:$9 sm:$0xff] %v4165
        %5102 = vst [vmem:[%s4803] ss:$9 sm:$0xff] %v4166
        %5103 = vst [vmem:[%s4805] ss:$9 sm:$0xff] %v4167
        %v5104 = vld [vmem:[#allocation1] sm:$0xff]
        %5105 = vst [vmem:[#allocation1] ss:$9 sm:$0xff] %v4168
        %5106 = vst [vmem:[%s4793] ss:$9 sm:$0xff] %v4169
        %5107 = vst [vmem:[%s4795] ss:$9 sm:$0xff] %v4170
        %5108 = vst [vmem:[%s4797] ss:$9 sm:$0xff] %v4171
        %5109 = vst [vmem:[%s4799] ss:$9 sm:$0xff] %v4172
        %5110 = vst [vmem:[%s4801] ss:$9 sm:$0xff] %v4173
        %5111 = vst [vmem:[%s4803] ss:$9 sm:$0xff] %v4174
        %5112 = vst [vmem:[%s4805] ss:$9 sm:$0xff] %v4175
        %v5113 = vld [vmem:[#allocation1] sm:$0xff]
        %5114 = vst [vmem:[#allocation1] ss:$9 sm:$0xff] %v4176
        %5115 = vst [vmem:[%s4793] ss:$9 sm:$0xff] %v4177
        %5116 = vst [vmem:[%s4795] ss:$9 sm:$0xff] %v4178
        %5117 = vst [vmem:[%s4797] ss:$9 sm:$0xff] %v4179
        %5118 = vst [vmem:[%s4799] ss:$9 sm:$0xff] %v4180
        %5119 = vst [vmem:[%s4801] ss:$9 sm:$0xff] %v4181
        %5120 = vst [vmem:[%s4803] ss:$9 sm:$0xff] %v4182
        %5121 = vst [vmem:[%s4805] ss:$9 sm:$0xff] %v4183
        %v5122 = vld [vmem:[#allocation1] sm:$0xff]
        %5123 = vst [vmem:[#allocation1] ss:$9 sm:$0xff] %v4184
        %5124 = vst [vmem:[%s4793] ss:$9 sm:$0xff] %v4185
        %5125 = vst [vmem:[%s4795] ss:$9 sm:$0xff] %v4186
        %5126 = vst [vmem:[%s4797] ss:$9 sm:$0xff] %v4187
        %5127 = vst [vmem:[%s4799] ss:$9 sm:$0xff] %v4188
        %5128 = vst [vmem:[%s4801] ss:$9 sm:$0xff] %v4189
        %5129 = vst [vmem:[%s4803] ss:$9 sm:$0xff] %v4190
        %5130 = vst [vmem:[%s4805] ss:$9 sm:$0xff] %v4191
        %v5131 = vld [vmem:[#allocation1] sm:$0xff]
        %5132 = vst [vmem:[#allocation1] ss:$9 sm:$0xff] %v4192
        %5133 = vst [vmem:[%s4793] ss:$9 sm:$0xff] %v4193
        %5134 = vst [vmem:[%s4795] ss:$9 sm:$0xff] %v4194
        %5135 = vst [vmem:[%s4797] ss:$9 sm:$0xff] %v4195
        %5136 = vst [vmem:[%s4799] ss:$9 sm:$0xff] %v4196
        %5137 = vst [vmem:[%s4801] ss:$9 sm:$0xff] %v4197
        %5138 = vst [vmem:[%s4803] ss:$9 sm:$0xff] %v4198
        %5139 = vst [vmem:[%s4805] ss:$9 sm:$0xff] %v4199
        %v5140 = vld [vmem:[#allocation1] sm:$0xff]
        %5141 = vst [vmem:[#allocation1] ss:$9 sm:$0xff] %v4200
        %5142 = vst [vmem:[%s4793] ss:$9 sm:$0xff] %v4201
        %5143 = vst [vmem:[%s4795] ss:$9 sm:$0xff] %v4202
        %5144 = vst [vmem:[%s4797] ss:$9 sm:$0xff] %v4203
        %5145 = vst [vmem:[%s4799] ss:$9 sm:$0xff] %v4204
        %5146 = vst [vmem:[%s4801] ss:$9 sm:$0xff] %v4205
        %5147 = vst [vmem:[%s4803] ss:$9 sm:$0xff] %v4206
        %5148 = vst [vmem:[%s4805] ss:$9 sm:$0xff] %v4207
        %v5149 = vld [vmem:[#allocation1] sm:$0xff]
        %5150 = vst [vmem:[#allocation1] ss:$9 sm:$0xff] %v4208
        %5151 = vst [vmem:[%s4793] ss:$9 sm:$0xff] %v4209
        %5152 = vst [vmem:[%s4795] ss:$9 sm:$0xff] %v4210
        %5153 = vst [vmem:[%s4797] ss:$9 sm:$0xff] %v4211
        %5154 = vst [vmem:[%s4799] ss:$9 sm:$0xff] %v4212
        %5155 = vst [vmem:[%s4801] ss:$9 sm:$0xff] %v4213
        %5156 = vst [vmem:[%s4803] ss:$9 sm:$0xff] %v4214
        %5157 = vst [vmem:[%s4805] ss:$9 sm:$0xff] %v4215
        %v5158 = vld [vmem:[#allocation1] sm:$0xff]
        %5159 = vst [vmem:[#allocation1] ss:$9 sm:$0xff] %v4216
        %5160 = vst [vmem:[%s4793] ss:$9 sm:$0xff] %v4217
        %5161 = vst [vmem:[%s4795] ss:$9 sm:$0xff] %v4218
        %5162 = vst [vmem:[%s4797] ss:$9 sm:$0xff] %v4219
        %5163 = vst [vmem:[%s4799] ss:$9 sm:$0xff] %v4220
        %5164 = vst [vmem:[%s4801] ss:$9 sm:$0xff] %v4221
        %5165 = vst [vmem:[%s4803] ss:$9 sm:$0xff] %v4222
        %5166 = vst [vmem:[%s4805] ss:$9 sm:$0xff] %v4223
        %v5167 = vld [vmem:[#allocation1] sm:$0xff]
        %5168 = vst [vmem:[#allocation1] ss:$9 sm:$0xff] %v4224
        %5169 = vst [vmem:[%s4793] ss:$9 sm:$0xff] %v4225
        %5170 = vst [vmem:[%s4795] ss:$9 sm:$0xff] %v4226
        %5171 = vst [vmem:[%s4797] ss:$9 sm:$0xff] %v4227
        %5172 = vst [vmem:[%s4799] ss:$9 sm:$0xff] %v4228
        %5173 = vst [vmem:[%s4801] ss:$9 sm:$0xff] %v4229
        %5174 = vst [vmem:[%s4803] ss:$9 sm:$0xff] %v4230
        %5175 = vst [vmem:[%s4805] ss:$9 sm:$0xff] %v4231
        %v5176 = vld [vmem:[#allocation1] sm:$0xff]
        %5177 = vst [vmem:[#allocation1] ss:$9 sm:$0xff] %v4232
        %5178 = vst [vmem:[%s4793] ss:$9 sm:$0xff] %v4233
        %5179 = vst [vmem:[%s4795] ss:$9 sm:$0xff] %v4234
        %5180 = vst [vmem:[%s4797] ss:$9 sm:$0xff] %v4235
        %5181 = vst [vmem:[%s4799] ss:$9 sm:$0xff] %v4236
        %5182 = vst [vmem:[%s4801] ss:$9 sm:$0xff] %v4237
        %5183 = vst [vmem:[%s4803] ss:$9 sm:$0xff] %v4238
        %5184 = vst [vmem:[%s4805] ss:$9 sm:$0xff] %v4239
        %v5185 = vld [vmem:[#allocation1] sm:$0xff]
        %5186 = vst [vmem:[#allocation1] ss:$9 sm:$0xff] %v4240
        %5187 = vst [vmem:[%s4793] ss:$9 sm:$0xff] %v4241
        %5188 = vst [vmem:[%s4795] ss:$9 sm:$0xff] %v4242
        %5189 = vst [vmem:[%s4797] ss:$9 sm:$0xff] %v4243
        %5190 = vst [vmem:[%s4799] ss:$9 sm:$0xff] %v4244
        %5191 = vst [vmem:[%s4801] ss:$9 sm:$0xff] %v4245
        %5192 = vst [vmem:[%s4803] ss:$9 sm:$0xff] %v4246
        %5193 = vst [vmem:[%s4805] ss:$9 sm:$0xff] %v4247
        %v5194 = vld [vmem:[#allocation1] sm:$0xff]
        %5195 = vst [vmem:[#allocation1] ss:$9 sm:$0xff] %v4248
        %5196 = vst [vmem:[%s4793] ss:$9 sm:$0xff] %v4249
        %5197 = vst [vmem:[%s4795] ss:$9 sm:$0xff] %v4250
        %5198 = vst [vmem:[%s4797] ss:$9 sm:$0xff] %v4251
        %5199 = vst [vmem:[%s4799] ss:$9 sm:$0xff] %v4252
        %5200 = vst [vmem:[%s4801] ss:$9 sm:$0xff] %v4253
        %5201 = vst [vmem:[%s4803] ss:$9 sm:$0xff] %v4254
        %5202 = vst [vmem:[%s4805] ss:$9 sm:$0xff] %v4255
        %v5203 = vld [vmem:[#allocation1] sm:$0xff]
        %5204 = vst [vmem:[#allocation1] ss:$9 sm:$0xff] %v4256
        %5205 = vst [vmem:[%s4793] ss:$9 sm:$0xff] %v4257
        %5206 = vst [vmem:[%s4795] ss:$9 sm:$0xff] %v4258
        %5207 = vst [vmem:[%s4797] ss:$9 sm:$0xff] %v4259
        %5208 = vst [vmem:[%s4799] ss:$9 sm:$0xff] %v4260
        %5209 = vst [vmem:[%s4801] ss:$9 sm:$0xff] %v4261
        %5210 = vst [vmem:[%s4803] ss:$9 sm:$0xff] %v4262
        %5211 = vst [vmem:[%s4805] ss:$9 sm:$0xff] %v4263
        %v5212 = vld [vmem:[#allocation1] sm:$0xff]
        %5213 = vst [vmem:[#allocation1] ss:$9 sm:$0xff] %v4264
        %5214 = vst [vmem:[%s4793] ss:$9 sm:$0xff] %v4265
        %5215 = vst [vmem:[%s4795] ss:$9 sm:$0xff] %v4266
        %5216 = vst [vmem:[%s4797] ss:$9 sm:$0xff] %v4267
        %5217 = vst [vmem:[%s4799] ss:$9 sm:$0xff] %v4268
        %5218 = vst [vmem:[%s4801] ss:$9 sm:$0xff] %v4269
        %5219 = vst [vmem:[%s4803] ss:$9 sm:$0xff] %v4270
        %5220 = vst [vmem:[%s4805] ss:$9 sm:$0xff] %v4271
        %v5221 = vld [vmem:[#allocation1] sm:$0xff]
        %5222 = vst [vmem:[#allocation1] ss:$9 sm:$0xff] %v4272
        %5223 = vst [vmem:[%s4793] ss:$9 sm:$0xff] %v4273
        %5224 = vst [vmem:[%s4795] ss:$9 sm:$0xff] %v4274
        %5225 = vst [vmem:[%s4797] ss:$9 sm:$0xff] %v4275
        %5226 = vst [vmem:[%s4799] ss:$9 sm:$0xff] %v4276
        %5227 = vst [vmem:[%s4801] ss:$9 sm:$0xff] %v4277
        %5228 = vst [vmem:[%s4803] ss:$9 sm:$0xff] %v4278
        %5229 = vst [vmem:[%s4805] ss:$9 sm:$0xff] %v4279
        %v5230 = vld [vmem:[#allocation1] sm:$0xff]
        %5231 = vst [vmem:[#allocation1] ss:$9 sm:$0xff] %v4280
        %5232 = vst [vmem:[%s4793] ss:$9 sm:$0xff] %v4281
        %5233 = vst [vmem:[%s4795] ss:$9 sm:$0xff] %v4282
        %5234 = vst [vmem:[%s4797] ss:$9 sm:$0xff] %v4283
        %5235 = vst [vmem:[%s4799] ss:$9 sm:$0xff] %v4284
        %5236 = vst [vmem:[%s4801] ss:$9 sm:$0xff] %v4285
        %5237 = vst [vmem:[%s4803] ss:$9 sm:$0xff] %v4286
        %5238 = vst [vmem:[%s4805] ss:$9 sm:$0xff] %v4287
        %v5239 = vld [vmem:[#allocation1] sm:$0xff]
        %5240 = vst [vmem:[#allocation1] ss:$9 sm:$0xff] %v4288
        %5241 = vst [vmem:[%s4793] ss:$9 sm:$0xff] %v4289
        %5242 = vst [vmem:[%s4795] ss:$9 sm:$0xff] %v4290
        %5243 = vst [vmem:[%s4797] ss:$9 sm:$0xff] %v4291
        %5244 = vst [vmem:[%s4799] ss:$9 sm:$0xff] %v4292
        %5245 = vst [vmem:[%s4801] ss:$9 sm:$0xff] %v4293
        %5246 = vst [vmem:[%s4803] ss:$9 sm:$0xff] %v4294
        %5247 = vst [vmem:[%s4805] ss:$9 sm:$0xff] %v4295
        %v5248 = vld [vmem:[#allocation1] sm:$0xff]
        %5249 = vst [vmem:[#allocation1] ss:$9 sm:$0xff] %v4296
        %5250 = vst [vmem:[%s4793] ss:$9 sm:$0xff] %v4297
        %5251 = vst [vmem:[%s4795] ss:$9 sm:$0xff] %v4298
        %5252 = vst [vmem:[%s4797] ss:$9 sm:$0xff] %v4299
        %5253 = vst [vmem:[%s4799] ss:$9 sm:$0xff] %v4300
        %5254 = vst [vmem:[%s4801] ss:$9 sm:$0xff] %v4301
        %5255 = vst [vmem:[%s4803] ss:$9 sm:$0xff] %v4302
        %5256 = vst [vmem:[%s4805] ss:$9 sm:$0xff] %v4303
        %v5257 = vld [vmem:[#allocation1] sm:$0xff]
        %5258 = vst [vmem:[#allocation1] ss:$9 sm:$0xff] %v4304
        %5259 = vst [vmem:[%s4793] ss:$9 sm:$0xff] %v4305
        %5260 = vst [vmem:[%s4795] ss:$9 sm:$0xff] %v4306
        %5261 = vst [vmem:[%s4797] ss:$9 sm:$0xff] %v4307
        %5262 = vst [vmem:[%s4799] ss:$9 sm:$0xff] %v4308
        %5263 = vst [vmem:[%s4801] ss:$9 sm:$0xff] %v4309
        %5264 = vst [vmem:[%s4803] ss:$9 sm:$0xff] %v4310
        %5265 = vst [vmem:[%s4805] ss:$9 sm:$0xff] %v4311
        %v5266 = vld [vmem:[#allocation1] sm:$0xff]
        %5267 = vst [vmem:[#allocation1] ss:$9 sm:$0xff] %v4312
        %5268 = vst [vmem:[%s4793] ss:$9 sm:$0xff] %v4313
        %5269 = vst [vmem:[%s4795] ss:$9 sm:$0xff] %v4314
        %5270 = vst [vmem:[%s4797] ss:$9 sm:$0xff] %v4315
        %5271 = vst [vmem:[%s4799] ss:$9 sm:$0xff] %v4316
        %5272 = vst [vmem:[%s4801] ss:$9 sm:$0xff] %v4317
        %5273 = vst [vmem:[%s4803] ss:$9 sm:$0xff] %v4318
        %5274 = vst [vmem:[%s4805] ss:$9 sm:$0xff] %v4319
        %v5275 = vld [vmem:[#allocation1] sm:$0xff]
        %5276 = vst [vmem:[#allocation1] ss:$9 sm:$0xff] %v4320
        %5277 = vst [vmem:[%s4793] ss:$9 sm:$0xff] %v4321
        %5278 = vst [vmem:[%s4795] ss:$9 sm:$0xff] %v4322
        %5279 = vst [vmem:[%s4797] ss:$9 sm:$0xff] %v4323
        %5280 = vst [vmem:[%s4799] ss:$9 sm:$0xff] %v4324
        %5281 = vst [vmem:[%s4801] ss:$9 sm:$0xff] %v4325
        %5282 = vst [vmem:[%s4803] ss:$9 sm:$0xff] %v4326
        %5283 = vst [vmem:[%s4805] ss:$9 sm:$0xff] %v4327
        %v5284 = vld [vmem:[#allocation1] sm:$0xff]
        %5285 = vst [vmem:[#allocation1] ss:$9 sm:$0xff] %v4328
        %5286 = vst [vmem:[%s4793] ss:$9 sm:$0xff] %v4329
        %5287 = vst [vmem:[%s4795] ss:$9 sm:$0xff] %v4330
        %5288 = vst [vmem:[%s4797] ss:$9 sm:$0xff] %v4331
        %5289 = vst [vmem:[%s4799] ss:$9 sm:$0xff] %v4332
        %5290 = vst [vmem:[%s4801] ss:$9 sm:$0xff] %v4333
        %5291 = vst [vmem:[%s4803] ss:$9 sm:$0xff] %v4334
        %5292 = vst [vmem:[%s4805] ss:$9 sm:$0xff] %v4335
        %v5293 = vld [vmem:[#allocation1] sm:$0xff]
        %5294 = vst [vmem:[#allocation1] ss:$9 sm:$0xff] %v4336
        %5295 = vst [vmem:[%s4793] ss:$9 sm:$0xff] %v4337
        %5296 = vst [vmem:[%s4795] ss:$9 sm:$0xff] %v4338
        %5297 = vst [vmem:[%s4797] ss:$9 sm:$0xff] %v4339
        %5298 = vst [vmem:[%s4799] ss:$9 sm:$0xff] %v4340
        %5299 = vst [vmem:[%s4801] ss:$9 sm:$0xff] %v4341
        %5300 = vst [vmem:[%s4803] ss:$9 sm:$0xff] %v4342
        %5301 = vst [vmem:[%s4805] ss:$9 sm:$0xff] %v4343
        %v5302 = vld [vmem:[#allocation1] sm:$0xff]
        %5303 = vst [vmem:[#allocation1] ss:$9 sm:$0xff] %v4344
        %5304 = vst [vmem:[%s4793] ss:$9 sm:$0xff] %v4345
        %5305 = vst [vmem:[%s4795] ss:$9 sm:$0xff] %v4346
        %5306 = vst [vmem:[%s4797] ss:$9 sm:$0xff] %v4347
        %5307 = vst [vmem:[%s4799] ss:$9 sm:$0xff] %v4348
        %5308 = vst [vmem:[%s4801] ss:$9 sm:$0xff] %v4349
        %5309 = vst [vmem:[%s4803] ss:$9 sm:$0xff] %v4350
        %5310 = vst [vmem:[%s4805] ss:$9 sm:$0xff] %v4351
        %v5311 = vld [vmem:[#allocation1] sm:$0xff]
        %5312 = vst [vmem:[#allocation1] ss:$9 sm:$0xff] %v4352
        %5313 = vst [vmem:[%s4793] ss:$9 sm:$0xff] %v4353
        %5314 = vst [vmem:[%s4795] ss:$9 sm:$0xff] %v4354
        %5315 = vst [vmem:[%s4797] ss:$9 sm:$0xff] %v4355
        %5316 = vst [vmem:[%s4799] ss:$9 sm:$0xff] %v4356
        %5317 = vst [vmem:[%s4801] ss:$9 sm:$0xff] %v4357
        %5318 = vst [vmem:[%s4803] ss:$9 sm:$0xff] %v4358
        %5319 = vst [vmem:[%s4805] ss:$9 sm:$0xff] %v4359
        %v5320 = vld [vmem:[#allocation1] sm:$0xff]
        %5321 = vst [vmem:[#allocation1] ss:$9 sm:$0xff] %v4360
        %5322 = vst [vmem:[%s4793] ss:$9 sm:$0xff] %v4361
        %5323 = vst [vmem:[%s4795] ss:$9 sm:$0xff] %v4362
        %5324 = vst [vmem:[%s4797] ss:$9 sm:$0xff] %v4363
        %5325 = vst [vmem:[%s4799] ss:$9 sm:$0xff] %v4364
        %5326 = vst [vmem:[%s4801] ss:$9 sm:$0xff] %v4365
        %5327 = vst [vmem:[%s4803] ss:$9 sm:$0xff] %v4366
        %5328 = vst [vmem:[%s4805] ss:$9 sm:$0xff] %v4367
        %v5329 = vld [vmem:[#allocation1] sm:$0xff]
        %5330 = vst [vmem:[#allocation1] ss:$9 sm:$0xff] %v4368
        %5331 = vst [vmem:[%s4793] ss:$9 sm:$0xff] %v4369
        %5332 = vst [vmem:[%s4795] ss:$9 sm:$0xff] %v4370
        %5333 = vst [vmem:[%s4797] ss:$9 sm:$0xff] %v4371
        %5334 = vst [vmem:[%s4799] ss:$9 sm:$0xff] %v4372
        %5335 = vst [vmem:[%s4801] ss:$9 sm:$0xff] %v4373
        %5336 = vst [vmem:[%s4803] ss:$9 sm:$0xff] %v4374
        %5337 = vst [vmem:[%s4805] ss:$9 sm:$0xff] %v4375
        %v5338 = vld [vmem:[#allocation1] sm:$0xff]
        %5339 = vst [vmem:[#allocation1] ss:$9 sm:$0xff] %v4376
        %5340 = vst [vmem:[%s4793] ss:$9 sm:$0xff] %v4377
        %5341 = vst [vmem:[%s4795] ss:$9 sm:$0xff] %v4378
        %5342 = vst [vmem:[%s4797] ss:$9 sm:$0xff] %v4379
        %5343 = vst [vmem:[%s4799] ss:$9 sm:$0xff] %v4380
        %5344 = vst [vmem:[%s4801] ss:$9 sm:$0xff] %v4381
        %5345 = vst [vmem:[%s4803] ss:$9 sm:$0xff] %v4382
        %5346 = vst [vmem:[%s4805] ss:$9 sm:$0xff] %v4383
        %v5347 = vld [vmem:[#allocation1] sm:$0xff]
        %5348 = vst [vmem:[#allocation1] ss:$9 sm:$0xff] %v4384
        %5349 = vst [vmem:[%s4793] ss:$9 sm:$0xff] %v4385
        %5350 = vst [vmem:[%s4795] ss:$9 sm:$0xff] %v4386
        %5351 = vst [vmem:[%s4797] ss:$9 sm:$0xff] %v4387
        %5352 = vst [vmem:[%s4799] ss:$9 sm:$0xff] %v4388
        %5353 = vst [vmem:[%s4801] ss:$9 sm:$0xff] %v4389
        %5354 = vst [vmem:[%s4803] ss:$9 sm:$0xff] %v4390
        %5355 = vst [vmem:[%s4805] ss:$9 sm:$0xff] %v4391
        %v5356 = vld [vmem:[#allocation1] sm:$0xff]
        %5357 = vst [vmem:[#allocation1] ss:$9 sm:$0xff] %v4392
        %5358 = vst [vmem:[%s4793] ss:$9 sm:$0xff] %v4393
        %5359 = vst [vmem:[%s4795] ss:$9 sm:$0xff] %v4394
        %5360 = vst [vmem:[%s4797] ss:$9 sm:$0xff] %v4395
        %5361 = vst [vmem:[%s4799] ss:$9 sm:$0xff] %v4396
        %5362 = vst [vmem:[%s4801] ss:$9 sm:$0xff] %v4397
        %5363 = vst [vmem:[%s4803] ss:$9 sm:$0xff] %v4398
        %5364 = vst [vmem:[%s4805] ss:$9 sm:$0xff] %v4399
        %v5365 = vld [vmem:[#allocation1] sm:$0xff]
        %5366 = vst [vmem:[#allocation1] ss:$9 sm:$0xff] %v4400
        %5367 = vst [vmem:[%s4793] ss:$9 sm:$0xff] %v4401
        %5368 = vst [vmem:[%s4795] ss:$9 sm:$0xff] %v4402
        %5369 = vst [vmem:[%s4797] ss:$9 sm:$0xff] %v4403
        %5370 = vst [vmem:[%s4799] ss:$9 sm:$0xff] %v4404
        %5371 = vst [vmem:[%s4801] ss:$9 sm:$0xff] %v4405
        %5372 = vst [vmem:[%s4803] ss:$9 sm:$0xff] %v4406
        %5373 = vst [vmem:[%s4805] ss:$9 sm:$0xff] %v4407
        %v5374 = vld [vmem:[#allocation1] sm:$0xff]
        %5375 = vst [vmem:[#allocation1] ss:$9 sm:$0xff] %v4408
        %5376 = vst [vmem:[%s4793] ss:$9 sm:$0xff] %v4409
        %5377 = vst [vmem:[%s4795] ss:$9 sm:$0xff] %v4410
        %5378 = vst [vmem:[%s4797] ss:$9 sm:$0xff] %v4411
        %5379 = vst [vmem:[%s4799] ss:$9 sm:$0xff] %v4412
        %5380 = vst [vmem:[%s4801] ss:$9 sm:$0xff] %v4413
        %5381 = vst [vmem:[%s4803] ss:$9 sm:$0xff] %v4414
        %5382 = vst [vmem:[%s4805] ss:$9 sm:$0xff] %v4415
        %v5383 = vld [vmem:[#allocation1] sm:$0xff]
        %5384 = vst [vmem:[#allocation1] ss:$9 sm:$0xff] %v4416
        %5385 = vst [vmem:[%s4793] ss:$9 sm:$0xff] %v4417
        %5386 = vst [vmem:[%s4795] ss:$9 sm:$0xff] %v4418
        %5387 = vst [vmem:[%s4797] ss:$9 sm:$0xff] %v4419
        %5388 = vst [vmem:[%s4799] ss:$9 sm:$0xff] %v4420
        %5389 = vst [vmem:[%s4801] ss:$9 sm:$0xff] %v4421
        %5390 = vst [vmem:[%s4803] ss:$9 sm:$0xff] %v4422
        %5391 = vst [vmem:[%s4805] ss:$9 sm:$0xff] %v4423
        %v5392 = vld [vmem:[#allocation1] sm:$0xff]
        %5393 = vst [vmem:[#allocation1] ss:$9 sm:$0xff] %v4424
        %5394 = vst [vmem:[%s4793] ss:$9 sm:$0xff] %v4425
        %5395 = vst [vmem:[%s4795] ss:$9 sm:$0xff] %v4426
        %5396 = vst [vmem:[%s4797] ss:$9 sm:$0xff] %v4427
        %5397 = vst [vmem:[%s4799] ss:$9 sm:$0xff] %v4428
        %5398 = vst [vmem:[%s4801] ss:$9 sm:$0xff] %v4429
        %5399 = vst [vmem:[%s4803] ss:$9 sm:$0xff] %v4430
        %5400 = vst [vmem:[%s4805] ss:$9 sm:$0xff] %v4431
        %v5401 = vld [vmem:[#allocation1] sm:$0xff]
        %5402 = vst [vmem:[#allocation1] ss:$9 sm:$0xff] %v4432
        %5403 = vst [vmem:[%s4793] ss:$9 sm:$0xff] %v4433
        %5404 = vst [vmem:[%s4795] ss:$9 sm:$0xff] %v4434
        %5405 = vst [vmem:[%s4797] ss:$9 sm:$0xff] %v4435
        %5406 = vst [vmem:[%s4799] ss:$9 sm:$0xff] %v4436
        %5407 = vst [vmem:[%s4801] ss:$9 sm:$0xff] %v4437
        %5408 = vst [vmem:[%s4803] ss:$9 sm:$0xff] %v4438
        %5409 = vst [vmem:[%s4805] ss:$9 sm:$0xff] %v4439
        %v5410 = vld [vmem:[#allocation1] sm:$0xff]
        %5411 = vst [vmem:[#allocation1] ss:$9 sm:$0xff] %v4440
        %5412 = vst [vmem:[%s4793] ss:$9 sm:$0xff] %v4441
        %5413 = vst [vmem:[%s4795] ss:$9 sm:$0xff] %v4442
        %5414 = vst [vmem:[%s4797] ss:$9 sm:$0xff] %v4443
        %5415 = vst [vmem:[%s4799] ss:$9 sm:$0xff] %v4444
        %5416 = vst [vmem:[%s4801] ss:$9 sm:$0xff] %v4445
        %5417 = vst [vmem:[%s4803] ss:$9 sm:$0xff] %v4446
        %5418 = vst [vmem:[%s4805] ss:$9 sm:$0xff] %v4447
        %v5419 = vld [vmem:[#allocation1] sm:$0xff]
        %5420 = vst [vmem:[#allocation1] ss:$9 sm:$0xff] %v4448
        %5421 = vst [vmem:[%s4793] ss:$9 sm:$0xff] %v4449
        %5422 = vst [vmem:[%s4795] ss:$9 sm:$0xff] %v4450
        %5423 = vst [vmem:[%s4797] ss:$9 sm:$0xff] %v4451
        %5424 = vst [vmem:[%s4799] ss:$9 sm:$0xff] %v4452
        %5425 = vst [vmem:[%s4801] ss:$9 sm:$0xff] %v4453
        %5426 = vst [vmem:[%s4803] ss:$9 sm:$0xff] %v4454
        %5427 = vst [vmem:[%s4805] ss:$9 sm:$0xff] %v4455
        %v5428 = vld [vmem:[#allocation1] sm:$0xff]
        %5429 = vst [vmem:[#allocation1] ss:$9 sm:$0xff] %v4456
        %5430 = vst [vmem:[%s4793] ss:$9 sm:$0xff] %v4457
        %5431 = vst [vmem:[%s4795] ss:$9 sm:$0xff] %v4458
        %5432 = vst [vmem:[%s4797] ss:$9 sm:$0xff] %v4459
        %5433 = vst [vmem:[%s4799] ss:$9 sm:$0xff] %v4460
        %5434 = vst [vmem:[%s4801] ss:$9 sm:$0xff] %v4461
        %5435 = vst [vmem:[%s4803] ss:$9 sm:$0xff] %v4462
        %5436 = vst [vmem:[%s4805] ss:$9 sm:$0xff] %v4463
        %v5437 = vld [vmem:[#allocation1] sm:$0xff]
        %5438 = vst [vmem:[#allocation1] ss:$9 sm:$0xff] %v4464
        %5439 = vst [vmem:[%s4793] ss:$9 sm:$0xff] %v4465
        %5440 = vst [vmem:[%s4795] ss:$9 sm:$0xff] %v4466
        %5441 = vst [vmem:[%s4797] ss:$9 sm:$0xff] %v4467
        %5442 = vst [vmem:[%s4799] ss:$9 sm:$0xff] %v4468
        %5443 = vst [vmem:[%s4801] ss:$9 sm:$0xff] %v4469
        %5444 = vst [vmem:[%s4803] ss:$9 sm:$0xff] %v4470
        %5445 = vst [vmem:[%s4805] ss:$9 sm:$0xff] %v4471
        %v5446 = vld [vmem:[#allocation1] sm:$0xff]
        %5447 = vst [vmem:[#allocation1] ss:$9 sm:$0xff] %v4472
        %5448 = vst [vmem:[%s4793] ss:$9 sm:$0xff] %v4473
        %5449 = vst [vmem:[%s4795] ss:$9 sm:$0xff] %v4474
        %5450 = vst [vmem:[%s4797] ss:$9 sm:$0xff] %v4475
        %5451 = vst [vmem:[%s4799] ss:$9 sm:$0xff] %v4476
        %5452 = vst [vmem:[%s4801] ss:$9 sm:$0xff] %v4477
        %5453 = vst [vmem:[%s4803] ss:$9 sm:$0xff] %v4478
        %5454 = vst [vmem:[%s4805] ss:$9 sm:$0xff] %v4479
        %v5455 = vld [vmem:[#allocation1] sm:$0xff]
        %5456 = vst [vmem:[#allocation1] ss:$9 sm:$0xff] %v4480
        %5457 = vst [vmem:[%s4793] ss:$9 sm:$0xff] %v4481
        %5458 = vst [vmem:[%s4795] ss:$9 sm:$0xff] %v4482
        %5459 = vst [vmem:[%s4797] ss:$9 sm:$0xff] %v4483
        %5460 = vst [vmem:[%s4799] ss:$9 sm:$0xff] %v4484
        %5461 = vst [vmem:[%s4801] ss:$9 sm:$0xff] %v4485
        %5462 = vst [vmem:[%s4803] ss:$9 sm:$0xff] %v4486
        %5463 = vst [vmem:[%s4805] ss:$9 sm:$0xff] %v4487
        %v5464 = vld [vmem:[#allocation1] sm:$0xff]
        %5465 = vst [vmem:[#allocation1] ss:$9 sm:$0xff] %v4488
        %5466 = vst [vmem:[%s4793] ss:$9 sm:$0xff] %v4489
        %5467 = vst [vmem:[%s4795] ss:$9 sm:$0xff] %v4490
        %5468 = vst [vmem:[%s4797] ss:$9 sm:$0xff] %v4491
        %5469 = vst [vmem:[%s4799] ss:$9 sm:$0xff] %v4492
        %5470 = vst [vmem:[%s4801] ss:$9 sm:$0xff] %v4493
        %5471 = vst [vmem:[%s4803] ss:$9 sm:$0xff] %v4494
        %5472 = vst [vmem:[%s4805] ss:$9 sm:$0xff] %v4495
        %v5473 = vld [vmem:[#allocation1] sm:$0xff]
        %5474 = vst [vmem:[#allocation1] ss:$9 sm:$0xff] %v4496
        %5475 = vst [vmem:[%s4793] ss:$9 sm:$0xff] %v4497
        %5476 = vst [vmem:[%s4795] ss:$9 sm:$0xff] %v4498
        %5477 = vst [vmem:[%s4797] ss:$9 sm:$0xff] %v4499
        %5478 = vst [vmem:[%s4799] ss:$9 sm:$0xff] %v4500
        %5479 = vst [vmem:[%s4801] ss:$9 sm:$0xff] %v4501
        %5480 = vst [vmem:[%s4803] ss:$9 sm:$0xff] %v4502
        %5481 = vst [vmem:[%s4805] ss:$9 sm:$0xff] %v4503
        %v5482 = vld [vmem:[#allocation1] sm:$0xff]
        %5483 = vst [vmem:[#allocation1] ss:$9 sm:$0xff] %v4504
        %5484 = vst [vmem:[%s4793] ss:$9 sm:$0xff] %v4505
        %5485 = vst [vmem:[%s4795] ss:$9 sm:$0xff] %v4506
        %5486 = vst [vmem:[%s4797] ss:$9 sm:$0xff] %v4507
        %5487 = vst [vmem:[%s4799] ss:$9 sm:$0xff] %v4508
        %5488 = vst [vmem:[%s4801] ss:$9 sm:$0xff] %v4509
        %5489 = vst [vmem:[%s4803] ss:$9 sm:$0xff] %v4510
        %5490 = vst [vmem:[%s4805] ss:$9 sm:$0xff] %v4511
        %v5491 = vld [vmem:[#allocation1] sm:$0xff]
        %5492 = vst [vmem:[#allocation1] ss:$9 sm:$0xff] %v4512
        %5493 = vst [vmem:[%s4793] ss:$9 sm:$0xff] %v4513
        %5494 = vst [vmem:[%s4795] ss:$9 sm:$0xff] %v4514
        %5495 = vst [vmem:[%s4797] ss:$9 sm:$0xff] %v4515
        %5496 = vst [vmem:[%s4799] ss:$9 sm:$0xff] %v4516
        %5497 = vst [vmem:[%s4801] ss:$9 sm:$0xff] %v4517
        %5498 = vst [vmem:[%s4803] ss:$9 sm:$0xff] %v4518
        %5499 = vst [vmem:[%s4805] ss:$9 sm:$0xff] %v4519
        %v5500 = vld [vmem:[#allocation1] sm:$0xff]
        %5501 = vst [vmem:[#allocation1] ss:$9 sm:$0xff] %v4520
        %5502 = vst [vmem:[%s4793] ss:$9 sm:$0xff] %v4521
        %5503 = vst [vmem:[%s4795] ss:$9 sm:$0xff] %v4522
        %5504 = vst [vmem:[%s4797] ss:$9 sm:$0xff] %v4523
        %5505 = vst [vmem:[%s4799] ss:$9 sm:$0xff] %v4524
        %5506 = vst [vmem:[%s4801] ss:$9 sm:$0xff] %v4525
        %5507 = vst [vmem:[%s4803] ss:$9 sm:$0xff] %v4526
        %5508 = vst [vmem:[%s4805] ss:$9 sm:$0xff] %v4527
        %v5509 = vld [vmem:[#allocation1] sm:$0xff]
        %5510 = vst [vmem:[#allocation1] ss:$9 sm:$0xff] %v4528
        %5511 = vst [vmem:[%s4793] ss:$9 sm:$0xff] %v4529
        %5512 = vst [vmem:[%s4795] ss:$9 sm:$0xff] %v4530
        %5513 = vst [vmem:[%s4797] ss:$9 sm:$0xff] %v4531
        %5514 = vst [vmem:[%s4799] ss:$9 sm:$0xff] %v4532
        %5515 = vst [vmem:[%s4801] ss:$9 sm:$0xff] %v4533
        %5516 = vst [vmem:[%s4803] ss:$9 sm:$0xff] %v4534
        %5517 = vst [vmem:[%s4805] ss:$9 sm:$0xff] %v4535
        %v5518 = vld [vmem:[#allocation1] sm:$0xff]
        %5519 = vst [vmem:[#allocation1] ss:$9 sm:$0xff] %v4536
        %5520 = vst [vmem:[%s4793] ss:$9 sm:$0xff] %v4537
        %5521 = vst [vmem:[%s4795] ss:$9 sm:$0xff] %v4538
        %5522 = vst [vmem:[%s4797] ss:$9 sm:$0xff] %v4539
        %5523 = vst [vmem:[%s4799] ss:$9 sm:$0xff] %v4540
        %5524 = vst [vmem:[%s4801] ss:$9 sm:$0xff] %v4541
        %5525 = vst [vmem:[%s4803] ss:$9 sm:$0xff] %v4542
        %5526 = vst [vmem:[%s4805] ss:$9 sm:$0xff] %v4543
        %v5527 = vld [vmem:[#allocation1] sm:$0xff]
        %5528 = vst [vmem:[#allocation1] ss:$9 sm:$0xff] %v4544
        %5529 = vst [vmem:[%s4793] ss:$9 sm:$0xff] %v4545
        %5530 = vst [vmem:[%s4795] ss:$9 sm:$0xff] %v4546
        %5531 = vst [vmem:[%s4797] ss:$9 sm:$0xff] %v4547
        %5532 = vst [vmem:[%s4799] ss:$9 sm:$0xff] %v4548
        %5533 = vst [vmem:[%s4801] ss:$9 sm:$0xff] %v4549
        %5534 = vst [vmem:[%s4803] ss:$9 sm:$0xff] %v4550
        %5535 = vst [vmem:[%s4805] ss:$9 sm:$0xff] %v4551
        %v5536 = vld [vmem:[#allocation1] sm:$0xff]
        %5537 = vst [vmem:[#allocation1] ss:$9 sm:$0xff] %v4552
        %5538 = vst [vmem:[%s4793] ss:$9 sm:$0xff] %v4553
        %5539 = vst [vmem:[%s4795] ss:$9 sm:$0xff] %v4554
        %5540 = vst [vmem:[%s4797] ss:$9 sm:$0xff] %v4555
        %5541 = vst [vmem:[%s4799] ss:$9 sm:$0xff] %v4556
        %5542 = vst [vmem:[%s4801] ss:$9 sm:$0xff] %v4557
        %5543 = vst [vmem:[%s4803] ss:$9 sm:$0xff] %v4558
        %5544 = vst [vmem:[%s4805] ss:$9 sm:$0xff] %v4559
        %v5545 = vld [vmem:[#allocation1] sm:$0xff]
        %5546 = vst [vmem:[#allocation1] ss:$9 sm:$0xff] %v4560
        %5547 = vst [vmem:[%s4793] ss:$9 sm:$0xff] %v4561
        %5548 = vst [vmem:[%s4795] ss:$9 sm:$0xff] %v4562
        %5549 = vst [vmem:[%s4797] ss:$9 sm:$0xff] %v4563
        %5550 = vst [vmem:[%s4799] ss:$9 sm:$0xff] %v4564
        %5551 = vst [vmem:[%s4801] ss:$9 sm:$0xff] %v4565
        %5552 = vst [vmem:[%s4803] ss:$9 sm:$0xff] %v4566
        %5553 = vst [vmem:[%s4805] ss:$9 sm:$0xff] %v4567
        %v5554 = vld [vmem:[#allocation1] sm:$0xff]
        %5555 = vst [vmem:[#allocation1] ss:$9 sm:$0xff] %v4568
        %5556 = vst [vmem:[%s4793] ss:$9 sm:$0xff] %v4569
        %5557 = vst [vmem:[%s4795] ss:$9 sm:$0xff] %v4570
        %5558 = vst [vmem:[%s4797] ss:$9 sm:$0xff] %v4571
        %5559 = vst [vmem:[%s4799] ss:$9 sm:$0xff] %v4572
        %5560 = vst [vmem:[%s4801] ss:$9 sm:$0xff] %v4573
        %5561 = vst [vmem:[%s4803] ss:$9 sm:$0xff] %v4574
        %5562 = vst [vmem:[%s4805] ss:$9 sm:$0xff] %v4575
        %v5563 = vld [vmem:[#allocation1] sm:$0xff]
        %5564 = vst [vmem:[#allocation1] ss:$9 sm:$0xff] %v4576
        %5565 = vst [vmem:[%s4793] ss:$9 sm:$0xff] %v4577
        %5566 = vst [vmem:[%s4795] ss:$9 sm:$0xff] %v4578
        %5567 = vst [vmem:[%s4797] ss:$9 sm:$0xff] %v4579
        %5568 = vst [vmem:[%s4799] ss:$9 sm:$0xff] %v4580
        %5569 = vst [vmem:[%s4801] ss:$9 sm:$0xff] %v4581
        %5570 = vst [vmem:[%s4803] ss:$9 sm:$0xff] %v4582
        %5571 = vst [vmem:[%s4805] ss:$9 sm:$0xff] %v4583
        %v5572 = vld [vmem:[#allocation1] sm:$0xff]
        %5573 = vst [vmem:[#allocation1] ss:$9 sm:$0xff] %v4584
        %5574 = vst [vmem:[%s4793] ss:$9 sm:$0xff] %v4585
        %5575 = vst [vmem:[%s4795] ss:$9 sm:$0xff] %v4586
        %5576 = vst [vmem:[%s4797] ss:$9 sm:$0xff] %v4587
        %5577 = vst [vmem:[%s4799] ss:$9 sm:$0xff] %v4588
        %5578 = vst [vmem:[%s4801] ss:$9 sm:$0xff] %v4589
        %5579 = vst [vmem:[%s4803] ss:$9 sm:$0xff] %v4590
        %5580 = vst [vmem:[%s4805] ss:$9 sm:$0xff] %v4591
        %v5581 = vld [vmem:[#allocation1] sm:$0xff]
        %5582 = vst [vmem:[#allocation1] ss:$9 sm:$0xff] %v4592
        %5583 = vst [vmem:[%s4793] ss:$9 sm:$0xff] %v4593
        %5584 = vst [vmem:[%s4795] ss:$9 sm:$0xff] %v4594
        %5585 = vst [vmem:[%s4797] ss:$9 sm:$0xff] %v4595
        %5586 = vst [vmem:[%s4799] ss:$9 sm:$0xff] %v4596
        %5587 = vst [vmem:[%s4801] ss:$9 sm:$0xff] %v4597
        %5588 = vst [vmem:[%s4803] ss:$9 sm:$0xff] %v4598
        %5589 = vst [vmem:[%s4805] ss:$9 sm:$0xff] %v4599
        %v5590 = vld [vmem:[#allocation1] sm:$0xff]
        %5591 = vst [vmem:[#allocation1] ss:$9 sm:$0xff] %v4600
        %5592 = vst [vmem:[%s4793] ss:$9 sm:$0xff] %v4601
        %5593 = vst [vmem:[%s4795] ss:$9 sm:$0xff] %v4602
        %5594 = vst [vmem:[%s4797] ss:$9 sm:$0xff] %v4603
        %5595 = vst [vmem:[%s4799] ss:$9 sm:$0xff] %v4604
        %5596 = vst [vmem:[%s4801] ss:$9 sm:$0xff] %v4605
        %5597 = vst [vmem:[%s4803] ss:$9 sm:$0xff] %v4606
        %5598 = vst [vmem:[%s4805] ss:$9 sm:$0xff] %v4607
        %v5599 = vld [vmem:[#allocation1] sm:$0xff]
        %5600 = vst [vmem:[#allocation1] ss:$9 sm:$0xff] %v4608
        %5601 = vst [vmem:[%s4793] ss:$9 sm:$0xff] %v4609
        %5602 = vst [vmem:[%s4795] ss:$9 sm:$0xff] %v4610
        %5603 = vst [vmem:[%s4797] ss:$9 sm:$0xff] %v4611
        %5604 = vst [vmem:[%s4799] ss:$9 sm:$0xff] %v4612
        %5605 = vst [vmem:[%s4801] ss:$9 sm:$0xff] %v4613
        %5606 = vst [vmem:[%s4803] ss:$9 sm:$0xff] %v4614
        %5607 = vst [vmem:[%s4805] ss:$9 sm:$0xff] %v4615
        %v5608 = vld [vmem:[#allocation1] sm:$0xff]
        %5609 = vst [vmem:[#allocation1] ss:$9 sm:$0xff] %v4616
        %5610 = vst [vmem:[%s4793] ss:$9 sm:$0xff] %v4617
        %5611 = vst [vmem:[%s4795] ss:$9 sm:$0xff] %v4618
        %5612 = vst [vmem:[%s4797] ss:$9 sm:$0xff] %v4619
        %5613 = vst [vmem:[%s4799] ss:$9 sm:$0xff] %v4620
        %5614 = vst [vmem:[%s4801] ss:$9 sm:$0xff] %v4621
        %5615 = vst [vmem:[%s4803] ss:$9 sm:$0xff] %v4622
        %5616 = vst [vmem:[%s4805] ss:$9 sm:$0xff] %v4623
        %v5617 = vld [vmem:[#allocation1] sm:$0xff]
        %5618 = vst [vmem:[#allocation1] ss:$9 sm:$0xff] %v4624
        %5619 = vst [vmem:[%s4793] ss:$9 sm:$0xff] %v4625
        %5620 = vst [vmem:[%s4795] ss:$9 sm:$0xff] %v4626
        %5621 = vst [vmem:[%s4797] ss:$9 sm:$0xff] %v4627
        %5622 = vst [vmem:[%s4799] ss:$9 sm:$0xff] %v4628
        %5623 = vst [vmem:[%s4801] ss:$9 sm:$0xff] %v4629
        %5624 = vst [vmem:[%s4803] ss:$9 sm:$0xff] %v4630
        %5625 = vst [vmem:[%s4805] ss:$9 sm:$0xff] %v4631
        %v5626 = vld [vmem:[#allocation1] sm:$0xff]
        %5627 = vst [vmem:[#allocation1] ss:$9 sm:$0xff] %v4632
        %5628 = vst [vmem:[%s4793] ss:$9 sm:$0xff] %v4633
        %5629 = vst [vmem:[%s4795] ss:$9 sm:$0xff] %v4634
        %5630 = vst [vmem:[%s4797] ss:$9 sm:$0xff] %v4635
        %5631 = vst [vmem:[%s4799] ss:$9 sm:$0xff] %v4636
        %5632 = vst [vmem:[%s4801] ss:$9 sm:$0xff] %v4637
        %5633 = vst [vmem:[%s4803] ss:$9 sm:$0xff] %v4638
        %5634 = vst [vmem:[%s4805] ss:$9 sm:$0xff] %v4639
        %v5635 = vld [vmem:[#allocation1] sm:$0xff]
        %5636 = vst [vmem:[#allocation1] ss:$9 sm:$0xff] %v4640
        %5637 = vst [vmem:[%s4793] ss:$9 sm:$0xff] %v4641
        %5638 = vst [vmem:[%s4795] ss:$9 sm:$0xff] %v4642
        %5639 = vst [vmem:[%s4797] ss:$9 sm:$0xff] %v4643
        %5640 = vst [vmem:[%s4799] ss:$9 sm:$0xff] %v4644
        %5641 = vst [vmem:[%s4801] ss:$9 sm:$0xff] %v4645
        %5642 = vst [vmem:[%s4803] ss:$9 sm:$0xff] %v4646
        %5643 = vst [vmem:[%s4805] ss:$9 sm:$0xff] %v4647
        %v5644 = vld [vmem:[#allocation1] sm:$0xff]
        %5645 = vst [vmem:[#allocation1] ss:$9 sm:$0xff] %v4648
        %5646 = vst [vmem:[%s4793] ss:$9 sm:$0xff] %v4649
        %5647 = vst [vmem:[%s4795] ss:$9 sm:$0xff] %v4650
        %5648 = vst [vmem:[%s4797] ss:$9 sm:$0xff] %v4651
        %5649 = vst [vmem:[%s4799] ss:$9 sm:$0xff] %v4652
        %5650 = vst [vmem:[%s4801] ss:$9 sm:$0xff] %v4653
        %5651 = vst [vmem:[%s4803] ss:$9 sm:$0xff] %v4654
        %5652 = vst [vmem:[%s4805] ss:$9 sm:$0xff] %v4655
        %v5653 = vld [vmem:[#allocation1] sm:$0xff]
        %5654 = vst [vmem:[#allocation1] ss:$9 sm:$0xff] %v4656
        %5655 = vst [vmem:[%s4793] ss:$9 sm:$0xff] %v4657
        %5656 = vst [vmem:[%s4795] ss:$9 sm:$0xff] %v4658
        %5657 = vst [vmem:[%s4797] ss:$9 sm:$0xff] %v4659
        %5658 = vst [vmem:[%s4799] ss:$9 sm:$0xff] %v4660
        %5659 = vst [vmem:[%s4801] ss:$9 sm:$0xff] %v4661
        %5660 = vst [vmem:[%s4803] ss:$9 sm:$0xff] %v4662
        %5661 = vst [vmem:[%s4805] ss:$9 sm:$0xff] %v4663
        %v5662 = vld [vmem:[#allocation1] sm:$0xff]
        %5663 = vst [vmem:[#allocation1] ss:$9 sm:$0xff] %v4664
        %5664 = vst [vmem:[%s4793] ss:$9 sm:$0xff] %v4665
        %5665 = vst [vmem:[%s4795] ss:$9 sm:$0xff] %v4666
        %5666 = vst [vmem:[%s4797] ss:$9 sm:$0xff] %v4667
        %5667 = vst [vmem:[%s4799] ss:$9 sm:$0xff] %v4668
        %5668 = vst [vmem:[%s4801] ss:$9 sm:$0xff] %v4669
        %5669 = vst [vmem:[%s4803] ss:$9 sm:$0xff] %v4670
        %5670 = vst [vmem:[%s4805] ss:$9 sm:$0xff] %v4671
        %v5671 = vld [vmem:[#allocation1] sm:$0xff]
        %5672 = vst [vmem:[#allocation1] ss:$9 sm:$0xff] %v4672
        %5673 = vst [vmem:[%s4793] ss:$9 sm:$0xff] %v4673
        %5674 = vst [vmem:[%s4795] ss:$9 sm:$0xff] %v4674
        %5675 = vst [vmem:[%s4797] ss:$9 sm:$0xff] %v4675
        %5676 = vst [vmem:[%s4799] ss:$9 sm:$0xff] %v4676
        %5677 = vst [vmem:[%s4801] ss:$9 sm:$0xff] %v4677
        %5678 = vst [vmem:[%s4803] ss:$9 sm:$0xff] %v4678
        %5679 = vst [vmem:[%s4805] ss:$9 sm:$0xff] %v4679
        %v5680 = vld [vmem:[#allocation1] sm:$0xff]
        %5681 = vst [vmem:[#allocation1] ss:$9 sm:$0xff] %v4680
        %5682 = vst [vmem:[%s4793] ss:$9 sm:$0xff] %v4681
        %5683 = vst [vmem:[%s4795] ss:$9 sm:$0xff] %v4682
        %5684 = vst [vmem:[%s4797] ss:$9 sm:$0xff] %v4683
        %5685 = vst [vmem:[%s4799] ss:$9 sm:$0xff] %v4684
        %5686 = vst [vmem:[%s4801] ss:$9 sm:$0xff] %v4685
        %5687 = vst [vmem:[%s4803] ss:$9 sm:$0xff] %v4686
        %5688 = vst [vmem:[%s4805] ss:$9 sm:$0xff] %v4687
        %v5689 = vld [vmem:[#allocation1] sm:$0xff]
        %5690 = vst [vmem:[#allocation1] ss:$9 sm:$0xff] %v4688
        %5691 = vst [vmem:[%s4793] ss:$9 sm:$0xff] %v4689
        %5692 = vst [vmem:[%s4795] ss:$9 sm:$0xff] %v4690
        %5693 = vst [vmem:[%s4797] ss:$9 sm:$0xff] %v4691
        %5694 = vst [vmem:[%s4799] ss:$9 sm:$0xff] %v4692
        %5695 = vst [vmem:[%s4801] ss:$9 sm:$0xff] %v4693
        %5696 = vst [vmem:[%s4803] ss:$9 sm:$0xff] %v4694
        %5697 = vst [vmem:[%s4805] ss:$9 sm:$0xff] %v4695
        %v5698 = vld [vmem:[#allocation1] sm:$0xff]
        %5699 = vst [vmem:[#allocation1] ss:$9 sm:$0xff] %v4696
        %5700 = vst [vmem:[%s4793] ss:$9 sm:$0xff] %v4697
        %5701 = vst [vmem:[%s4795] ss:$9 sm:$0xff] %v4698
        %5702 = vst [vmem:[%s4797] ss:$9 sm:$0xff] %v4699
        %5703 = vst [vmem:[%s4799] ss:$9 sm:$0xff] %v4700
        %5704 = vst [vmem:[%s4801] ss:$9 sm:$0xff] %v4701
        %5705 = vst [vmem:[%s4803] ss:$9 sm:$0xff] %v4702
        %5706 = vst [vmem:[%s4805] ss:$9 sm:$0xff] %v4703
        %v5707 = vld [vmem:[#allocation1] sm:$0xff]
        %5708 = vst [vmem:[#allocation1] ss:$9 sm:$0xff] %v4704
        %5709 = vst [vmem:[%s4793] ss:$9 sm:$0xff] %v4705
        %5710 = vst [vmem:[%s4795] ss:$9 sm:$0xff] %v4706
        %5711 = vst [vmem:[%s4797] ss:$9 sm:$0xff] %v4707
        %5712 = vst [vmem:[%s4799] ss:$9 sm:$0xff] %v4708
        %5713 = vst [vmem:[%s4801] ss:$9 sm:$0xff] %v4709
        %5714 = vst [vmem:[%s4803] ss:$9 sm:$0xff] %v4710
        %5715 = vst [vmem:[%s4805] ss:$9 sm:$0xff] %v4711
        %v5716 = vld [vmem:[#allocation1] sm:$0xff]
        %5717 = vst [vmem:[#allocation1] ss:$9 sm:$0xff] %v4712
        %5718 = vst [vmem:[%s4793] ss:$9 sm:$0xff] %v4713
        %5719 = vst [vmem:[%s4795] ss:$9 sm:$0xff] %v4714
        %5720 = vst [vmem:[%s4797] ss:$9 sm:$0xff] %v4715
        %5721 = vst [vmem:[%s4799] ss:$9 sm:$0xff] %v4716
        %5722 = vst [vmem:[%s4801] ss:$9 sm:$0xff] %v4717
        %5723 = vst [vmem:[%s4803] ss:$9 sm:$0xff] %v4718
        %5724 = vst [vmem:[%s4805] ss:$9 sm:$0xff] %v4719
        %v5725 = vld [vmem:[#allocation1] sm:$0xff]
        %5726 = vst [vmem:[#allocation1] ss:$9 sm:$0xff] %v4720
        %5727 = vst [vmem:[%s4793] ss:$9 sm:$0xff] %v4721
        %5728 = vst [vmem:[%s4795] ss:$9 sm:$0xff] %v4722
        %5729 = vst [vmem:[%s4797] ss:$9 sm:$0xff] %v4723
        %5730 = vst [vmem:[%s4799] ss:$9 sm:$0xff] %v4724
        %5731 = vst [vmem:[%s4801] ss:$9 sm:$0xff] %v4725
        %5732 = vst [vmem:[%s4803] ss:$9 sm:$0xff] %v4726
        %5733 = vst [vmem:[%s4805] ss:$9 sm:$0xff] %v4727
        %v5734 = vld [vmem:[#allocation1] sm:$0xff]
        %5735 = vst [vmem:[#allocation1] ss:$9 sm:$0xff] %v4728
        %5736 = vst [vmem:[%s4793] ss:$9 sm:$0xff] %v4729
        %5737 = vst [vmem:[%s4795] ss:$9 sm:$0xff] %v4730
        %5738 = vst [vmem:[%s4797] ss:$9 sm:$0xff] %v4731
        %5739 = vst [vmem:[%s4799] ss:$9 sm:$0xff] %v4732
        %5740 = vst [vmem:[%s4801] ss:$9 sm:$0xff] %v4733
        %5741 = vst [vmem:[%s4803] ss:$9 sm:$0xff] %v4734
        %5742 = vst [vmem:[%s4805] ss:$9 sm:$0xff] %v4735
        %v5743 = vld [vmem:[#allocation1] sm:$0xff]
        %5744 = vst [vmem:[#allocation1] ss:$9 sm:$0xff] %v4736
        %5745 = vst [vmem:[%s4793] ss:$9 sm:$0xff] %v4737
        %5746 = vst [vmem:[%s4795] ss:$9 sm:$0xff] %v4738
        %5747 = vst [vmem:[%s4797] ss:$9 sm:$0xff] %v4739
        %5748 = vst [vmem:[%s4799] ss:$9 sm:$0xff] %v4740
        %5749 = vst [vmem:[%s4801] ss:$9 sm:$0xff] %v4741
        %5750 = vst [vmem:[%s4803] ss:$9 sm:$0xff] %v4742
        %5751 = vst [vmem:[%s4805] ss:$9 sm:$0xff] %v4743
        %v5752 = vld [vmem:[#allocation1] sm:$0xff]
        %5753 = vst [vmem:[#allocation1] ss:$9 sm:$0xff] %v4744
        %5754 = vst [vmem:[%s4793] ss:$9 sm:$0xff] %v4745
        %5755 = vst [vmem:[%s4795] ss:$9 sm:$0xff] %v4746
        %5756 = vst [vmem:[%s4797] ss:$9 sm:$0xff] %v4747
        %5757 = vst [vmem:[%s4799] ss:$9 sm:$0xff] %v4748
        %5758 = vst [vmem:[%s4801] ss:$9 sm:$0xff] %v4749
        %5759 = vst [vmem:[%s4803] ss:$9 sm:$0xff] %v4750
        %5760 = vst [vmem:[%s4805] ss:$9 sm:$0xff] %v4751
        %v5761 = vld [vmem:[#allocation1] sm:$0xff]
        %5762 = vst [vmem:[#allocation1] ss:$9 sm:$0xff] %v4752
        %5763 = vst [vmem:[%s4793] ss:$9 sm:$0xff] %v4753
        %5764 = vst [vmem:[%s4795] ss:$9 sm:$0xff] %v4754
        %5765 = vst [vmem:[%s4797] ss:$9 sm:$0xff] %v4755
        %5766 = vst [vmem:[%s4799] ss:$9 sm:$0xff] %v4756
        %5767 = vst [vmem:[%s4801] ss:$9 sm:$0xff] %v4757
        %5768 = vst [vmem:[%s4803] ss:$9 sm:$0xff] %v4758
        %5769 = vst [vmem:[%s4805] ss:$9 sm:$0xff] %v4759
        %v5770 = vld [vmem:[#allocation1] sm:$0xff]
        %5771 = vst [vmem:[#allocation1] ss:$9 sm:$0xff] %v4760
        %5772 = vst [vmem:[%s4793] ss:$9 sm:$0xff] %v4761
        %5773 = vst [vmem:[%s4795] ss:$9 sm:$0xff] %v4762
        %5774 = vst [vmem:[%s4797] ss:$9 sm:$0xff] %v4763
        %5775 = vst [vmem:[%s4799] ss:$9 sm:$0xff] %v4764
        %5776 = vst [vmem:[%s4801] ss:$9 sm:$0xff] %v4765
        %5777 = vst [vmem:[%s4803] ss:$9 sm:$0xff] %v4766
        %5778 = vst [vmem:[%s4805] ss:$9 sm:$0xff] %v4767
        %v5779 = vld [vmem:[#allocation1] sm:$0xff]
        %5780 = vst [vmem:[#allocation1] ss:$9 sm:$0xff] %v4768
        %5781 = vst [vmem:[%s4793] ss:$9 sm:$0xff] %v4769
        %5782 = vst [vmem:[%s4795] ss:$9 sm:$0xff] %v4770
        %5783 = vst [vmem:[%s4797] ss:$9 sm:$0xff] %v4771
        %5784 = vst [vmem:[%s4799] ss:$9 sm:$0xff] %v4772
        %5785 = vst [vmem:[%s4801] ss:$9 sm:$0xff] %v4773
        %5786 = vst [vmem:[%s4803] ss:$9 sm:$0xff] %v4774
        %5787 = vst [vmem:[%s4805] ss:$9 sm:$0xff] %v4775
        %v5788 = vld [vmem:[#allocation1] sm:$0xff]
        %5789 = vst [vmem:[#allocation1] ss:$9 sm:$0xff] %v4776
        %5790 = vst [vmem:[%s4793] ss:$9 sm:$0xff] %v4777
        %5791 = vst [vmem:[%s4795] ss:$9 sm:$0xff] %v4778
        %5792 = vst [vmem:[%s4797] ss:$9 sm:$0xff] %v4779
        %5793 = vst [vmem:[%s4799] ss:$9 sm:$0xff] %v4780
        %5794 = vst [vmem:[%s4801] ss:$9 sm:$0xff] %v4781
        %5795 = vst [vmem:[%s4803] ss:$9 sm:$0xff] %v4782
        %5796 = vst [vmem:[%s4805] ss:$9 sm:$0xff] %v4783
        %v5797 = vld [vmem:[#allocation1] sm:$0xff]
        %5798 = vst [vmem:[#allocation1] ss:$9 sm:$0xff] %v4784
        %5799 = vst [vmem:[%s4793] ss:$9 sm:$0xff] %v4785
        %5800 = vst [vmem:[%s4795] ss:$9 sm:$0xff] %v4786
        %5801 = vst [vmem:[%s4797] ss:$9 sm:$0xff] %v4787
        %5802 = vst [vmem:[%s4799] ss:$9 sm:$0xff] %v4788
        %5803 = vst [vmem:[%s4801] ss:$9 sm:$0xff] %v4789
        %5804 = vst [vmem:[%s4803] ss:$9 sm:$0xff] %v4790
        %5805 = vst [vmem:[%s4805] ss:$9 sm:$0xff] %v4791
        %v5806 = vld [vmem:[#allocation1] sm:$0xff]
        %5807 = vset.pattern.permute.xlu0 0
        %5808 = vperm.xlu0 %5807, %v4807
        %v5809 = vpop.permute.xlu0 %5808
        %5810 = vset.pattern.permute.xlu0 0
        %5811 = vperm.xlu0 %5810, %v4816
        %v5812 = vpop.permute.xlu0 %5811
        %5813 = vset.pattern.permute.xlu0 0
        %5814 = vperm.xlu0 %5813, %v4825
        %v5815 = vpop.permute.xlu0 %5814
        %5816 = vset.pattern.permute.xlu0 0
        %5817 = vperm.xlu0 %5816, %v4834
        %v5818 = vpop.permute.xlu0 %5817
        %5819 = vset.pattern.permute.xlu0 0
        %5820 = vperm.xlu0 %5819, %v4843
        %v5821 = vpop.permute.xlu0 %5820
        %5822 = vset.pattern.permute.xlu0 0
        %5823 = vperm.xlu0 %5822, %v4852
        %v5824 = vpop.permute.xlu0 %5823
        %5825 = vset.pattern.permute.xlu0 0
        %5826 = vperm.xlu0 %5825, %v4861
        %v5827 = vpop.permute.xlu0 %5826
        %5828 = vset.pattern.permute.xlu0 0
        %5829 = vperm.xlu0 %5828, %v4870
        %v5830 = vpop.permute.xlu0 %5829
        %5831 = vset.pattern.permute.xlu0 0
        %5832 = vperm.xlu0 %5831, %v4879
        %v5833 = vpop.permute.xlu0 %5832
        %5834 = vset.pattern.permute.xlu0 0
        %5835 = vperm.xlu0 %5834, %v4888
        %v5836 = vpop.permute.xlu0 %5835
        %5837 = vset.pattern.permute.xlu0 0
        %5838 = vperm.xlu0 %5837, %v4897
        %v5839 = vpop.permute.xlu0 %5838
        %5840 = vset.pattern.permute.xlu0 0
        %5841 = vperm.xlu0 %5840, %v4906
        %v5842 = vpop.permute.xlu0 %5841
        %5843 = vset.pattern.permute.xlu0 0
        %5844 = vperm.xlu0 %5843, %v4915
        %v5845 = vpop.permute.xlu0 %5844
        %5846 = vset.pattern.permute.xlu0 0
        %5847 = vperm.xlu0 %5846, %v4924
        %v5848 = vpop.permute.xlu0 %5847
        %5849 = vset.pattern.permute.xlu0 0
        %5850 = vperm.xlu0 %5849, %v4933
        %v5851 = vpop.permute.xlu0 %5850
        %5852 = vset.pattern.permute.xlu0 0
        %5853 = vperm.xlu0 %5852, %v4942
        %v5854 = vpop.permute.xlu0 %5853
        %5855 = vset.pattern.permute.xlu0 0
        %5856 = vperm.xlu0 %5855, %v4951
        %v5857 = vpop.permute.xlu0 %5856
        %5858 = vset.pattern.permute.xlu0 0
        %5859 = vperm.xlu0 %5858, %v4960
        %v5860 = vpop.permute.xlu0 %5859
        %5861 = vset.pattern.permute.xlu0 0
        %5862 = vperm.xlu0 %5861, %v4969
        %v5863 = vpop.permute.xlu0 %5862
        %5864 = vset.pattern.permute.xlu0 0
        %5865 = vperm.xlu0 %5864, %v4978
        %v5866 = vpop.permute.xlu0 %5865
        %5867 = vset.pattern.permute.xlu0 0
        %5868 = vperm.xlu0 %5867, %v4987
        %v5869 = vpop.permute.xlu0 %5868
        %5870 = vset.pattern.permute.xlu0 0
        %5871 = vperm.xlu0 %5870, %v4996
        %v5872 = vpop.permute.xlu0 %5871
        %5873 = vset.pattern.permute.xlu0 0
        %5874 = vperm.xlu0 %5873, %v5005
        %v5875 = vpop.permute.xlu0 %5874
        %5876 = vset.pattern.permute.xlu0 0
        %5877 = vperm.xlu0 %5876, %v5014
        %v5878 = vpop.permute.xlu0 %5877
        %5879 = vset.pattern.permute.xlu0 0
        %5880 = vperm.xlu0 %5879, %v5023
        %v5881 = vpop.permute.xlu0 %5880
        %5882 = vset.pattern.permute.xlu0 0
        %5883 = vperm.xlu0 %5882, %v5032
        %v5884 = vpop.permute.xlu0 %5883
        %5885 = vset.pattern.permute.xlu0 0
        %5886 = vperm.xlu0 %5885, %v5041
        %v5887 = vpop.permute.xlu0 %5886
        %5888 = vset.pattern.permute.xlu0 0
        %5889 = vperm.xlu0 %5888, %v5050
        %v5890 = vpop.permute.xlu0 %5889
        %5891 = vset.pattern.permute.xlu0 0
        %5892 = vperm.xlu0 %5891, %v5059
        %v5893 = vpop.permute.xlu0 %5892
        %5894 = vset.pattern.permute.xlu0 0
        %5895 = vperm.xlu0 %5894, %v5068
        %v5896 = vpop.permute.xlu0 %5895
        %5897 = vset.pattern.permute.xlu0 0
        %5898 = vperm.xlu0 %5897, %v5077
        %v5899 = vpop.permute.xlu0 %5898
        %5900 = vset.pattern.permute.xlu0 0
        %5901 = vperm.xlu0 %5900, %v5086
        %v5902 = vpop.permute.xlu0 %5901
        %5903 = vset.pattern.permute.xlu0 0
        %5904 = vperm.xlu0 %5903, %v5095
        %v5905 = vpop.permute.xlu0 %5904
        %5906 = vset.pattern.permute.xlu0 0
        %5907 = vperm.xlu0 %5906, %v5104
        %v5908 = vpop.permute.xlu0 %5907
        %5909 = vset.pattern.permute.xlu0 0
        %5910 = vperm.xlu0 %5909, %v5113
        %v5911 = vpop.permute.xlu0 %5910
        %5912 = vset.pattern.permute.xlu0 0
        %5913 = vperm.xlu0 %5912, %v5122
        %v5914 = vpop.permute.xlu0 %5913
        %5915 = vset.pattern.permute.xlu0 0
        %5916 = vperm.xlu0 %5915, %v5131
        %v5917 = vpop.permute.xlu0 %5916
        %5918 = vset.pattern.permute.xlu0 0
        %5919 = vperm.xlu0 %5918, %v5140
        %v5920 = vpop.permute.xlu0 %5919
        %5921 = vset.pattern.permute.xlu0 0
        %5922 = vperm.xlu0 %5921, %v5149
        %v5923 = vpop.permute.xlu0 %5922
        %5924 = vset.pattern.permute.xlu0 0
        %5925 = vperm.xlu0 %5924, %v5158
        %v5926 = vpop.permute.xlu0 %5925
        %5927 = vset.pattern.permute.xlu0 0
        %5928 = vperm.xlu0 %5927, %v5167
        %v5929 = vpop.permute.xlu0 %5928
        %5930 = vset.pattern.permute.xlu0 0
        %5931 = vperm.xlu0 %5930, %v5176
        %v5932 = vpop.permute.xlu0 %5931
        %5933 = vset.pattern.permute.xlu0 0
        %5934 = vperm.xlu0 %5933, %v5185
        %v5935 = vpop.permute.xlu0 %5934
        %5936 = vset.pattern.permute.xlu0 0
        %5937 = vperm.xlu0 %5936, %v5194
        %v5938 = vpop.permute.xlu0 %5937
        %5939 = vset.pattern.permute.xlu0 0
        %5940 = vperm.xlu0 %5939, %v5203
        %v5941 = vpop.permute.xlu0 %5940
        %5942 = vset.pattern.permute.xlu0 0
        %5943 = vperm.xlu0 %5942, %v5212
        %v5944 = vpop.permute.xlu0 %5943
        %5945 = vset.pattern.permute.xlu0 0
        %5946 = vperm.xlu0 %5945, %v5221
        %v5947 = vpop.permute.xlu0 %5946
        %5948 = vset.pattern.permute.xlu0 0
        %5949 = vperm.xlu0 %5948, %v5230
        %v5950 = vpop.permute.xlu0 %5949
        %5951 = vset.pattern.permute.xlu0 0
        %5952 = vperm.xlu0 %5951, %v5239
        %v5953 = vpop.permute.xlu0 %5952
        %5954 = vset.pattern.permute.xlu0 0
        %5955 = vperm.xlu0 %5954, %v5248
        %v5956 = vpop.permute.xlu0 %5955
        %5957 = vset.pattern.permute.xlu0 0
        %5958 = vperm.xlu0 %5957, %v5257
        %v5959 = vpop.permute.xlu0 %5958
        %5960 = vset.pattern.permute.xlu0 0
        %5961 = vperm.xlu0 %5960, %v5266
        %v5962 = vpop.permute.xlu0 %5961
        %5963 = vset.pattern.permute.xlu0 0
        %5964 = vperm.xlu0 %5963, %v5275
        %v5965 = vpop.permute.xlu0 %5964
        %5966 = vset.pattern.permute.xlu0 0
        %5967 = vperm.xlu0 %5966, %v5284
        %v5968 = vpop.permute.xlu0 %5967
        %5969 = vset.pattern.permute.xlu0 0
        %5970 = vperm.xlu0 %5969, %v5293
        %v5971 = vpop.permute.xlu0 %5970
        %5972 = vset.pattern.permute.xlu0 0
        %5973 = vperm.xlu0 %5972, %v5302
        %v5974 = vpop.permute.xlu0 %5973
        %5975 = vset.pattern.permute.xlu0 0
        %5976 = vperm.xlu0 %5975, %v5311
        %v5977 = vpop.permute.xlu0 %5976
        %5978 = vset.pattern.permute.xlu0 0
        %5979 = vperm.xlu0 %5978, %v5320
        %v5980 = vpop.permute.xlu0 %5979
        %5981 = vset.pattern.permute.xlu0 0
        %5982 = vperm.xlu0 %5981, %v5329
        %v5983 = vpop.permute.xlu0 %5982
        %5984 = vset.pattern.permute.xlu0 0
        %5985 = vperm.xlu0 %5984, %v5338
        %v5986 = vpop.permute.xlu0 %5985
        %5987 = vset.pattern.permute.xlu0 0
        %5988 = vperm.xlu0 %5987, %v5347
        %v5989 = vpop.permute.xlu0 %5988
        %5990 = vset.pattern.permute.xlu0 0
        %5991 = vperm.xlu0 %5990, %v5356
        %v5992 = vpop.permute.xlu0 %5991
        %5993 = vset.pattern.permute.xlu0 0
        %5994 = vperm.xlu0 %5993, %v5365
        %v5995 = vpop.permute.xlu0 %5994
        %5996 = vset.pattern.permute.xlu0 0
        %5997 = vperm.xlu0 %5996, %v5374
        %v5998 = vpop.permute.xlu0 %5997
        %5999 = vset.pattern.permute.xlu0 0
        %6000 = vperm.xlu0 %5999, %v5383
        %v6001 = vpop.permute.xlu0 %6000
        %6002 = vset.pattern.permute.xlu0 0
        %6003 = vperm.xlu0 %6002, %v5392
        %v6004 = vpop.permute.xlu0 %6003
        %6005 = vset.pattern.permute.xlu0 0
        %6006 = vperm.xlu0 %6005, %v5401
        %v6007 = vpop.permute.xlu0 %6006
        %6008 = vset.pattern.permute.xlu0 0
        %6009 = vperm.xlu0 %6008, %v5410
        %v6010 = vpop.permute.xlu0 %6009
        %6011 = vset.pattern.permute.xlu0 0
        %6012 = vperm.xlu0 %6011, %v5419
        %v6013 = vpop.permute.xlu0 %6012
        %6014 = vset.pattern.permute.xlu0 0
        %6015 = vperm.xlu0 %6014, %v5428
        %v6016 = vpop.permute.xlu0 %6015
        %6017 = vset.pattern.permute.xlu0 0
        %6018 = vperm.xlu0 %6017, %v5437
        %v6019 = vpop.permute.xlu0 %6018
        %6020 = vset.pattern.permute.xlu0 0
        %6021 = vperm.xlu0 %6020, %v5446
        %v6022 = vpop.permute.xlu0 %6021
        %6023 = vset.pattern.permute.xlu0 0
        %6024 = vperm.xlu0 %6023, %v5455
        %v6025 = vpop.permute.xlu0 %6024
        %6026 = vset.pattern.permute.xlu0 0
        %6027 = vperm.xlu0 %6026, %v5464
        %v6028 = vpop.permute.xlu0 %6027
        %6029 = vset.pattern.permute.xlu0 0
        %6030 = vperm.xlu0 %6029, %v5473
        %v6031 = vpop.permute.xlu0 %6030
        %6032 = vset.pattern.permute.xlu0 0
        %6033 = vperm.xlu0 %6032, %v5482
        %v6034 = vpop.permute.xlu0 %6033
        %6035 = vset.pattern.permute.xlu0 0
        %6036 = vperm.xlu0 %6035, %v5491
        %v6037 = vpop.permute.xlu0 %6036
        %6038 = vset.pattern.permute.xlu0 0
        %6039 = vperm.xlu0 %6038, %v5500
        %v6040 = vpop.permute.xlu0 %6039
        %6041 = vset.pattern.permute.xlu0 0
        %6042 = vperm.xlu0 %6041, %v5509
        %v6043 = vpop.permute.xlu0 %6042
        %6044 = vset.pattern.permute.xlu0 0
        %6045 = vperm.xlu0 %6044, %v5518
        %v6046 = vpop.permute.xlu0 %6045
        %6047 = vset.pattern.permute.xlu0 0
        %6048 = vperm.xlu0 %6047, %v5527
        %v6049 = vpop.permute.xlu0 %6048
        %6050 = vset.pattern.permute.xlu0 0
        %6051 = vperm.xlu0 %6050, %v5536
        %v6052 = vpop.permute.xlu0 %6051
        %6053 = vset.pattern.permute.xlu0 0
        %6054 = vperm.xlu0 %6053, %v5545
        %v6055 = vpop.permute.xlu0 %6054
        %6056 = vset.pattern.permute.xlu0 0
        %6057 = vperm.xlu0 %6056, %v5554
        %v6058 = vpop.permute.xlu0 %6057
        %6059 = vset.pattern.permute.xlu0 0
        %6060 = vperm.xlu0 %6059, %v5563
        %v6061 = vpop.permute.xlu0 %6060
        %6062 = vset.pattern.permute.xlu0 0
        %6063 = vperm.xlu0 %6062, %v5572
        %v6064 = vpop.permute.xlu0 %6063
        %6065 = vset.pattern.permute.xlu0 0
        %6066 = vperm.xlu0 %6065, %v5581
        %v6067 = vpop.permute.xlu0 %6066
        %6068 = vset.pattern.permute.xlu0 0
        %6069 = vperm.xlu0 %6068, %v5590
        %v6070 = vpop.permute.xlu0 %6069
        %6071 = vset.pattern.permute.xlu0 0
        %6072 = vperm.xlu0 %6071, %v5599
        %v6073 = vpop.permute.xlu0 %6072
        %6074 = vset.pattern.permute.xlu0 0
        %6075 = vperm.xlu0 %6074, %v5608
        %v6076 = vpop.permute.xlu0 %6075
        %6077 = vset.pattern.permute.xlu0 0
        %6078 = vperm.xlu0 %6077, %v5617
        %v6079 = vpop.permute.xlu0 %6078
        %6080 = vset.pattern.permute.xlu0 0
        %6081 = vperm.xlu0 %6080, %v5626
        %v6082 = vpop.permute.xlu0 %6081
        %6083 = vset.pattern.permute.xlu0 0
        %6084 = vperm.xlu0 %6083, %v5635
        %v6085 = vpop.permute.xlu0 %6084
        %6086 = vset.pattern.permute.xlu0 0
        %6087 = vperm.xlu0 %6086, %v5644
        %v6088 = vpop.permute.xlu0 %6087
        %6089 = vset.pattern.permute.xlu0 0
        %6090 = vperm.xlu0 %6089, %v5653
        %v6091 = vpop.permute.xlu0 %6090
        %6092 = vset.pattern.permute.xlu0 0
        %6093 = vperm.xlu0 %6092, %v5662
        %v6094 = vpop.permute.xlu0 %6093
        %6095 = vset.pattern.permute.xlu0 0
        %6096 = vperm.xlu0 %6095, %v5671
        %v6097 = vpop.permute.xlu0 %6096
        %6098 = vset.pattern.permute.xlu0 0
        %6099 = vperm.xlu0 %6098, %v5680
        %v6100 = vpop.permute.xlu0 %6099
        %6101 = vset.pattern.permute.xlu0 0
        %6102 = vperm.xlu0 %6101, %v5689
        %v6103 = vpop.permute.xlu0 %6102
        %6104 = vset.pattern.permute.xlu0 0
        %6105 = vperm.xlu0 %6104, %v5698
        %v6106 = vpop.permute.xlu0 %6105
        %6107 = vset.pattern.permute.xlu0 0
        %6108 = vperm.xlu0 %6107, %v5707
        %v6109 = vpop.permute.xlu0 %6108
        %6110 = vset.pattern.permute.xlu0 0
        %6111 = vperm.xlu0 %6110, %v5716
        %v6112 = vpop.permute.xlu0 %6111
        %6113 = vset.pattern.permute.xlu0 0
        %6114 = vperm.xlu0 %6113, %v5725
        %v6115 = vpop.permute.xlu0 %6114
        %6116 = vset.pattern.permute.xlu0 0
        %6117 = vperm.xlu0 %6116, %v5734
        %v6118 = vpop.permute.xlu0 %6117
        %6119 = vset.pattern.permute.xlu0 0
        %6120 = vperm.xlu0 %6119, %v5743
        %v6121 = vpop.permute.xlu0 %6120
        %6122 = vset.pattern.permute.xlu0 0
        %6123 = vperm.xlu0 %6122, %v5752
        %v6124 = vpop.permute.xlu0 %6123
        %6125 = vset.pattern.permute.xlu0 0
        %6126 = vperm.xlu0 %6125, %v5761
        %v6127 = vpop.permute.xlu0 %6126
        %6128 = vset.pattern.permute.xlu0 0
        %6129 = vperm.xlu0 %6128, %v5770
        %v6130 = vpop.permute.xlu0 %6129
        %6131 = vset.pattern.permute.xlu0 0
        %6132 = vperm.xlu0 %6131, %v5779
        %v6133 = vpop.permute.xlu0 %6132
        %6134 = vset.pattern.permute.xlu0 0
        %6135 = vperm.xlu0 %6134, %v5788
        %v6136 = vpop.permute.xlu0 %6135
        %6137 = vset.pattern.permute.xlu0 0
        %6138 = vperm.xlu0 %6137, %v5797
        %v6139 = vpop.permute.xlu0 %6138
        %6140 = vset.pattern.permute.xlu0 0
        %6141 = vperm.xlu0 %6140, %v5806
        %v6142 = vpop.permute.xlu0 %6141
        %v6143 = vperm.slane %v5809, %v3172
        %v6144 = vperm.slane %v5812, %v3174
        %v6145 = vsel %vm3176, %v6144, %v6143
        %v6146 = vperm.slane %v5815, %v3178
        %v6147 = vsel %vm3180, %v6146, %v6145
        %v6148 = vperm.slane %v5818, %v3182
        %v6149 = vsel %vm3184, %v6148, %v6147
        %v6150 = vperm.slane %v5821, %v3186
        %v6151 = vsel %vm3188, %v6150, %v6149
        %v6152 = vperm.slane %v5824, %v3190
        %v6153 = vsel %vm3192, %v6152, %v6151
        %v6154 = vperm.slane %v5827, %v3194
        %v6155 = vsel %vm3196, %v6154, %v6153
        %v6156 = vperm.slane %v5830, %v3198
        %v6157 = vsel %vm3200, %v6156, %v6155
        %v6158 = vperm.slane %v5833, %v3202
        %v6159 = vsel %vm3204, %v6158, %v6157
        %v6160 = vperm.slane %v5836, %v3206
        %v6161 = vsel %vm3208, %v6160, %v6159
        %v6162 = vperm.slane %v5839, %v3210
        %v6163 = vsel %vm3212, %v6162, %v6161
        %v6164 = vperm.slane %v5842, %v3214
        %v6165 = vsel %vm3216, %v6164, %v6163
        %v6166 = vperm.slane %v5845, %v3218
        %v6167 = vsel %vm3220, %v6166, %v6165
        %v6168 = vperm.slane %v5848, %v3222
        %v6169 = vsel %vm3224, %v6168, %v6167
        %v6170 = vperm.slane %v5851, %v3226
        %v6171 = vsel %vm3228, %v6170, %v6169
        %v6172 = vperm.slane %v5854, %v3230
        %v6173 = vsel %vm3232, %v6172, %v6171
        %v6174 = vperm.slane %v5857, %v3172
        %v6175 = vperm.slane %v5860, %v3174
        %v6176 = vsel %vm3176, %v6175, %v6174
        %v6177 = vperm.slane %v5863, %v3178
        %v6178 = vsel %vm3180, %v6177, %v6176
        %v6179 = vperm.slane %v5866, %v3182
        %v6180 = vsel %vm3184, %v6179, %v6178
        %v6181 = vperm.slane %v5869, %v3186
        %v6182 = vsel %vm3188, %v6181, %v6180
        %v6183 = vperm.slane %v5872, %v3190
        %v6184 = vsel %vm3192, %v6183, %v6182
        %v6185 = vperm.slane %v5875, %v3194
        %v6186 = vsel %vm3196, %v6185, %v6184
        %v6187 = vperm.slane %v5878, %v3198
        %v6188 = vsel %vm3200, %v6187, %v6186
        %v6189 = vperm.slane %v5881, %v3202
        %v6190 = vsel %vm3204, %v6189, %v6188
        %v6191 = vperm.slane %v5884, %v3206
        %v6192 = vsel %vm3208, %v6191, %v6190
        %v6193 = vperm.slane %v5887, %v3210
        %v6194 = vsel %vm3212, %v6193, %v6192
        %v6195 = vperm.slane %v5890, %v3214
        %v6196 = vsel %vm3216, %v6195, %v6194
        %v6197 = vperm.slane %v5893, %v3218
        %v6198 = vsel %vm3220, %v6197, %v6196
        %v6199 = vperm.slane %v5896, %v3222
        %v6200 = vsel %vm3224, %v6199, %v6198
        %v6201 = vperm.slane %v5899, %v3226
        %v6202 = vsel %vm3228, %v6201, %v6200
        %v6203 = vperm.slane %v5902, %v3230
        %v6204 = vsel %vm3232, %v6203, %v6202
        %v6205 = vperm.slane %v5905, %v3172
        %v6206 = vperm.slane %v5908, %v3174
        %v6207 = vsel %vm3176, %v6206, %v6205
        %v6208 = vperm.slane %v5911, %v3178
        %v6209 = vsel %vm3180, %v6208, %v6207
        %v6210 = vperm.slane %v5914, %v3182
        %v6211 = vsel %vm3184, %v6210, %v6209
        %v6212 = vperm.slane %v5917, %v3186
        %v6213 = vsel %vm3188, %v6212, %v6211
        %v6214 = vperm.slane %v5920, %v3190
        %v6215 = vsel %vm3192, %v6214, %v6213
        %v6216 = vperm.slane %v5923, %v3194
        %v6217 = vsel %vm3196, %v6216, %v6215
        %v6218 = vperm.slane %v5926, %v3198
        %v6219 = vsel %vm3200, %v6218, %v6217
        %v6220 = vperm.slane %v5929, %v3202
        %v6221 = vsel %vm3204, %v6220, %v6219
        %v6222 = vperm.slane %v5932, %v3206
        %v6223 = vsel %vm3208, %v6222, %v6221
        %v6224 = vperm.slane %v5935, %v3210
        %v6225 = vsel %vm3212, %v6224, %v6223
        %v6226 = vperm.slane %v5938, %v3214
        %v6227 = vsel %vm3216, %v6226, %v6225
        %v6228 = vperm.slane %v5941, %v3218
        %v6229 = vsel %vm3220, %v6228, %v6227
        %v6230 = vperm.slane %v5944, %v3222
        %v6231 = vsel %vm3224, %v6230, %v6229
        %v6232 = vperm.slane %v5947, %v3226
        %v6233 = vsel %vm3228, %v6232, %v6231
        %v6234 = vperm.slane %v5950, %v3230
        %v6235 = vsel %vm3232, %v6234, %v6233
        %v6236 = vperm.slane %v5953, %v3172
        %v6237 = vperm.slane %v5956, %v3174
        %v6238 = vsel %vm3176, %v6237, %v6236
        %v6239 = vperm.slane %v5959, %v3178
        %v6240 = vsel %vm3180, %v6239, %v6238
        %v6241 = vperm.slane %v5962, %v3182
        %v6242 = vsel %vm3184, %v6241, %v6240
        %v6243 = vperm.slane %v5965, %v3186
        %v6244 = vsel %vm3188, %v6243, %v6242
        %v6245 = vperm.slane %v5968, %v3190
        %v6246 = vsel %vm3192, %v6245, %v6244
        %v6247 = vperm.slane %v5971, %v3194
        %v6248 = vsel %vm3196, %v6247, %v6246
        %v6249 = vperm.slane %v5974, %v3198
        %v6250 = vsel %vm3200, %v6249, %v6248
        %v6251 = vperm.slane %v5977, %v3202
        %v6252 = vsel %vm3204, %v6251, %v6250
        %v6253 = vperm.slane %v5980, %v3206
        %v6254 = vsel %vm3208, %v6253, %v6252
        %v6255 = vperm.slane %v5983, %v3210
        %v6256 = vsel %vm3212, %v6255, %v6254
        %v6257 = vperm.slane %v5986, %v3214
        %v6258 = vsel %vm3216, %v6257, %v6256
        %v6259 = vperm.slane %v5989, %v3218
        %v6260 = vsel %vm3220, %v6259, %v6258
        %v6261 = vperm.slane %v5992, %v3222
        %v6262 = vsel %vm3224, %v6261, %v6260
        %v6263 = vperm.slane %v5995, %v3226
        %v6264 = vsel %vm3228, %v6263, %v6262
        %v6265 = vperm.slane %v5998, %v3230
        %v6266 = vsel %vm3232, %v6265, %v6264
        %v6267 = vperm.slane %v6001, %v3172
        %v6268 = vperm.slane %v6004, %v3174
        %v6269 = vsel %vm3176, %v6268, %v6267
        %v6270 = vperm.slane %v6007, %v3178
        %v6271 = vsel %vm3180, %v6270, %v6269
        %v6272 = vperm.slane %v6010, %v3182
        %v6273 = vsel %vm3184, %v6272, %v6271
        %v6274 = vperm.slane %v6013, %v3186
        %v6275 = vsel %vm3188, %v6274, %v6273
        %v6276 = vperm.slane %v6016, %v3190
        %v6277 = vsel %vm3192, %v6276, %v6275
        %v6278 = vperm.slane %v6019, %v3194
        %v6279 = vsel %vm3196, %v6278, %v6277
        %v6280 = vperm.slane %v6022, %v3198
        %v6281 = vsel %vm3200, %v6280, %v6279
        %v6282 = vperm.slane %v6025, %v3202
        %v6283 = vsel %vm3204, %v6282, %v6281
        %v6284 = vperm.slane %v6028, %v3206
        %v6285 = vsel %vm3208, %v6284, %v6283
        %v6286 = vperm.slane %v6031, %v3210
        %v6287 = vsel %vm3212, %v6286, %v6285
        %v6288 = vperm.slane %v6034, %v3214
        %v6289 = vsel %vm3216, %v6288, %v6287
        %v6290 = vperm.slane %v6037, %v3218
        %v6291 = vsel %vm3220, %v6290, %v6289
        %v6292 = vperm.slane %v6040, %v3222
        %v6293 = vsel %vm3224, %v6292, %v6291
        %v6294 = vperm.slane %v6043, %v3226
        %v6295 = vsel %vm3228, %v6294, %v6293
        %v6296 = vperm.slane %v6046, %v3230
        %v6297 = vsel %vm3232, %v6296, %v6295
        %v6298 = vperm.slane %v6049, %v3172
        %v6299 = vperm.slane %v6052, %v3174
        %v6300 = vsel %vm3176, %v6299, %v6298
        %v6301 = vperm.slane %v6055, %v3178
        %v6302 = vsel %vm3180, %v6301, %v6300
        %v6303 = vperm.slane %v6058, %v3182
        %v6304 = vsel %vm3184, %v6303, %v6302
        %v6305 = vperm.slane %v6061, %v3186
        %v6306 = vsel %vm3188, %v6305, %v6304
        %v6307 = vperm.slane %v6064, %v3190
        %v6308 = vsel %vm3192, %v6307, %v6306
        %v6309 = vperm.slane %v6067, %v3194
        %v6310 = vsel %vm3196, %v6309, %v6308
        %v6311 = vperm.slane %v6070, %v3198
        %v6312 = vsel %vm3200, %v6311, %v6310
        %v6313 = vperm.slane %v6073, %v3202
        %v6314 = vsel %vm3204, %v6313, %v6312
        %v6315 = vperm.slane %v6076, %v3206
        %v6316 = vsel %vm3208, %v6315, %v6314
        %v6317 = vperm.slane %v6079, %v3210
        %v6318 = vsel %vm3212, %v6317, %v6316
        %v6319 = vperm.slane %v6082, %v3214
        %v6320 = vsel %vm3216, %v6319, %v6318
        %v6321 = vperm.slane %v6085, %v3218
        %v6322 = vsel %vm3220, %v6321, %v6320
        %v6323 = vperm.slane %v6088, %v3222
        %v6324 = vsel %vm3224, %v6323, %v6322
        %v6325 = vperm.slane %v6091, %v3226
        %v6326 = vsel %vm3228, %v6325, %v6324
        %v6327 = vperm.slane %v6094, %v3230
        %v6328 = vsel %vm3232, %v6327, %v6326
        %v6329 = vperm.slane %v6097, %v3172
        %v6330 = vperm.slane %v6100, %v3174
        %v6331 = vsel %vm3176, %v6330, %v6329
        %v6332 = vperm.slane %v6103, %v3178
        %v6333 = vsel %vm3180, %v6332, %v6331
        %v6334 = vperm.slane %v6106, %v3182
        %v6335 = vsel %vm3184, %v6334, %v6333
        %v6336 = vperm.slane %v6109, %v3186
        %v6337 = vsel %vm3188, %v6336, %v6335
        %v6338 = vperm.slane %v6112, %v3190
        %v6339 = vsel %vm3192, %v6338, %v6337
        %v6340 = vperm.slane %v6115, %v3194
        %v6341 = vsel %vm3196, %v6340, %v6339
        %v6342 = vperm.slane %v6118, %v3198
        %v6343 = vsel %vm3200, %v6342, %v6341
        %v6344 = vperm.slane %v6121, %v3202
        %v6345 = vsel %vm3204, %v6344, %v6343
        %v6346 = vperm.slane %v6124, %v3206
        %v6347 = vsel %vm3208, %v6346, %v6345
        %v6348 = vperm.slane %v6127, %v3210
        %v6349 = vsel %vm3212, %v6348, %v6347
        %v6350 = vperm.slane %v6130, %v3214
        %v6351 = vsel %vm3216, %v6350, %v6349
        %v6352 = vperm.slane %v6133, %v3218
        %v6353 = vsel %vm3220, %v6352, %v6351
        %v6354 = vperm.slane %v6136, %v3222
        %v6355 = vsel %vm3224, %v6354, %v6353
        %v6356 = vperm.slane %v6139, %v3226
        %v6357 = vsel %vm3228, %v6356, %v6355
        %v6358 = vperm.slane %v6142, %v3230
        %v6359 = vsel %vm3232, %v6358, %v6357
        %v6360 = vrot.slane %v6204, 7
        %v6361 = vrot.slane %v6235, 6
        %v6362 = vrot.slane %v6266, 5
        %v6363 = vrot.slane %v6297, 4
        %v6364 = vrot.slane %v6328, 3
        %v6365 = vrot.slane %v6359, 2
        %v6366 = vsel %vm3426, %v6173, %v6360
        %v6367 = vsel %vm3428, %v6361, %v6362
        %v6368 = vsel %vm3430, %v6366, %v6367
        %v6369 = vsel %vm3432, %v6363, %v6364
        %v6370 = vsel %vm3434, %v6369, %v6365
        %v6371 = vsel %vm3436, %v6368, %v6370
        %s6373 = scalar_lea.vmem %s3442, 1 [#allocation2]
        %6374 = vst.msk [vmem:[%s6373] ss:$2 sm:$0x7f] %vm3446, %v6371
        %p6375 = scmp.eq.s32.totalorder %s24, 1
        // Predicated region
        $region41: #{tpu_custom_call.1} parent=39 // pred_check
          %p6376 = pneg %p6375
        $region42: #{tpu_custom_call.1} parent=39 // pred_check_branch
          %6378 = sbr.rel (%p6376) target = $region44
        $region43: #{tpu_custom_call.1} parent=39 // pred_region
          %v6379 = vld [vmem:[#allocation2] sm:$0xff]
          %v6380 = vld [vmem:[#allocation2 + $0x8] sm:$0xff]
          %v6381 = vld [vmem:[#allocation2 + $0x10] sm:$0xff]
          %v6382 = vld [vmem:[#allocation2 + $0x18] sm:$0xf]
          %6387 = vst [vmem:[#allocation1] ss:$4 sm:$0xff] %v6379
          %s6388 = scalar_lea.vmem [#allocation1], 32
          %6389 = vst [vmem:[%s6388] ss:$4 sm:$0xff] %v6380
          %v6390 = vld.sshfl [vmem:[#allocation1] sm:$0xff pattern:$0x73625140]
          %v6391 = vld.sshfl [vmem:[#allocation1 + $0x8] sm:$0xff pattern:$0x73625140]
          %v6392 = vld.sshfl [vmem:[#allocation1 + $0x10] sm:$0xff pattern:$0x73625140]
          %v6393 = vld.sshfl [vmem:[#allocation1 + $0x18] sm:$0xff pattern:$0x73625140]
          %v6394 = vld.sshfl [vmem:[#allocation1 + $0x20] sm:$0xff pattern:$0x73625140]
          %v6395 = vld.sshfl [vmem:[#allocation1 + $0x28] sm:$0xff pattern:$0x73625140]
          %v6396 = vld.sshfl [vmem:[#allocation1 + $0x30] sm:$0xff pattern:$0x73625140]
          %v6397 = vld.sshfl [vmem:[#allocation1 + $0x38] sm:$0xff pattern:$0x73625140]
          %6398 = vst [vmem:[#allocation1] ss:$4 sm:$0xff] %v6381
          %6399 = vst [vmem:[%s6388] ss:$4 sm:$0xff] %v6382
          %v6400 = vld.sshfl [vmem:[#allocation1] sm:$0xff pattern:$0x73625140]
          %v6401 = vld.sshfl [vmem:[#allocation1 + $0x8] sm:$0xff pattern:$0x73625140]
          %v6402 = vld.sshfl [vmem:[#allocation1 + $0x10] sm:$0xff pattern:$0x73625140]
          %v6403 = vld.sshfl [vmem:[#allocation1 + $0x18] sm:$0xff pattern:$0x73625140]
          %v6404 = vld.sshfl [vmem:[#allocation1 + $0x20] sm:$0xff pattern:$0x73625140]
          %v6405 = vld.sshfl [vmem:[#allocation1 + $0x28] sm:$0xff pattern:$0x73625140]
          %v6420 = vpack.c.bf16 %v6390, %v6390
          %v6421 = vpack.c.bf16 %v6391, %v6391
          %v6422 = vpack.c.bf16 %v6392, %v6392
          %v6423 = vpack.c.bf16 %v6393, %v6393
          %v6424 = vpack.c.bf16 %v6394, %v6394
          %v6425 = vpack.c.bf16 %v6395, %v6395
          %v6426 = vpack.c.bf16 %v6396, %v6396
          %v6427 = vpack.c.bf16 %v6397, %v6397
          %v6428 = vpack.c.bf16 %v6400, %v6400
          %v6429 = vpack.c.bf16 %v6401, %v6401
          %v6430 = vpack.c.bf16 %v6402, %v6402
          %v6431 = vpack.c.bf16 %v6403, %v6403
          %v6432 = vpack.c.bf16 %v6404, %v6404
          %v6433 = vpack.c.bf16 %v6405, %v6405
          %v6434 = vld [vmem:[%s1] sm:$0xff]
          %v6435 = vld [vmem:[%s1 + $0x8] sm:$0xff]
          %v6436 = vld [vmem:[%s1 + $0x10] sm:$0xff]
          %v6437 = vld [vmem:[%s1 + $0x18] sm:$0xff]
          %v6438 = vld [vmem:[%s1 + $0x20] sm:$0xff]
          %v6439 = vld [vmem:[%s1 + $0x28] sm:$0xff]
          %v6440 = vld [vmem:[%s1 + $0x30] sm:$0xff]
          %v6441 = vld [vmem:[%s1 + $0x38] sm:$0xff]
          %v6442 = vld [vmem:[%s1 + $0x40] sm:$0xff]
          %v6443 = vld [vmem:[%s1 + $0x48] sm:$0xff]
          %v6444 = vld [vmem:[%s1 + $0x50] sm:$0xff]
          %v6445 = vld [vmem:[%s1 + $0x58] sm:$0xff]
          %v6446 = vld [vmem:[%s1 + $0x60] sm:$0xff]
          %v6447 = vld [vmem:[%s1 + $0x68] sm:$0xff]
          %v6448 = vld [vmem:[%s1 + $0x70] sm:$0xff]
          %v6449 = vld [vmem:[%s1 + $0x78] sm:$0xff]
          %v6450 = vld [vmem:[%s1 + $0x80] sm:$0xff]
          %v6451 = vld [vmem:[%s1 + $0x88] sm:$0xff]
          %v6452 = vld [vmem:[%s1 + $0x90] sm:$0xff]
          %v6453 = vld [vmem:[%s1 + $0x98] sm:$0xff]
          %v6454 = vld [vmem:[%s1 + $0xa0] sm:$0xff]
          %v6455 = vld [vmem:[%s1 + $0xa8] sm:$0xff]
          %v6456 = vld [vmem:[%s1 + $0xb0] sm:$0xff]
          %v6457 = vld [vmem:[%s1 + $0xb8] sm:$0xff]
          %v6458 = vld [vmem:[%s1 + $0xc0] sm:$0xff]
          %v6459 = vld [vmem:[%s1 + $0xc8] sm:$0xff]
          %v6460 = vld [vmem:[%s1 + $0xd0] sm:$0xff]
          %v6461 = vld [vmem:[%s1 + $0xd8] sm:$0xff]
          %v6462 = vld [vmem:[%s1 + $0xe0] sm:$0xff]
          %v6463 = vld [vmem:[%s1 + $0xe8] sm:$0xff]
          %v6464 = vld [vmem:[%s1 + $0xf0] sm:$0xff]
          %v6465 = vld [vmem:[%s1 + $0xf8] sm:$0xff]
          %v6466 = vld [vmem:[%s1 + $0x100] sm:$0xff]
          %v6467 = vld [vmem:[%s1 + $0x108] sm:$0xff]
          %v6468 = vld [vmem:[%s1 + $0x110] sm:$0xff]
          %v6469 = vld [vmem:[%s1 + $0x118] sm:$0xff]
          %v6470 = vld [vmem:[%s1 + $0x120] sm:$0xff]
          %v6471 = vld [vmem:[%s1 + $0x128] sm:$0xff]
          %v6472 = vld [vmem:[%s1 + $0x130] sm:$0xff]
          %v6473 = vld [vmem:[%s1 + $0x138] sm:$0xff]
          %v6474 = vld [vmem:[%s1 + $0x140] sm:$0xff]
          %v6475 = vld [vmem:[%s1 + $0x148] sm:$0xff]
          %v6476 = vld [vmem:[%s1 + $0x150] sm:$0xff]
          %v6477 = vld [vmem:[%s1 + $0x158] sm:$0xff]
          %v6478 = vld [vmem:[%s1 + $0x160] sm:$0xff]
          %v6479 = vld [vmem:[%s1 + $0x168] sm:$0xff]
          %v6480 = vld [vmem:[%s1 + $0x170] sm:$0xff]
          %v6481 = vld [vmem:[%s1 + $0x178] sm:$0xff]
          %v6482 = vld [vmem:[%s1 + $0x180] sm:$0xff]
          %v6483 = vld [vmem:[%s1 + $0x188] sm:$0xff]
          %v6484 = vld [vmem:[%s1 + $0x190] sm:$0xff]
          %v6485 = vld [vmem:[%s1 + $0x198] sm:$0xff]
          %v6486 = vld [vmem:[%s1 + $0x1a0] sm:$0xff]
          %v6487 = vld [vmem:[%s1 + $0x1a8] sm:$0xff]
          %v6488 = vld [vmem:[%s1 + $0x1b0] sm:$0xff]
          %v6489 = vld [vmem:[%s1 + $0x1b8] sm:$0xff]
          %v6490 = vld [vmem:[%s1 + $0x1c0] sm:$0xff]
          %v6491 = vld [vmem:[%s1 + $0x1c8] sm:$0xff]
          %v6492 = vld [vmem:[%s1 + $0x1d0] sm:$0xff]
          %v6493 = vld [vmem:[%s1 + $0x1d8] sm:$0xff]
          %v6494 = vld [vmem:[%s1 + $0x1e0] sm:$0xff]
          %v6495 = vld [vmem:[%s1 + $0x1e8] sm:$0xff]
          %v6496 = vld [vmem:[%s1 + $0x1f0] sm:$0xff]
          %v6497 = vld [vmem:[%s1 + $0x1f8] sm:$0xff]
          %v6498 = vld [vmem:[%s1 + $0x200] sm:$0xff]
          %v6499 = vld [vmem:[%s1 + $0x208] sm:$0xff]
          %v6500 = vld [vmem:[%s1 + $0x210] sm:$0xff]
          %v6501 = vld [vmem:[%s1 + $0x218] sm:$0xff]
          %v6502 = vld [vmem:[%s1 + $0x220] sm:$0xff]
          %v6503 = vld [vmem:[%s1 + $0x228] sm:$0xff]
          %v6504 = vld [vmem:[%s1 + $0x230] sm:$0xff]
          %v6505 = vld [vmem:[%s1 + $0x238] sm:$0xff]
          %v6506 = vld [vmem:[%s1 + $0x240] sm:$0xff]
          %v6507 = vld [vmem:[%s1 + $0x248] sm:$0xff]
          %v6508 = vld [vmem:[%s1 + $0x250] sm:$0xff]
          %v6509 = vld [vmem:[%s1 + $0x258] sm:$0xff]
          %v6510 = vld [vmem:[%s1 + $0x260] sm:$0xff]
          %v6511 = vld [vmem:[%s1 + $0x268] sm:$0xff]
          %v6512 = vld [vmem:[%s1 + $0x270] sm:$0xff]
          %v6513 = vld [vmem:[%s1 + $0x278] sm:$0xff]
          %v6514 = vld [vmem:[%s1 + $0x280] sm:$0xff]
          %v6515 = vld [vmem:[%s1 + $0x288] sm:$0xff]
          %v6516 = vld [vmem:[%s1 + $0x290] sm:$0xff]
          %v6517 = vld [vmem:[%s1 + $0x298] sm:$0xff]
          %v6518 = vld [vmem:[%s1 + $0x2a0] sm:$0xff]
          %v6519 = vld [vmem:[%s1 + $0x2a8] sm:$0xff]
          %v6520 = vld [vmem:[%s1 + $0x2b0] sm:$0xff]
          %v6521 = vld [vmem:[%s1 + $0x2b8] sm:$0xff]
          %v6522 = vld [vmem:[%s1 + $0x2c0] sm:$0xff]
          %v6523 = vld [vmem:[%s1 + $0x2c8] sm:$0xff]
          %v6524 = vld [vmem:[%s1 + $0x2d0] sm:$0xff]
          %v6525 = vld [vmem:[%s1 + $0x2d8] sm:$0xff]
          %v6526 = vld [vmem:[%s1 + $0x2e0] sm:$0xff]
          %v6527 = vld [vmem:[%s1 + $0x2e8] sm:$0xff]
          %v6528 = vld [vmem:[%s1 + $0x2f0] sm:$0xff]
          %v6529 = vld [vmem:[%s1 + $0x2f8] sm:$0xff]
          %v6530 = vld [vmem:[%s1 + $0x300] sm:$0xff]
          %v6531 = vld [vmem:[%s1 + $0x308] sm:$0xff]
          %v6532 = vld [vmem:[%s1 + $0x310] sm:$0xff]
          %v6533 = vld [vmem:[%s1 + $0x318] sm:$0xff]
          %v6534 = vld [vmem:[%s1 + $0x320] sm:$0xff]
          %v6535 = vld [vmem:[%s1 + $0x328] sm:$0xff]
          %v6536 = vld [vmem:[%s1 + $0x330] sm:$0xff]
          %v6537 = vld [vmem:[%s1 + $0x338] sm:$0xff]
          %v6538 = vld [vmem:[%s1 + $0x340] sm:$0xff]
          %v6539 = vld [vmem:[%s1 + $0x348] sm:$0xff]
          %v6540 = vld [vmem:[%s1 + $0x350] sm:$0xff]
          %v6541 = vld [vmem:[%s1 + $0x358] sm:$0xff]
          %v6542 = vld [vmem:[%s1 + $0x360] sm:$0xff]
          %v6543 = vld [vmem:[%s1 + $0x368] sm:$0xff]
          %v6544 = vld [vmem:[%s1 + $0x370] sm:$0xff]
          %v6545 = vld [vmem:[%s1 + $0x378] sm:$0xff]
          %v6546 = vld [vmem:[%s1 + $0x380] sm:$0xff]
          %v6547 = vld [vmem:[%s1 + $0x388] sm:$0xff]
          %v6548 = vld [vmem:[%s1 + $0x390] sm:$0xff]
          %v6549 = vld [vmem:[%s1 + $0x398] sm:$0xff]
          %v6550 = vld [vmem:[%s1 + $0x3a0] sm:$0xff]
          %v6551 = vld [vmem:[%s1 + $0x3a8] sm:$0xff]
          %v6552 = vld [vmem:[%s1 + $0x3b0] sm:$0xff]
          %v6553 = vld [vmem:[%s1 + $0x3b8] sm:$0xff]
          %v6554 = vld [vmem:[%s1 + $0x3c0] sm:$0xff]
          %v6555 = vld [vmem:[%s1 + $0x3c8] sm:$0xff]
          %v6556 = vld [vmem:[%s1 + $0x3d0] sm:$0xff]
          %v6557 = vld [vmem:[%s1 + $0x3d8] sm:$0xff]
          %v6558 = vld [vmem:[%s1 + $0x3e0] sm:$0xff]
          %v6559 = vld [vmem:[%s1 + $0x3e8] sm:$0xff]
          %v6560 = vld [vmem:[%s1 + $0x3f0] sm:$0xff]
          %v6561 = vld [vmem:[%s1 + $0x3f8] sm:$0xff]
          %v6562 = vld [vmem:[%s1 + $0x400] sm:$0xff]
          %v6563 = vld [vmem:[%s1 + $0x408] sm:$0xff]
          %v6564 = vld [vmem:[%s1 + $0x410] sm:$0xff]
          %v6565 = vld [vmem:[%s1 + $0x418] sm:$0xff]
          %v6566 = vld [vmem:[%s1 + $0x420] sm:$0xff]
          %v6567 = vld [vmem:[%s1 + $0x428] sm:$0xff]
          %v6568 = vld [vmem:[%s1 + $0x430] sm:$0xff]
          %v6569 = vld [vmem:[%s1 + $0x438] sm:$0xff]
          %v6570 = vld [vmem:[%s1 + $0x440] sm:$0xff]
          %v6571 = vld [vmem:[%s1 + $0x448] sm:$0xff]
          %v6572 = vld [vmem:[%s1 + $0x450] sm:$0xff]
          %v6573 = vld [vmem:[%s1 + $0x458] sm:$0xff]
          %v6574 = vld [vmem:[%s1 + $0x460] sm:$0xff]
          %v6575 = vld [vmem:[%s1 + $0x468] sm:$0xff]
          %v6576 = vld [vmem:[%s1 + $0x470] sm:$0xff]
          %v6577 = vld [vmem:[%s1 + $0x478] sm:$0xff]
          %v6578 = vld [vmem:[%s1 + $0x480] sm:$0xff]
          %v6579 = vld [vmem:[%s1 + $0x488] sm:$0xff]
          %v6580 = vld [vmem:[%s1 + $0x490] sm:$0xff]
          %v6581 = vld [vmem:[%s1 + $0x498] sm:$0xff]
          %v6582 = vld [vmem:[%s1 + $0x4a0] sm:$0xff]
          %v6583 = vld [vmem:[%s1 + $0x4a8] sm:$0xff]
          %v6584 = vld [vmem:[%s1 + $0x4b0] sm:$0xff]
          %v6585 = vld [vmem:[%s1 + $0x4b8] sm:$0xff]
          %v6586 = vld [vmem:[%s1 + $0x4c0] sm:$0xff]
          %v6587 = vld [vmem:[%s1 + $0x4c8] sm:$0xff]
          %v6588 = vld [vmem:[%s1 + $0x4d0] sm:$0xff]
          %v6589 = vld [vmem:[%s1 + $0x4d8] sm:$0xff]
          %v6590 = vld [vmem:[%s1 + $0x4e0] sm:$0xff]
          %v6591 = vld [vmem:[%s1 + $0x4e8] sm:$0xff]
          %v6592 = vld [vmem:[%s1 + $0x4f0] sm:$0xff]
          %v6593 = vld [vmem:[%s1 + $0x4f8] sm:$0xff]
          %v6594 = vld [vmem:[%s1 + $0x500] sm:$0xff]
          %v6595 = vld [vmem:[%s1 + $0x508] sm:$0xff]
          %v6596 = vld [vmem:[%s1 + $0x510] sm:$0xff]
          %v6597 = vld [vmem:[%s1 + $0x518] sm:$0xff]
          %v6598 = vld [vmem:[%s1 + $0x520] sm:$0xff]
          %v6599 = vld [vmem:[%s1 + $0x528] sm:$0xff]
          %v6600 = vld [vmem:[%s1 + $0x530] sm:$0xff]
          %v6601 = vld [vmem:[%s1 + $0x538] sm:$0xff]
          %v6602 = vld [vmem:[%s1 + $0x540] sm:$0xff]
          %v6603 = vld [vmem:[%s1 + $0x548] sm:$0xff]
          %v6604 = vld [vmem:[%s1 + $0x550] sm:$0xff]
          %v6605 = vld [vmem:[%s1 + $0x558] sm:$0xff]
          %v6606 = vld [vmem:[%s1 + $0x560] sm:$0xff]
          %v6607 = vld [vmem:[%s1 + $0x568] sm:$0xff]
          %v6608 = vld [vmem:[%s1 + $0x570] sm:$0xff]
          %v6609 = vld [vmem:[%s1 + $0x578] sm:$0xff]
          %v6610 = vld [vmem:[%s1 + $0x580] sm:$0xff]
          %v6611 = vld [vmem:[%s1 + $0x588] sm:$0xff]
          %v6612 = vld [vmem:[%s1 + $0x590] sm:$0xff]
          %v6613 = vld [vmem:[%s1 + $0x598] sm:$0xff]
          %v6614 = vld [vmem:[%s1 + $0x5a0] sm:$0xff]
          %v6615 = vld [vmem:[%s1 + $0x5a8] sm:$0xff]
          %v6616 = vld [vmem:[%s1 + $0x5b0] sm:$0xff]
          %v6617 = vld [vmem:[%s1 + $0x5b8] sm:$0xff]
          %v6618 = vld [vmem:[%s1 + $0x5c0] sm:$0xff]
          %v6619 = vld [vmem:[%s1 + $0x5c8] sm:$0xff]
          %v6620 = vld [vmem:[%s1 + $0x5d0] sm:$0xff]
          %v6621 = vld [vmem:[%s1 + $0x5d8] sm:$0xff]
          %v6622 = vld [vmem:[%s1 + $0x5e0] sm:$0xff]
          %v6623 = vld [vmem:[%s1 + $0x5e8] sm:$0xff]
          %v6624 = vld [vmem:[%s1 + $0x5f0] sm:$0xff]
          %v6625 = vld [vmem:[%s1 + $0x5f8] sm:$0xff]
          %v6626 = vld [vmem:[%s1 + $0x600] sm:$0xff]
          %v6627 = vld [vmem:[%s1 + $0x608] sm:$0xff]
          %v6628 = vld [vmem:[%s1 + $0x610] sm:$0xff]
          %v6629 = vld [vmem:[%s1 + $0x618] sm:$0xff]
          %v6630 = vld [vmem:[%s1 + $0x620] sm:$0xff]
          %v6631 = vld [vmem:[%s1 + $0x628] sm:$0xff]
          %v6632 = vld [vmem:[%s1 + $0x630] sm:$0xff]
          %v6633 = vld [vmem:[%s1 + $0x638] sm:$0xff]
          %v6634 = vld [vmem:[%s1 + $0x640] sm:$0xff]
          %v6635 = vld [vmem:[%s1 + $0x648] sm:$0xff]
          %v6636 = vld [vmem:[%s1 + $0x650] sm:$0xff]
          %v6637 = vld [vmem:[%s1 + $0x658] sm:$0xff]
          %v6638 = vld [vmem:[%s1 + $0x660] sm:$0xff]
          %v6639 = vld [vmem:[%s1 + $0x668] sm:$0xff]
          %v6640 = vld [vmem:[%s1 + $0x670] sm:$0xff]
          %v6641 = vld [vmem:[%s1 + $0x678] sm:$0xff]
          %v6642 = vld [vmem:[%s1 + $0x680] sm:$0xff]
          %v6643 = vld [vmem:[%s1 + $0x688] sm:$0xff]
          %v6644 = vld [vmem:[%s1 + $0x690] sm:$0xff]
          %v6645 = vld [vmem:[%s1 + $0x698] sm:$0xff]
          %v6646 = vld [vmem:[%s1 + $0x6a0] sm:$0xff]
          %v6647 = vld [vmem:[%s1 + $0x6a8] sm:$0xff]
          %v6648 = vld [vmem:[%s1 + $0x6b0] sm:$0xff]
          %v6649 = vld [vmem:[%s1 + $0x6b8] sm:$0xff]
          %v6650 = vld [vmem:[%s1 + $0x6c0] sm:$0xff]
          %v6651 = vld [vmem:[%s1 + $0x6c8] sm:$0xff]
          %v6652 = vld [vmem:[%s1 + $0x6d0] sm:$0xff]
          %v6653 = vld [vmem:[%s1 + $0x6d8] sm:$0xff]
          %v6654 = vld [vmem:[%s1 + $0x6e0] sm:$0xff]
          %v6655 = vld [vmem:[%s1 + $0x6e8] sm:$0xff]
          %v6656 = vld [vmem:[%s1 + $0x6f0] sm:$0xff]
          %v6657 = vld [vmem:[%s1 + $0x6f8] sm:$0xff]
          %v6882 = vunpack.c.l.b16 %v6434
          %v6883 = vunpack.c.h.b16 %v6434
          %v6884 = vunpack.c.l.b16 %v6435
          %v6885 = vunpack.c.h.b16 %v6435
          %v6886 = vunpack.c.l.b16 %v6436
          %v6887 = vunpack.c.h.b16 %v6436
          %v6888 = vunpack.c.l.b16 %v6437
          %v6889 = vunpack.c.h.b16 %v6437
          %v6890 = vunpack.c.l.b16 %v6438
          %v6891 = vunpack.c.h.b16 %v6438
          %v6892 = vunpack.c.l.b16 %v6439
          %v6893 = vunpack.c.h.b16 %v6439
          %v6894 = vunpack.c.l.b16 %v6440
          %v6895 = vunpack.c.h.b16 %v6440
          %v6896 = vunpack.c.l.b16 %v6441
          %v6897 = vunpack.c.h.b16 %v6441
          %v6898 = vunpack.c.l.b16 %v6442
          %v6899 = vunpack.c.h.b16 %v6442
          %v6900 = vunpack.c.l.b16 %v6443
          %v6901 = vunpack.c.h.b16 %v6443
          %v6902 = vunpack.c.l.b16 %v6444
          %v6903 = vunpack.c.h.b16 %v6444
          %v6904 = vunpack.c.l.b16 %v6445
          %v6905 = vunpack.c.h.b16 %v6445
          %v6906 = vunpack.c.l.b16 %v6446
          %v6907 = vunpack.c.h.b16 %v6446
          %v6908 = vunpack.c.l.b16 %v6447
          %v6909 = vunpack.c.h.b16 %v6447
          %v6910 = vunpack.c.l.b16 %v6448
          %v6911 = vunpack.c.h.b16 %v6448
          %v6912 = vunpack.c.l.b16 %v6449
          %v6913 = vunpack.c.h.b16 %v6449
          %v6914 = vunpack.c.l.b16 %v6450
          %v6915 = vunpack.c.h.b16 %v6450
          %v6916 = vunpack.c.l.b16 %v6451
          %v6917 = vunpack.c.h.b16 %v6451
          %v6918 = vunpack.c.l.b16 %v6452
          %v6919 = vunpack.c.h.b16 %v6452
          %v6920 = vunpack.c.l.b16 %v6453
          %v6921 = vunpack.c.h.b16 %v6453
          %v6922 = vunpack.c.l.b16 %v6454
          %v6923 = vunpack.c.h.b16 %v6454
          %v6924 = vunpack.c.l.b16 %v6455
          %v6925 = vunpack.c.h.b16 %v6455
          %v6926 = vunpack.c.l.b16 %v6456
          %v6927 = vunpack.c.h.b16 %v6456
          %v6928 = vunpack.c.l.b16 %v6457
          %v6929 = vunpack.c.h.b16 %v6457
          %v6930 = vunpack.c.l.b16 %v6458
          %v6931 = vunpack.c.h.b16 %v6458
          %v6932 = vunpack.c.l.b16 %v6459
          %v6933 = vunpack.c.h.b16 %v6459
          %v6934 = vunpack.c.l.b16 %v6460
          %v6935 = vunpack.c.h.b16 %v6460
          %v6936 = vunpack.c.l.b16 %v6461
          %v6937 = vunpack.c.h.b16 %v6461
          %v6938 = vunpack.c.l.b16 %v6462
          %v6939 = vunpack.c.h.b16 %v6462
          %v6940 = vunpack.c.l.b16 %v6463
          %v6941 = vunpack.c.h.b16 %v6463
          %v6942 = vunpack.c.l.b16 %v6464
          %v6943 = vunpack.c.h.b16 %v6464
          %v6944 = vunpack.c.l.b16 %v6465
          %v6945 = vunpack.c.h.b16 %v6465
          %v6946 = vunpack.c.l.b16 %v6466
          %v6947 = vunpack.c.h.b16 %v6466
          %v6948 = vunpack.c.l.b16 %v6467
          %v6949 = vunpack.c.h.b16 %v6467
          %v6950 = vunpack.c.l.b16 %v6468
          %v6951 = vunpack.c.h.b16 %v6468
          %v6952 = vunpack.c.l.b16 %v6469
          %v6953 = vunpack.c.h.b16 %v6469
          %v6954 = vunpack.c.l.b16 %v6470
          %v6955 = vunpack.c.h.b16 %v6470
          %v6956 = vunpack.c.l.b16 %v6471
          %v6957 = vunpack.c.h.b16 %v6471
          %v6958 = vunpack.c.l.b16 %v6472
          %v6959 = vunpack.c.h.b16 %v6472
          %v6960 = vunpack.c.l.b16 %v6473
          %v6961 = vunpack.c.h.b16 %v6473
          %v6962 = vunpack.c.l.b16 %v6474
          %v6963 = vunpack.c.h.b16 %v6474
          %v6964 = vunpack.c.l.b16 %v6475
          %v6965 = vunpack.c.h.b16 %v6475
          %v6966 = vunpack.c.l.b16 %v6476
          %v6967 = vunpack.c.h.b16 %v6476
          %v6968 = vunpack.c.l.b16 %v6477
          %v6969 = vunpack.c.h.b16 %v6477
          %v6970 = vunpack.c.l.b16 %v6478
          %v6971 = vunpack.c.h.b16 %v6478
          %v6972 = vunpack.c.l.b16 %v6479
          %v6973 = vunpack.c.h.b16 %v6479
          %v6974 = vunpack.c.l.b16 %v6480
          %v6975 = vunpack.c.h.b16 %v6480
          %v6976 = vunpack.c.l.b16 %v6481
          %v6977 = vunpack.c.h.b16 %v6481
          %v6978 = vunpack.c.l.b16 %v6482
          %v6979 = vunpack.c.h.b16 %v6482
          %v6980 = vunpack.c.l.b16 %v6483
          %v6981 = vunpack.c.h.b16 %v6483
          %v6982 = vunpack.c.l.b16 %v6484
          %v6983 = vunpack.c.h.b16 %v6484
          %v6984 = vunpack.c.l.b16 %v6485
          %v6985 = vunpack.c.h.b16 %v6485
          %v6986 = vunpack.c.l.b16 %v6486
          %v6987 = vunpack.c.h.b16 %v6486
          %v6988 = vunpack.c.l.b16 %v6487
          %v6989 = vunpack.c.h.b16 %v6487
          %v6990 = vunpack.c.l.b16 %v6488
          %v6991 = vunpack.c.h.b16 %v6488
          %v6992 = vunpack.c.l.b16 %v6489
          %v6993 = vunpack.c.h.b16 %v6489
          %v6994 = vunpack.c.l.b16 %v6490
          %v6995 = vunpack.c.h.b16 %v6490
          %v6996 = vunpack.c.l.b16 %v6491
          %v6997 = vunpack.c.h.b16 %v6491
          %v6998 = vunpack.c.l.b16 %v6492
          %v6999 = vunpack.c.h.b16 %v6492
          %v7000 = vunpack.c.l.b16 %v6493
          %v7001 = vunpack.c.h.b16 %v6493
          %v7002 = vunpack.c.l.b16 %v6494
          %v7003 = vunpack.c.h.b16 %v6494
          %v7004 = vunpack.c.l.b16 %v6495
          %v7005 = vunpack.c.h.b16 %v6495
          %v7006 = vunpack.c.l.b16 %v6496
          %v7007 = vunpack.c.h.b16 %v6496
          %v7008 = vunpack.c.l.b16 %v6497
          %v7009 = vunpack.c.h.b16 %v6497
          %v7010 = vunpack.c.l.b16 %v6498
          %v7011 = vunpack.c.h.b16 %v6498
          %v7012 = vunpack.c.l.b16 %v6499
          %v7013 = vunpack.c.h.b16 %v6499
          %v7014 = vunpack.c.l.b16 %v6500
          %v7015 = vunpack.c.h.b16 %v6500
          %v7016 = vunpack.c.l.b16 %v6501
          %v7017 = vunpack.c.h.b16 %v6501
          %v7018 = vunpack.c.l.b16 %v6502
          %v7019 = vunpack.c.h.b16 %v6502
          %v7020 = vunpack.c.l.b16 %v6503
          %v7021 = vunpack.c.h.b16 %v6503
          %v7022 = vunpack.c.l.b16 %v6504
          %v7023 = vunpack.c.h.b16 %v6504
          %v7024 = vunpack.c.l.b16 %v6505
          %v7025 = vunpack.c.h.b16 %v6505
          %v7026 = vunpack.c.l.b16 %v6506
          %v7027 = vunpack.c.h.b16 %v6506
          %v7028 = vunpack.c.l.b16 %v6507
          %v7029 = vunpack.c.h.b16 %v6507
          %v7030 = vunpack.c.l.b16 %v6508
          %v7031 = vunpack.c.h.b16 %v6508
          %v7032 = vunpack.c.l.b16 %v6509
          %v7033 = vunpack.c.h.b16 %v6509
          %v7034 = vunpack.c.l.b16 %v6510
          %v7035 = vunpack.c.h.b16 %v6510
          %v7036 = vunpack.c.l.b16 %v6511
          %v7037 = vunpack.c.h.b16 %v6511
          %v7038 = vunpack.c.l.b16 %v6512
          %v7039 = vunpack.c.h.b16 %v6512
          %v7040 = vunpack.c.l.b16 %v6513
          %v7041 = vunpack.c.h.b16 %v6513
          %v7042 = vunpack.c.l.b16 %v6514
          %v7043 = vunpack.c.h.b16 %v6514
          %v7044 = vunpack.c.l.b16 %v6515
          %v7045 = vunpack.c.h.b16 %v6515
          %v7046 = vunpack.c.l.b16 %v6516
          %v7047 = vunpack.c.h.b16 %v6516
          %v7048 = vunpack.c.l.b16 %v6517
          %v7049 = vunpack.c.h.b16 %v6517
          %v7050 = vunpack.c.l.b16 %v6518
          %v7051 = vunpack.c.h.b16 %v6518
          %v7052 = vunpack.c.l.b16 %v6519
          %v7053 = vunpack.c.h.b16 %v6519
          %v7054 = vunpack.c.l.b16 %v6520
          %v7055 = vunpack.c.h.b16 %v6520
          %v7056 = vunpack.c.l.b16 %v6521
          %v7057 = vunpack.c.h.b16 %v6521
          %v7058 = vunpack.c.l.b16 %v6522
          %v7059 = vunpack.c.h.b16 %v6522
          %v7060 = vunpack.c.l.b16 %v6523
          %v7061 = vunpack.c.h.b16 %v6523
          %v7062 = vunpack.c.l.b16 %v6524
          %v7063 = vunpack.c.h.b16 %v6524
          %v7064 = vunpack.c.l.b16 %v6525
          %v7065 = vunpack.c.h.b16 %v6525
          %v7066 = vunpack.c.l.b16 %v6526
          %v7067 = vunpack.c.h.b16 %v6526
          %v7068 = vunpack.c.l.b16 %v6527
          %v7069 = vunpack.c.h.b16 %v6527
          %v7070 = vunpack.c.l.b16 %v6528
          %v7071 = vunpack.c.h.b16 %v6528
          %v7072 = vunpack.c.l.b16 %v6529
          %v7073 = vunpack.c.h.b16 %v6529
          %v7074 = vunpack.c.l.b16 %v6530
          %v7075 = vunpack.c.h.b16 %v6530
          %v7076 = vunpack.c.l.b16 %v6531
          %v7077 = vunpack.c.h.b16 %v6531
          %v7078 = vunpack.c.l.b16 %v6532
          %v7079 = vunpack.c.h.b16 %v6532
          %v7080 = vunpack.c.l.b16 %v6533
          %v7081 = vunpack.c.h.b16 %v6533
          %v7082 = vunpack.c.l.b16 %v6534
          %v7083 = vunpack.c.h.b16 %v6534
          %v7084 = vunpack.c.l.b16 %v6535
          %v7085 = vunpack.c.h.b16 %v6535
          %v7086 = vunpack.c.l.b16 %v6536
          %v7087 = vunpack.c.h.b16 %v6536
          %v7088 = vunpack.c.l.b16 %v6537
          %v7089 = vunpack.c.h.b16 %v6537
          %v7090 = vunpack.c.l.b16 %v6538
          %v7091 = vunpack.c.h.b16 %v6538
          %v7092 = vunpack.c.l.b16 %v6539
          %v7093 = vunpack.c.h.b16 %v6539
          %v7094 = vunpack.c.l.b16 %v6540
          %v7095 = vunpack.c.h.b16 %v6540
          %v7096 = vunpack.c.l.b16 %v6541
          %v7097 = vunpack.c.h.b16 %v6541
          %v7098 = vunpack.c.l.b16 %v6542
          %v7099 = vunpack.c.h.b16 %v6542
          %v7100 = vunpack.c.l.b16 %v6543
          %v7101 = vunpack.c.h.b16 %v6543
          %v7102 = vunpack.c.l.b16 %v6544
          %v7103 = vunpack.c.h.b16 %v6544
          %v7104 = vunpack.c.l.b16 %v6545
          %v7105 = vunpack.c.h.b16 %v6545
          %v7106 = vunpack.c.l.b16 %v6546
          %v7107 = vunpack.c.h.b16 %v6546
          %v7108 = vunpack.c.l.b16 %v6547
          %v7109 = vunpack.c.h.b16 %v6547
          %v7110 = vunpack.c.l.b16 %v6548
          %v7111 = vunpack.c.h.b16 %v6548
          %v7112 = vunpack.c.l.b16 %v6549
          %v7113 = vunpack.c.h.b16 %v6549
          %v7114 = vunpack.c.l.b16 %v6550
          %v7115 = vunpack.c.h.b16 %v6550
          %v7116 = vunpack.c.l.b16 %v6551
          %v7117 = vunpack.c.h.b16 %v6551
          %v7118 = vunpack.c.l.b16 %v6552
          %v7119 = vunpack.c.h.b16 %v6552
          %v7120 = vunpack.c.l.b16 %v6553
          %v7121 = vunpack.c.h.b16 %v6553
          %v7122 = vunpack.c.l.b16 %v6554
          %v7123 = vunpack.c.h.b16 %v6554
          %v7124 = vunpack.c.l.b16 %v6555
          %v7125 = vunpack.c.h.b16 %v6555
          %v7126 = vunpack.c.l.b16 %v6556
          %v7127 = vunpack.c.h.b16 %v6556
          %v7128 = vunpack.c.l.b16 %v6557
          %v7129 = vunpack.c.h.b16 %v6557
          %v7130 = vunpack.c.l.b16 %v6558
          %v7131 = vunpack.c.h.b16 %v6558
          %v7132 = vunpack.c.l.b16 %v6559
          %v7133 = vunpack.c.h.b16 %v6559
          %v7134 = vunpack.c.l.b16 %v6560
          %v7135 = vunpack.c.h.b16 %v6560
          %v7136 = vunpack.c.l.b16 %v6561
          %v7137 = vunpack.c.h.b16 %v6561
          %v7138 = vunpack.c.l.b16 %v6562
          %v7139 = vunpack.c.h.b16 %v6562
          %v7140 = vunpack.c.l.b16 %v6563
          %v7141 = vunpack.c.h.b16 %v6563
          %v7142 = vunpack.c.l.b16 %v6564
          %v7143 = vunpack.c.h.b16 %v6564
          %v7144 = vunpack.c.l.b16 %v6565
          %v7145 = vunpack.c.h.b16 %v6565
          %v7146 = vunpack.c.l.b16 %v6566
          %v7147 = vunpack.c.h.b16 %v6566
          %v7148 = vunpack.c.l.b16 %v6567
          %v7149 = vunpack.c.h.b16 %v6567
          %v7150 = vunpack.c.l.b16 %v6568
          %v7151 = vunpack.c.h.b16 %v6568
          %v7152 = vunpack.c.l.b16 %v6569
          %v7153 = vunpack.c.h.b16 %v6569
          %v7154 = vunpack.c.l.b16 %v6570
          %v7155 = vunpack.c.h.b16 %v6570
          %v7156 = vunpack.c.l.b16 %v6571
          %v7157 = vunpack.c.h.b16 %v6571
          %v7158 = vunpack.c.l.b16 %v6572
          %v7159 = vunpack.c.h.b16 %v6572
          %v7160 = vunpack.c.l.b16 %v6573
          %v7161 = vunpack.c.h.b16 %v6573
          %v7162 = vunpack.c.l.b16 %v6574
          %v7163 = vunpack.c.h.b16 %v6574
          %v7164 = vunpack.c.l.b16 %v6575
          %v7165 = vunpack.c.h.b16 %v6575
          %v7166 = vunpack.c.l.b16 %v6576
          %v7167 = vunpack.c.h.b16 %v6576
          %v7168 = vunpack.c.l.b16 %v6577
          %v7169 = vunpack.c.h.b16 %v6577
          %v7170 = vunpack.c.l.b16 %v6578
          %v7171 = vunpack.c.h.b16 %v6578
          %v7172 = vunpack.c.l.b16 %v6579
          %v7173 = vunpack.c.h.b16 %v6579
          %v7174 = vunpack.c.l.b16 %v6580
          %v7175 = vunpack.c.h.b16 %v6580
          %v7176 = vunpack.c.l.b16 %v6581
          %v7177 = vunpack.c.h.b16 %v6581
          %v7178 = vunpack.c.l.b16 %v6582
          %v7179 = vunpack.c.h.b16 %v6582
          %v7180 = vunpack.c.l.b16 %v6583
          %v7181 = vunpack.c.h.b16 %v6583
          %v7182 = vunpack.c.l.b16 %v6584
          %v7183 = vunpack.c.h.b16 %v6584
          %v7184 = vunpack.c.l.b16 %v6585
          %v7185 = vunpack.c.h.b16 %v6585
          %v7186 = vunpack.c.l.b16 %v6586
          %v7187 = vunpack.c.h.b16 %v6586
          %v7188 = vunpack.c.l.b16 %v6587
          %v7189 = vunpack.c.h.b16 %v6587
          %v7190 = vunpack.c.l.b16 %v6588
          %v7191 = vunpack.c.h.b16 %v6588
          %v7192 = vunpack.c.l.b16 %v6589
          %v7193 = vunpack.c.h.b16 %v6589
          %v7194 = vunpack.c.l.b16 %v6590
          %v7195 = vunpack.c.h.b16 %v6590
          %v7196 = vunpack.c.l.b16 %v6591
          %v7197 = vunpack.c.h.b16 %v6591
          %v7198 = vunpack.c.l.b16 %v6592
          %v7199 = vunpack.c.h.b16 %v6592
          %v7200 = vunpack.c.l.b16 %v6593
          %v7201 = vunpack.c.h.b16 %v6593
          %v7202 = vunpack.c.l.b16 %v6594
          %v7203 = vunpack.c.h.b16 %v6594
          %v7204 = vunpack.c.l.b16 %v6595
          %v7205 = vunpack.c.h.b16 %v6595
          %v7206 = vunpack.c.l.b16 %v6596
          %v7207 = vunpack.c.h.b16 %v6596
          %v7208 = vunpack.c.l.b16 %v6597
          %v7209 = vunpack.c.h.b16 %v6597
          %v7210 = vunpack.c.l.b16 %v6598
          %v7211 = vunpack.c.h.b16 %v6598
          %v7212 = vunpack.c.l.b16 %v6599
          %v7213 = vunpack.c.h.b16 %v6599
          %v7214 = vunpack.c.l.b16 %v6600
          %v7215 = vunpack.c.h.b16 %v6600
          %v7216 = vunpack.c.l.b16 %v6601
          %v7217 = vunpack.c.h.b16 %v6601
          %v7218 = vunpack.c.l.b16 %v6602
          %v7219 = vunpack.c.h.b16 %v6602
          %v7220 = vunpack.c.l.b16 %v6603
          %v7221 = vunpack.c.h.b16 %v6603
          %v7222 = vunpack.c.l.b16 %v6604
          %v7223 = vunpack.c.h.b16 %v6604
          %v7224 = vunpack.c.l.b16 %v6605
          %v7225 = vunpack.c.h.b16 %v6605
          %v7226 = vunpack.c.l.b16 %v6606
          %v7227 = vunpack.c.h.b16 %v6606
          %v7228 = vunpack.c.l.b16 %v6607
          %v7229 = vunpack.c.h.b16 %v6607
          %v7230 = vunpack.c.l.b16 %v6608
          %v7231 = vunpack.c.h.b16 %v6608
          %v7232 = vunpack.c.l.b16 %v6609
          %v7233 = vunpack.c.h.b16 %v6609
          %v7234 = vunpack.c.l.b16 %v6610
          %v7235 = vunpack.c.h.b16 %v6610
          %v7236 = vunpack.c.l.b16 %v6611
          %v7237 = vunpack.c.h.b16 %v6611
          %v7238 = vunpack.c.l.b16 %v6612
          %v7239 = vunpack.c.h.b16 %v6612
          %v7240 = vunpack.c.l.b16 %v6613
          %v7241 = vunpack.c.h.b16 %v6613
          %v7242 = vunpack.c.l.b16 %v6614
          %v7243 = vunpack.c.h.b16 %v6614
          %v7244 = vunpack.c.l.b16 %v6615
          %v7245 = vunpack.c.h.b16 %v6615
          %v7246 = vunpack.c.l.b16 %v6616
          %v7247 = vunpack.c.h.b16 %v6616
          %v7248 = vunpack.c.l.b16 %v6617
          %v7249 = vunpack.c.h.b16 %v6617
          %v7250 = vunpack.c.l.b16 %v6618
          %v7251 = vunpack.c.h.b16 %v6618
          %v7252 = vunpack.c.l.b16 %v6619
          %v7253 = vunpack.c.h.b16 %v6619
          %v7254 = vunpack.c.l.b16 %v6620
          %v7255 = vunpack.c.h.b16 %v6620
          %v7256 = vunpack.c.l.b16 %v6621
          %v7257 = vunpack.c.h.b16 %v6621
          %v7258 = vunpack.c.l.b16 %v6622
          %v7259 = vunpack.c.h.b16 %v6622
          %v7260 = vunpack.c.l.b16 %v6623
          %v7261 = vunpack.c.h.b16 %v6623
          %v7262 = vunpack.c.l.b16 %v6624
          %v7263 = vunpack.c.h.b16 %v6624
          %v7264 = vunpack.c.l.b16 %v6625
          %v7265 = vunpack.c.h.b16 %v6625
          %v7266 = vunpack.c.l.b16 %v6626
          %v7267 = vunpack.c.h.b16 %v6626
          %v7268 = vunpack.c.l.b16 %v6627
          %v7269 = vunpack.c.h.b16 %v6627
          %v7270 = vunpack.c.l.b16 %v6628
          %v7271 = vunpack.c.h.b16 %v6628
          %v7272 = vunpack.c.l.b16 %v6629
          %v7273 = vunpack.c.h.b16 %v6629
          %v7274 = vunpack.c.l.b16 %v6630
          %v7275 = vunpack.c.h.b16 %v6630
          %v7276 = vunpack.c.l.b16 %v6631
          %v7277 = vunpack.c.h.b16 %v6631
          %v7278 = vunpack.c.l.b16 %v6632
          %v7279 = vunpack.c.h.b16 %v6632
          %v7280 = vunpack.c.l.b16 %v6633
          %v7281 = vunpack.c.h.b16 %v6633
          %v7282 = vunpack.c.l.b16 %v6634
          %v7283 = vunpack.c.h.b16 %v6634
          %v7284 = vunpack.c.l.b16 %v6635
          %v7285 = vunpack.c.h.b16 %v6635
          %v7286 = vunpack.c.l.b16 %v6636
          %v7287 = vunpack.c.h.b16 %v6636
          %v7288 = vunpack.c.l.b16 %v6637
          %v7289 = vunpack.c.h.b16 %v6637
          %v7290 = vunpack.c.l.b16 %v6638
          %v7291 = vunpack.c.h.b16 %v6638
          %v7292 = vunpack.c.l.b16 %v6639
          %v7293 = vunpack.c.h.b16 %v6639
          %v7294 = vunpack.c.l.b16 %v6640
          %v7295 = vunpack.c.h.b16 %v6640
          %v7296 = vunpack.c.l.b16 %v6641
          %v7297 = vunpack.c.h.b16 %v6641
          %v7298 = vunpack.c.l.b16 %v6642
          %v7299 = vunpack.c.h.b16 %v6642
          %v7300 = vunpack.c.l.b16 %v6643
          %v7301 = vunpack.c.h.b16 %v6643
          %v7302 = vunpack.c.l.b16 %v6644
          %v7303 = vunpack.c.h.b16 %v6644
          %v7304 = vunpack.c.l.b16 %v6645
          %v7305 = vunpack.c.h.b16 %v6645
          %v7306 = vunpack.c.l.b16 %v6646
          %v7307 = vunpack.c.h.b16 %v6646
          %v7308 = vunpack.c.l.b16 %v6647
          %v7309 = vunpack.c.h.b16 %v6647
          %v7310 = vunpack.c.l.b16 %v6648
          %v7311 = vunpack.c.h.b16 %v6648
          %v7312 = vunpack.c.l.b16 %v6649
          %v7313 = vunpack.c.h.b16 %v6649
          %v7314 = vunpack.c.l.b16 %v6650
          %v7315 = vunpack.c.h.b16 %v6650
          %v7316 = vunpack.c.l.b16 %v6651
          %v7317 = vunpack.c.h.b16 %v6651
          %v7318 = vunpack.c.l.b16 %v6652
          %v7319 = vunpack.c.h.b16 %v6652
          %v7320 = vunpack.c.l.b16 %v6653
          %v7321 = vunpack.c.h.b16 %v6653
          %v7322 = vunpack.c.l.b16 %v6654
          %v7323 = vunpack.c.h.b16 %v6654
          %v7324 = vunpack.c.l.b16 %v6655
          %v7325 = vunpack.c.h.b16 %v6655
          %v7326 = vunpack.c.l.b16 %v6656
          %v7327 = vunpack.c.h.b16 %v6656
          %v7328 = vunpack.c.l.b16 %v6657
          %v7329 = vunpack.c.h.b16 %v6657
          %v7330 = vpack.c.b16 %v6884, %v6882
          %v7331 = vpack.c.b16 %v6885, %v6883
          %v7332 = vpack.c.b16 %v6888, %v6886
          %v7333 = vpack.c.b16 %v6889, %v6887
          %v7334 = vpack.c.b16 %v6892, %v6890
          %v7335 = vpack.c.b16 %v6893, %v6891
          %v7336 = vpack.c.b16 %v6896, %v6894
          %v7337 = vpack.c.b16 %v6897, %v6895
          %v7338 = vpack.c.b16 %v6900, %v6898
          %v7339 = vpack.c.b16 %v6901, %v6899
          %v7340 = vpack.c.b16 %v6904, %v6902
          %v7341 = vpack.c.b16 %v6905, %v6903
          %v7342 = vpack.c.b16 %v6908, %v6906
          %v7343 = vpack.c.b16 %v6909, %v6907
          %v7344 = vpack.c.b16 %v6912, %v6910
          %v7345 = vpack.c.b16 %v6913, %v6911
          %v7346 = vpack.c.b16 %v6916, %v6914
          %v7347 = vpack.c.b16 %v6917, %v6915
          %v7348 = vpack.c.b16 %v6920, %v6918
          %v7349 = vpack.c.b16 %v6921, %v6919
          %v7350 = vpack.c.b16 %v6924, %v6922
          %v7351 = vpack.c.b16 %v6925, %v6923
          %v7352 = vpack.c.b16 %v6928, %v6926
          %v7353 = vpack.c.b16 %v6929, %v6927
          %v7354 = vpack.c.b16 %v6932, %v6930
          %v7355 = vpack.c.b16 %v6933, %v6931
          %v7356 = vpack.c.b16 %v6936, %v6934
          %v7357 = vpack.c.b16 %v6937, %v6935
          %v7358 = vpack.c.b16 %v6940, %v6938
          %v7359 = vpack.c.b16 %v6941, %v6939
          %v7360 = vpack.c.b16 %v6944, %v6942
          %v7361 = vpack.c.b16 %v6945, %v6943
          %v7362 = vpack.c.b16 %v6948, %v6946
          %v7363 = vpack.c.b16 %v6949, %v6947
          %v7364 = vpack.c.b16 %v6952, %v6950
          %v7365 = vpack.c.b16 %v6953, %v6951
          %v7366 = vpack.c.b16 %v6956, %v6954
          %v7367 = vpack.c.b16 %v6957, %v6955
          %v7368 = vpack.c.b16 %v6960, %v6958
          %v7369 = vpack.c.b16 %v6961, %v6959
          %v7370 = vpack.c.b16 %v6964, %v6962
          %v7371 = vpack.c.b16 %v6965, %v6963
          %v7372 = vpack.c.b16 %v6968, %v6966
          %v7373 = vpack.c.b16 %v6969, %v6967
          %v7374 = vpack.c.b16 %v6972, %v6970
          %v7375 = vpack.c.b16 %v6973, %v6971
          %v7376 = vpack.c.b16 %v6976, %v6974
          %v7377 = vpack.c.b16 %v6977, %v6975
          %v7378 = vpack.c.b16 %v6980, %v6978
          %v7379 = vpack.c.b16 %v6981, %v6979
          %v7380 = vpack.c.b16 %v6984, %v6982
          %v7381 = vpack.c.b16 %v6985, %v6983
          %v7382 = vpack.c.b16 %v6988, %v6986
          %v7383 = vpack.c.b16 %v6989, %v6987
          %v7384 = vpack.c.b16 %v6992, %v6990
          %v7385 = vpack.c.b16 %v6993, %v6991
          %v7386 = vpack.c.b16 %v6996, %v6994
          %v7387 = vpack.c.b16 %v6997, %v6995
          %v7388 = vpack.c.b16 %v7000, %v6998
          %v7389 = vpack.c.b16 %v7001, %v6999
          %v7390 = vpack.c.b16 %v7004, %v7002
          %v7391 = vpack.c.b16 %v7005, %v7003
          %v7392 = vpack.c.b16 %v7008, %v7006
          %v7393 = vpack.c.b16 %v7009, %v7007
          %v7394 = vpack.c.b16 %v7012, %v7010
          %v7395 = vpack.c.b16 %v7013, %v7011
          %v7396 = vpack.c.b16 %v7016, %v7014
          %v7397 = vpack.c.b16 %v7017, %v7015
          %v7398 = vpack.c.b16 %v7020, %v7018
          %v7399 = vpack.c.b16 %v7021, %v7019
          %v7400 = vpack.c.b16 %v7024, %v7022
          %v7401 = vpack.c.b16 %v7025, %v7023
          %v7402 = vpack.c.b16 %v7028, %v7026
          %v7403 = vpack.c.b16 %v7029, %v7027
          %v7404 = vpack.c.b16 %v7032, %v7030
          %v7405 = vpack.c.b16 %v7033, %v7031
          %v7406 = vpack.c.b16 %v7036, %v7034
          %v7407 = vpack.c.b16 %v7037, %v7035
          %v7408 = vpack.c.b16 %v7040, %v7038
          %v7409 = vpack.c.b16 %v7041, %v7039
          %v7410 = vpack.c.b16 %v7044, %v7042
          %v7411 = vpack.c.b16 %v7045, %v7043
          %v7412 = vpack.c.b16 %v7048, %v7046
          %v7413 = vpack.c.b16 %v7049, %v7047
          %v7414 = vpack.c.b16 %v7052, %v7050
          %v7415 = vpack.c.b16 %v7053, %v7051
          %v7416 = vpack.c.b16 %v7056, %v7054
          %v7417 = vpack.c.b16 %v7057, %v7055
          %v7418 = vpack.c.b16 %v7060, %v7058
          %v7419 = vpack.c.b16 %v7061, %v7059
          %v7420 = vpack.c.b16 %v7064, %v7062
          %v7421 = vpack.c.b16 %v7065, %v7063
          %v7422 = vpack.c.b16 %v7068, %v7066
          %v7423 = vpack.c.b16 %v7069, %v7067
          %v7424 = vpack.c.b16 %v7072, %v7070
          %v7425 = vpack.c.b16 %v7073, %v7071
          %v7426 = vpack.c.b16 %v7076, %v7074
          %v7427 = vpack.c.b16 %v7077, %v7075
          %v7428 = vpack.c.b16 %v7080, %v7078
          %v7429 = vpack.c.b16 %v7081, %v7079
          %v7430 = vpack.c.b16 %v7084, %v7082
          %v7431 = vpack.c.b16 %v7085, %v7083
          %v7432 = vpack.c.b16 %v7088, %v7086
          %v7433 = vpack.c.b16 %v7089, %v7087
          %v7434 = vpack.c.b16 %v7092, %v7090
          %v7435 = vpack.c.b16 %v7093, %v7091
          %v7436 = vpack.c.b16 %v7096, %v7094
          %v7437 = vpack.c.b16 %v7097, %v7095
          %v7438 = vpack.c.b16 %v7100, %v7098
          %v7439 = vpack.c.b16 %v7101, %v7099
          %v7440 = vpack.c.b16 %v7104, %v7102
          %v7441 = vpack.c.b16 %v7105, %v7103
          %v7442 = vpack.c.b16 %v7108, %v7106
          %v7443 = vpack.c.b16 %v7109, %v7107
          %v7444 = vpack.c.b16 %v7112, %v7110
          %v7445 = vpack.c.b16 %v7113, %v7111
          %v7446 = vpack.c.b16 %v7116, %v7114
          %v7447 = vpack.c.b16 %v7117, %v7115
          %v7448 = vpack.c.b16 %v7120, %v7118
          %v7449 = vpack.c.b16 %v7121, %v7119
          %v7450 = vpack.c.b16 %v7124, %v7122
          %v7451 = vpack.c.b16 %v7125, %v7123
          %v7452 = vpack.c.b16 %v7128, %v7126
          %v7453 = vpack.c.b16 %v7129, %v7127
          %v7454 = vpack.c.b16 %v7132, %v7130
          %v7455 = vpack.c.b16 %v7133, %v7131
          %v7456 = vpack.c.b16 %v7136, %v7134
          %v7457 = vpack.c.b16 %v7137, %v7135
          %v7458 = vpack.c.b16 %v7140, %v7138
          %v7459 = vpack.c.b16 %v7141, %v7139
          %v7460 = vpack.c.b16 %v7144, %v7142
          %v7461 = vpack.c.b16 %v7145, %v7143
          %v7462 = vpack.c.b16 %v7148, %v7146
          %v7463 = vpack.c.b16 %v7149, %v7147
          %v7464 = vpack.c.b16 %v7152, %v7150
          %v7465 = vpack.c.b16 %v7153, %v7151
          %v7466 = vpack.c.b16 %v7156, %v7154
          %v7467 = vpack.c.b16 %v7157, %v7155
          %v7468 = vpack.c.b16 %v7160, %v7158
          %v7469 = vpack.c.b16 %v7161, %v7159
          %v7470 = vpack.c.b16 %v7164, %v7162
          %v7471 = vpack.c.b16 %v7165, %v7163
          %v7472 = vpack.c.b16 %v7168, %v7166
          %v7473 = vpack.c.b16 %v7169, %v7167
          %v7474 = vpack.c.b16 %v7172, %v7170
          %v7475 = vpack.c.b16 %v7173, %v7171
          %v7476 = vpack.c.b16 %v7176, %v7174
          %v7477 = vpack.c.b16 %v7177, %v7175
          %v7478 = vpack.c.b16 %v7180, %v7178
          %v7479 = vpack.c.b16 %v7181, %v7179
          %v7480 = vpack.c.b16 %v7184, %v7182
          %v7481 = vpack.c.b16 %v7185, %v7183
          %v7482 = vpack.c.b16 %v7188, %v7186
          %v7483 = vpack.c.b16 %v7189, %v7187
          %v7484 = vpack.c.b16 %v7192, %v7190
          %v7485 = vpack.c.b16 %v7193, %v7191
          %v7486 = vpack.c.b16 %v7196, %v7194
          %v7487 = vpack.c.b16 %v7197, %v7195
          %v7488 = vpack.c.b16 %v7200, %v7198
          %v7489 = vpack.c.b16 %v7201, %v7199
          %v7490 = vpack.c.b16 %v7204, %v7202
          %v7491 = vpack.c.b16 %v7205, %v7203
          %v7492 = vpack.c.b16 %v7208, %v7206
          %v7493 = vpack.c.b16 %v7209, %v7207
          %v7494 = vpack.c.b16 %v7212, %v7210
          %v7495 = vpack.c.b16 %v7213, %v7211
          %v7496 = vpack.c.b16 %v7216, %v7214
          %v7497 = vpack.c.b16 %v7217, %v7215
          %v7498 = vpack.c.b16 %v7220, %v7218
          %v7499 = vpack.c.b16 %v7221, %v7219
          %v7500 = vpack.c.b16 %v7224, %v7222
          %v7501 = vpack.c.b16 %v7225, %v7223
          %v7502 = vpack.c.b16 %v7228, %v7226
          %v7503 = vpack.c.b16 %v7229, %v7227
          %v7504 = vpack.c.b16 %v7232, %v7230
          %v7505 = vpack.c.b16 %v7233, %v7231
          %v7506 = vpack.c.b16 %v7236, %v7234
          %v7507 = vpack.c.b16 %v7237, %v7235
          %v7508 = vpack.c.b16 %v7240, %v7238
          %v7509 = vpack.c.b16 %v7241, %v7239
          %v7510 = vpack.c.b16 %v7244, %v7242
          %v7511 = vpack.c.b16 %v7245, %v7243
          %v7512 = vpack.c.b16 %v7248, %v7246
          %v7513 = vpack.c.b16 %v7249, %v7247
          %v7514 = vpack.c.b16 %v7252, %v7250
          %v7515 = vpack.c.b16 %v7253, %v7251
          %v7516 = vpack.c.b16 %v7256, %v7254
          %v7517 = vpack.c.b16 %v7257, %v7255
          %v7518 = vpack.c.b16 %v7260, %v7258
          %v7519 = vpack.c.b16 %v7261, %v7259
          %v7520 = vpack.c.b16 %v7264, %v7262
          %v7521 = vpack.c.b16 %v7265, %v7263
          %v7522 = vpack.c.b16 %v7268, %v7266
          %v7523 = vpack.c.b16 %v7269, %v7267
          %v7524 = vpack.c.b16 %v7272, %v7270
          %v7525 = vpack.c.b16 %v7273, %v7271
          %v7526 = vpack.c.b16 %v7276, %v7274
          %v7527 = vpack.c.b16 %v7277, %v7275
          %v7528 = vpack.c.b16 %v7280, %v7278
          %v7529 = vpack.c.b16 %v7281, %v7279
          %v7530 = vpack.c.b16 %v7284, %v7282
          %v7531 = vpack.c.b16 %v7285, %v7283
          %v7532 = vpack.c.b16 %v7288, %v7286
          %v7533 = vpack.c.b16 %v7289, %v7287
          %v7534 = vpack.c.b16 %v7292, %v7290
          %v7535 = vpack.c.b16 %v7293, %v7291
          %v7536 = vpack.c.b16 %v7296, %v7294
          %v7537 = vpack.c.b16 %v7297, %v7295
          %v7538 = vpack.c.b16 %v7300, %v7298
          %v7539 = vpack.c.b16 %v7301, %v7299
          %v7540 = vpack.c.b16 %v7304, %v7302
          %v7541 = vpack.c.b16 %v7305, %v7303
          %v7542 = vpack.c.b16 %v7308, %v7306
          %v7543 = vpack.c.b16 %v7309, %v7307
          %v7544 = vpack.c.b16 %v7312, %v7310
          %v7545 = vpack.c.b16 %v7313, %v7311
          %v7546 = vpack.c.b16 %v7316, %v7314
          %v7547 = vpack.c.b16 %v7317, %v7315
          %v7548 = vpack.c.b16 %v7320, %v7318
          %v7549 = vpack.c.b16 %v7321, %v7319
          %v7550 = vpack.c.b16 %v7324, %v7322
          %v7551 = vpack.c.b16 %v7325, %v7323
          %v7552 = vpack.c.b16 %v7328, %v7326
          %v7553 = vpack.c.b16 %v7329, %v7327
          %7778 = vmatpush.bf16.msra.mxu0 %v7344
          %7779 = vmatpush.bf16.msra.mxu0 %v7342
          %7780 = vmatpush.bf16.msra.mxu0 %v7340
          %7781 = vmatpush.bf16.msra.mxu0 %v7338
          %7782 = vmatpush.bf16.msra.mxu0 %v7336
          %7783 = vmatpush.bf16.msra.mxu0 %v7334
          %7784 = vmatpush.bf16.msra.mxu0 %v7332
          %7785 = vmatpush.bf16.msra.mxu0 %v7330
          %7786 = vmatmul.bf16.gmra.mxu0 %v6420
          %v7787 = vpop.f32.mrf.mxu0
          %v7788 = vadd.f32 0.0, %v7787
          %v7789 = vpop.f32.mrf.mxu0
          %7790 = vdwg.mxu0
          %7791 = vmatpush.bf16.msra.mxu0 %v7360
          %7792 = vmatpush.bf16.msra.mxu0 %v7358
          %7793 = vmatpush.bf16.msra.mxu0 %v7356
          %7794 = vmatpush.bf16.msra.mxu0 %v7354
          %7795 = vmatpush.bf16.msra.mxu0 %v7352
          %7796 = vmatpush.bf16.msra.mxu0 %v7350
          %7797 = vmatpush.bf16.msra.mxu0 %v7348
          %7798 = vmatpush.bf16.msra.mxu0 %v7346
          %7799 = vmatmul.bf16.gmra.mxu0 %v6421
          %v7800 = vpop.f32.mrf.mxu0
          %v7801 = vadd.f32 %v7788, %v7800
          %v7802 = vpop.f32.mrf.mxu0
          %7803 = vdwg.mxu0
          %7804 = vmatpush.bf16.msra.mxu0 %v7376
          %7805 = vmatpush.bf16.msra.mxu0 %v7374
          %7806 = vmatpush.bf16.msra.mxu0 %v7372
          %7807 = vmatpush.bf16.msra.mxu0 %v7370
          %7808 = vmatpush.bf16.msra.mxu0 %v7368
          %7809 = vmatpush.bf16.msra.mxu0 %v7366
          %7810 = vmatpush.bf16.msra.mxu0 %v7364
          %7811 = vmatpush.bf16.msra.mxu0 %v7362
          %7812 = vmatmul.bf16.gmra.mxu0 %v6422
          %v7813 = vpop.f32.mrf.mxu0
          %v7814 = vadd.f32 %v7801, %v7813
          %v7815 = vpop.f32.mrf.mxu0
          %7816 = vdwg.mxu0
          %7817 = vmatpush.bf16.msra.mxu0 %v7392
          %7818 = vmatpush.bf16.msra.mxu0 %v7390
          %7819 = vmatpush.bf16.msra.mxu0 %v7388
          %7820 = vmatpush.bf16.msra.mxu0 %v7386
          %7821 = vmatpush.bf16.msra.mxu0 %v7384
          %7822 = vmatpush.bf16.msra.mxu0 %v7382
          %7823 = vmatpush.bf16.msra.mxu0 %v7380
          %7824 = vmatpush.bf16.msra.mxu0 %v7378
          %7825 = vmatmul.bf16.gmra.mxu0 %v6423
          %v7826 = vpop.f32.mrf.mxu0
          %v7827 = vadd.f32 %v7814, %v7826
          %v7828 = vpop.f32.mrf.mxu0
          %7829 = vdwg.mxu0
          %7830 = vmatpush.bf16.msra.mxu0 %v7408
          %7831 = vmatpush.bf16.msra.mxu0 %v7406
          %7832 = vmatpush.bf16.msra.mxu0 %v7404
          %7833 = vmatpush.bf16.msra.mxu0 %v7402
          %7834 = vmatpush.bf16.msra.mxu0 %v7400
          %7835 = vmatpush.bf16.msra.mxu0 %v7398
          %7836 = vmatpush.bf16.msra.mxu0 %v7396
          %7837 = vmatpush.bf16.msra.mxu0 %v7394
          %7838 = vmatmul.bf16.gmra.mxu0 %v6424
          %v7839 = vpop.f32.mrf.mxu0
          %v7840 = vadd.f32 %v7827, %v7839
          %v7841 = vpop.f32.mrf.mxu0
          %7842 = vdwg.mxu0
          %7843 = vmatpush.bf16.msra.mxu0 %v7424
          %7844 = vmatpush.bf16.msra.mxu0 %v7422
          %7845 = vmatpush.bf16.msra.mxu0 %v7420
          %7846 = vmatpush.bf16.msra.mxu0 %v7418
          %7847 = vmatpush.bf16.msra.mxu0 %v7416
          %7848 = vmatpush.bf16.msra.mxu0 %v7414
          %7849 = vmatpush.bf16.msra.mxu0 %v7412
          %7850 = vmatpush.bf16.msra.mxu0 %v7410
          %7851 = vmatmul.bf16.gmra.mxu0 %v6425
          %v7852 = vpop.f32.mrf.mxu0
          %v7853 = vadd.f32 %v7840, %v7852
          %v7854 = vpop.f32.mrf.mxu0
          %7855 = vdwg.mxu0
          %7856 = vmatpush.bf16.msra.mxu0 %v7440
          %7857 = vmatpush.bf16.msra.mxu0 %v7438
          %7858 = vmatpush.bf16.msra.mxu0 %v7436
          %7859 = vmatpush.bf16.msra.mxu0 %v7434
          %7860 = vmatpush.bf16.msra.mxu0 %v7432
          %7861 = vmatpush.bf16.msra.mxu0 %v7430
          %7862 = vmatpush.bf16.msra.mxu0 %v7428
          %7863 = vmatpush.bf16.msra.mxu0 %v7426
          %7864 = vmatmul.bf16.gmra.mxu0 %v6426
          %v7865 = vpop.f32.mrf.mxu0
          %v7866 = vadd.f32 %v7853, %v7865
          %v7867 = vpop.f32.mrf.mxu0
          %7868 = vdwg.mxu0
          %7869 = vmatpush.bf16.msra.mxu0 %v7456
          %7870 = vmatpush.bf16.msra.mxu0 %v7454
          %7871 = vmatpush.bf16.msra.mxu0 %v7452
          %7872 = vmatpush.bf16.msra.mxu0 %v7450
          %7873 = vmatpush.bf16.msra.mxu0 %v7448
          %7874 = vmatpush.bf16.msra.mxu0 %v7446
          %7875 = vmatpush.bf16.msra.mxu0 %v7444
          %7876 = vmatpush.bf16.msra.mxu0 %v7442
          %7877 = vmatmul.bf16.gmra.mxu0 %v6427
          %v7878 = vpop.f32.mrf.mxu0
          %v7879 = vadd.f32 %v7866, %v7878
          %v7880 = vpop.f32.mrf.mxu0
          %7881 = vdwg.mxu0
          %7882 = vmatpush.bf16.msra.mxu0 %v7472
          %7883 = vmatpush.bf16.msra.mxu0 %v7470
          %7884 = vmatpush.bf16.msra.mxu0 %v7468
          %7885 = vmatpush.bf16.msra.mxu0 %v7466
          %7886 = vmatpush.bf16.msra.mxu0 %v7464
          %7887 = vmatpush.bf16.msra.mxu0 %v7462
          %7888 = vmatpush.bf16.msra.mxu0 %v7460
          %7889 = vmatpush.bf16.msra.mxu0 %v7458
          %7890 = vmatmul.bf16.gmra.mxu0 %v6428
          %v7891 = vpop.f32.mrf.mxu0
          %v7892 = vadd.f32 %v7879, %v7891
          %v7893 = vpop.f32.mrf.mxu0
          %7894 = vdwg.mxu0
          %7895 = vmatpush.bf16.msra.mxu0 %v7488
          %7896 = vmatpush.bf16.msra.mxu0 %v7486
          %7897 = vmatpush.bf16.msra.mxu0 %v7484
          %7898 = vmatpush.bf16.msra.mxu0 %v7482
          %7899 = vmatpush.bf16.msra.mxu0 %v7480
          %7900 = vmatpush.bf16.msra.mxu0 %v7478
          %7901 = vmatpush.bf16.msra.mxu0 %v7476
          %7902 = vmatpush.bf16.msra.mxu0 %v7474
          %7903 = vmatmul.bf16.gmra.mxu0 %v6429
          %v7904 = vpop.f32.mrf.mxu0
          %v7905 = vadd.f32 %v7892, %v7904
          %v7906 = vpop.f32.mrf.mxu0
          %7907 = vdwg.mxu0
          %7908 = vmatpush.bf16.msra.mxu0 %v7504
          %7909 = vmatpush.bf16.msra.mxu0 %v7502
          %7910 = vmatpush.bf16.msra.mxu0 %v7500
          %7911 = vmatpush.bf16.msra.mxu0 %v7498
          %7912 = vmatpush.bf16.msra.mxu0 %v7496
          %7913 = vmatpush.bf16.msra.mxu0 %v7494
          %7914 = vmatpush.bf16.msra.mxu0 %v7492
          %7915 = vmatpush.bf16.msra.mxu0 %v7490
          %7916 = vmatmul.bf16.gmra.mxu0 %v6430
          %v7917 = vpop.f32.mrf.mxu0
          %v7918 = vadd.f32 %v7905, %v7917
          %v7919 = vpop.f32.mrf.mxu0
          %7920 = vdwg.mxu0
          %7921 = vmatpush.bf16.msra.mxu0 %v7520
          %7922 = vmatpush.bf16.msra.mxu0 %v7518
          %7923 = vmatpush.bf16.msra.mxu0 %v7516
          %7924 = vmatpush.bf16.msra.mxu0 %v7514
          %7925 = vmatpush.bf16.msra.mxu0 %v7512
          %7926 = vmatpush.bf16.msra.mxu0 %v7510
          %7927 = vmatpush.bf16.msra.mxu0 %v7508
          %7928 = vmatpush.bf16.msra.mxu0 %v7506
          %7929 = vmatmul.bf16.gmra.mxu0 %v6431
          %v7930 = vpop.f32.mrf.mxu0
          %v7931 = vadd.f32 %v7918, %v7930
          %v7932 = vpop.f32.mrf.mxu0
          %7933 = vdwg.mxu0
          %7934 = vmatpush.bf16.msra.mxu0 %v7536
          %7935 = vmatpush.bf16.msra.mxu0 %v7534
          %7936 = vmatpush.bf16.msra.mxu0 %v7532
          %7937 = vmatpush.bf16.msra.mxu0 %v7530
          %7938 = vmatpush.bf16.msra.mxu0 %v7528
          %7939 = vmatpush.bf16.msra.mxu0 %v7526
          %7940 = vmatpush.bf16.msra.mxu0 %v7524
          %7941 = vmatpush.bf16.msra.mxu0 %v7522
          %7942 = vmatmul.bf16.gmra.mxu0 %v6432
          %v7943 = vpop.f32.mrf.mxu0
          %v7944 = vadd.f32 %v7931, %v7943
          %v7945 = vpop.f32.mrf.mxu0
          %7946 = vdwg.mxu0
          %7947 = vmatpush.bf16.msra.mxu0 %v7552
          %7948 = vmatpush.bf16.msra.mxu0 %v7550
          %7949 = vmatpush.bf16.msra.mxu0 %v7548
          %7950 = vmatpush.bf16.msra.mxu0 %v7546
          %7951 = vmatpush.bf16.msra.mxu0 %v7544
          %7952 = vmatpush.bf16.msra.mxu0 %v7542
          %7953 = vmatpush.bf16.msra.mxu0 %v7540
          %7954 = vmatpush.bf16.msra.mxu0 %v7538
          %7955 = vmatmul.bf16.gmra.mxu0 %v6433
          %v7956 = vpop.f32.mrf.mxu0
          %v7957 = vadd.f32 %v7944, %v7956
          %v7958 = vpop.f32.mrf.mxu0
          %7959 = vdwg.mxu0
          %7960 = vmatpush.bf16.msra.mxu0 %v7345
          %7961 = vmatpush.bf16.msra.mxu0 %v7343
          %7962 = vmatpush.bf16.msra.mxu0 %v7341
          %7963 = vmatpush.bf16.msra.mxu0 %v7339
          %7964 = vmatpush.bf16.msra.mxu0 %v7337
          %7965 = vmatpush.bf16.msra.mxu0 %v7335
          %7966 = vmatpush.bf16.msra.mxu0 %v7333
          %7967 = vmatpush.bf16.msra.mxu0 %v7331
          %7968 = vmatmul.bf16.gmra.mxu0 %v6420
          %v7969 = vpop.f32.mrf.mxu0
          %v7970 = vadd.f32 0.0, %v7969
          %v7971 = vpop.f32.mrf.mxu0
          %7972 = vdwg.mxu0
          %7973 = vmatpush.bf16.msra.mxu0 %v7361
          %7974 = vmatpush.bf16.msra.mxu0 %v7359
          %7975 = vmatpush.bf16.msra.mxu0 %v7357
          %7976 = vmatpush.bf16.msra.mxu0 %v7355
          %7977 = vmatpush.bf16.msra.mxu0 %v7353
          %7978 = vmatpush.bf16.msra.mxu0 %v7351
          %7979 = vmatpush.bf16.msra.mxu0 %v7349
          %7980 = vmatpush.bf16.msra.mxu0 %v7347
          %7981 = vmatmul.bf16.gmra.mxu0 %v6421
          %v7982 = vpop.f32.mrf.mxu0
          %v7983 = vadd.f32 %v7970, %v7982
          %v7984 = vpop.f32.mrf.mxu0
          %7985 = vdwg.mxu0
          %7986 = vmatpush.bf16.msra.mxu0 %v7377
          %7987 = vmatpush.bf16.msra.mxu0 %v7375
          %7988 = vmatpush.bf16.msra.mxu0 %v7373
          %7989 = vmatpush.bf16.msra.mxu0 %v7371
          %7990 = vmatpush.bf16.msra.mxu0 %v7369
          %7991 = vmatpush.bf16.msra.mxu0 %v7367
          %7992 = vmatpush.bf16.msra.mxu0 %v7365
          %7993 = vmatpush.bf16.msra.mxu0 %v7363
          %7994 = vmatmul.bf16.gmra.mxu0 %v6422
          %v7995 = vpop.f32.mrf.mxu0
          %v7996 = vadd.f32 %v7983, %v7995
          %v7997 = vpop.f32.mrf.mxu0
          %7998 = vdwg.mxu0
          %7999 = vmatpush.bf16.msra.mxu0 %v7393
          %8000 = vmatpush.bf16.msra.mxu0 %v7391
          %8001 = vmatpush.bf16.msra.mxu0 %v7389
          %8002 = vmatpush.bf16.msra.mxu0 %v7387
          %8003 = vmatpush.bf16.msra.mxu0 %v7385
          %8004 = vmatpush.bf16.msra.mxu0 %v7383
          %8005 = vmatpush.bf16.msra.mxu0 %v7381
          %8006 = vmatpush.bf16.msra.mxu0 %v7379
          %8007 = vmatmul.bf16.gmra.mxu0 %v6423
          %v8008 = vpop.f32.mrf.mxu0
          %v8009 = vadd.f32 %v7996, %v8008
          %v8010 = vpop.f32.mrf.mxu0
          %8011 = vdwg.mxu0
          %8012 = vmatpush.bf16.msra.mxu0 %v7409
          %8013 = vmatpush.bf16.msra.mxu0 %v7407
          %8014 = vmatpush.bf16.msra.mxu0 %v7405
          %8015 = vmatpush.bf16.msra.mxu0 %v7403
          %8016 = vmatpush.bf16.msra.mxu0 %v7401
          %8017 = vmatpush.bf16.msra.mxu0 %v7399
          %8018 = vmatpush.bf16.msra.mxu0 %v7397
          %8019 = vmatpush.bf16.msra.mxu0 %v7395
          %8020 = vmatmul.bf16.gmra.mxu0 %v6424
          %v8021 = vpop.f32.mrf.mxu0
          %v8022 = vadd.f32 %v8009, %v8021
          %v8023 = vpop.f32.mrf.mxu0
          %8024 = vdwg.mxu0
          %8025 = vmatpush.bf16.msra.mxu0 %v7425
          %8026 = vmatpush.bf16.msra.mxu0 %v7423
          %8027 = vmatpush.bf16.msra.mxu0 %v7421
          %8028 = vmatpush.bf16.msra.mxu0 %v7419
          %8029 = vmatpush.bf16.msra.mxu0 %v7417
          %8030 = vmatpush.bf16.msra.mxu0 %v7415
          %8031 = vmatpush.bf16.msra.mxu0 %v7413
          %8032 = vmatpush.bf16.msra.mxu0 %v7411
          %8033 = vmatmul.bf16.gmra.mxu0 %v6425
          %v8034 = vpop.f32.mrf.mxu0
          %v8035 = vadd.f32 %v8022, %v8034
          %v8036 = vpop.f32.mrf.mxu0
          %8037 = vdwg.mxu0
          %8038 = vmatpush.bf16.msra.mxu0 %v7441
          %8039 = vmatpush.bf16.msra.mxu0 %v7439
          %8040 = vmatpush.bf16.msra.mxu0 %v7437
          %8041 = vmatpush.bf16.msra.mxu0 %v7435
          %8042 = vmatpush.bf16.msra.mxu0 %v7433
          %8043 = vmatpush.bf16.msra.mxu0 %v7431
          %8044 = vmatpush.bf16.msra.mxu0 %v7429
          %8045 = vmatpush.bf16.msra.mxu0 %v7427
          %8046 = vmatmul.bf16.gmra.mxu0 %v6426
          %v8047 = vpop.f32.mrf.mxu0
          %v8048 = vadd.f32 %v8035, %v8047
          %v8049 = vpop.f32.mrf.mxu0
          %8050 = vdwg.mxu0
          %8051 = vmatpush.bf16.msra.mxu0 %v7457
          %8052 = vmatpush.bf16.msra.mxu0 %v7455
          %8053 = vmatpush.bf16.msra.mxu0 %v7453
          %8054 = vmatpush.bf16.msra.mxu0 %v7451
          %8055 = vmatpush.bf16.msra.mxu0 %v7449
          %8056 = vmatpush.bf16.msra.mxu0 %v7447
          %8057 = vmatpush.bf16.msra.mxu0 %v7445
          %8058 = vmatpush.bf16.msra.mxu0 %v7443
          %8059 = vmatmul.bf16.gmra.mxu0 %v6427
          %v8060 = vpop.f32.mrf.mxu0
          %v8061 = vadd.f32 %v8048, %v8060
          %v8062 = vpop.f32.mrf.mxu0
          %8063 = vdwg.mxu0
          %8064 = vmatpush.bf16.msra.mxu0 %v7473
          %8065 = vmatpush.bf16.msra.mxu0 %v7471
          %8066 = vmatpush.bf16.msra.mxu0 %v7469
          %8067 = vmatpush.bf16.msra.mxu0 %v7467
          %8068 = vmatpush.bf16.msra.mxu0 %v7465
          %8069 = vmatpush.bf16.msra.mxu0 %v7463
          %8070 = vmatpush.bf16.msra.mxu0 %v7461
          %8071 = vmatpush.bf16.msra.mxu0 %v7459
          %8072 = vmatmul.bf16.gmra.mxu0 %v6428
          %v8073 = vpop.f32.mrf.mxu0
          %v8074 = vadd.f32 %v8061, %v8073
          %v8075 = vpop.f32.mrf.mxu0
          %8076 = vdwg.mxu0
          %8077 = vmatpush.bf16.msra.mxu0 %v7489
          %8078 = vmatpush.bf16.msra.mxu0 %v7487
          %8079 = vmatpush.bf16.msra.mxu0 %v7485
          %8080 = vmatpush.bf16.msra.mxu0 %v7483
          %8081 = vmatpush.bf16.msra.mxu0 %v7481
          %8082 = vmatpush.bf16.msra.mxu0 %v7479
          %8083 = vmatpush.bf16.msra.mxu0 %v7477
          %8084 = vmatpush.bf16.msra.mxu0 %v7475
          %8085 = vmatmul.bf16.gmra.mxu0 %v6429
          %v8086 = vpop.f32.mrf.mxu0
          %v8087 = vadd.f32 %v8074, %v8086
          %v8088 = vpop.f32.mrf.mxu0
          %8089 = vdwg.mxu0
          %8090 = vmatpush.bf16.msra.mxu0 %v7505
          %8091 = vmatpush.bf16.msra.mxu0 %v7503
          %8092 = vmatpush.bf16.msra.mxu0 %v7501
          %8093 = vmatpush.bf16.msra.mxu0 %v7499
          %8094 = vmatpush.bf16.msra.mxu0 %v7497
          %8095 = vmatpush.bf16.msra.mxu0 %v7495
          %8096 = vmatpush.bf16.msra.mxu0 %v7493
          %8097 = vmatpush.bf16.msra.mxu0 %v7491
          %8098 = vmatmul.bf16.gmra.mxu0 %v6430
          %v8099 = vpop.f32.mrf.mxu0
          %v8100 = vadd.f32 %v8087, %v8099
          %v8101 = vpop.f32.mrf.mxu0
          %8102 = vdwg.mxu0
          %8103 = vmatpush.bf16.msra.mxu0 %v7521
          %8104 = vmatpush.bf16.msra.mxu0 %v7519
          %8105 = vmatpush.bf16.msra.mxu0 %v7517
          %8106 = vmatpush.bf16.msra.mxu0 %v7515
          %8107 = vmatpush.bf16.msra.mxu0 %v7513
          %8108 = vmatpush.bf16.msra.mxu0 %v7511
          %8109 = vmatpush.bf16.msra.mxu0 %v7509
          %8110 = vmatpush.bf16.msra.mxu0 %v7507
          %8111 = vmatmul.bf16.gmra.mxu0 %v6431
          %v8112 = vpop.f32.mrf.mxu0
          %v8113 = vadd.f32 %v8100, %v8112
          %v8114 = vpop.f32.mrf.mxu0
          %8115 = vdwg.mxu0
          %8116 = vmatpush.bf16.msra.mxu0 %v7537
          %8117 = vmatpush.bf16.msra.mxu0 %v7535
          %8118 = vmatpush.bf16.msra.mxu0 %v7533
          %8119 = vmatpush.bf16.msra.mxu0 %v7531
          %8120 = vmatpush.bf16.msra.mxu0 %v7529
          %8121 = vmatpush.bf16.msra.mxu0 %v7527
          %8122 = vmatpush.bf16.msra.mxu0 %v7525
          %8123 = vmatpush.bf16.msra.mxu0 %v7523
          %8124 = vmatmul.bf16.gmra.mxu0 %v6432
          %v8125 = vpop.f32.mrf.mxu0
          %v8126 = vadd.f32 %v8113, %v8125
          %v8127 = vpop.f32.mrf.mxu0
          %8128 = vdwg.mxu0
          %8129 = vmatpush.bf16.msra.mxu0 %v7553
          %8130 = vmatpush.bf16.msra.mxu0 %v7551
          %8131 = vmatpush.bf16.msra.mxu0 %v7549
          %8132 = vmatpush.bf16.msra.mxu0 %v7547
          %8133 = vmatpush.bf16.msra.mxu0 %v7545
          %8134 = vmatpush.bf16.msra.mxu0 %v7543
          %8135 = vmatpush.bf16.msra.mxu0 %v7541
          %8136 = vmatpush.bf16.msra.mxu0 %v7539
          %8137 = vmatmul.bf16.gmra.mxu0 %v6433
          %v8138 = vpop.f32.mrf.mxu0
          %v8139 = vadd.f32 %v8126, %v8138
          %v8140 = vpop.f32.mrf.mxu0
          %8141 = vdwg.mxu0
          %v8142 = vmax.f32 %v7957, 0.0
          %v8143 = vmax.f32 %v8139, 0.0
          %v8144 = vpack.c.bf16 %v8142, %v8142
          %v8145 = vpack.c.bf16 %v8143, %v8143
          %v8146 = vld [vmem:[%s2] sm:$0xff]
          %v8147 = vld [vmem:[%s2 + $0x8] sm:$0xff]
          %v8148 = vld [vmem:[%s2 + $0x10] sm:$0xff]
          %v8149 = vld [vmem:[%s2 + $0x18] sm:$0xff]
          %v8150 = vld [vmem:[%s2 + $0x20] sm:$0xff]
          %v8151 = vld [vmem:[%s2 + $0x28] sm:$0xff]
          %v8152 = vld [vmem:[%s2 + $0x30] sm:$0xff]
          %v8153 = vld [vmem:[%s2 + $0x38] sm:$0xff]
          %v8154 = vld [vmem:[%s2 + $0x40] sm:$0xff]
          %v8155 = vld [vmem:[%s2 + $0x48] sm:$0xff]
          %v8156 = vld [vmem:[%s2 + $0x50] sm:$0xff]
          %v8157 = vld [vmem:[%s2 + $0x58] sm:$0xff]
          %v8158 = vld [vmem:[%s2 + $0x60] sm:$0xff]
          %v8159 = vld [vmem:[%s2 + $0x68] sm:$0xff]
          %v8160 = vld [vmem:[%s2 + $0x70] sm:$0xff]
          %v8161 = vld [vmem:[%s2 + $0x78] sm:$0xff]
          %v8162 = vld [vmem:[%s2 + $0x80] sm:$0xff]
          %v8163 = vld [vmem:[%s2 + $0x88] sm:$0xff]
          %v8164 = vld [vmem:[%s2 + $0x90] sm:$0xff]
          %v8165 = vld [vmem:[%s2 + $0x98] sm:$0xff]
          %v8166 = vld [vmem:[%s2 + $0xa0] sm:$0xff]
          %v8167 = vld [vmem:[%s2 + $0xa8] sm:$0xff]
          %v8168 = vld [vmem:[%s2 + $0xb0] sm:$0xff]
          %v8169 = vld [vmem:[%s2 + $0xb8] sm:$0xff]
          %v8170 = vld [vmem:[%s2 + $0xc0] sm:$0xff]
          %v8171 = vld [vmem:[%s2 + $0xc8] sm:$0xff]
          %v8172 = vld [vmem:[%s2 + $0xd0] sm:$0xff]
          %v8173 = vld [vmem:[%s2 + $0xd8] sm:$0xff]
          %v8174 = vld [vmem:[%s2 + $0xe0] sm:$0xff]
          %v8175 = vld [vmem:[%s2 + $0xe8] sm:$0xff]
          %v8176 = vld [vmem:[%s2 + $0xf0] sm:$0xff]
          %v8177 = vld [vmem:[%s2 + $0xf8] sm:$0xff]
          %v8178 = vld [vmem:[%s2 + $0x100] sm:$0xff]
          %v8179 = vld [vmem:[%s2 + $0x108] sm:$0xff]
          %v8180 = vld [vmem:[%s2 + $0x110] sm:$0xff]
          %v8181 = vld [vmem:[%s2 + $0x118] sm:$0xff]
          %v8182 = vld [vmem:[%s2 + $0x120] sm:$0xff]
          %v8183 = vld [vmem:[%s2 + $0x128] sm:$0xff]
          %v8184 = vld [vmem:[%s2 + $0x130] sm:$0xff]
          %v8185 = vld [vmem:[%s2 + $0x138] sm:$0xff]
          %v8186 = vld [vmem:[%s2 + $0x140] sm:$0xff]
          %v8187 = vld [vmem:[%s2 + $0x148] sm:$0xff]
          %v8188 = vld [vmem:[%s2 + $0x150] sm:$0xff]
          %v8189 = vld [vmem:[%s2 + $0x158] sm:$0xff]
          %v8190 = vld [vmem:[%s2 + $0x160] sm:$0xff]
          %v8191 = vld [vmem:[%s2 + $0x168] sm:$0xff]
          %v8192 = vld [vmem:[%s2 + $0x170] sm:$0xff]
          %v8193 = vld [vmem:[%s2 + $0x178] sm:$0xff]
          %v8194 = vld [vmem:[%s2 + $0x180] sm:$0xff]
          %v8195 = vld [vmem:[%s2 + $0x188] sm:$0xff]
          %v8196 = vld [vmem:[%s2 + $0x190] sm:$0xff]
          %v8197 = vld [vmem:[%s2 + $0x198] sm:$0xff]
          %v8198 = vld [vmem:[%s2 + $0x1a0] sm:$0xff]
          %v8199 = vld [vmem:[%s2 + $0x1a8] sm:$0xff]
          %v8200 = vld [vmem:[%s2 + $0x1b0] sm:$0xff]
          %v8201 = vld [vmem:[%s2 + $0x1b8] sm:$0xff]
          %v8202 = vld [vmem:[%s2 + $0x1c0] sm:$0xff]
          %v8203 = vld [vmem:[%s2 + $0x1c8] sm:$0xff]
          %v8204 = vld [vmem:[%s2 + $0x1d0] sm:$0xff]
          %v8205 = vld [vmem:[%s2 + $0x1d8] sm:$0xff]
          %v8206 = vld [vmem:[%s2 + $0x1e0] sm:$0xff]
          %v8207 = vld [vmem:[%s2 + $0x1e8] sm:$0xff]
          %v8208 = vld [vmem:[%s2 + $0x1f0] sm:$0xff]
          %v8209 = vld [vmem:[%s2 + $0x1f8] sm:$0xff]
          %v8210 = vld [vmem:[%s2 + $0x200] sm:$0xff]
          %v8211 = vld [vmem:[%s2 + $0x208] sm:$0xff]
          %v8212 = vld [vmem:[%s2 + $0x210] sm:$0xff]
          %v8213 = vld [vmem:[%s2 + $0x218] sm:$0xff]
          %v8214 = vld [vmem:[%s2 + $0x220] sm:$0xff]
          %v8215 = vld [vmem:[%s2 + $0x228] sm:$0xff]
          %v8216 = vld [vmem:[%s2 + $0x230] sm:$0xff]
          %v8217 = vld [vmem:[%s2 + $0x238] sm:$0xff]
          %v8218 = vld [vmem:[%s2 + $0x240] sm:$0xff]
          %v8219 = vld [vmem:[%s2 + $0x248] sm:$0xff]
          %v8220 = vld [vmem:[%s2 + $0x250] sm:$0xff]
          %v8221 = vld [vmem:[%s2 + $0x258] sm:$0xff]
          %v8222 = vld [vmem:[%s2 + $0x260] sm:$0xff]
          %v8223 = vld [vmem:[%s2 + $0x268] sm:$0xff]
          %v8224 = vld [vmem:[%s2 + $0x270] sm:$0xff]
          %v8225 = vld [vmem:[%s2 + $0x278] sm:$0xff]
          %v8226 = vld [vmem:[%s2 + $0x280] sm:$0xff]
          %v8227 = vld [vmem:[%s2 + $0x288] sm:$0xff]
          %v8228 = vld [vmem:[%s2 + $0x290] sm:$0xff]
          %v8229 = vld [vmem:[%s2 + $0x298] sm:$0xff]
          %v8230 = vld [vmem:[%s2 + $0x2a0] sm:$0xff]
          %v8231 = vld [vmem:[%s2 + $0x2a8] sm:$0xff]
          %v8232 = vld [vmem:[%s2 + $0x2b0] sm:$0xff]
          %v8233 = vld [vmem:[%s2 + $0x2b8] sm:$0xff]
          %v8234 = vld [vmem:[%s2 + $0x2c0] sm:$0xff]
          %v8235 = vld [vmem:[%s2 + $0x2c8] sm:$0xff]
          %v8236 = vld [vmem:[%s2 + $0x2d0] sm:$0xff]
          %v8237 = vld [vmem:[%s2 + $0x2d8] sm:$0xff]
          %v8238 = vld [vmem:[%s2 + $0x2e0] sm:$0xff]
          %v8239 = vld [vmem:[%s2 + $0x2e8] sm:$0xff]
          %v8240 = vld [vmem:[%s2 + $0x2f0] sm:$0xff]
          %v8241 = vld [vmem:[%s2 + $0x2f8] sm:$0xff]
          %v8242 = vld [vmem:[%s2 + $0x300] sm:$0xff]
          %v8243 = vld [vmem:[%s2 + $0x308] sm:$0xff]
          %v8244 = vld [vmem:[%s2 + $0x310] sm:$0xff]
          %v8245 = vld [vmem:[%s2 + $0x318] sm:$0xff]
          %v8246 = vld [vmem:[%s2 + $0x320] sm:$0xff]
          %v8247 = vld [vmem:[%s2 + $0x328] sm:$0xff]
          %v8248 = vld [vmem:[%s2 + $0x330] sm:$0xff]
          %v8249 = vld [vmem:[%s2 + $0x338] sm:$0xff]
          %v8250 = vld [vmem:[%s2 + $0x340] sm:$0xff]
          %v8251 = vld [vmem:[%s2 + $0x348] sm:$0xff]
          %v8252 = vld [vmem:[%s2 + $0x350] sm:$0xff]
          %v8253 = vld [vmem:[%s2 + $0x358] sm:$0xff]
          %v8254 = vld [vmem:[%s2 + $0x360] sm:$0xff]
          %v8255 = vld [vmem:[%s2 + $0x368] sm:$0xff]
          %v8256 = vld [vmem:[%s2 + $0x370] sm:$0xff]
          %v8257 = vld [vmem:[%s2 + $0x378] sm:$0xff]
          %v8258 = vld [vmem:[%s2 + $0x380] sm:$0xff]
          %v8259 = vld [vmem:[%s2 + $0x388] sm:$0xff]
          %v8260 = vld [vmem:[%s2 + $0x390] sm:$0xff]
          %v8261 = vld [vmem:[%s2 + $0x398] sm:$0xff]
          %v8262 = vld [vmem:[%s2 + $0x3a0] sm:$0xff]
          %v8263 = vld [vmem:[%s2 + $0x3a8] sm:$0xff]
          %v8264 = vld [vmem:[%s2 + $0x3b0] sm:$0xff]
          %v8265 = vld [vmem:[%s2 + $0x3b8] sm:$0xff]
          %v8266 = vld [vmem:[%s2 + $0x3c0] sm:$0xff]
          %v8267 = vld [vmem:[%s2 + $0x3c8] sm:$0xff]
          %v8268 = vld [vmem:[%s2 + $0x3d0] sm:$0xff]
          %v8269 = vld [vmem:[%s2 + $0x3d8] sm:$0xff]
          %v8270 = vld [vmem:[%s2 + $0x3e0] sm:$0xff]
          %v8271 = vld [vmem:[%s2 + $0x3e8] sm:$0xff]
          %v8272 = vld [vmem:[%s2 + $0x3f0] sm:$0xff]
          %v8273 = vld [vmem:[%s2 + $0x3f8] sm:$0xff]
          %v8274 = vld [vmem:[%s2 + $0x400] sm:$0xff]
          %v8275 = vld [vmem:[%s2 + $0x408] sm:$0xff]
          %v8276 = vld [vmem:[%s2 + $0x410] sm:$0xff]
          %v8277 = vld [vmem:[%s2 + $0x418] sm:$0xff]
          %v8278 = vld [vmem:[%s2 + $0x420] sm:$0xff]
          %v8279 = vld [vmem:[%s2 + $0x428] sm:$0xff]
          %v8280 = vld [vmem:[%s2 + $0x430] sm:$0xff]
          %v8281 = vld [vmem:[%s2 + $0x438] sm:$0xff]
          %v8282 = vld [vmem:[%s2 + $0x440] sm:$0xff]
          %v8283 = vld [vmem:[%s2 + $0x448] sm:$0xff]
          %v8284 = vld [vmem:[%s2 + $0x450] sm:$0xff]
          %v8285 = vld [vmem:[%s2 + $0x458] sm:$0xff]
          %v8286 = vld [vmem:[%s2 + $0x460] sm:$0xff]
          %v8287 = vld [vmem:[%s2 + $0x468] sm:$0xff]
          %v8288 = vld [vmem:[%s2 + $0x470] sm:$0xff]
          %v8289 = vld [vmem:[%s2 + $0x478] sm:$0xff]
          %v8290 = vld [vmem:[%s2 + $0x480] sm:$0xff]
          %v8291 = vld [vmem:[%s2 + $0x488] sm:$0xff]
          %v8292 = vld [vmem:[%s2 + $0x490] sm:$0xff]
          %v8293 = vld [vmem:[%s2 + $0x498] sm:$0xff]
          %v8294 = vld [vmem:[%s2 + $0x4a0] sm:$0xff]
          %v8295 = vld [vmem:[%s2 + $0x4a8] sm:$0xff]
          %v8296 = vld [vmem:[%s2 + $0x4b0] sm:$0xff]
          %v8297 = vld [vmem:[%s2 + $0x4b8] sm:$0xff]
          %v8298 = vld [vmem:[%s2 + $0x4c0] sm:$0xff]
          %v8299 = vld [vmem:[%s2 + $0x4c8] sm:$0xff]
          %v8300 = vld [vmem:[%s2 + $0x4d0] sm:$0xff]
          %v8301 = vld [vmem:[%s2 + $0x4d8] sm:$0xff]
          %v8302 = vld [vmem:[%s2 + $0x4e0] sm:$0xff]
          %v8303 = vld [vmem:[%s2 + $0x4e8] sm:$0xff]
          %v8304 = vld [vmem:[%s2 + $0x4f0] sm:$0xff]
          %v8305 = vld [vmem:[%s2 + $0x4f8] sm:$0xff]
          %v8306 = vld [vmem:[%s2 + $0x500] sm:$0xff]
          %v8307 = vld [vmem:[%s2 + $0x508] sm:$0xff]
          %v8308 = vld [vmem:[%s2 + $0x510] sm:$0xff]
          %v8309 = vld [vmem:[%s2 + $0x518] sm:$0xff]
          %v8310 = vld [vmem:[%s2 + $0x520] sm:$0xff]
          %v8311 = vld [vmem:[%s2 + $0x528] sm:$0xff]
          %v8312 = vld [vmem:[%s2 + $0x530] sm:$0xff]
          %v8313 = vld [vmem:[%s2 + $0x538] sm:$0xff]
          %v8314 = vld [vmem:[%s2 + $0x540] sm:$0xff]
          %v8315 = vld [vmem:[%s2 + $0x548] sm:$0xff]
          %v8316 = vld [vmem:[%s2 + $0x550] sm:$0xff]
          %v8317 = vld [vmem:[%s2 + $0x558] sm:$0xff]
          %v8318 = vld [vmem:[%s2 + $0x560] sm:$0xff]
          %v8319 = vld [vmem:[%s2 + $0x568] sm:$0xff]
          %v8320 = vld [vmem:[%s2 + $0x570] sm:$0xff]
          %v8321 = vld [vmem:[%s2 + $0x578] sm:$0xff]
          %v8322 = vld [vmem:[%s2 + $0x580] sm:$0xff]
          %v8323 = vld [vmem:[%s2 + $0x588] sm:$0xff]
          %v8324 = vld [vmem:[%s2 + $0x590] sm:$0xff]
          %v8325 = vld [vmem:[%s2 + $0x598] sm:$0xff]
          %v8326 = vld [vmem:[%s2 + $0x5a0] sm:$0xff]
          %v8327 = vld [vmem:[%s2 + $0x5a8] sm:$0xff]
          %v8328 = vld [vmem:[%s2 + $0x5b0] sm:$0xff]
          %v8329 = vld [vmem:[%s2 + $0x5b8] sm:$0xff]
          %v8330 = vld [vmem:[%s2 + $0x5c0] sm:$0xff]
          %v8331 = vld [vmem:[%s2 + $0x5c8] sm:$0xff]
          %v8332 = vld [vmem:[%s2 + $0x5d0] sm:$0xff]
          %v8333 = vld [vmem:[%s2 + $0x5d8] sm:$0xff]
          %v8334 = vld [vmem:[%s2 + $0x5e0] sm:$0xff]
          %v8335 = vld [vmem:[%s2 + $0x5e8] sm:$0xff]
          %v8336 = vld [vmem:[%s2 + $0x5f0] sm:$0xff]
          %v8337 = vld [vmem:[%s2 + $0x5f8] sm:$0xff]
          %v8338 = vld [vmem:[%s2 + $0x600] sm:$0xff]
          %v8339 = vld [vmem:[%s2 + $0x608] sm:$0xff]
          %v8340 = vld [vmem:[%s2 + $0x610] sm:$0xff]
          %v8341 = vld [vmem:[%s2 + $0x618] sm:$0xff]
          %v8342 = vld [vmem:[%s2 + $0x620] sm:$0xff]
          %v8343 = vld [vmem:[%s2 + $0x628] sm:$0xff]
          %v8344 = vld [vmem:[%s2 + $0x630] sm:$0xff]
          %v8345 = vld [vmem:[%s2 + $0x638] sm:$0xff]
          %v8346 = vld [vmem:[%s2 + $0x640] sm:$0xff]
          %v8347 = vld [vmem:[%s2 + $0x648] sm:$0xff]
          %v8348 = vld [vmem:[%s2 + $0x650] sm:$0xff]
          %v8349 = vld [vmem:[%s2 + $0x658] sm:$0xff]
          %v8350 = vld [vmem:[%s2 + $0x660] sm:$0xff]
          %v8351 = vld [vmem:[%s2 + $0x668] sm:$0xff]
          %v8352 = vld [vmem:[%s2 + $0x670] sm:$0xff]
          %v8353 = vld [vmem:[%s2 + $0x678] sm:$0xff]
          %v8354 = vld [vmem:[%s2 + $0x680] sm:$0xff]
          %v8355 = vld [vmem:[%s2 + $0x688] sm:$0xff]
          %v8356 = vld [vmem:[%s2 + $0x690] sm:$0xff]
          %v8357 = vld [vmem:[%s2 + $0x698] sm:$0xff]
          %v8358 = vld [vmem:[%s2 + $0x6a0] sm:$0xff]
          %v8359 = vld [vmem:[%s2 + $0x6a8] sm:$0xff]
          %v8360 = vld [vmem:[%s2 + $0x6b0] sm:$0xff]
          %v8361 = vld [vmem:[%s2 + $0x6b8] sm:$0xff]
          %v8362 = vld [vmem:[%s2 + $0x6c0] sm:$0xff]
          %v8363 = vld [vmem:[%s2 + $0x6c8] sm:$0xff]
          %v8364 = vld [vmem:[%s2 + $0x6d0] sm:$0xff]
          %v8365 = vld [vmem:[%s2 + $0x6d8] sm:$0xff]
          %v8366 = vld [vmem:[%s2 + $0x6e0] sm:$0xff]
          %v8367 = vld [vmem:[%s2 + $0x6e8] sm:$0xff]
          %v8368 = vld [vmem:[%s2 + $0x6f0] sm:$0xff]
          %v8369 = vld [vmem:[%s2 + $0x6f8] sm:$0xff]
          %v8594 = vunpack.c.l.b16 %v8146
          %v8595 = vunpack.c.h.b16 %v8146
          %v8596 = vunpack.c.l.b16 %v8147
          %v8597 = vunpack.c.h.b16 %v8147
          %v8598 = vunpack.c.l.b16 %v8148
          %v8599 = vunpack.c.h.b16 %v8148
          %v8600 = vunpack.c.l.b16 %v8149
          %v8601 = vunpack.c.h.b16 %v8149
          %v8602 = vunpack.c.l.b16 %v8150
          %v8603 = vunpack.c.h.b16 %v8150
          %v8604 = vunpack.c.l.b16 %v8151
          %v8605 = vunpack.c.h.b16 %v8151
          %v8606 = vunpack.c.l.b16 %v8152
          %v8607 = vunpack.c.h.b16 %v8152
          %v8608 = vunpack.c.l.b16 %v8153
          %v8609 = vunpack.c.h.b16 %v8153
          %v8610 = vunpack.c.l.b16 %v8154
          %v8611 = vunpack.c.h.b16 %v8154
          %v8612 = vunpack.c.l.b16 %v8155
          %v8613 = vunpack.c.h.b16 %v8155
          %v8614 = vunpack.c.l.b16 %v8156
          %v8615 = vunpack.c.h.b16 %v8156
          %v8616 = vunpack.c.l.b16 %v8157
          %v8617 = vunpack.c.h.b16 %v8157
          %v8618 = vunpack.c.l.b16 %v8158
          %v8619 = vunpack.c.h.b16 %v8158
          %v8620 = vunpack.c.l.b16 %v8159
          %v8621 = vunpack.c.h.b16 %v8159
          %v8622 = vunpack.c.l.b16 %v8160
          %v8623 = vunpack.c.h.b16 %v8160
          %v8624 = vunpack.c.l.b16 %v8161
          %v8625 = vunpack.c.h.b16 %v8161
          %v8626 = vunpack.c.l.b16 %v8162
          %v8627 = vunpack.c.h.b16 %v8162
          %v8628 = vunpack.c.l.b16 %v8163
          %v8629 = vunpack.c.h.b16 %v8163
          %v8630 = vunpack.c.l.b16 %v8164
          %v8631 = vunpack.c.h.b16 %v8164
          %v8632 = vunpack.c.l.b16 %v8165
          %v8633 = vunpack.c.h.b16 %v8165
          %v8634 = vunpack.c.l.b16 %v8166
          %v8635 = vunpack.c.h.b16 %v8166
          %v8636 = vunpack.c.l.b16 %v8167
          %v8637 = vunpack.c.h.b16 %v8167
          %v8638 = vunpack.c.l.b16 %v8168
          %v8639 = vunpack.c.h.b16 %v8168
          %v8640 = vunpack.c.l.b16 %v8169
          %v8641 = vunpack.c.h.b16 %v8169
          %v8642 = vunpack.c.l.b16 %v8170
          %v8643 = vunpack.c.h.b16 %v8170
          %v8644 = vunpack.c.l.b16 %v8171
          %v8645 = vunpack.c.h.b16 %v8171
          %v8646 = vunpack.c.l.b16 %v8172
          %v8647 = vunpack.c.h.b16 %v8172
          %v8648 = vunpack.c.l.b16 %v8173
          %v8649 = vunpack.c.h.b16 %v8173
          %v8650 = vunpack.c.l.b16 %v8174
          %v8651 = vunpack.c.h.b16 %v8174
          %v8652 = vunpack.c.l.b16 %v8175
          %v8653 = vunpack.c.h.b16 %v8175
          %v8654 = vunpack.c.l.b16 %v8176
          %v8655 = vunpack.c.h.b16 %v8176
          %v8656 = vunpack.c.l.b16 %v8177
          %v8657 = vunpack.c.h.b16 %v8177
          %v8658 = vunpack.c.l.b16 %v8178
          %v8659 = vunpack.c.h.b16 %v8178
          %v8660 = vunpack.c.l.b16 %v8179
          %v8661 = vunpack.c.h.b16 %v8179
          %v8662 = vunpack.c.l.b16 %v8180
          %v8663 = vunpack.c.h.b16 %v8180
          %v8664 = vunpack.c.l.b16 %v8181
          %v8665 = vunpack.c.h.b16 %v8181
          %v8666 = vunpack.c.l.b16 %v8182
          %v8667 = vunpack.c.h.b16 %v8182
          %v8668 = vunpack.c.l.b16 %v8183
          %v8669 = vunpack.c.h.b16 %v8183
          %v8670 = vunpack.c.l.b16 %v8184
          %v8671 = vunpack.c.h.b16 %v8184
          %v8672 = vunpack.c.l.b16 %v8185
          %v8673 = vunpack.c.h.b16 %v8185
          %v8674 = vunpack.c.l.b16 %v8186
          %v8675 = vunpack.c.h.b16 %v8186
          %v8676 = vunpack.c.l.b16 %v8187
          %v8677 = vunpack.c.h.b16 %v8187
          %v8678 = vunpack.c.l.b16 %v8188
          %v8679 = vunpack.c.h.b16 %v8188
          %v8680 = vunpack.c.l.b16 %v8189
          %v8681 = vunpack.c.h.b16 %v8189
          %v8682 = vunpack.c.l.b16 %v8190
          %v8683 = vunpack.c.h.b16 %v8190
          %v8684 = vunpack.c.l.b16 %v8191
          %v8685 = vunpack.c.h.b16 %v8191
          %v8686 = vunpack.c.l.b16 %v8192
          %v8687 = vunpack.c.h.b16 %v8192
          %v8688 = vunpack.c.l.b16 %v8193
          %v8689 = vunpack.c.h.b16 %v8193
          %v8690 = vunpack.c.l.b16 %v8194
          %v8691 = vunpack.c.h.b16 %v8194
          %v8692 = vunpack.c.l.b16 %v8195
          %v8693 = vunpack.c.h.b16 %v8195
          %v8694 = vunpack.c.l.b16 %v8196
          %v8695 = vunpack.c.h.b16 %v8196
          %v8696 = vunpack.c.l.b16 %v8197
          %v8697 = vunpack.c.h.b16 %v8197
          %v8698 = vunpack.c.l.b16 %v8198
          %v8699 = vunpack.c.h.b16 %v8198
          %v8700 = vunpack.c.l.b16 %v8199
          %v8701 = vunpack.c.h.b16 %v8199
          %v8702 = vunpack.c.l.b16 %v8200
          %v8703 = vunpack.c.h.b16 %v8200
          %v8704 = vunpack.c.l.b16 %v8201
          %v8705 = vunpack.c.h.b16 %v8201
          %v8706 = vunpack.c.l.b16 %v8202
          %v8707 = vunpack.c.h.b16 %v8202
          %v8708 = vunpack.c.l.b16 %v8203
          %v8709 = vunpack.c.h.b16 %v8203
          %v8710 = vunpack.c.l.b16 %v8204
          %v8711 = vunpack.c.h.b16 %v8204
          %v8712 = vunpack.c.l.b16 %v8205
          %v8713 = vunpack.c.h.b16 %v8205
          %v8714 = vunpack.c.l.b16 %v8206
          %v8715 = vunpack.c.h.b16 %v8206
          %v8716 = vunpack.c.l.b16 %v8207
          %v8717 = vunpack.c.h.b16 %v8207
          %v8718 = vunpack.c.l.b16 %v8208
          %v8719 = vunpack.c.h.b16 %v8208
          %v8720 = vunpack.c.l.b16 %v8209
          %v8721 = vunpack.c.h.b16 %v8209
          %v8722 = vunpack.c.l.b16 %v8210
          %v8723 = vunpack.c.h.b16 %v8210
          %v8724 = vunpack.c.l.b16 %v8211
          %v8725 = vunpack.c.h.b16 %v8211
          %v8726 = vunpack.c.l.b16 %v8212
          %v8727 = vunpack.c.h.b16 %v8212
          %v8728 = vunpack.c.l.b16 %v8213
          %v8729 = vunpack.c.h.b16 %v8213
          %v8730 = vunpack.c.l.b16 %v8214
          %v8731 = vunpack.c.h.b16 %v8214
          %v8732 = vunpack.c.l.b16 %v8215
          %v8733 = vunpack.c.h.b16 %v8215
          %v8734 = vunpack.c.l.b16 %v8216
          %v8735 = vunpack.c.h.b16 %v8216
          %v8736 = vunpack.c.l.b16 %v8217
          %v8737 = vunpack.c.h.b16 %v8217
          %v8738 = vunpack.c.l.b16 %v8218
          %v8739 = vunpack.c.h.b16 %v8218
          %v8740 = vunpack.c.l.b16 %v8219
          %v8741 = vunpack.c.h.b16 %v8219
          %v8742 = vunpack.c.l.b16 %v8220
          %v8743 = vunpack.c.h.b16 %v8220
          %v8744 = vunpack.c.l.b16 %v8221
          %v8745 = vunpack.c.h.b16 %v8221
          %v8746 = vunpack.c.l.b16 %v8222
          %v8747 = vunpack.c.h.b16 %v8222
          %v8748 = vunpack.c.l.b16 %v8223
          %v8749 = vunpack.c.h.b16 %v8223
          %v8750 = vunpack.c.l.b16 %v8224
          %v8751 = vunpack.c.h.b16 %v8224
          %v8752 = vunpack.c.l.b16 %v8225
          %v8753 = vunpack.c.h.b16 %v8225
          %v8754 = vunpack.c.l.b16 %v8226
          %v8755 = vunpack.c.h.b16 %v8226
          %v8756 = vunpack.c.l.b16 %v8227
          %v8757 = vunpack.c.h.b16 %v8227
          %v8758 = vunpack.c.l.b16 %v8228
          %v8759 = vunpack.c.h.b16 %v8228
          %v8760 = vunpack.c.l.b16 %v8229
          %v8761 = vunpack.c.h.b16 %v8229
          %v8762 = vunpack.c.l.b16 %v8230
          %v8763 = vunpack.c.h.b16 %v8230
          %v8764 = vunpack.c.l.b16 %v8231
          %v8765 = vunpack.c.h.b16 %v8231
          %v8766 = vunpack.c.l.b16 %v8232
          %v8767 = vunpack.c.h.b16 %v8232
          %v8768 = vunpack.c.l.b16 %v8233
          %v8769 = vunpack.c.h.b16 %v8233
          %v8770 = vunpack.c.l.b16 %v8234
          %v8771 = vunpack.c.h.b16 %v8234
          %v8772 = vunpack.c.l.b16 %v8235
          %v8773 = vunpack.c.h.b16 %v8235
          %v8774 = vunpack.c.l.b16 %v8236
          %v8775 = vunpack.c.h.b16 %v8236
          %v8776 = vunpack.c.l.b16 %v8237
          %v8777 = vunpack.c.h.b16 %v8237
          %v8778 = vunpack.c.l.b16 %v8238
          %v8779 = vunpack.c.h.b16 %v8238
          %v8780 = vunpack.c.l.b16 %v8239
          %v8781 = vunpack.c.h.b16 %v8239
          %v8782 = vunpack.c.l.b16 %v8240
          %v8783 = vunpack.c.h.b16 %v8240
          %v8784 = vunpack.c.l.b16 %v8241
          %v8785 = vunpack.c.h.b16 %v8241
          %v8786 = vunpack.c.l.b16 %v8242
          %v8787 = vunpack.c.h.b16 %v8242
          %v8788 = vunpack.c.l.b16 %v8243
          %v8789 = vunpack.c.h.b16 %v8243
          %v8790 = vunpack.c.l.b16 %v8244
          %v8791 = vunpack.c.h.b16 %v8244
          %v8792 = vunpack.c.l.b16 %v8245
          %v8793 = vunpack.c.h.b16 %v8245
          %v8794 = vunpack.c.l.b16 %v8246
          %v8795 = vunpack.c.h.b16 %v8246
          %v8796 = vunpack.c.l.b16 %v8247
          %v8797 = vunpack.c.h.b16 %v8247
          %v8798 = vunpack.c.l.b16 %v8248
          %v8799 = vunpack.c.h.b16 %v8248
          %v8800 = vunpack.c.l.b16 %v8249
          %v8801 = vunpack.c.h.b16 %v8249
          %v8802 = vunpack.c.l.b16 %v8250
          %v8803 = vunpack.c.h.b16 %v8250
          %v8804 = vunpack.c.l.b16 %v8251
          %v8805 = vunpack.c.h.b16 %v8251
          %v8806 = vunpack.c.l.b16 %v8252
          %v8807 = vunpack.c.h.b16 %v8252
          %v8808 = vunpack.c.l.b16 %v8253
          %v8809 = vunpack.c.h.b16 %v8253
          %v8810 = vunpack.c.l.b16 %v8254
          %v8811 = vunpack.c.h.b16 %v8254
          %v8812 = vunpack.c.l.b16 %v8255
          %v8813 = vunpack.c.h.b16 %v8255
          %v8814 = vunpack.c.l.b16 %v8256
          %v8815 = vunpack.c.h.b16 %v8256
          %v8816 = vunpack.c.l.b16 %v8257
          %v8817 = vunpack.c.h.b16 %v8257
          %v8818 = vunpack.c.l.b16 %v8258
          %v8819 = vunpack.c.h.b16 %v8258
          %v8820 = vunpack.c.l.b16 %v8259
          %v8821 = vunpack.c.h.b16 %v8259
          %v8822 = vunpack.c.l.b16 %v8260
          %v8823 = vunpack.c.h.b16 %v8260
          %v8824 = vunpack.c.l.b16 %v8261
          %v8825 = vunpack.c.h.b16 %v8261
          %v8826 = vunpack.c.l.b16 %v8262
          %v8827 = vunpack.c.h.b16 %v8262
          %v8828 = vunpack.c.l.b16 %v8263
          %v8829 = vunpack.c.h.b16 %v8263
          %v8830 = vunpack.c.l.b16 %v8264
          %v8831 = vunpack.c.h.b16 %v8264
          %v8832 = vunpack.c.l.b16 %v8265
          %v8833 = vunpack.c.h.b16 %v8265
          %v8834 = vunpack.c.l.b16 %v8266
          %v8835 = vunpack.c.h.b16 %v8266
          %v8836 = vunpack.c.l.b16 %v8267
          %v8837 = vunpack.c.h.b16 %v8267
          %v8838 = vunpack.c.l.b16 %v8268
          %v8839 = vunpack.c.h.b16 %v8268
          %v8840 = vunpack.c.l.b16 %v8269
          %v8841 = vunpack.c.h.b16 %v8269
          %v8842 = vunpack.c.l.b16 %v8270
          %v8843 = vunpack.c.h.b16 %v8270
          %v8844 = vunpack.c.l.b16 %v8271
          %v8845 = vunpack.c.h.b16 %v8271
          %v8846 = vunpack.c.l.b16 %v8272
          %v8847 = vunpack.c.h.b16 %v8272
          %v8848 = vunpack.c.l.b16 %v8273
          %v8849 = vunpack.c.h.b16 %v8273
          %v8850 = vunpack.c.l.b16 %v8274
          %v8851 = vunpack.c.h.b16 %v8274
          %v8852 = vunpack.c.l.b16 %v8275
          %v8853 = vunpack.c.h.b16 %v8275
          %v8854 = vunpack.c.l.b16 %v8276
          %v8855 = vunpack.c.h.b16 %v8276
          %v8856 = vunpack.c.l.b16 %v8277
          %v8857 = vunpack.c.h.b16 %v8277
          %v8858 = vunpack.c.l.b16 %v8278
          %v8859 = vunpack.c.h.b16 %v8278
          %v8860 = vunpack.c.l.b16 %v8279
          %v8861 = vunpack.c.h.b16 %v8279
          %v8862 = vunpack.c.l.b16 %v8280
          %v8863 = vunpack.c.h.b16 %v8280
          %v8864 = vunpack.c.l.b16 %v8281
          %v8865 = vunpack.c.h.b16 %v8281
          %v8866 = vunpack.c.l.b16 %v8282
          %v8867 = vunpack.c.h.b16 %v8282
          %v8868 = vunpack.c.l.b16 %v8283
          %v8869 = vunpack.c.h.b16 %v8283
          %v8870 = vunpack.c.l.b16 %v8284
          %v8871 = vunpack.c.h.b16 %v8284
          %v8872 = vunpack.c.l.b16 %v8285
          %v8873 = vunpack.c.h.b16 %v8285
          %v8874 = vunpack.c.l.b16 %v8286
          %v8875 = vunpack.c.h.b16 %v8286
          %v8876 = vunpack.c.l.b16 %v8287
          %v8877 = vunpack.c.h.b16 %v8287
          %v8878 = vunpack.c.l.b16 %v8288
          %v8879 = vunpack.c.h.b16 %v8288
          %v8880 = vunpack.c.l.b16 %v8289
          %v8881 = vunpack.c.h.b16 %v8289
          %v8882 = vunpack.c.l.b16 %v8290
          %v8883 = vunpack.c.h.b16 %v8290
          %v8884 = vunpack.c.l.b16 %v8291
          %v8885 = vunpack.c.h.b16 %v8291
          %v8886 = vunpack.c.l.b16 %v8292
          %v8887 = vunpack.c.h.b16 %v8292
          %v8888 = vunpack.c.l.b16 %v8293
          %v8889 = vunpack.c.h.b16 %v8293
          %v8890 = vunpack.c.l.b16 %v8294
          %v8891 = vunpack.c.h.b16 %v8294
          %v8892 = vunpack.c.l.b16 %v8295
          %v8893 = vunpack.c.h.b16 %v8295
          %v8894 = vunpack.c.l.b16 %v8296
          %v8895 = vunpack.c.h.b16 %v8296
          %v8896 = vunpack.c.l.b16 %v8297
          %v8897 = vunpack.c.h.b16 %v8297
          %v8898 = vunpack.c.l.b16 %v8298
          %v8899 = vunpack.c.h.b16 %v8298
          %v8900 = vunpack.c.l.b16 %v8299
          %v8901 = vunpack.c.h.b16 %v8299
          %v8902 = vunpack.c.l.b16 %v8300
          %v8903 = vunpack.c.h.b16 %v8300
          %v8904 = vunpack.c.l.b16 %v8301
          %v8905 = vunpack.c.h.b16 %v8301
          %v8906 = vunpack.c.l.b16 %v8302
          %v8907 = vunpack.c.h.b16 %v8302
          %v8908 = vunpack.c.l.b16 %v8303
          %v8909 = vunpack.c.h.b16 %v8303
          %v8910 = vunpack.c.l.b16 %v8304
          %v8911 = vunpack.c.h.b16 %v8304
          %v8912 = vunpack.c.l.b16 %v8305
          %v8913 = vunpack.c.h.b16 %v8305
          %v8914 = vunpack.c.l.b16 %v8306
          %v8915 = vunpack.c.h.b16 %v8306
          %v8916 = vunpack.c.l.b16 %v8307
          %v8917 = vunpack.c.h.b16 %v8307
          %v8918 = vunpack.c.l.b16 %v8308
          %v8919 = vunpack.c.h.b16 %v8308
          %v8920 = vunpack.c.l.b16 %v8309
          %v8921 = vunpack.c.h.b16 %v8309
          %v8922 = vunpack.c.l.b16 %v8310
          %v8923 = vunpack.c.h.b16 %v8310
          %v8924 = vunpack.c.l.b16 %v8311
          %v8925 = vunpack.c.h.b16 %v8311
          %v8926 = vunpack.c.l.b16 %v8312
          %v8927 = vunpack.c.h.b16 %v8312
          %v8928 = vunpack.c.l.b16 %v8313
          %v8929 = vunpack.c.h.b16 %v8313
          %v8930 = vunpack.c.l.b16 %v8314
          %v8931 = vunpack.c.h.b16 %v8314
          %v8932 = vunpack.c.l.b16 %v8315
          %v8933 = vunpack.c.h.b16 %v8315
          %v8934 = vunpack.c.l.b16 %v8316
          %v8935 = vunpack.c.h.b16 %v8316
          %v8936 = vunpack.c.l.b16 %v8317
          %v8937 = vunpack.c.h.b16 %v8317
          %v8938 = vunpack.c.l.b16 %v8318
          %v8939 = vunpack.c.h.b16 %v8318
          %v8940 = vunpack.c.l.b16 %v8319
          %v8941 = vunpack.c.h.b16 %v8319
          %v8942 = vunpack.c.l.b16 %v8320
          %v8943 = vunpack.c.h.b16 %v8320
          %v8944 = vunpack.c.l.b16 %v8321
          %v8945 = vunpack.c.h.b16 %v8321
          %v8946 = vunpack.c.l.b16 %v8322
          %v8947 = vunpack.c.h.b16 %v8322
          %v8948 = vunpack.c.l.b16 %v8323
          %v8949 = vunpack.c.h.b16 %v8323
          %v8950 = vunpack.c.l.b16 %v8324
          %v8951 = vunpack.c.h.b16 %v8324
          %v8952 = vunpack.c.l.b16 %v8325
          %v8953 = vunpack.c.h.b16 %v8325
          %v8954 = vunpack.c.l.b16 %v8326
          %v8955 = vunpack.c.h.b16 %v8326
          %v8956 = vunpack.c.l.b16 %v8327
          %v8957 = vunpack.c.h.b16 %v8327
          %v8958 = vunpack.c.l.b16 %v8328
          %v8959 = vunpack.c.h.b16 %v8328
          %v8960 = vunpack.c.l.b16 %v8329
          %v8961 = vunpack.c.h.b16 %v8329
          %v8962 = vunpack.c.l.b16 %v8330
          %v8963 = vunpack.c.h.b16 %v8330
          %v8964 = vunpack.c.l.b16 %v8331
          %v8965 = vunpack.c.h.b16 %v8331
          %v8966 = vunpack.c.l.b16 %v8332
          %v8967 = vunpack.c.h.b16 %v8332
          %v8968 = vunpack.c.l.b16 %v8333
          %v8969 = vunpack.c.h.b16 %v8333
          %v8970 = vunpack.c.l.b16 %v8334
          %v8971 = vunpack.c.h.b16 %v8334
          %v8972 = vunpack.c.l.b16 %v8335
          %v8973 = vunpack.c.h.b16 %v8335
          %v8974 = vunpack.c.l.b16 %v8336
          %v8975 = vunpack.c.h.b16 %v8336
          %v8976 = vunpack.c.l.b16 %v8337
          %v8977 = vunpack.c.h.b16 %v8337
          %v8978 = vunpack.c.l.b16 %v8338
          %v8979 = vunpack.c.h.b16 %v8338
          %v8980 = vunpack.c.l.b16 %v8339
          %v8981 = vunpack.c.h.b16 %v8339
          %v8982 = vunpack.c.l.b16 %v8340
          %v8983 = vunpack.c.h.b16 %v8340
          %v8984 = vunpack.c.l.b16 %v8341
          %v8985 = vunpack.c.h.b16 %v8341
          %v8986 = vunpack.c.l.b16 %v8342
          %v8987 = vunpack.c.h.b16 %v8342
          %v8988 = vunpack.c.l.b16 %v8343
          %v8989 = vunpack.c.h.b16 %v8343
          %v8990 = vunpack.c.l.b16 %v8344
          %v8991 = vunpack.c.h.b16 %v8344
          %v8992 = vunpack.c.l.b16 %v8345
          %v8993 = vunpack.c.h.b16 %v8345
          %v8994 = vunpack.c.l.b16 %v8346
          %v8995 = vunpack.c.h.b16 %v8346
          %v8996 = vunpack.c.l.b16 %v8347
          %v8997 = vunpack.c.h.b16 %v8347
          %v8998 = vunpack.c.l.b16 %v8348
          %v8999 = vunpack.c.h.b16 %v8348
          %v9000 = vunpack.c.l.b16 %v8349
          %v9001 = vunpack.c.h.b16 %v8349
          %v9002 = vunpack.c.l.b16 %v8350
          %v9003 = vunpack.c.h.b16 %v8350
          %v9004 = vunpack.c.l.b16 %v8351
          %v9005 = vunpack.c.h.b16 %v8351
          %v9006 = vunpack.c.l.b16 %v8352
          %v9007 = vunpack.c.h.b16 %v8352
          %v9008 = vunpack.c.l.b16 %v8353
          %v9009 = vunpack.c.h.b16 %v8353
          %v9010 = vunpack.c.l.b16 %v8354
          %v9011 = vunpack.c.h.b16 %v8354
          %v9012 = vunpack.c.l.b16 %v8355
          %v9013 = vunpack.c.h.b16 %v8355
          %v9014 = vunpack.c.l.b16 %v8356
          %v9015 = vunpack.c.h.b16 %v8356
          %v9016 = vunpack.c.l.b16 %v8357
          %v9017 = vunpack.c.h.b16 %v8357
          %v9018 = vunpack.c.l.b16 %v8358
          %v9019 = vunpack.c.h.b16 %v8358
          %v9020 = vunpack.c.l.b16 %v8359
          %v9021 = vunpack.c.h.b16 %v8359
          %v9022 = vunpack.c.l.b16 %v8360
          %v9023 = vunpack.c.h.b16 %v8360
          %v9024 = vunpack.c.l.b16 %v8361
          %v9025 = vunpack.c.h.b16 %v8361
          %v9026 = vunpack.c.l.b16 %v8362
          %v9027 = vunpack.c.h.b16 %v8362
          %v9028 = vunpack.c.l.b16 %v8363
          %v9029 = vunpack.c.h.b16 %v8363
          %v9030 = vunpack.c.l.b16 %v8364
          %v9031 = vunpack.c.h.b16 %v8364
          %v9032 = vunpack.c.l.b16 %v8365
          %v9033 = vunpack.c.h.b16 %v8365
          %v9034 = vunpack.c.l.b16 %v8366
          %v9035 = vunpack.c.h.b16 %v8366
          %v9036 = vunpack.c.l.b16 %v8367
          %v9037 = vunpack.c.h.b16 %v8367
          %v9038 = vunpack.c.l.b16 %v8368
          %v9039 = vunpack.c.h.b16 %v8368
          %v9040 = vunpack.c.l.b16 %v8369
          %v9041 = vunpack.c.h.b16 %v8369
          %v9042 = vpack.c.b16 %v8608, %v8594
          %v9043 = vpack.c.b16 %v8609, %v8595
          %v9044 = vpack.c.b16 %v8610, %v8596
          %v9045 = vpack.c.b16 %v8611, %v8597
          %v9046 = vpack.c.b16 %v8612, %v8598
          %v9047 = vpack.c.b16 %v8613, %v8599
          %v9048 = vpack.c.b16 %v8614, %v8600
          %v9049 = vpack.c.b16 %v8615, %v8601
          %v9050 = vpack.c.b16 %v8616, %v8602
          %v9051 = vpack.c.b16 %v8617, %v8603
          %v9052 = vpack.c.b16 %v8618, %v8604
          %v9053 = vpack.c.b16 %v8619, %v8605
          %v9054 = vpack.c.b16 %v8620, %v8606
          %v9055 = vpack.c.b16 %v8621, %v8607
          %v9056 = vpack.c.b16 %v8636, %v8622
          %v9057 = vpack.c.b16 %v8637, %v8623
          %v9058 = vpack.c.b16 %v8638, %v8624
          %v9059 = vpack.c.b16 %v8639, %v8625
          %v9060 = vpack.c.b16 %v8640, %v8626
          %v9061 = vpack.c.b16 %v8641, %v8627
          %v9062 = vpack.c.b16 %v8642, %v8628
          %v9063 = vpack.c.b16 %v8643, %v8629
          %v9064 = vpack.c.b16 %v8644, %v8630
          %v9065 = vpack.c.b16 %v8645, %v8631
          %v9066 = vpack.c.b16 %v8646, %v8632
          %v9067 = vpack.c.b16 %v8647, %v8633
          %v9068 = vpack.c.b16 %v8648, %v8634
          %v9069 = vpack.c.b16 %v8649, %v8635
          %v9070 = vpack.c.b16 %v8664, %v8650
          %v9071 = vpack.c.b16 %v8665, %v8651
          %v9072 = vpack.c.b16 %v8666, %v8652
          %v9073 = vpack.c.b16 %v8667, %v8653
          %v9074 = vpack.c.b16 %v8668, %v8654
          %v9075 = vpack.c.b16 %v8669, %v8655
          %v9076 = vpack.c.b16 %v8670, %v8656
          %v9077 = vpack.c.b16 %v8671, %v8657
          %v9078 = vpack.c.b16 %v8672, %v8658
          %v9079 = vpack.c.b16 %v8673, %v8659
          %v9080 = vpack.c.b16 %v8674, %v8660
          %v9081 = vpack.c.b16 %v8675, %v8661
          %v9082 = vpack.c.b16 %v8676, %v8662
          %v9083 = vpack.c.b16 %v8677, %v8663
          %v9084 = vpack.c.b16 %v8692, %v8678
          %v9085 = vpack.c.b16 %v8693, %v8679
          %v9086 = vpack.c.b16 %v8694, %v8680
          %v9087 = vpack.c.b16 %v8695, %v8681
          %v9088 = vpack.c.b16 %v8696, %v8682
          %v9089 = vpack.c.b16 %v8697, %v8683
          %v9090 = vpack.c.b16 %v8698, %v8684
          %v9091 = vpack.c.b16 %v8699, %v8685
          %v9092 = vpack.c.b16 %v8700, %v8686
          %v9093 = vpack.c.b16 %v8701, %v8687
          %v9094 = vpack.c.b16 %v8702, %v8688
          %v9095 = vpack.c.b16 %v8703, %v8689
          %v9096 = vpack.c.b16 %v8704, %v8690
          %v9097 = vpack.c.b16 %v8705, %v8691
          %v9098 = vpack.c.b16 %v8720, %v8706
          %v9099 = vpack.c.b16 %v8721, %v8707
          %v9100 = vpack.c.b16 %v8722, %v8708
          %v9101 = vpack.c.b16 %v8723, %v8709
          %v9102 = vpack.c.b16 %v8724, %v8710
          %v9103 = vpack.c.b16 %v8725, %v8711
          %v9104 = vpack.c.b16 %v8726, %v8712
          %v9105 = vpack.c.b16 %v8727, %v8713
          %v9106 = vpack.c.b16 %v8728, %v8714
          %v9107 = vpack.c.b16 %v8729, %v8715
          %v9108 = vpack.c.b16 %v8730, %v8716
          %v9109 = vpack.c.b16 %v8731, %v8717
          %v9110 = vpack.c.b16 %v8732, %v8718
          %v9111 = vpack.c.b16 %v8733, %v8719
          %v9112 = vpack.c.b16 %v8748, %v8734
          %v9113 = vpack.c.b16 %v8749, %v8735
          %v9114 = vpack.c.b16 %v8750, %v8736
          %v9115 = vpack.c.b16 %v8751, %v8737
          %v9116 = vpack.c.b16 %v8752, %v8738
          %v9117 = vpack.c.b16 %v8753, %v8739
          %v9118 = vpack.c.b16 %v8754, %v8740
          %v9119 = vpack.c.b16 %v8755, %v8741
          %v9120 = vpack.c.b16 %v8756, %v8742
          %v9121 = vpack.c.b16 %v8757, %v8743
          %v9122 = vpack.c.b16 %v8758, %v8744
          %v9123 = vpack.c.b16 %v8759, %v8745
          %v9124 = vpack.c.b16 %v8760, %v8746
          %v9125 = vpack.c.b16 %v8761, %v8747
          %v9126 = vpack.c.b16 %v8776, %v8762
          %v9127 = vpack.c.b16 %v8777, %v8763
          %v9128 = vpack.c.b16 %v8778, %v8764
          %v9129 = vpack.c.b16 %v8779, %v8765
          %v9130 = vpack.c.b16 %v8780, %v8766
          %v9131 = vpack.c.b16 %v8781, %v8767
          %v9132 = vpack.c.b16 %v8782, %v8768
          %v9133 = vpack.c.b16 %v8783, %v8769
          %v9134 = vpack.c.b16 %v8784, %v8770
          %v9135 = vpack.c.b16 %v8785, %v8771
          %v9136 = vpack.c.b16 %v8786, %v8772
          %v9137 = vpack.c.b16 %v8787, %v8773
          %v9138 = vpack.c.b16 %v8788, %v8774
          %v9139 = vpack.c.b16 %v8789, %v8775
          %v9140 = vpack.c.b16 %v8804, %v8790
          %v9141 = vpack.c.b16 %v8805, %v8791
          %v9142 = vpack.c.b16 %v8806, %v8792
          %v9143 = vpack.c.b16 %v8807, %v8793
          %v9144 = vpack.c.b16 %v8808, %v8794
          %v9145 = vpack.c.b16 %v8809, %v8795
          %v9146 = vpack.c.b16 %v8810, %v8796
          %v9147 = vpack.c.b16 %v8811, %v8797
          %v9148 = vpack.c.b16 %v8812, %v8798
          %v9149 = vpack.c.b16 %v8813, %v8799
          %v9150 = vpack.c.b16 %v8814, %v8800
          %v9151 = vpack.c.b16 %v8815, %v8801
          %v9152 = vpack.c.b16 %v8816, %v8802
          %v9153 = vpack.c.b16 %v8817, %v8803
          %v9154 = vpack.c.b16 %v8832, %v8818
          %v9155 = vpack.c.b16 %v8833, %v8819
          %v9156 = vpack.c.b16 %v8834, %v8820
          %v9157 = vpack.c.b16 %v8835, %v8821
          %v9158 = vpack.c.b16 %v8836, %v8822
          %v9159 = vpack.c.b16 %v8837, %v8823
          %v9160 = vpack.c.b16 %v8838, %v8824
          %v9161 = vpack.c.b16 %v8839, %v8825
          %v9162 = vpack.c.b16 %v8840, %v8826
          %v9163 = vpack.c.b16 %v8841, %v8827
          %v9164 = vpack.c.b16 %v8842, %v8828
          %v9165 = vpack.c.b16 %v8843, %v8829
          %v9166 = vpack.c.b16 %v8844, %v8830
          %v9167 = vpack.c.b16 %v8845, %v8831
          %v9168 = vpack.c.b16 %v8860, %v8846
          %v9169 = vpack.c.b16 %v8861, %v8847
          %v9170 = vpack.c.b16 %v8862, %v8848
          %v9171 = vpack.c.b16 %v8863, %v8849
          %v9172 = vpack.c.b16 %v8864, %v8850
          %v9173 = vpack.c.b16 %v8865, %v8851
          %v9174 = vpack.c.b16 %v8866, %v8852
          %v9175 = vpack.c.b16 %v8867, %v8853
          %v9176 = vpack.c.b16 %v8868, %v8854
          %v9177 = vpack.c.b16 %v8869, %v8855
          %v9178 = vpack.c.b16 %v8870, %v8856
          %v9179 = vpack.c.b16 %v8871, %v8857
          %v9180 = vpack.c.b16 %v8872, %v8858
          %v9181 = vpack.c.b16 %v8873, %v8859
          %v9182 = vpack.c.b16 %v8888, %v8874
          %v9183 = vpack.c.b16 %v8889, %v8875
          %v9184 = vpack.c.b16 %v8890, %v8876
          %v9185 = vpack.c.b16 %v8891, %v8877
          %v9186 = vpack.c.b16 %v8892, %v8878
          %v9187 = vpack.c.b16 %v8893, %v8879
          %v9188 = vpack.c.b16 %v8894, %v8880
          %v9189 = vpack.c.b16 %v8895, %v8881
          %v9190 = vpack.c.b16 %v8896, %v8882
          %v9191 = vpack.c.b16 %v8897, %v8883
          %v9192 = vpack.c.b16 %v8898, %v8884
          %v9193 = vpack.c.b16 %v8899, %v8885
          %v9194 = vpack.c.b16 %v8900, %v8886
          %v9195 = vpack.c.b16 %v8901, %v8887
          %v9196 = vpack.c.b16 %v8916, %v8902
          %v9197 = vpack.c.b16 %v8917, %v8903
          %v9198 = vpack.c.b16 %v8918, %v8904
          %v9199 = vpack.c.b16 %v8919, %v8905
          %v9200 = vpack.c.b16 %v8920, %v8906
          %v9201 = vpack.c.b16 %v8921, %v8907
          %v9202 = vpack.c.b16 %v8922, %v8908
          %v9203 = vpack.c.b16 %v8923, %v8909
          %v9204 = vpack.c.b16 %v8924, %v8910
          %v9205 = vpack.c.b16 %v8925, %v8911
          %v9206 = vpack.c.b16 %v8926, %v8912
          %v9207 = vpack.c.b16 %v8927, %v8913
          %v9208 = vpack.c.b16 %v8928, %v8914
          %v9209 = vpack.c.b16 %v8929, %v8915
          %v9210 = vpack.c.b16 %v8944, %v8930
          %v9211 = vpack.c.b16 %v8945, %v8931
          %v9212 = vpack.c.b16 %v8946, %v8932
          %v9213 = vpack.c.b16 %v8947, %v8933
          %v9214 = vpack.c.b16 %v8948, %v8934
          %v9215 = vpack.c.b16 %v8949, %v8935
          %v9216 = vpack.c.b16 %v8950, %v8936
          %v9217 = vpack.c.b16 %v8951, %v8937
          %v9218 = vpack.c.b16 %v8952, %v8938
          %v9219 = vpack.c.b16 %v8953, %v8939
          %v9220 = vpack.c.b16 %v8954, %v8940
          %v9221 = vpack.c.b16 %v8955, %v8941
          %v9222 = vpack.c.b16 %v8956, %v8942
          %v9223 = vpack.c.b16 %v8957, %v8943
          %v9224 = vpack.c.b16 %v8972, %v8958
          %v9225 = vpack.c.b16 %v8973, %v8959
          %v9226 = vpack.c.b16 %v8974, %v8960
          %v9227 = vpack.c.b16 %v8975, %v8961
          %v9228 = vpack.c.b16 %v8976, %v8962
          %v9229 = vpack.c.b16 %v8977, %v8963
          %v9230 = vpack.c.b16 %v8978, %v8964
          %v9231 = vpack.c.b16 %v8979, %v8965
          %v9232 = vpack.c.b16 %v8980, %v8966
          %v9233 = vpack.c.b16 %v8981, %v8967
          %v9234 = vpack.c.b16 %v8982, %v8968
          %v9235 = vpack.c.b16 %v8983, %v8969
          %v9236 = vpack.c.b16 %v8984, %v8970
          %v9237 = vpack.c.b16 %v8985, %v8971
          %v9238 = vpack.c.b16 %v9000, %v8986
          %v9239 = vpack.c.b16 %v9001, %v8987
          %v9240 = vpack.c.b16 %v9002, %v8988
          %v9241 = vpack.c.b16 %v9003, %v8989
          %v9242 = vpack.c.b16 %v9004, %v8990
          %v9243 = vpack.c.b16 %v9005, %v8991
          %v9244 = vpack.c.b16 %v9006, %v8992
          %v9245 = vpack.c.b16 %v9007, %v8993
          %v9246 = vpack.c.b16 %v9008, %v8994
          %v9247 = vpack.c.b16 %v9009, %v8995
          %v9248 = vpack.c.b16 %v9010, %v8996
          %v9249 = vpack.c.b16 %v9011, %v8997
          %v9250 = vpack.c.b16 %v9012, %v8998
          %v9251 = vpack.c.b16 %v9013, %v8999
          %v9252 = vpack.c.b16 %v9028, %v9014
          %v9253 = vpack.c.b16 %v9029, %v9015
          %v9254 = vpack.c.b16 %v9030, %v9016
          %v9255 = vpack.c.b16 %v9031, %v9017
          %v9256 = vpack.c.b16 %v9032, %v9018
          %v9257 = vpack.c.b16 %v9033, %v9019
          %v9258 = vpack.c.b16 %v9034, %v9020
          %v9259 = vpack.c.b16 %v9035, %v9021
          %v9260 = vpack.c.b16 %v9036, %v9022
          %v9261 = vpack.c.b16 %v9037, %v9023
          %v9262 = vpack.c.b16 %v9038, %v9024
          %v9263 = vpack.c.b16 %v9039, %v9025
          %v9264 = vpack.c.b16 %v9040, %v9026
          %v9265 = vpack.c.b16 %v9041, %v9027
          %9490 = vmatpush.bf16.msra.mxu0 %v9140
          %9491 = vmatpush.bf16.msra.mxu0 %v9126
          %9492 = vmatpush.bf16.msra.mxu0 %v9112
          %9493 = vmatpush.bf16.msra.mxu0 %v9098
          %9494 = vmatpush.bf16.msra.mxu0 %v9084
          %9495 = vmatpush.bf16.msra.mxu0 %v9070
          %9496 = vmatpush.bf16.msra.mxu0 %v9056
          %9497 = vmatpush.bf16.msra.mxu0 %v9042
          %9498 = vmatmul.bf16.gmra.mxu0 %v8144
          %v9499 = vpop.f32.mrf.mxu0
          %v9500 = vadd.f32 0.0, %v9499
          %v9501 = vpop.f32.mrf.mxu0
          %9502 = vdwg.mxu0
          %9503 = vmatpush.bf16.msra.mxu0 %v9252
          %9504 = vmatpush.bf16.msra.mxu0 %v9238
          %9505 = vmatpush.bf16.msra.mxu0 %v9224
          %9506 = vmatpush.bf16.msra.mxu0 %v9210
          %9507 = vmatpush.bf16.msra.mxu0 %v9196
          %9508 = vmatpush.bf16.msra.mxu0 %v9182
          %9509 = vmatpush.bf16.msra.mxu0 %v9168
          %9510 = vmatpush.bf16.msra.mxu0 %v9154
          %9511 = vmatmul.bf16.gmra.mxu0 %v8145
          %v9512 = vpop.f32.mrf.mxu0
          %v9513 = vadd.f32 %v9500, %v9512
          %v9514 = vpop.f32.mrf.mxu0
          %9515 = vdwg.mxu0
          %9516 = vmatpush.bf16.msra.mxu0 %v9141
          %9517 = vmatpush.bf16.msra.mxu0 %v9127
          %9518 = vmatpush.bf16.msra.mxu0 %v9113
          %9519 = vmatpush.bf16.msra.mxu0 %v9099
          %9520 = vmatpush.bf16.msra.mxu0 %v9085
          %9521 = vmatpush.bf16.msra.mxu0 %v9071
          %9522 = vmatpush.bf16.msra.mxu0 %v9057
          %9523 = vmatpush.bf16.msra.mxu0 %v9043
          %9524 = vmatmul.bf16.gmra.mxu0 %v8144
          %v9525 = vpop.f32.mrf.mxu0
          %v9526 = vadd.f32 0.0, %v9525
          %v9527 = vpop.f32.mrf.mxu0
          %9528 = vdwg.mxu0
          %9529 = vmatpush.bf16.msra.mxu0 %v9253
          %9530 = vmatpush.bf16.msra.mxu0 %v9239
          %9531 = vmatpush.bf16.msra.mxu0 %v9225
          %9532 = vmatpush.bf16.msra.mxu0 %v9211
          %9533 = vmatpush.bf16.msra.mxu0 %v9197
          %9534 = vmatpush.bf16.msra.mxu0 %v9183
          %9535 = vmatpush.bf16.msra.mxu0 %v9169
          %9536 = vmatpush.bf16.msra.mxu0 %v9155
          %9537 = vmatmul.bf16.gmra.mxu0 %v8145
          %v9538 = vpop.f32.mrf.mxu0
          %v9539 = vadd.f32 %v9526, %v9538
          %v9540 = vpop.f32.mrf.mxu0
          %9541 = vdwg.mxu0
          %9542 = vmatpush.bf16.msra.mxu0 %v9142
          %9543 = vmatpush.bf16.msra.mxu0 %v9128
          %9544 = vmatpush.bf16.msra.mxu0 %v9114
          %9545 = vmatpush.bf16.msra.mxu0 %v9100
          %9546 = vmatpush.bf16.msra.mxu0 %v9086
          %9547 = vmatpush.bf16.msra.mxu0 %v9072
          %9548 = vmatpush.bf16.msra.mxu0 %v9058
          %9549 = vmatpush.bf16.msra.mxu0 %v9044
          %9550 = vmatmul.bf16.gmra.mxu0 %v8144
          %v9551 = vpop.f32.mrf.mxu0
          %v9552 = vadd.f32 0.0, %v9551
          %v9553 = vpop.f32.mrf.mxu0
          %9554 = vdwg.mxu0
          %9555 = vmatpush.bf16.msra.mxu0 %v9254
          %9556 = vmatpush.bf16.msra.mxu0 %v9240
          %9557 = vmatpush.bf16.msra.mxu0 %v9226
          %9558 = vmatpush.bf16.msra.mxu0 %v9212
          %9559 = vmatpush.bf16.msra.mxu0 %v9198
          %9560 = vmatpush.bf16.msra.mxu0 %v9184
          %9561 = vmatpush.bf16.msra.mxu0 %v9170
          %9562 = vmatpush.bf16.msra.mxu0 %v9156
          %9563 = vmatmul.bf16.gmra.mxu0 %v8145
          %v9564 = vpop.f32.mrf.mxu0
          %v9565 = vadd.f32 %v9552, %v9564
          %v9566 = vpop.f32.mrf.mxu0
          %9567 = vdwg.mxu0
          %9568 = vmatpush.bf16.msra.mxu0 %v9143
          %9569 = vmatpush.bf16.msra.mxu0 %v9129
          %9570 = vmatpush.bf16.msra.mxu0 %v9115
          %9571 = vmatpush.bf16.msra.mxu0 %v9101
          %9572 = vmatpush.bf16.msra.mxu0 %v9087
          %9573 = vmatpush.bf16.msra.mxu0 %v9073
          %9574 = vmatpush.bf16.msra.mxu0 %v9059
          %9575 = vmatpush.bf16.msra.mxu0 %v9045
          %9576 = vmatmul.bf16.gmra.mxu0 %v8144
          %v9577 = vpop.f32.mrf.mxu0
          %v9578 = vadd.f32 0.0, %v9577
          %v9579 = vpop.f32.mrf.mxu0
          %9580 = vdwg.mxu0
          %9581 = vmatpush.bf16.msra.mxu0 %v9255
          %9582 = vmatpush.bf16.msra.mxu0 %v9241
          %9583 = vmatpush.bf16.msra.mxu0 %v9227
          %9584 = vmatpush.bf16.msra.mxu0 %v9213
          %9585 = vmatpush.bf16.msra.mxu0 %v9199
          %9586 = vmatpush.bf16.msra.mxu0 %v9185
          %9587 = vmatpush.bf16.msra.mxu0 %v9171
          %9588 = vmatpush.bf16.msra.mxu0 %v9157
          %9589 = vmatmul.bf16.gmra.mxu0 %v8145
          %v9590 = vpop.f32.mrf.mxu0
          %v9591 = vadd.f32 %v9578, %v9590
          %v9592 = vpop.f32.mrf.mxu0
          %9593 = vdwg.mxu0
          %9594 = vmatpush.bf16.msra.mxu0 %v9144
          %9595 = vmatpush.bf16.msra.mxu0 %v9130
          %9596 = vmatpush.bf16.msra.mxu0 %v9116
          %9597 = vmatpush.bf16.msra.mxu0 %v9102
          %9598 = vmatpush.bf16.msra.mxu0 %v9088
          %9599 = vmatpush.bf16.msra.mxu0 %v9074
          %9600 = vmatpush.bf16.msra.mxu0 %v9060
          %9601 = vmatpush.bf16.msra.mxu0 %v9046
          %9602 = vmatmul.bf16.gmra.mxu0 %v8144
          %v9603 = vpop.f32.mrf.mxu0
          %v9604 = vadd.f32 0.0, %v9603
          %v9605 = vpop.f32.mrf.mxu0
          %9606 = vdwg.mxu0
          %9607 = vmatpush.bf16.msra.mxu0 %v9256
          %9608 = vmatpush.bf16.msra.mxu0 %v9242
          %9609 = vmatpush.bf16.msra.mxu0 %v9228
          %9610 = vmatpush.bf16.msra.mxu0 %v9214
          %9611 = vmatpush.bf16.msra.mxu0 %v9200
          %9612 = vmatpush.bf16.msra.mxu0 %v9186
          %9613 = vmatpush.bf16.msra.mxu0 %v9172
          %9614 = vmatpush.bf16.msra.mxu0 %v9158
          %9615 = vmatmul.bf16.gmra.mxu0 %v8145
          %v9616 = vpop.f32.mrf.mxu0
          %v9617 = vadd.f32 %v9604, %v9616
          %v9618 = vpop.f32.mrf.mxu0
          %9619 = vdwg.mxu0
          %9620 = vmatpush.bf16.msra.mxu0 %v9145
          %9621 = vmatpush.bf16.msra.mxu0 %v9131
          %9622 = vmatpush.bf16.msra.mxu0 %v9117
          %9623 = vmatpush.bf16.msra.mxu0 %v9103
          %9624 = vmatpush.bf16.msra.mxu0 %v9089
          %9625 = vmatpush.bf16.msra.mxu0 %v9075
          %9626 = vmatpush.bf16.msra.mxu0 %v9061
          %9627 = vmatpush.bf16.msra.mxu0 %v9047
          %9628 = vmatmul.bf16.gmra.mxu0 %v8144
          %v9629 = vpop.f32.mrf.mxu0
          %v9630 = vadd.f32 0.0, %v9629
          %v9631 = vpop.f32.mrf.mxu0
          %9632 = vdwg.mxu0
          %9633 = vmatpush.bf16.msra.mxu0 %v9257
          %9634 = vmatpush.bf16.msra.mxu0 %v9243
          %9635 = vmatpush.bf16.msra.mxu0 %v9229
          %9636 = vmatpush.bf16.msra.mxu0 %v9215
          %9637 = vmatpush.bf16.msra.mxu0 %v9201
          %9638 = vmatpush.bf16.msra.mxu0 %v9187
          %9639 = vmatpush.bf16.msra.mxu0 %v9173
          %9640 = vmatpush.bf16.msra.mxu0 %v9159
          %9641 = vmatmul.bf16.gmra.mxu0 %v8145
          %v9642 = vpop.f32.mrf.mxu0
          %v9643 = vadd.f32 %v9630, %v9642
          %v9644 = vpop.f32.mrf.mxu0
          %9645 = vdwg.mxu0
          %9646 = vmatpush.bf16.msra.mxu0 %v9146
          %9647 = vmatpush.bf16.msra.mxu0 %v9132
          %9648 = vmatpush.bf16.msra.mxu0 %v9118
          %9649 = vmatpush.bf16.msra.mxu0 %v9104
          %9650 = vmatpush.bf16.msra.mxu0 %v9090
          %9651 = vmatpush.bf16.msra.mxu0 %v9076
          %9652 = vmatpush.bf16.msra.mxu0 %v9062
          %9653 = vmatpush.bf16.msra.mxu0 %v9048
          %9654 = vmatmul.bf16.gmra.mxu0 %v8144
          %v9655 = vpop.f32.mrf.mxu0
          %v9656 = vadd.f32 0.0, %v9655
          %v9657 = vpop.f32.mrf.mxu0
          %9658 = vdwg.mxu0
          %9659 = vmatpush.bf16.msra.mxu0 %v9258
          %9660 = vmatpush.bf16.msra.mxu0 %v9244
          %9661 = vmatpush.bf16.msra.mxu0 %v9230
          %9662 = vmatpush.bf16.msra.mxu0 %v9216
          %9663 = vmatpush.bf16.msra.mxu0 %v9202
          %9664 = vmatpush.bf16.msra.mxu0 %v9188
          %9665 = vmatpush.bf16.msra.mxu0 %v9174
          %9666 = vmatpush.bf16.msra.mxu0 %v9160
          %9667 = vmatmul.bf16.gmra.mxu0 %v8145
          %v9668 = vpop.f32.mrf.mxu0
          %v9669 = vadd.f32 %v9656, %v9668
          %v9670 = vpop.f32.mrf.mxu0
          %9671 = vdwg.mxu0
          %9672 = vmatpush.bf16.msra.mxu0 %v9147
          %9673 = vmatpush.bf16.msra.mxu0 %v9133
          %9674 = vmatpush.bf16.msra.mxu0 %v9119
          %9675 = vmatpush.bf16.msra.mxu0 %v9105
          %9676 = vmatpush.bf16.msra.mxu0 %v9091
          %9677 = vmatpush.bf16.msra.mxu0 %v9077
          %9678 = vmatpush.bf16.msra.mxu0 %v9063
          %9679 = vmatpush.bf16.msra.mxu0 %v9049
          %9680 = vmatmul.bf16.gmra.mxu0 %v8144
          %v9681 = vpop.f32.mrf.mxu0
          %v9682 = vadd.f32 0.0, %v9681
          %v9683 = vpop.f32.mrf.mxu0
          %9684 = vdwg.mxu0
          %9685 = vmatpush.bf16.msra.mxu0 %v9259
          %9686 = vmatpush.bf16.msra.mxu0 %v9245
          %9687 = vmatpush.bf16.msra.mxu0 %v9231
          %9688 = vmatpush.bf16.msra.mxu0 %v9217
          %9689 = vmatpush.bf16.msra.mxu0 %v9203
          %9690 = vmatpush.bf16.msra.mxu0 %v9189
          %9691 = vmatpush.bf16.msra.mxu0 %v9175
          %9692 = vmatpush.bf16.msra.mxu0 %v9161
          %9693 = vmatmul.bf16.gmra.mxu0 %v8145
          %v9694 = vpop.f32.mrf.mxu0
          %v9695 = vadd.f32 %v9682, %v9694
          %v9696 = vpop.f32.mrf.mxu0
          %9697 = vdwg.mxu0
          %9698 = vmatpush.bf16.msra.mxu0 %v9148
          %9699 = vmatpush.bf16.msra.mxu0 %v9134
          %9700 = vmatpush.bf16.msra.mxu0 %v9120
          %9701 = vmatpush.bf16.msra.mxu0 %v9106
          %9702 = vmatpush.bf16.msra.mxu0 %v9092
          %9703 = vmatpush.bf16.msra.mxu0 %v9078
          %9704 = vmatpush.bf16.msra.mxu0 %v9064
          %9705 = vmatpush.bf16.msra.mxu0 %v9050
          %9706 = vmatmul.bf16.gmra.mxu0 %v8144
          %v9707 = vpop.f32.mrf.mxu0
          %v9708 = vadd.f32 0.0, %v9707
          %v9709 = vpop.f32.mrf.mxu0
          %9710 = vdwg.mxu0
          %9711 = vmatpush.bf16.msra.mxu0 %v9260
          %9712 = vmatpush.bf16.msra.mxu0 %v9246
          %9713 = vmatpush.bf16.msra.mxu0 %v9232
          %9714 = vmatpush.bf16.msra.mxu0 %v9218
          %9715 = vmatpush.bf16.msra.mxu0 %v9204
          %9716 = vmatpush.bf16.msra.mxu0 %v9190
          %9717 = vmatpush.bf16.msra.mxu0 %v9176
          %9718 = vmatpush.bf16.msra.mxu0 %v9162
          %9719 = vmatmul.bf16.gmra.mxu0 %v8145
          %v9720 = vpop.f32.mrf.mxu0
          %v9721 = vadd.f32 %v9708, %v9720
          %v9722 = vpop.f32.mrf.mxu0
          %9723 = vdwg.mxu0
          %9724 = vmatpush.bf16.msra.mxu0 %v9149
          %9725 = vmatpush.bf16.msra.mxu0 %v9135
          %9726 = vmatpush.bf16.msra.mxu0 %v9121
          %9727 = vmatpush.bf16.msra.mxu0 %v9107
          %9728 = vmatpush.bf16.msra.mxu0 %v9093
          %9729 = vmatpush.bf16.msra.mxu0 %v9079
          %9730 = vmatpush.bf16.msra.mxu0 %v9065
          %9731 = vmatpush.bf16.msra.mxu0 %v9051
          %9732 = vmatmul.bf16.gmra.mxu0 %v8144
          %v9733 = vpop.f32.mrf.mxu0
          %v9734 = vadd.f32 0.0, %v9733
          %v9735 = vpop.f32.mrf.mxu0
          %9736 = vdwg.mxu0
          %9737 = vmatpush.bf16.msra.mxu0 %v9261
          %9738 = vmatpush.bf16.msra.mxu0 %v9247
          %9739 = vmatpush.bf16.msra.mxu0 %v9233
          %9740 = vmatpush.bf16.msra.mxu0 %v9219
          %9741 = vmatpush.bf16.msra.mxu0 %v9205
          %9742 = vmatpush.bf16.msra.mxu0 %v9191
          %9743 = vmatpush.bf16.msra.mxu0 %v9177
          %9744 = vmatpush.bf16.msra.mxu0 %v9163
          %9745 = vmatmul.bf16.gmra.mxu0 %v8145
          %v9746 = vpop.f32.mrf.mxu0
          %v9747 = vadd.f32 %v9734, %v9746
          %v9748 = vpop.f32.mrf.mxu0
          %9749 = vdwg.mxu0
          %9750 = vmatpush.bf16.msra.mxu0 %v9150
          %9751 = vmatpush.bf16.msra.mxu0 %v9136
          %9752 = vmatpush.bf16.msra.mxu0 %v9122
          %9753 = vmatpush.bf16.msra.mxu0 %v9108
          %9754 = vmatpush.bf16.msra.mxu0 %v9094
          %9755 = vmatpush.bf16.msra.mxu0 %v9080
          %9756 = vmatpush.bf16.msra.mxu0 %v9066
          %9757 = vmatpush.bf16.msra.mxu0 %v9052
          %9758 = vmatmul.bf16.gmra.mxu0 %v8144
          %v9759 = vpop.f32.mrf.mxu0
          %v9760 = vadd.f32 0.0, %v9759
          %v9761 = vpop.f32.mrf.mxu0
          %9762 = vdwg.mxu0
          %9763 = vmatpush.bf16.msra.mxu0 %v9262
          %9764 = vmatpush.bf16.msra.mxu0 %v9248
          %9765 = vmatpush.bf16.msra.mxu0 %v9234
          %9766 = vmatpush.bf16.msra.mxu0 %v9220
          %9767 = vmatpush.bf16.msra.mxu0 %v9206
          %9768 = vmatpush.bf16.msra.mxu0 %v9192
          %9769 = vmatpush.bf16.msra.mxu0 %v9178
          %9770 = vmatpush.bf16.msra.mxu0 %v9164
          %9771 = vmatmul.bf16.gmra.mxu0 %v8145
          %v9772 = vpop.f32.mrf.mxu0
          %v9773 = vadd.f32 %v9760, %v9772
          %v9774 = vpop.f32.mrf.mxu0
          %9775 = vdwg.mxu0
          %9776 = vmatpush.bf16.msra.mxu0 %v9151
          %9777 = vmatpush.bf16.msra.mxu0 %v9137
          %9778 = vmatpush.bf16.msra.mxu0 %v9123
          %9779 = vmatpush.bf16.msra.mxu0 %v9109
          %9780 = vmatpush.bf16.msra.mxu0 %v9095
          %9781 = vmatpush.bf16.msra.mxu0 %v9081
          %9782 = vmatpush.bf16.msra.mxu0 %v9067
          %9783 = vmatpush.bf16.msra.mxu0 %v9053
          %9784 = vmatmul.bf16.gmra.mxu0 %v8144
          %v9785 = vpop.f32.mrf.mxu0
          %v9786 = vadd.f32 0.0, %v9785
          %v9787 = vpop.f32.mrf.mxu0
          %9788 = vdwg.mxu0
          %9789 = vmatpush.bf16.msra.mxu0 %v9263
          %9790 = vmatpush.bf16.msra.mxu0 %v9249
          %9791 = vmatpush.bf16.msra.mxu0 %v9235
          %9792 = vmatpush.bf16.msra.mxu0 %v9221
          %9793 = vmatpush.bf16.msra.mxu0 %v9207
          %9794 = vmatpush.bf16.msra.mxu0 %v9193
          %9795 = vmatpush.bf16.msra.mxu0 %v9179
          %9796 = vmatpush.bf16.msra.mxu0 %v9165
          %9797 = vmatmul.bf16.gmra.mxu0 %v8145
          %v9798 = vpop.f32.mrf.mxu0
          %v9799 = vadd.f32 %v9786, %v9798
          %v9800 = vpop.f32.mrf.mxu0
          %9801 = vdwg.mxu0
          %9802 = vmatpush.bf16.msra.mxu0 %v9152
          %9803 = vmatpush.bf16.msra.mxu0 %v9138
          %9804 = vmatpush.bf16.msra.mxu0 %v9124
          %9805 = vmatpush.bf16.msra.mxu0 %v9110
          %9806 = vmatpush.bf16.msra.mxu0 %v9096
          %9807 = vmatpush.bf16.msra.mxu0 %v9082
          %9808 = vmatpush.bf16.msra.mxu0 %v9068
          %9809 = vmatpush.bf16.msra.mxu0 %v9054
          %9810 = vmatmul.bf16.gmra.mxu0 %v8144
          %v9811 = vpop.f32.mrf.mxu0
          %v9812 = vadd.f32 0.0, %v9811
          %v9813 = vpop.f32.mrf.mxu0
          %9814 = vdwg.mxu0
          %9815 = vmatpush.bf16.msra.mxu0 %v9264
          %9816 = vmatpush.bf16.msra.mxu0 %v9250
          %9817 = vmatpush.bf16.msra.mxu0 %v9236
          %9818 = vmatpush.bf16.msra.mxu0 %v9222
          %9819 = vmatpush.bf16.msra.mxu0 %v9208
          %9820 = vmatpush.bf16.msra.mxu0 %v9194
          %9821 = vmatpush.bf16.msra.mxu0 %v9180
          %9822 = vmatpush.bf16.msra.mxu0 %v9166
          %9823 = vmatmul.bf16.gmra.mxu0 %v8145
          %v9824 = vpop.f32.mrf.mxu0
          %v9825 = vadd.f32 %v9812, %v9824
          %v9826 = vpop.f32.mrf.mxu0
          %9827 = vdwg.mxu0
          %9828 = vmatpush.bf16.msra.mxu0 %v9153
          %9829 = vmatpush.bf16.msra.mxu0 %v9139
          %9830 = vmatpush.bf16.msra.mxu0 %v9125
          %9831 = vmatpush.bf16.msra.mxu0 %v9111
          %9832 = vmatpush.bf16.msra.mxu0 %v9097
          %9833 = vmatpush.bf16.msra.mxu0 %v9083
          %9834 = vmatpush.bf16.msra.mxu0 %v9069
          %9835 = vmatpush.bf16.msra.mxu0 %v9055
          %9836 = vmatmul.bf16.gmra.mxu0 %v8144
          %v9837 = vpop.f32.mrf.mxu0
          %v9838 = vadd.f32 0.0, %v9837
          %v9839 = vpop.f32.mrf.mxu0
          %9840 = vdwg.mxu0
          %9841 = vmatpush.bf16.msra.mxu0 %v9265
          %9842 = vmatpush.bf16.msra.mxu0 %v9251
          %9843 = vmatpush.bf16.msra.mxu0 %v9237
          %9844 = vmatpush.bf16.msra.mxu0 %v9223
          %9845 = vmatpush.bf16.msra.mxu0 %v9209
          %9846 = vmatpush.bf16.msra.mxu0 %v9195
          %9847 = vmatpush.bf16.msra.mxu0 %v9181
          %9848 = vmatpush.bf16.msra.mxu0 %v9167
          %9849 = vmatmul.bf16.gmra.mxu0 %v8145
          %v9850 = vpop.f32.mrf.mxu0
          %v9851 = vadd.f32 %v9838, %v9850
          %v9852 = vpop.f32.mrf.mxu0
          %9853 = vdwg.mxu0
          %v9868 = vrot.slane %v9513, 1
          %v9869 = vrot.slane %v9539, 1
          %v9870 = vrot.slane %v9565, 1
          %v9871 = vrot.slane %v9591, 1
          %v9872 = vrot.slane %v9617, 1
          %v9873 = vrot.slane %v9643, 1
          %v9874 = vrot.slane %v9669, 1
          %v9875 = vrot.slane %v9695, 1
          %v9876 = vrot.slane %v9721, 1
          %v9877 = vrot.slane %v9747, 1
          %v9878 = vrot.slane %v9773, 1
          %v9879 = vrot.slane %v9799, 1
          %v9880 = vrot.slane %v9825, 1
          %v9881 = vrot.slane %v9851, 1
          %v9896 = vadd.f32 %v9513, %v9868
          %v9897 = vadd.f32 %v9539, %v9869
          %v9898 = vadd.f32 %v9565, %v9870
          %v9899 = vadd.f32 %v9591, %v9871
          %v9900 = vadd.f32 %v9617, %v9872
          %v9901 = vadd.f32 %v9643, %v9873
          %v9902 = vadd.f32 %v9669, %v9874
          %v9903 = vadd.f32 %v9695, %v9875
          %v9904 = vadd.f32 %v9721, %v9876
          %v9905 = vadd.f32 %v9747, %v9877
          %v9906 = vadd.f32 %v9773, %v9878
          %v9907 = vadd.f32 %v9799, %v9879
          %v9908 = vadd.f32 %v9825, %v9880
          %v9909 = vadd.f32 %v9851, %v9881
          %v9910 = vxor.u32 %v9896, 2147483648
          %v9911 = vxor.u32 %v9897, 2147483648
          %v9912 = vxor.u32 %v9898, 2147483648
          %v9913 = vxor.u32 %v9899, 2147483648
          %v9914 = vxor.u32 %v9900, 2147483648
          %v9915 = vxor.u32 %v9901, 2147483648
          %v9916 = vxor.u32 %v9902, 2147483648
          %v9917 = vxor.u32 %v9903, 2147483648
          %v9918 = vxor.u32 %v9904, 2147483648
          %v9919 = vxor.u32 %v9905, 2147483648
          %v9920 = vxor.u32 %v9906, 2147483648
          %v9921 = vxor.u32 %v9907, 2147483648
          %v9922 = vxor.u32 %v9908, 2147483648
          %v9923 = vxor.u32 %v9909, 2147483648
          %v9924 = vmul.f32 %v9910, 1.442695
          %v9925 = vpow.pop %v9924
          %v9926 = vmul.f32 %v9911, 1.442695
          %v9927 = vpow.pop %v9926
          %v9928 = vmul.f32 %v9912, 1.442695
          %v9929 = vpow.pop %v9928
          %v9930 = vmul.f32 %v9913, 1.442695
          %v9931 = vpow.pop %v9930
          %v9932 = vmul.f32 %v9914, 1.442695
          %v9933 = vpow.pop %v9932
          %v9934 = vmul.f32 %v9915, 1.442695
          %v9935 = vpow.pop %v9934
          %v9936 = vmul.f32 %v9916, 1.442695
          %v9937 = vpow.pop %v9936
          %v9938 = vmul.f32 %v9917, 1.442695
          %v9939 = vpow.pop %v9938
          %v9940 = vmul.f32 %v9918, 1.442695
          %v9941 = vpow.pop %v9940
          %v9942 = vmul.f32 %v9919, 1.442695
          %v9943 = vpow.pop %v9942
          %v9944 = vmul.f32 %v9920, 1.442695
          %v9945 = vpow.pop %v9944
          %v9946 = vmul.f32 %v9921, 1.442695
          %v9947 = vpow.pop %v9946
          %v9948 = vmul.f32 %v9922, 1.442695
          %v9949 = vpow.pop %v9948
          %v9950 = vmul.f32 %v9923, 1.442695
          %v9951 = vpow.pop %v9950
          %v9952 = vadd.f32 %v9925, 1.0
          %v9953 = vadd.f32 %v9927, 1.0
          %v9954 = vadd.f32 %v9929, 1.0
          %v9955 = vadd.f32 %v9931, 1.0
          %v9956 = vadd.f32 %v9933, 1.0
          %v9957 = vadd.f32 %v9935, 1.0
          %v9958 = vadd.f32 %v9937, 1.0
          %v9959 = vadd.f32 %v9939, 1.0
          %v9960 = vadd.f32 %v9941, 1.0
          %v9961 = vadd.f32 %v9943, 1.0
          %v9962 = vadd.f32 %v9945, 1.0
          %v9963 = vadd.f32 %v9947, 1.0
          %v9964 = vadd.f32 %v9949, 1.0
          %v9965 = vadd.f32 %v9951, 1.0
          %v9966 = vrcp.pop %v9952
          %v9967 = vmul.f32 %v9952, %v9966
          %v9968 = vsub.f32 1.0, %v9967
          %v9969 = vmul.f32 %v9966, %v9968
          %v9970 = vadd.f32 %v9966, %v9969
          %vm9971 = vweird.f32 %v9952
          %vm9972 = vweird.f32 %v9966
          %vm9973 = vmor %vm9971, %vm9972
          %v9974 = vsel %vm9973, %v9966, %v9970
          %v9975 = vand.u32 2147483647, %v9952
          %vm9976 = vcmp.eq.f32.partialorder %v9975, 8.507059e+37
          %v9977 = vand.u32 %v9952, 2147483648
          %v9978 = vor.u32 1.1754944e-38, %v9977
          %v9979 = vsel %vm9976, %v9978, %v9974
          %v9980 = vmul.f32 1.0, %v9979
          %v9981 = vrcp.pop %v9953
          %v9982 = vmul.f32 %v9953, %v9981
          %v9983 = vsub.f32 1.0, %v9982
          %v9984 = vmul.f32 %v9981, %v9983
          %v9985 = vadd.f32 %v9981, %v9984
          %vm9986 = vweird.f32 %v9953
          %vm9987 = vweird.f32 %v9981
          %vm9988 = vmor %vm9986, %vm9987
          %v9989 = vsel %vm9988, %v9981, %v9985
          %v9990 = vand.u32 2147483647, %v9953
          %vm9991 = vcmp.eq.f32.partialorder %v9990, 8.507059e+37
          %v9992 = vand.u32 %v9953, 2147483648
          %v9993 = vor.u32 1.1754944e-38, %v9992
          %v9994 = vsel %vm9991, %v9993, %v9989
          %v9995 = vmul.f32 1.0, %v9994
          %v9996 = vrcp.pop %v9954
          %v9997 = vmul.f32 %v9954, %v9996
          %v9998 = vsub.f32 1.0, %v9997
          %v9999 = vmul.f32 %v9996, %v9998
          %v10000 = vadd.f32 %v9996, %v9999
          %vm10001 = vweird.f32 %v9954
          %vm10002 = vweird.f32 %v9996
          %vm10003 = vmor %vm10001, %vm10002
          %v10004 = vsel %vm10003, %v9996, %v10000
          %v10005 = vand.u32 2147483647, %v9954
          %vm10006 = vcmp.eq.f32.partialorder %v10005, 8.507059e+37
          %v10007 = vand.u32 %v9954, 2147483648
          %v10008 = vor.u32 1.1754944e-38, %v10007
          %v10009 = vsel %vm10006, %v10008, %v10004
          %v10010 = vmul.f32 1.0, %v10009
          %v10011 = vrcp.pop %v9955
          %v10012 = vmul.f32 %v9955, %v10011
          %v10013 = vsub.f32 1.0, %v10012
          %v10014 = vmul.f32 %v10011, %v10013
          %v10015 = vadd.f32 %v10011, %v10014
          %vm10016 = vweird.f32 %v9955
          %vm10017 = vweird.f32 %v10011
          %vm10018 = vmor %vm10016, %vm10017
          %v10019 = vsel %vm10018, %v10011, %v10015
          %v10020 = vand.u32 2147483647, %v9955
          %vm10021 = vcmp.eq.f32.partialorder %v10020, 8.507059e+37
          %v10022 = vand.u32 %v9955, 2147483648
          %v10023 = vor.u32 1.1754944e-38, %v10022
          %v10024 = vsel %vm10021, %v10023, %v10019
          %v10025 = vmul.f32 1.0, %v10024
          %v10026 = vrcp.pop %v9956
          %v10027 = vmul.f32 %v9956, %v10026
          %v10028 = vsub.f32 1.0, %v10027
          %v10029 = vmul.f32 %v10026, %v10028
          %v10030 = vadd.f32 %v10026, %v10029
          %vm10031 = vweird.f32 %v9956
          %vm10032 = vweird.f32 %v10026
          %vm10033 = vmor %vm10031, %vm10032
          %v10034 = vsel %vm10033, %v10026, %v10030
          %v10035 = vand.u32 2147483647, %v9956
          %vm10036 = vcmp.eq.f32.partialorder %v10035, 8.507059e+37
          %v10037 = vand.u32 %v9956, 2147483648
          %v10038 = vor.u32 1.1754944e-38, %v10037
          %v10039 = vsel %vm10036, %v10038, %v10034
          %v10040 = vmul.f32 1.0, %v10039
          %v10041 = vrcp.pop %v9957
          %v10042 = vmul.f32 %v9957, %v10041
          %v10043 = vsub.f32 1.0, %v10042
          %v10044 = vmul.f32 %v10041, %v10043
          %v10045 = vadd.f32 %v10041, %v10044
          %vm10046 = vweird.f32 %v9957
          %vm10047 = vweird.f32 %v10041
          %vm10048 = vmor %vm10046, %vm10047
          %v10049 = vsel %vm10048, %v10041, %v10045
          %v10050 = vand.u32 2147483647, %v9957
          %vm10051 = vcmp.eq.f32.partialorder %v10050, 8.507059e+37
          %v10052 = vand.u32 %v9957, 2147483648
          %v10053 = vor.u32 1.1754944e-38, %v10052
          %v10054 = vsel %vm10051, %v10053, %v10049
          %v10055 = vmul.f32 1.0, %v10054
          %v10056 = vrcp.pop %v9958
          %v10057 = vmul.f32 %v9958, %v10056
          %v10058 = vsub.f32 1.0, %v10057
          %v10059 = vmul.f32 %v10056, %v10058
          %v10060 = vadd.f32 %v10056, %v10059
          %vm10061 = vweird.f32 %v9958
          %vm10062 = vweird.f32 %v10056
          %vm10063 = vmor %vm10061, %vm10062
          %v10064 = vsel %vm10063, %v10056, %v10060
          %v10065 = vand.u32 2147483647, %v9958
          %vm10066 = vcmp.eq.f32.partialorder %v10065, 8.507059e+37
          %v10067 = vand.u32 %v9958, 2147483648
          %v10068 = vor.u32 1.1754944e-38, %v10067
          %v10069 = vsel %vm10066, %v10068, %v10064
          %v10070 = vmul.f32 1.0, %v10069
          %v10071 = vrcp.pop %v9959
          %v10072 = vmul.f32 %v9959, %v10071
          %v10073 = vsub.f32 1.0, %v10072
          %v10074 = vmul.f32 %v10071, %v10073
          %v10075 = vadd.f32 %v10071, %v10074
          %vm10076 = vweird.f32 %v9959
          %vm10077 = vweird.f32 %v10071
          %vm10078 = vmor %vm10076, %vm10077
          %v10079 = vsel %vm10078, %v10071, %v10075
          %v10080 = vand.u32 2147483647, %v9959
          %vm10081 = vcmp.eq.f32.partialorder %v10080, 8.507059e+37
          %v10082 = vand.u32 %v9959, 2147483648
          %v10083 = vor.u32 1.1754944e-38, %v10082
          %v10084 = vsel %vm10081, %v10083, %v10079
          %v10085 = vmul.f32 1.0, %v10084
          %v10086 = vrcp.pop %v9960
          %v10087 = vmul.f32 %v9960, %v10086
          %v10088 = vsub.f32 1.0, %v10087
          %v10089 = vmul.f32 %v10086, %v10088
          %v10090 = vadd.f32 %v10086, %v10089
          %vm10091 = vweird.f32 %v9960
          %vm10092 = vweird.f32 %v10086
          %vm10093 = vmor %vm10091, %vm10092
          %v10094 = vsel %vm10093, %v10086, %v10090
          %v10095 = vand.u32 2147483647, %v9960
          %vm10096 = vcmp.eq.f32.partialorder %v10095, 8.507059e+37
          %v10097 = vand.u32 %v9960, 2147483648
          %v10098 = vor.u32 1.1754944e-38, %v10097
          %v10099 = vsel %vm10096, %v10098, %v10094
          %v10100 = vmul.f32 1.0, %v10099
          %v10101 = vrcp.pop %v9961
          %v10102 = vmul.f32 %v9961, %v10101
          %v10103 = vsub.f32 1.0, %v10102
          %v10104 = vmul.f32 %v10101, %v10103
          %v10105 = vadd.f32 %v10101, %v10104
          %vm10106 = vweird.f32 %v9961
          %vm10107 = vweird.f32 %v10101
          %vm10108 = vmor %vm10106, %vm10107
          %v10109 = vsel %vm10108, %v10101, %v10105
          %v10110 = vand.u32 2147483647, %v9961
          %vm10111 = vcmp.eq.f32.partialorder %v10110, 8.507059e+37
          %v10112 = vand.u32 %v9961, 2147483648
          %v10113 = vor.u32 1.1754944e-38, %v10112
          %v10114 = vsel %vm10111, %v10113, %v10109
          %v10115 = vmul.f32 1.0, %v10114
          %v10116 = vrcp.pop %v9962
          %v10117 = vmul.f32 %v9962, %v10116
          %v10118 = vsub.f32 1.0, %v10117
          %v10119 = vmul.f32 %v10116, %v10118
          %v10120 = vadd.f32 %v10116, %v10119
          %vm10121 = vweird.f32 %v9962
          %vm10122 = vweird.f32 %v10116
          %vm10123 = vmor %vm10121, %vm10122
          %v10124 = vsel %vm10123, %v10116, %v10120
          %v10125 = vand.u32 2147483647, %v9962
          %vm10126 = vcmp.eq.f32.partialorder %v10125, 8.507059e+37
          %v10127 = vand.u32 %v9962, 2147483648
          %v10128 = vor.u32 1.1754944e-38, %v10127
          %v10129 = vsel %vm10126, %v10128, %v10124
          %v10130 = vmul.f32 1.0, %v10129
          %v10131 = vrcp.pop %v9963
          %v10132 = vmul.f32 %v9963, %v10131
          %v10133 = vsub.f32 1.0, %v10132
          %v10134 = vmul.f32 %v10131, %v10133
          %v10135 = vadd.f32 %v10131, %v10134
          %vm10136 = vweird.f32 %v9963
          %vm10137 = vweird.f32 %v10131
          %vm10138 = vmor %vm10136, %vm10137
          %v10139 = vsel %vm10138, %v10131, %v10135
          %v10140 = vand.u32 2147483647, %v9963
          %vm10141 = vcmp.eq.f32.partialorder %v10140, 8.507059e+37
          %v10142 = vand.u32 %v9963, 2147483648
          %v10143 = vor.u32 1.1754944e-38, %v10142
          %v10144 = vsel %vm10141, %v10143, %v10139
          %v10145 = vmul.f32 1.0, %v10144
          %v10146 = vrcp.pop %v9964
          %v10147 = vmul.f32 %v9964, %v10146
          %v10148 = vsub.f32 1.0, %v10147
          %v10149 = vmul.f32 %v10146, %v10148
          %v10150 = vadd.f32 %v10146, %v10149
          %vm10151 = vweird.f32 %v9964
          %vm10152 = vweird.f32 %v10146
          %vm10153 = vmor %vm10151, %vm10152
          %v10154 = vsel %vm10153, %v10146, %v10150
          %v10155 = vand.u32 2147483647, %v9964
          %vm10156 = vcmp.eq.f32.partialorder %v10155, 8.507059e+37
          %v10157 = vand.u32 %v9964, 2147483648
          %v10158 = vor.u32 1.1754944e-38, %v10157
          %v10159 = vsel %vm10156, %v10158, %v10154
          %v10160 = vmul.f32 1.0, %v10159
          %v10161 = vrcp.pop %v9965
          %v10162 = vmul.f32 %v9965, %v10161
          %v10163 = vsub.f32 1.0, %v10162
          %v10164 = vmul.f32 %v10161, %v10163
          %v10165 = vadd.f32 %v10161, %v10164
          %vm10166 = vweird.f32 %v9965
          %vm10167 = vweird.f32 %v10161
          %vm10168 = vmor %vm10166, %vm10167
          %v10169 = vsel %vm10168, %v10161, %v10165
          %v10170 = vand.u32 2147483647, %v9965
          %vm10171 = vcmp.eq.f32.partialorder %v10170, 8.507059e+37
          %v10172 = vand.u32 %v9965, 2147483648
          %v10173 = vor.u32 1.1754944e-38, %v10172
          %v10174 = vsel %vm10171, %v10173, %v10169
          %v10175 = vmul.f32 1.0, %v10174
          %v10190 = vrot.slane %v9995, 6
          %v10191 = vrot.slane %v10010, 4
          %v10192 = vrot.slane %v10025, 2
          %v10193 = vrot.slane %v10055, 6
          %v10194 = vrot.slane %v10070, 4
          %v10195 = vrot.slane %v10085, 2
          %v10196 = vrot.slane %v10115, 6
          %v10197 = vrot.slane %v10130, 4
          %v10198 = vrot.slane %v10145, 2
          %v10199 = vrot.slane %v10175, 6
          %v10200 = vsel %vm3430, %v9980, %v10190
          %v10201 = vsel %vm3434, %v10191, %v10192
          %v10202 = vsel %vm3436, %v10200, %v10201
          %v10203 = vsel %vm3430, %v10040, %v10193
          %v10204 = vsel %vm3434, %v10194, %v10195
          %v10205 = vsel %vm3436, %v10203, %v10204
          %v10206 = vsel %vm3430, %v10100, %v10196
          %v10207 = vsel %vm3434, %v10197, %v10198
          %v10208 = vsel %vm3436, %v10206, %v10207
          %v10209 = vsel %vm3430, %v10160, %v10199
          %v10214 = vmul.f32 %v6379, %v10202
          %v10215 = vmul.f32 %v6380, %v10205
          %v10216 = vmul.f32 %v6381, %v10208
          %v10217 = vmul.f32 %v6382, %v10209
          %v10222 = vperm.slane %v10214, 0
          %v10223 = vperm.slane %v10214, 2
          %v10224 = vperm.slane %v10214, 4
          %v10225 = vperm.slane %v10214, 6
          %v10226 = vperm.slane %v10215, 0
          %v10227 = vperm.slane %v10215, 2
          %v10228 = vperm.slane %v10215, 4
          %v10229 = vperm.slane %v10215, 6
          %v10230 = vperm.slane %v10216, 0
          %v10231 = vperm.slane %v10216, 2
          %v10232 = vperm.slane %v10216, 4
          %v10233 = vperm.slane %v10216, 6
          %v10234 = vperm.slane %v10217, 0
          %v10235 = vperm.slane %v10217, 2
          %v10250 = vpack.c.bf16 %v10222, %v10222
          %v10251 = vpack.c.bf16 %v10223, %v10223
          %v10252 = vpack.c.bf16 %v10224, %v10224
          %v10253 = vpack.c.bf16 %v10225, %v10225
          %v10254 = vpack.c.bf16 %v10226, %v10226
          %v10255 = vpack.c.bf16 %v10227, %v10227
          %v10256 = vpack.c.bf16 %v10228, %v10228
          %v10257 = vpack.c.bf16 %v10229, %v10229
          %v10258 = vpack.c.bf16 %v10230, %v10230
          %v10259 = vpack.c.bf16 %v10231, %v10231
          %v10260 = vpack.c.bf16 %v10232, %v10232
          %v10261 = vpack.c.bf16 %v10233, %v10233
          %v10262 = vpack.c.bf16 %v10234, %v10234
          %v10263 = vpack.c.bf16 %v10235, %v10235
          %v10264 = vld [vmem:[%s3] sm:$0xf]
          %v10265 = vld [vmem:[%s3 + $0x4] sm:$0xf]
          %v10266 = vld [vmem:[%s3 + $0x8] sm:$0xf]
          %v10267 = vld [vmem:[%s3 + $0xc] sm:$0xf]
          %v10268 = vld [vmem:[%s3 + $0x10] sm:$0xf]
          %v10269 = vld [vmem:[%s3 + $0x14] sm:$0xf]
          %v10270 = vld [vmem:[%s3 + $0x18] sm:$0xf]
          %v10271 = vld [vmem:[%s3 + $0x1c] sm:$0xf]
          %v10272 = vld [vmem:[%s3 + $0x20] sm:$0xf]
          %v10273 = vld [vmem:[%s3 + $0x24] sm:$0xf]
          %v10274 = vld [vmem:[%s3 + $0x28] sm:$0xf]
          %v10275 = vld [vmem:[%s3 + $0x2c] sm:$0xf]
          %v10276 = vld [vmem:[%s3 + $0x30] sm:$0xf]
          %v10277 = vld [vmem:[%s3 + $0x34] sm:$0xf]
          %v10278 = vld [vmem:[%s3 + $0x38] sm:$0xf]
          %v10279 = vld [vmem:[%s3 + $0x3c] sm:$0xf]
          %v10280 = vld [vmem:[%s3 + $0x40] sm:$0xf]
          %v10281 = vld [vmem:[%s3 + $0x44] sm:$0xf]
          %v10282 = vld [vmem:[%s3 + $0x48] sm:$0xf]
          %v10283 = vld [vmem:[%s3 + $0x4c] sm:$0xf]
          %v10284 = vld [vmem:[%s3 + $0x50] sm:$0xf]
          %v10285 = vld [vmem:[%s3 + $0x54] sm:$0xf]
          %v10286 = vld [vmem:[%s3 + $0x58] sm:$0xf]
          %v10287 = vld [vmem:[%s3 + $0x5c] sm:$0xf]
          %v10288 = vld [vmem:[%s3 + $0x60] sm:$0xf]
          %v10289 = vld [vmem:[%s3 + $0x64] sm:$0xf]
          %v10290 = vld [vmem:[%s3 + $0x68] sm:$0xf]
          %v10291 = vld [vmem:[%s3 + $0x6c] sm:$0xf]
          %v10292 = vld [vmem:[%s3 + $0x70] sm:$0xf]
          %v10293 = vld [vmem:[%s3 + $0x74] sm:$0xf]
          %v10294 = vld [vmem:[%s3 + $0x78] sm:$0xf]
          %v10295 = vld [vmem:[%s3 + $0x7c] sm:$0xf]
          %v10296 = vld [vmem:[%s3 + $0x80] sm:$0xf]
          %v10297 = vld [vmem:[%s3 + $0x84] sm:$0xf]
          %v10298 = vld [vmem:[%s3 + $0x88] sm:$0xf]
          %v10299 = vld [vmem:[%s3 + $0x8c] sm:$0xf]
          %v10300 = vld [vmem:[%s3 + $0x90] sm:$0xf]
          %v10301 = vld [vmem:[%s3 + $0x94] sm:$0xf]
          %v10302 = vld [vmem:[%s3 + $0x98] sm:$0xf]
          %v10303 = vld [vmem:[%s3 + $0x9c] sm:$0xf]
          %v10304 = vld [vmem:[%s3 + $0xa0] sm:$0xf]
          %v10305 = vld [vmem:[%s3 + $0xa4] sm:$0xf]
          %v10306 = vld [vmem:[%s3 + $0xa8] sm:$0xf]
          %v10307 = vld [vmem:[%s3 + $0xac] sm:$0xf]
          %v10308 = vld [vmem:[%s3 + $0xb0] sm:$0xf]
          %v10309 = vld [vmem:[%s3 + $0xb4] sm:$0xf]
          %v10310 = vld [vmem:[%s3 + $0xb8] sm:$0xf]
          %v10311 = vld [vmem:[%s3 + $0xbc] sm:$0xf]
          %v10312 = vld [vmem:[%s3 + $0xc0] sm:$0xf]
          %v10313 = vld [vmem:[%s3 + $0xc4] sm:$0xf]
          %v10314 = vld [vmem:[%s3 + $0xc8] sm:$0xf]
          %v10315 = vld [vmem:[%s3 + $0xcc] sm:$0xf]
          %v10316 = vld [vmem:[%s3 + $0xd0] sm:$0xf]
          %v10317 = vld [vmem:[%s3 + $0xd4] sm:$0xf]
          %v10318 = vld [vmem:[%s3 + $0xd8] sm:$0xf]
          %v10319 = vld [vmem:[%s3 + $0xdc] sm:$0xf]
          %v10320 = vld [vmem:[%s3 + $0xe0] sm:$0xf]
          %v10321 = vld [vmem:[%s3 + $0xe4] sm:$0xf]
          %v10322 = vld [vmem:[%s3 + $0xe8] sm:$0xf]
          %v10323 = vld [vmem:[%s3 + $0xec] sm:$0xf]
          %v10324 = vld [vmem:[%s3 + $0xf0] sm:$0xf]
          %v10325 = vld [vmem:[%s3 + $0xf4] sm:$0xf]
          %v10326 = vld [vmem:[%s3 + $0xf8] sm:$0xf]
          %v10327 = vld [vmem:[%s3 + $0xfc] sm:$0xf]
          %v10328 = vld [vmem:[%s3 + $0x100] sm:$0xf]
          %v10329 = vld [vmem:[%s3 + $0x104] sm:$0xf]
          %v10330 = vld [vmem:[%s3 + $0x108] sm:$0xf]
          %v10331 = vld [vmem:[%s3 + $0x10c] sm:$0xf]
          %v10332 = vld [vmem:[%s3 + $0x110] sm:$0xf]
          %v10333 = vld [vmem:[%s3 + $0x114] sm:$0xf]
          %v10334 = vld [vmem:[%s3 + $0x118] sm:$0xf]
          %v10335 = vld [vmem:[%s3 + $0x11c] sm:$0xf]
          %v10336 = vld [vmem:[%s3 + $0x120] sm:$0xf]
          %v10337 = vld [vmem:[%s3 + $0x124] sm:$0xf]
          %v10338 = vld [vmem:[%s3 + $0x128] sm:$0xf]
          %v10339 = vld [vmem:[%s3 + $0x12c] sm:$0xf]
          %v10340 = vld [vmem:[%s3 + $0x130] sm:$0xf]
          %v10341 = vld [vmem:[%s3 + $0x134] sm:$0xf]
          %v10342 = vld [vmem:[%s3 + $0x138] sm:$0xf]
          %v10343 = vld [vmem:[%s3 + $0x13c] sm:$0xf]
          %v10344 = vld [vmem:[%s3 + $0x140] sm:$0xf]
          %v10345 = vld [vmem:[%s3 + $0x144] sm:$0xf]
          %v10346 = vld [vmem:[%s3 + $0x148] sm:$0xf]
          %v10347 = vld [vmem:[%s3 + $0x14c] sm:$0xf]
          %v10348 = vld [vmem:[%s3 + $0x150] sm:$0xf]
          %v10349 = vld [vmem:[%s3 + $0x154] sm:$0xf]
          %v10350 = vld [vmem:[%s3 + $0x158] sm:$0xf]
          %v10351 = vld [vmem:[%s3 + $0x15c] sm:$0xf]
          %v10352 = vld [vmem:[%s3 + $0x160] sm:$0xf]
          %v10353 = vld [vmem:[%s3 + $0x164] sm:$0xf]
          %v10354 = vld [vmem:[%s3 + $0x168] sm:$0xf]
          %v10355 = vld [vmem:[%s3 + $0x16c] sm:$0xf]
          %v10356 = vld [vmem:[%s3 + $0x170] sm:$0xf]
          %v10357 = vld [vmem:[%s3 + $0x174] sm:$0xf]
          %v10358 = vld [vmem:[%s3 + $0x178] sm:$0xf]
          %v10359 = vld [vmem:[%s3 + $0x17c] sm:$0xf]
          %v10360 = vld [vmem:[%s3 + $0x180] sm:$0xf]
          %v10361 = vld [vmem:[%s3 + $0x184] sm:$0xf]
          %v10362 = vld [vmem:[%s3 + $0x188] sm:$0xf]
          %v10363 = vld [vmem:[%s3 + $0x18c] sm:$0xf]
          %v10364 = vld [vmem:[%s3 + $0x190] sm:$0xf]
          %v10365 = vld [vmem:[%s3 + $0x194] sm:$0xf]
          %v10366 = vld [vmem:[%s3 + $0x198] sm:$0xf]
          %v10367 = vld [vmem:[%s3 + $0x19c] sm:$0xf]
          %v10368 = vld [vmem:[%s3 + $0x1a0] sm:$0xf]
          %v10369 = vld [vmem:[%s3 + $0x1a4] sm:$0xf]
          %v10370 = vld [vmem:[%s3 + $0x1a8] sm:$0xf]
          %v10371 = vld [vmem:[%s3 + $0x1ac] sm:$0xf]
          %v10372 = vld [vmem:[%s3 + $0x1b0] sm:$0xf]
          %v10373 = vld [vmem:[%s3 + $0x1b4] sm:$0xf]
          %v10374 = vld [vmem:[%s3 + $0x1b8] sm:$0xf]
          %v10375 = vld [vmem:[%s3 + $0x1bc] sm:$0xf]
          %v10376 = vld [vmem:[%s3 + $0x1c0] sm:$0xf]
          %v10377 = vld [vmem:[%s3 + $0x1c4] sm:$0xf]
          %v10378 = vld [vmem:[%s3 + $0x1c8] sm:$0xf]
          %v10379 = vld [vmem:[%s3 + $0x1cc] sm:$0xf]
          %v10380 = vld [vmem:[%s3 + $0x1d0] sm:$0xf]
          %v10381 = vld [vmem:[%s3 + $0x1d4] sm:$0xf]
          %v10382 = vld [vmem:[%s3 + $0x1d8] sm:$0xf]
          %v10383 = vld [vmem:[%s3 + $0x1dc] sm:$0xf]
          %v10384 = vld [vmem:[%s3 + $0x1e0] sm:$0xf]
          %v10385 = vld [vmem:[%s3 + $0x1e4] sm:$0xf]
          %v10386 = vld [vmem:[%s3 + $0x1e8] sm:$0xf]
          %v10387 = vld [vmem:[%s3 + $0x1ec] sm:$0xf]
          %v10388 = vld [vmem:[%s3 + $0x1f0] sm:$0xf]
          %v10389 = vld [vmem:[%s3 + $0x1f4] sm:$0xf]
          %v10390 = vld [vmem:[%s3 + $0x1f8] sm:$0xf]
          %v10391 = vld [vmem:[%s3 + $0x1fc] sm:$0xf]
          %v10392 = vld [vmem:[%s3 + $0x200] sm:$0xf]
          %v10393 = vld [vmem:[%s3 + $0x204] sm:$0xf]
          %v10394 = vld [vmem:[%s3 + $0x208] sm:$0xf]
          %v10395 = vld [vmem:[%s3 + $0x20c] sm:$0xf]
          %v10396 = vld [vmem:[%s3 + $0x210] sm:$0xf]
          %v10397 = vld [vmem:[%s3 + $0x214] sm:$0xf]
          %v10398 = vld [vmem:[%s3 + $0x218] sm:$0xf]
          %v10399 = vld [vmem:[%s3 + $0x21c] sm:$0xf]
          %v10400 = vld [vmem:[%s3 + $0x220] sm:$0xf]
          %v10401 = vld [vmem:[%s3 + $0x224] sm:$0xf]
          %v10402 = vld [vmem:[%s3 + $0x228] sm:$0xf]
          %v10403 = vld [vmem:[%s3 + $0x22c] sm:$0xf]
          %v10404 = vld [vmem:[%s3 + $0x230] sm:$0xf]
          %v10405 = vld [vmem:[%s3 + $0x234] sm:$0xf]
          %v10406 = vld [vmem:[%s3 + $0x238] sm:$0xf]
          %v10407 = vld [vmem:[%s3 + $0x23c] sm:$0xf]
          %v10408 = vld [vmem:[%s3 + $0x240] sm:$0xf]
          %v10409 = vld [vmem:[%s3 + $0x244] sm:$0xf]
          %v10410 = vld [vmem:[%s3 + $0x248] sm:$0xf]
          %v10411 = vld [vmem:[%s3 + $0x24c] sm:$0xf]
          %v10412 = vld [vmem:[%s3 + $0x250] sm:$0xf]
          %v10413 = vld [vmem:[%s3 + $0x254] sm:$0xf]
          %v10414 = vld [vmem:[%s3 + $0x258] sm:$0xf]
          %v10415 = vld [vmem:[%s3 + $0x25c] sm:$0xf]
          %v10416 = vld [vmem:[%s3 + $0x260] sm:$0xf]
          %v10417 = vld [vmem:[%s3 + $0x264] sm:$0xf]
          %v10418 = vld [vmem:[%s3 + $0x268] sm:$0xf]
          %v10419 = vld [vmem:[%s3 + $0x26c] sm:$0xf]
          %v10420 = vld [vmem:[%s3 + $0x270] sm:$0xf]
          %v10421 = vld [vmem:[%s3 + $0x274] sm:$0xf]
          %v10422 = vld [vmem:[%s3 + $0x278] sm:$0xf]
          %v10423 = vld [vmem:[%s3 + $0x27c] sm:$0xf]
          %v10424 = vld [vmem:[%s3 + $0x280] sm:$0xf]
          %v10425 = vld [vmem:[%s3 + $0x284] sm:$0xf]
          %v10426 = vld [vmem:[%s3 + $0x288] sm:$0xf]
          %v10427 = vld [vmem:[%s3 + $0x28c] sm:$0xf]
          %v10428 = vld [vmem:[%s3 + $0x290] sm:$0xf]
          %v10429 = vld [vmem:[%s3 + $0x294] sm:$0xf]
          %v10430 = vld [vmem:[%s3 + $0x298] sm:$0xf]
          %v10431 = vld [vmem:[%s3 + $0x29c] sm:$0xf]
          %v10432 = vld [vmem:[%s3 + $0x2a0] sm:$0xf]
          %v10433 = vld [vmem:[%s3 + $0x2a4] sm:$0xf]
          %v10434 = vld [vmem:[%s3 + $0x2a8] sm:$0xf]
          %v10435 = vld [vmem:[%s3 + $0x2ac] sm:$0xf]
          %v10436 = vld [vmem:[%s3 + $0x2b0] sm:$0xf]
          %v10437 = vld [vmem:[%s3 + $0x2b4] sm:$0xf]
          %v10438 = vld [vmem:[%s3 + $0x2b8] sm:$0xf]
          %v10439 = vld [vmem:[%s3 + $0x2bc] sm:$0xf]
          %v10440 = vld [vmem:[%s3 + $0x2c0] sm:$0xf]
          %v10441 = vld [vmem:[%s3 + $0x2c4] sm:$0xf]
          %v10442 = vld [vmem:[%s3 + $0x2c8] sm:$0xf]
          %v10443 = vld [vmem:[%s3 + $0x2cc] sm:$0xf]
          %v10444 = vld [vmem:[%s3 + $0x2d0] sm:$0xf]
          %v10445 = vld [vmem:[%s3 + $0x2d4] sm:$0xf]
          %v10446 = vld [vmem:[%s3 + $0x2d8] sm:$0xf]
          %v10447 = vld [vmem:[%s3 + $0x2dc] sm:$0xf]
          %v10448 = vld [vmem:[%s3 + $0x2e0] sm:$0xf]
          %v10449 = vld [vmem:[%s3 + $0x2e4] sm:$0xf]
          %v10450 = vld [vmem:[%s3 + $0x2e8] sm:$0xf]
          %v10451 = vld [vmem:[%s3 + $0x2ec] sm:$0xf]
          %v10452 = vld [vmem:[%s3 + $0x2f0] sm:$0xf]
          %v10453 = vld [vmem:[%s3 + $0x2f4] sm:$0xf]
          %v10454 = vld [vmem:[%s3 + $0x2f8] sm:$0xf]
          %v10455 = vld [vmem:[%s3 + $0x2fc] sm:$0xf]
          %v10456 = vld [vmem:[%s3 + $0x300] sm:$0xf]
          %v10457 = vld [vmem:[%s3 + $0x304] sm:$0xf]
          %v10458 = vld [vmem:[%s3 + $0x308] sm:$0xf]
          %v10459 = vld [vmem:[%s3 + $0x30c] sm:$0xf]
          %v10460 = vld [vmem:[%s3 + $0x310] sm:$0xf]
          %v10461 = vld [vmem:[%s3 + $0x314] sm:$0xf]
          %v10462 = vld [vmem:[%s3 + $0x318] sm:$0xf]
          %v10463 = vld [vmem:[%s3 + $0x31c] sm:$0xf]
          %v10464 = vld [vmem:[%s3 + $0x320] sm:$0xf]
          %v10465 = vld [vmem:[%s3 + $0x324] sm:$0xf]
          %v10466 = vld [vmem:[%s3 + $0x328] sm:$0xf]
          %v10467 = vld [vmem:[%s3 + $0x32c] sm:$0xf]
          %v10468 = vld [vmem:[%s3 + $0x330] sm:$0xf]
          %v10469 = vld [vmem:[%s3 + $0x334] sm:$0xf]
          %v10470 = vld [vmem:[%s3 + $0x338] sm:$0xf]
          %v10471 = vld [vmem:[%s3 + $0x33c] sm:$0xf]
          %v10472 = vld [vmem:[%s3 + $0x340] sm:$0xf]
          %v10473 = vld [vmem:[%s3 + $0x344] sm:$0xf]
          %v10474 = vld [vmem:[%s3 + $0x348] sm:$0xf]
          %v10475 = vld [vmem:[%s3 + $0x34c] sm:$0xf]
          %v10476 = vld [vmem:[%s3 + $0x350] sm:$0xf]
          %v10477 = vld [vmem:[%s3 + $0x354] sm:$0xf]
          %v10478 = vld [vmem:[%s3 + $0x358] sm:$0xf]
          %v10479 = vld [vmem:[%s3 + $0x35c] sm:$0xf]
          %v10480 = vld [vmem:[%s3 + $0x360] sm:$0xf]
          %v10481 = vld [vmem:[%s3 + $0x364] sm:$0xf]
          %v10482 = vld [vmem:[%s3 + $0x368] sm:$0xf]
          %v10483 = vld [vmem:[%s3 + $0x36c] sm:$0xf]
          %v10484 = vld [vmem:[%s3 + $0x370] sm:$0xf]
          %v10485 = vld [vmem:[%s3 + $0x374] sm:$0xf]
          %v10486 = vld [vmem:[%s3 + $0x378] sm:$0xf]
          %v10487 = vld [vmem:[%s3 + $0x37c] sm:$0xf]
          %v10488 = vld [vmem:[%s4] sm:$0x1]
          %v10713 = vunpack.c.l.b16 %v10264
          %v10714 = vunpack.c.l.b16 %v10265
          %v10715 = vunpack.c.l.b16 %v10266
          %v10716 = vunpack.c.l.b16 %v10267
          %v10717 = vunpack.c.l.b16 %v10268
          %v10718 = vunpack.c.l.b16 %v10269
          %v10719 = vunpack.c.l.b16 %v10270
          %v10720 = vunpack.c.l.b16 %v10271
          %v10721 = vunpack.c.l.b16 %v10272
          %v10722 = vunpack.c.l.b16 %v10273
          %v10723 = vunpack.c.l.b16 %v10274
          %v10724 = vunpack.c.l.b16 %v10275
          %v10725 = vunpack.c.l.b16 %v10276
          %v10726 = vunpack.c.l.b16 %v10277
          %v10727 = vunpack.c.l.b16 %v10278
          %v10728 = vunpack.c.l.b16 %v10279
          %v10729 = vunpack.c.l.b16 %v10280
          %v10730 = vunpack.c.l.b16 %v10281
          %v10731 = vunpack.c.l.b16 %v10282
          %v10732 = vunpack.c.l.b16 %v10283
          %v10733 = vunpack.c.l.b16 %v10284
          %v10734 = vunpack.c.l.b16 %v10285
          %v10735 = vunpack.c.l.b16 %v10286
          %v10736 = vunpack.c.l.b16 %v10287
          %v10737 = vunpack.c.l.b16 %v10288
          %v10738 = vunpack.c.l.b16 %v10289
          %v10739 = vunpack.c.l.b16 %v10290
          %v10740 = vunpack.c.l.b16 %v10291
          %v10741 = vunpack.c.l.b16 %v10292
          %v10742 = vunpack.c.l.b16 %v10293
          %v10743 = vunpack.c.l.b16 %v10294
          %v10744 = vunpack.c.l.b16 %v10295
          %v10745 = vunpack.c.l.b16 %v10296
          %v10746 = vunpack.c.l.b16 %v10297
          %v10747 = vunpack.c.l.b16 %v10298
          %v10748 = vunpack.c.l.b16 %v10299
          %v10749 = vunpack.c.l.b16 %v10300
          %v10750 = vunpack.c.l.b16 %v10301
          %v10751 = vunpack.c.l.b16 %v10302
          %v10752 = vunpack.c.l.b16 %v10303
          %v10753 = vunpack.c.l.b16 %v10304
          %v10754 = vunpack.c.l.b16 %v10305
          %v10755 = vunpack.c.l.b16 %v10306
          %v10756 = vunpack.c.l.b16 %v10307
          %v10757 = vunpack.c.l.b16 %v10308
          %v10758 = vunpack.c.l.b16 %v10309
          %v10759 = vunpack.c.l.b16 %v10310
          %v10760 = vunpack.c.l.b16 %v10311
          %v10761 = vunpack.c.l.b16 %v10312
          %v10762 = vunpack.c.l.b16 %v10313
          %v10763 = vunpack.c.l.b16 %v10314
          %v10764 = vunpack.c.l.b16 %v10315
          %v10765 = vunpack.c.l.b16 %v10316
          %v10766 = vunpack.c.l.b16 %v10317
          %v10767 = vunpack.c.l.b16 %v10318
          %v10768 = vunpack.c.l.b16 %v10319
          %v10769 = vunpack.c.l.b16 %v10320
          %v10770 = vunpack.c.l.b16 %v10321
          %v10771 = vunpack.c.l.b16 %v10322
          %v10772 = vunpack.c.l.b16 %v10323
          %v10773 = vunpack.c.l.b16 %v10324
          %v10774 = vunpack.c.l.b16 %v10325
          %v10775 = vunpack.c.l.b16 %v10326
          %v10776 = vunpack.c.l.b16 %v10327
          %v10777 = vunpack.c.l.b16 %v10328
          %v10778 = vunpack.c.l.b16 %v10329
          %v10779 = vunpack.c.l.b16 %v10330
          %v10780 = vunpack.c.l.b16 %v10331
          %v10781 = vunpack.c.l.b16 %v10332
          %v10782 = vunpack.c.l.b16 %v10333
          %v10783 = vunpack.c.l.b16 %v10334
          %v10784 = vunpack.c.l.b16 %v10335
          %v10785 = vunpack.c.l.b16 %v10336
          %v10786 = vunpack.c.l.b16 %v10337
          %v10787 = vunpack.c.l.b16 %v10338
          %v10788 = vunpack.c.l.b16 %v10339
          %v10789 = vunpack.c.l.b16 %v10340
          %v10790 = vunpack.c.l.b16 %v10341
          %v10791 = vunpack.c.l.b16 %v10342
          %v10792 = vunpack.c.l.b16 %v10343
          %v10793 = vunpack.c.l.b16 %v10344
          %v10794 = vunpack.c.l.b16 %v10345
          %v10795 = vunpack.c.l.b16 %v10346
          %v10796 = vunpack.c.l.b16 %v10347
          %v10797 = vunpack.c.l.b16 %v10348
          %v10798 = vunpack.c.l.b16 %v10349
          %v10799 = vunpack.c.l.b16 %v10350
          %v10800 = vunpack.c.l.b16 %v10351
          %v10801 = vunpack.c.l.b16 %v10352
          %v10802 = vunpack.c.l.b16 %v10353
          %v10803 = vunpack.c.l.b16 %v10354
          %v10804 = vunpack.c.l.b16 %v10355
          %v10805 = vunpack.c.l.b16 %v10356
          %v10806 = vunpack.c.l.b16 %v10357
          %v10807 = vunpack.c.l.b16 %v10358
          %v10808 = vunpack.c.l.b16 %v10359
          %v10809 = vunpack.c.l.b16 %v10360
          %v10810 = vunpack.c.l.b16 %v10361
          %v10811 = vunpack.c.l.b16 %v10362
          %v10812 = vunpack.c.l.b16 %v10363
          %v10813 = vunpack.c.l.b16 %v10364
          %v10814 = vunpack.c.l.b16 %v10365
          %v10815 = vunpack.c.l.b16 %v10366
          %v10816 = vunpack.c.l.b16 %v10367
          %v10817 = vunpack.c.l.b16 %v10368
          %v10818 = vunpack.c.l.b16 %v10369
          %v10819 = vunpack.c.l.b16 %v10370
          %v10820 = vunpack.c.l.b16 %v10371
          %v10821 = vunpack.c.l.b16 %v10372
          %v10822 = vunpack.c.l.b16 %v10373
          %v10823 = vunpack.c.l.b16 %v10374
          %v10824 = vunpack.c.l.b16 %v10375
          %v10825 = vunpack.c.l.b16 %v10376
          %v10826 = vunpack.c.l.b16 %v10377
          %v10827 = vunpack.c.l.b16 %v10378
          %v10828 = vunpack.c.l.b16 %v10379
          %v10829 = vunpack.c.l.b16 %v10380
          %v10830 = vunpack.c.l.b16 %v10381
          %v10831 = vunpack.c.l.b16 %v10382
          %v10832 = vunpack.c.l.b16 %v10383
          %v10833 = vunpack.c.l.b16 %v10384
          %v10834 = vunpack.c.l.b16 %v10385
          %v10835 = vunpack.c.l.b16 %v10386
          %v10836 = vunpack.c.l.b16 %v10387
          %v10837 = vunpack.c.l.b16 %v10388
          %v10838 = vunpack.c.l.b16 %v10389
          %v10839 = vunpack.c.l.b16 %v10390
          %v10840 = vunpack.c.l.b16 %v10391
          %v10841 = vunpack.c.l.b16 %v10392
          %v10842 = vunpack.c.l.b16 %v10393
          %v10843 = vunpack.c.l.b16 %v10394
          %v10844 = vunpack.c.l.b16 %v10395
          %v10845 = vunpack.c.l.b16 %v10396
          %v10846 = vunpack.c.l.b16 %v10397
          %v10847 = vunpack.c.l.b16 %v10398
          %v10848 = vunpack.c.l.b16 %v10399
          %v10849 = vunpack.c.l.b16 %v10400
          %v10850 = vunpack.c.l.b16 %v10401
          %v10851 = vunpack.c.l.b16 %v10402
          %v10852 = vunpack.c.l.b16 %v10403
          %v10853 = vunpack.c.l.b16 %v10404
          %v10854 = vunpack.c.l.b16 %v10405
          %v10855 = vunpack.c.l.b16 %v10406
          %v10856 = vunpack.c.l.b16 %v10407
          %v10857 = vunpack.c.l.b16 %v10408
          %v10858 = vunpack.c.l.b16 %v10409
          %v10859 = vunpack.c.l.b16 %v10410
          %v10860 = vunpack.c.l.b16 %v10411
          %v10861 = vunpack.c.l.b16 %v10412
          %v10862 = vunpack.c.l.b16 %v10413
          %v10863 = vunpack.c.l.b16 %v10414
          %v10864 = vunpack.c.l.b16 %v10415
          %v10865 = vunpack.c.l.b16 %v10416
          %v10866 = vunpack.c.l.b16 %v10417
          %v10867 = vunpack.c.l.b16 %v10418
          %v10868 = vunpack.c.l.b16 %v10419
          %v10869 = vunpack.c.l.b16 %v10420
          %v10870 = vunpack.c.l.b16 %v10421
          %v10871 = vunpack.c.l.b16 %v10422
          %v10872 = vunpack.c.l.b16 %v10423
          %v10873 = vunpack.c.l.b16 %v10424
          %v10874 = vunpack.c.l.b16 %v10425
          %v10875 = vunpack.c.l.b16 %v10426
          %v10876 = vunpack.c.l.b16 %v10427
          %v10877 = vunpack.c.l.b16 %v10428
          %v10878 = vunpack.c.l.b16 %v10429
          %v10879 = vunpack.c.l.b16 %v10430
          %v10880 = vunpack.c.l.b16 %v10431
          %v10881 = vunpack.c.l.b16 %v10432
          %v10882 = vunpack.c.l.b16 %v10433
          %v10883 = vunpack.c.l.b16 %v10434
          %v10884 = vunpack.c.l.b16 %v10435
          %v10885 = vunpack.c.l.b16 %v10436
          %v10886 = vunpack.c.l.b16 %v10437
          %v10887 = vunpack.c.l.b16 %v10438
          %v10888 = vunpack.c.l.b16 %v10439
          %v10889 = vunpack.c.l.b16 %v10440
          %v10890 = vunpack.c.l.b16 %v10441
          %v10891 = vunpack.c.l.b16 %v10442
          %v10892 = vunpack.c.l.b16 %v10443
          %v10893 = vunpack.c.l.b16 %v10444
          %v10894 = vunpack.c.l.b16 %v10445
          %v10895 = vunpack.c.l.b16 %v10446
          %v10896 = vunpack.c.l.b16 %v10447
          %v10897 = vunpack.c.l.b16 %v10448
          %v10898 = vunpack.c.l.b16 %v10449
          %v10899 = vunpack.c.l.b16 %v10450
          %v10900 = vunpack.c.l.b16 %v10451
          %v10901 = vunpack.c.l.b16 %v10452
          %v10902 = vunpack.c.l.b16 %v10453
          %v10903 = vunpack.c.l.b16 %v10454
          %v10904 = vunpack.c.l.b16 %v10455
          %v10905 = vunpack.c.l.b16 %v10456
          %v10906 = vunpack.c.l.b16 %v10457
          %v10907 = vunpack.c.l.b16 %v10458
          %v10908 = vunpack.c.l.b16 %v10459
          %v10909 = vunpack.c.l.b16 %v10460
          %v10910 = vunpack.c.l.b16 %v10461
          %v10911 = vunpack.c.l.b16 %v10462
          %v10912 = vunpack.c.l.b16 %v10463
          %v10913 = vunpack.c.l.b16 %v10464
          %v10914 = vunpack.c.l.b16 %v10465
          %v10915 = vunpack.c.l.b16 %v10466
          %v10916 = vunpack.c.l.b16 %v10467
          %v10917 = vunpack.c.l.b16 %v10468
          %v10918 = vunpack.c.l.b16 %v10469
          %v10919 = vunpack.c.l.b16 %v10470
          %v10920 = vunpack.c.l.b16 %v10471
          %v10921 = vunpack.c.l.b16 %v10472
          %v10922 = vunpack.c.l.b16 %v10473
          %v10923 = vunpack.c.l.b16 %v10474
          %v10924 = vunpack.c.l.b16 %v10475
          %v10925 = vunpack.c.l.b16 %v10476
          %v10926 = vunpack.c.l.b16 %v10477
          %v10927 = vunpack.c.l.b16 %v10478
          %v10928 = vunpack.c.l.b16 %v10479
          %v10929 = vunpack.c.l.b16 %v10480
          %v10930 = vunpack.c.l.b16 %v10481
          %v10931 = vunpack.c.l.b16 %v10482
          %v10932 = vunpack.c.l.b16 %v10483
          %v10933 = vunpack.c.l.b16 %v10484
          %v10934 = vunpack.c.l.b16 %v10485
          %v10935 = vunpack.c.l.b16 %v10486
          %v10936 = vunpack.c.l.b16 %v10487
          %v10937 = vpack.c.b16 %v10714, %v10713
          %v10938 = vpack.c.b16 %v10716, %v10715
          %v10939 = vpack.c.b16 %v10718, %v10717
          %v10940 = vpack.c.b16 %v10720, %v10719
          %v10941 = vpack.c.b16 %v10722, %v10721
          %v10942 = vpack.c.b16 %v10724, %v10723
          %v10943 = vpack.c.b16 %v10726, %v10725
          %v10944 = vpack.c.b16 %v10728, %v10727
          %v10945 = vpack.c.b16 %v10730, %v10729
          %v10946 = vpack.c.b16 %v10732, %v10731
          %v10947 = vpack.c.b16 %v10734, %v10733
          %v10948 = vpack.c.b16 %v10736, %v10735
          %v10949 = vpack.c.b16 %v10738, %v10737
          %v10950 = vpack.c.b16 %v10740, %v10739
          %v10951 = vpack.c.b16 %v10742, %v10741
          %v10952 = vpack.c.b16 %v10744, %v10743
          %v10953 = vpack.c.b16 %v10746, %v10745
          %v10954 = vpack.c.b16 %v10748, %v10747
          %v10955 = vpack.c.b16 %v10750, %v10749
          %v10956 = vpack.c.b16 %v10752, %v10751
          %v10957 = vpack.c.b16 %v10754, %v10753
          %v10958 = vpack.c.b16 %v10756, %v10755
          %v10959 = vpack.c.b16 %v10758, %v10757
          %v10960 = vpack.c.b16 %v10760, %v10759
          %v10961 = vpack.c.b16 %v10762, %v10761
          %v10962 = vpack.c.b16 %v10764, %v10763
          %v10963 = vpack.c.b16 %v10766, %v10765
          %v10964 = vpack.c.b16 %v10768, %v10767
          %v10965 = vpack.c.b16 %v10770, %v10769
          %v10966 = vpack.c.b16 %v10772, %v10771
          %v10967 = vpack.c.b16 %v10774, %v10773
          %v10968 = vpack.c.b16 %v10776, %v10775
          %v10969 = vpack.c.b16 %v10778, %v10777
          %v10970 = vpack.c.b16 %v10780, %v10779
          %v10971 = vpack.c.b16 %v10782, %v10781
          %v10972 = vpack.c.b16 %v10784, %v10783
          %v10973 = vpack.c.b16 %v10786, %v10785
          %v10974 = vpack.c.b16 %v10788, %v10787
          %v10975 = vpack.c.b16 %v10790, %v10789
          %v10976 = vpack.c.b16 %v10792, %v10791
          %v10977 = vpack.c.b16 %v10794, %v10793
          %v10978 = vpack.c.b16 %v10796, %v10795
          %v10979 = vpack.c.b16 %v10798, %v10797
          %v10980 = vpack.c.b16 %v10800, %v10799
          %v10981 = vpack.c.b16 %v10802, %v10801
          %v10982 = vpack.c.b16 %v10804, %v10803
          %v10983 = vpack.c.b16 %v10806, %v10805
          %v10984 = vpack.c.b16 %v10808, %v10807
          %v10985 = vpack.c.b16 %v10810, %v10809
          %v10986 = vpack.c.b16 %v10812, %v10811
          %v10987 = vpack.c.b16 %v10814, %v10813
          %v10988 = vpack.c.b16 %v10816, %v10815
          %v10989 = vpack.c.b16 %v10818, %v10817
          %v10990 = vpack.c.b16 %v10820, %v10819
          %v10991 = vpack.c.b16 %v10822, %v10821
          %v10992 = vpack.c.b16 %v10824, %v10823
          %v10993 = vpack.c.b16 %v10826, %v10825
          %v10994 = vpack.c.b16 %v10828, %v10827
          %v10995 = vpack.c.b16 %v10830, %v10829
          %v10996 = vpack.c.b16 %v10832, %v10831
          %v10997 = vpack.c.b16 %v10834, %v10833
          %v10998 = vpack.c.b16 %v10836, %v10835
          %v10999 = vpack.c.b16 %v10838, %v10837
          %v11000 = vpack.c.b16 %v10840, %v10839
          %v11001 = vpack.c.b16 %v10842, %v10841
          %v11002 = vpack.c.b16 %v10844, %v10843
          %v11003 = vpack.c.b16 %v10846, %v10845
          %v11004 = vpack.c.b16 %v10848, %v10847
          %v11005 = vpack.c.b16 %v10850, %v10849
          %v11006 = vpack.c.b16 %v10852, %v10851
          %v11007 = vpack.c.b16 %v10854, %v10853
          %v11008 = vpack.c.b16 %v10856, %v10855
          %v11009 = vpack.c.b16 %v10858, %v10857
          %v11010 = vpack.c.b16 %v10860, %v10859
          %v11011 = vpack.c.b16 %v10862, %v10861
          %v11012 = vpack.c.b16 %v10864, %v10863
          %v11013 = vpack.c.b16 %v10866, %v10865
          %v11014 = vpack.c.b16 %v10868, %v10867
          %v11015 = vpack.c.b16 %v10870, %v10869
          %v11016 = vpack.c.b16 %v10872, %v10871
          %v11017 = vpack.c.b16 %v10874, %v10873
          %v11018 = vpack.c.b16 %v10876, %v10875
          %v11019 = vpack.c.b16 %v10878, %v10877
          %v11020 = vpack.c.b16 %v10880, %v10879
          %v11021 = vpack.c.b16 %v10882, %v10881
          %v11022 = vpack.c.b16 %v10884, %v10883
          %v11023 = vpack.c.b16 %v10886, %v10885
          %v11024 = vpack.c.b16 %v10888, %v10887
          %v11025 = vpack.c.b16 %v10890, %v10889
          %v11026 = vpack.c.b16 %v10892, %v10891
          %v11027 = vpack.c.b16 %v10894, %v10893
          %v11028 = vpack.c.b16 %v10896, %v10895
          %v11029 = vpack.c.b16 %v10898, %v10897
          %v11030 = vpack.c.b16 %v10900, %v10899
          %v11031 = vpack.c.b16 %v10902, %v10901
          %v11032 = vpack.c.b16 %v10904, %v10903
          %v11033 = vpack.c.b16 %v10906, %v10905
          %v11034 = vpack.c.b16 %v10908, %v10907
          %v11035 = vpack.c.b16 %v10910, %v10909
          %v11036 = vpack.c.b16 %v10912, %v10911
          %v11037 = vpack.c.b16 %v10914, %v10913
          %v11038 = vpack.c.b16 %v10916, %v10915
          %v11039 = vpack.c.b16 %v10918, %v10917
          %v11040 = vpack.c.b16 %v10920, %v10919
          %v11041 = vpack.c.b16 %v10922, %v10921
          %v11042 = vpack.c.b16 %v10924, %v10923
          %v11043 = vpack.c.b16 %v10926, %v10925
          %v11044 = vpack.c.b16 %v10928, %v10927
          %v11045 = vpack.c.b16 %v10930, %v10929
          %v11046 = vpack.c.b16 %v10932, %v10931
          %v11047 = vpack.c.b16 %v10934, %v10933
          %v11048 = vpack.c.b16 %v10936, %v10935
          %11161 = vmatpush.bf16.msra.mxu0 %v10944
          %11162 = vmatpush.bf16.msra.mxu0 %v10943
          %11163 = vmatpush.bf16.msra.mxu0 %v10942
          %11164 = vmatpush.bf16.msra.mxu0 %v10941
          %11165 = vmatpush.bf16.msra.mxu0 %v10940
          %11166 = vmatpush.bf16.msra.mxu0 %v10939
          %11167 = vmatpush.bf16.msra.mxu0 %v10938
          %11168 = vmatpush.bf16.msra.mxu0 %v10937
          %11169 = vmatmul.bf16.gmra.mxu0 %v10250
          %v11170 = vpop.f32.mrf.mxu0
          %v11171 = vadd.f32 %v10488, %v11170
          %v11172 = vpop.f32.mrf.mxu0
          %11173 = vdwg.mxu0
          %11174 = vmatpush.bf16.msra.mxu0 %v10952
          %11175 = vmatpush.bf16.msra.mxu0 %v10951
          %11176 = vmatpush.bf16.msra.mxu0 %v10950
          %11177 = vmatpush.bf16.msra.mxu0 %v10949
          %11178 = vmatpush.bf16.msra.mxu0 %v10948
          %11179 = vmatpush.bf16.msra.mxu0 %v10947
          %11180 = vmatpush.bf16.msra.mxu0 %v10946
          %11181 = vmatpush.bf16.msra.mxu0 %v10945
          %11182 = vmatmul.bf16.gmra.mxu0 %v10251
          %v11183 = vpop.f32.mrf.mxu0
          %v11184 = vadd.f32 %v11171, %v11183
          %v11185 = vpop.f32.mrf.mxu0
          %11186 = vdwg.mxu0
          %11187 = vmatpush.bf16.msra.mxu0 %v10960
          %11188 = vmatpush.bf16.msra.mxu0 %v10959
          %11189 = vmatpush.bf16.msra.mxu0 %v10958
          %11190 = vmatpush.bf16.msra.mxu0 %v10957
          %11191 = vmatpush.bf16.msra.mxu0 %v10956
          %11192 = vmatpush.bf16.msra.mxu0 %v10955
          %11193 = vmatpush.bf16.msra.mxu0 %v10954
          %11194 = vmatpush.bf16.msra.mxu0 %v10953
          %11195 = vmatmul.bf16.gmra.mxu0 %v10252
          %v11196 = vpop.f32.mrf.mxu0
          %v11197 = vadd.f32 %v11184, %v11196
          %v11198 = vpop.f32.mrf.mxu0
          %11199 = vdwg.mxu0
          %11200 = vmatpush.bf16.msra.mxu0 %v10968
          %11201 = vmatpush.bf16.msra.mxu0 %v10967
          %11202 = vmatpush.bf16.msra.mxu0 %v10966
          %11203 = vmatpush.bf16.msra.mxu0 %v10965
          %11204 = vmatpush.bf16.msra.mxu0 %v10964
          %11205 = vmatpush.bf16.msra.mxu0 %v10963
          %11206 = vmatpush.bf16.msra.mxu0 %v10962
          %11207 = vmatpush.bf16.msra.mxu0 %v10961
          %11208 = vmatmul.bf16.gmra.mxu0 %v10253
          %v11209 = vpop.f32.mrf.mxu0
          %v11210 = vadd.f32 %v11197, %v11209
          %v11211 = vpop.f32.mrf.mxu0
          %11212 = vdwg.mxu0
          %11213 = vmatpush.bf16.msra.mxu0 %v10976
          %11214 = vmatpush.bf16.msra.mxu0 %v10975
          %11215 = vmatpush.bf16.msra.mxu0 %v10974
          %11216 = vmatpush.bf16.msra.mxu0 %v10973
          %11217 = vmatpush.bf16.msra.mxu0 %v10972
          %11218 = vmatpush.bf16.msra.mxu0 %v10971
          %11219 = vmatpush.bf16.msra.mxu0 %v10970
          %11220 = vmatpush.bf16.msra.mxu0 %v10969
          %11221 = vmatmul.bf16.gmra.mxu0 %v10254
          %v11222 = vpop.f32.mrf.mxu0
          %v11223 = vadd.f32 %v11210, %v11222
          %v11224 = vpop.f32.mrf.mxu0
          %11225 = vdwg.mxu0
          %11226 = vmatpush.bf16.msra.mxu0 %v10984
          %11227 = vmatpush.bf16.msra.mxu0 %v10983
          %11228 = vmatpush.bf16.msra.mxu0 %v10982
          %11229 = vmatpush.bf16.msra.mxu0 %v10981
          %11230 = vmatpush.bf16.msra.mxu0 %v10980
          %11231 = vmatpush.bf16.msra.mxu0 %v10979
          %11232 = vmatpush.bf16.msra.mxu0 %v10978
          %11233 = vmatpush.bf16.msra.mxu0 %v10977
          %11234 = vmatmul.bf16.gmra.mxu0 %v10255
          %v11235 = vpop.f32.mrf.mxu0
          %v11236 = vadd.f32 %v11223, %v11235
          %v11237 = vpop.f32.mrf.mxu0
          %11238 = vdwg.mxu0
          %11239 = vmatpush.bf16.msra.mxu0 %v10992
          %11240 = vmatpush.bf16.msra.mxu0 %v10991
          %11241 = vmatpush.bf16.msra.mxu0 %v10990
          %11242 = vmatpush.bf16.msra.mxu0 %v10989
          %11243 = vmatpush.bf16.msra.mxu0 %v10988
          %11244 = vmatpush.bf16.msra.mxu0 %v10987
          %11245 = vmatpush.bf16.msra.mxu0 %v10986
          %11246 = vmatpush.bf16.msra.mxu0 %v10985
          %11247 = vmatmul.bf16.gmra.mxu0 %v10256
          %v11248 = vpop.f32.mrf.mxu0
          %v11249 = vadd.f32 %v11236, %v11248
          %v11250 = vpop.f32.mrf.mxu0
          %11251 = vdwg.mxu0
          %11252 = vmatpush.bf16.msra.mxu0 %v11000
          %11253 = vmatpush.bf16.msra.mxu0 %v10999
          %11254 = vmatpush.bf16.msra.mxu0 %v10998
          %11255 = vmatpush.bf16.msra.mxu0 %v10997
          %11256 = vmatpush.bf16.msra.mxu0 %v10996
          %11257 = vmatpush.bf16.msra.mxu0 %v10995
          %11258 = vmatpush.bf16.msra.mxu0 %v10994
          %11259 = vmatpush.bf16.msra.mxu0 %v10993
          %11260 = vmatmul.bf16.gmra.mxu0 %v10257
          %v11261 = vpop.f32.mrf.mxu0
          %v11262 = vadd.f32 %v11249, %v11261
          %v11263 = vpop.f32.mrf.mxu0
          %11264 = vdwg.mxu0
          %11265 = vmatpush.bf16.msra.mxu0 %v11008
          %11266 = vmatpush.bf16.msra.mxu0 %v11007
          %11267 = vmatpush.bf16.msra.mxu0 %v11006
          %11268 = vmatpush.bf16.msra.mxu0 %v11005
          %11269 = vmatpush.bf16.msra.mxu0 %v11004
          %11270 = vmatpush.bf16.msra.mxu0 %v11003
          %11271 = vmatpush.bf16.msra.mxu0 %v11002
          %11272 = vmatpush.bf16.msra.mxu0 %v11001
          %11273 = vmatmul.bf16.gmra.mxu0 %v10258
          %v11274 = vpop.f32.mrf.mxu0
          %v11275 = vadd.f32 %v11262, %v11274
          %v11276 = vpop.f32.mrf.mxu0
          %11277 = vdwg.mxu0
          %11278 = vmatpush.bf16.msra.mxu0 %v11016
          %11279 = vmatpush.bf16.msra.mxu0 %v11015
          %11280 = vmatpush.bf16.msra.mxu0 %v11014
          %11281 = vmatpush.bf16.msra.mxu0 %v11013
          %11282 = vmatpush.bf16.msra.mxu0 %v11012
          %11283 = vmatpush.bf16.msra.mxu0 %v11011
          %11284 = vmatpush.bf16.msra.mxu0 %v11010
          %11285 = vmatpush.bf16.msra.mxu0 %v11009
          %11286 = vmatmul.bf16.gmra.mxu0 %v10259
          %v11287 = vpop.f32.mrf.mxu0
          %v11288 = vadd.f32 %v11275, %v11287
          %v11289 = vpop.f32.mrf.mxu0
          %11290 = vdwg.mxu0
          %11291 = vmatpush.bf16.msra.mxu0 %v11024
          %11292 = vmatpush.bf16.msra.mxu0 %v11023
          %11293 = vmatpush.bf16.msra.mxu0 %v11022
          %11294 = vmatpush.bf16.msra.mxu0 %v11021
          %11295 = vmatpush.bf16.msra.mxu0 %v11020
          %11296 = vmatpush.bf16.msra.mxu0 %v11019
          %11297 = vmatpush.bf16.msra.mxu0 %v11018
          %11298 = vmatpush.bf16.msra.mxu0 %v11017
          %11299 = vmatmul.bf16.gmra.mxu0 %v10260
          %v11300 = vpop.f32.mrf.mxu0
          %v11301 = vadd.f32 %v11288, %v11300
          %v11302 = vpop.f32.mrf.mxu0
          %11303 = vdwg.mxu0
          %11304 = vmatpush.bf16.msra.mxu0 %v11032
          %11305 = vmatpush.bf16.msra.mxu0 %v11031
          %11306 = vmatpush.bf16.msra.mxu0 %v11030
          %11307 = vmatpush.bf16.msra.mxu0 %v11029
          %11308 = vmatpush.bf16.msra.mxu0 %v11028
          %11309 = vmatpush.bf16.msra.mxu0 %v11027
          %11310 = vmatpush.bf16.msra.mxu0 %v11026
          %11311 = vmatpush.bf16.msra.mxu0 %v11025
          %11312 = vmatmul.bf16.gmra.mxu0 %v10261
          %v11313 = vpop.f32.mrf.mxu0
          %v11314 = vadd.f32 %v11301, %v11313
          %v11315 = vpop.f32.mrf.mxu0
          %11316 = vdwg.mxu0
          %11317 = vmatpush.bf16.msra.mxu0 %v11040
          %11318 = vmatpush.bf16.msra.mxu0 %v11039
          %11319 = vmatpush.bf16.msra.mxu0 %v11038
          %11320 = vmatpush.bf16.msra.mxu0 %v11037
          %11321 = vmatpush.bf16.msra.mxu0 %v11036
          %11322 = vmatpush.bf16.msra.mxu0 %v11035
          %11323 = vmatpush.bf16.msra.mxu0 %v11034
          %11324 = vmatpush.bf16.msra.mxu0 %v11033
          %11325 = vmatmul.bf16.gmra.mxu0 %v10262
          %v11326 = vpop.f32.mrf.mxu0
          %v11327 = vadd.f32 %v11314, %v11326
          %v11328 = vpop.f32.mrf.mxu0
          %11329 = vdwg.mxu0
          %11330 = vmatpush.bf16.msra.mxu0 %v11048
          %11331 = vmatpush.bf16.msra.mxu0 %v11047
          %11332 = vmatpush.bf16.msra.mxu0 %v11046
          %11333 = vmatpush.bf16.msra.mxu0 %v11045
          %11334 = vmatpush.bf16.msra.mxu0 %v11044
          %11335 = vmatpush.bf16.msra.mxu0 %v11043
          %11336 = vmatpush.bf16.msra.mxu0 %v11042
          %11337 = vmatpush.bf16.msra.mxu0 %v11041
          %11338 = vmatmul.bf16.gmra.mxu0 %v10263
          %v11339 = vpop.f32.mrf.mxu0
          %v11340 = vadd.f32 %v11327, %v11339
          %v11341 = vpop.f32.mrf.mxu0
          %11342 = vdwg.mxu0
          %11343 = vst [vmem:[%s239] sm:$0x1] %v11340
        $region44: #{tpu_custom_call.1} parent=39 // pred_fallthru
          _
        %s11344 = sand.u32 %s151, 1
        %s11345 = scalar_lea.sflag [#allocation4], %s11344
        %s11346 = sand.u32 %s151, 1
        %s11347 = scalar_lea.vmem [#allocation3], %s11346
        // Predicated region
        $region45: #{tpu_custom_call.1} parent=39 // pred_check
          %p11348 = pneg %p161
        $region46: #{tpu_custom_call.1} parent=39 // pred_check_branch
          %11350 = sbr.rel (%p11348) target = $region48
        $region47: #{tpu_custom_call.1} parent=39 // pred_region
          %11352 = vsyncadd %s11345, 0
          %s11353 = scalar_lea.hbm %s5, %s23
          %s11355 = sshll.u32 %s11347, 4
          %s11356 = int_to_ptr.vmem [resolvable:$true] %s11355
          %s11357 = sshll.u32 %s11353, 4
          %s11358 = int_to_ptr.hbm [resolvable:$true] %s11357
          %11360 = dma.vmem_to_hbm [thread:$0]  %s11356, 16, %s11358, %s11345
        $region48: #{tpu_custom_call.1} parent=39 // pred_fallthru
          _
      $region40: #{tpu_custom_call.1} parent=5 // pred_fallthru
        _
      %p11361 = scmp.le.s32.totalorder 2, %s14
      // Predicated region
      $region49: #{tpu_custom_call.1} parent=5 // pred_check
        %p11362 = pneg %p11361
      $region50: #{tpu_custom_call.1} parent=5 // pred_check_branch
        %11364 = sbr.rel (%p11362) target = $region52
      $region51: #{tpu_custom_call.1} parent=5 // pred_region
        %s11365 = ssub.s32 %s14, 2
        // Predicated region
        $region53: #{tpu_custom_call.1} parent=51 // pred_check
          %p11366 = pneg %p167
        $region54: #{tpu_custom_call.1} parent=51 // pred_check_branch
          %11368 = sbr.rel (%p11366) target = $region56
        $region55: #{tpu_custom_call.1} parent=51 // pred_region
          %s11369 = sand.u32 %s152, 1
          %s11370 = scalar_lea.sflag [#allocation4], %s11369
          %s11371 = sand.u32 %s152, 1
          %s11372 = scalar_lea.vmem [#allocation3], %s11371
          %11374 = dma.done %s11370, 16
        $region56: #{tpu_custom_call.1} parent=51 // pred_fallthru
          _
      $region52: #{tpu_custom_call.1} parent=5 // pred_fallthru
        _
    $region6: #{tpu_custom_call.1} parent=1 // loop_footer
      %s18 = sadd.s32 1, %s14
    $region7: #{tpu_custom_call.1} parent=1 // loop_footer_branch
      %13 = sbr.rel target = $region3
    $region8: #{tpu_custom_call.1} parent=1 // loop_exit
      _
    %11375 = vsyncpa [#allocation4], 1
    %s11376 = scalar_lea.sflag [#allocation4], 1
    %11377 = vsyncpa %s11376, 1

</llo_original>
